<compile_context>
chip_gen: v7x
topology: tpu7x:2x2x1
jax: 0.10.0
libtpu: 0.0.40
codegen_flags: <defaults>
</compile_context>

<pallas_src>
import functools
import math

import jax
import jax.numpy as jnp
from jax.experimental import pallas as pl
from jax.experimental.pallas import tpu as pltpu


# ----------------------------- compiler-parameter helpers -----------------------------

@functools.lru_cache(maxsize=1)
def _vmem_limit_bytes():
    """3/4 of physical VMEM, capped at 96 MiB (=> ~48 MiB on v7x, 96 MiB on v5e/v6e)."""
    try:
        cap = int(pltpu.get_tpu_info().vmem_capacity_bytes)
        return min((cap * 3) // 4, 96 * 1024 * 1024)
    except Exception:
        return None   # unknown generation / query failed -> compiler default scoped limit


def _cparams():
    return pltpu.CompilerParams(dimension_semantics=("parallel",),
                                vmem_limit_bytes=_vmem_limit_bytes())


# ----------------------------- in-kernel building blocks -----------------------------

def _layer_norm(x, g, b, eps):
    mu = jnp.mean(x, axis=-1, keepdims=True)
    var = jnp.mean(jnp.square(x - mu), axis=-1, keepdims=True)
    return (x - mu) * jax.lax.rsqrt(var + eps) * g + b


def _mha_block(xn_bf, kv_bf, bias, wq, bq, wkv, bkv, wo, bo, *, H, dm, scale):
    """Multi-head attention for one batch element (head-batched, 2D-lane friendly).

    xn_bf : (Sq, Dq)  bf16   LayerNorm'ed query source
    kv_bf : (Sk, Dkv) bf16   key/value source (== xn_bf for self-attention)
    bias  : (1, 1, Sk) f32   additive key mask (0 or -1e30)
    wq (Dq, dm) bf16, wkv (Dkv, 2*dm) bf16, wo (H, dk, Dq) bf16; biases f32.
    Returns the MHA output (Sq, Dq) f32 (pre-residual, includes output bias).
    """
    dk = dm // H

    # Wide projections (d_model in lanes), f32 accumulation on the MXU.
    q = jnp.dot(xn_bf, wq, preferred_element_type=jnp.float32) + bq        # (Sq, dm)
    kv = jnp.dot(kv_bf, wkv, preferred_element_type=jnp.float32) + bkv     # (Sk, 2*dm)
    k = kv[:, :dm]
    v = kv[:, dm:]

    # Split heads once: (H, S, dk); a single bf16 cast per tensor (no per-head casts).
    q3 = jnp.stack([q[:, h * dk:(h + 1) * dk] for h in range(H)], axis=0).astype(jnp.bfloat16)
    k3 = jnp.stack([k[:, h * dk:(h + 1) * dk] for h in range(H)], axis=0).astype(jnp.bfloat16)
    v3 = jnp.stack([v[:, h * dk:(h + 1) * dk] for h in range(H)], axis=0).astype(jnp.bfloat16)

    # Head-batched scores + softmax (exact division, matches torch.softmax).
    s = jnp.einsum('hqd,hkd->hqk', q3, k3,
                   preferred_element_type=jnp.float32) * scale + bias       # (H, Sq, Sk)
    m = jnp.max(s, axis=-1, keepdims=True)
    e = jnp.exp(s - m)
    p = e / jnp.sum(e, axis=-1, keepdims=True)

    # Head-batched PV and output projection.
    ctx = jnp.einsum('hqk,hkd->hqd', p.astype(jnp.bfloat16), v3,
                     preferred_element_type=jnp.float32)                    # (H, Sq, dk)
    att3 = jnp.einsum('hqd,hdo->hqo', ctx.astype(jnp.bfloat16), wo,
                      preferred_element_type=jnp.float32)                   # (H, Sq, Dq)

    # Reduce over heads: sum_h ctx_h @ Wo_h == concat_h(ctx_h) @ Wo.  Explicit unrolled
    # adds (H is small) — pure VPU work, kept off the MXU/XLU paths.
    att = att3[0]
    for h in range(1, H):
        att = att + att3[h]
    return att + bo                                                         # (Sq, Dq)


# ----------------------------- fused sublayer kernels -----------------------------

def _self_attn_kernel(x_ref, bias_ref, g_ref, b_ref,
                      wq_ref, bq_ref, wkv_ref, bkv_ref, wo_ref, bo_ref,
                      o_ref, *, H, dm, scale, eps):
    """Residual( x, LN -> self-MHA(Q=K=V=LN(x)) ) for one batch element."""
    x = x_ref[0]                                                            # (S, D) f32
    xn_bf = _layer_norm(x, g_ref[...], b_ref[...], eps).astype(jnp.bfloat16)
    att = _mha_block(xn_bf, xn_bf, bias_ref[...],
                     wq_ref[...], bq_ref[...], wkv_ref[...], bkv_ref[...],
                     wo_ref[...], bo_ref[...], H=H, dm=dm, scale=scale)
    o_ref[0] = x + att                                                      # fused residual


def _cross_attn_ffn_kernel(x_ref, kv_ref, bias_ref,
                           g1_ref, b1_ref, wq_ref, bq_ref, wkv_ref, bkv_ref, wo_ref, bo_ref,
                           g2_ref, b2_ref, w1_ref, c1_ref, w2_ref, c2_ref,
                           o_ref, *, H, dm, scale, eps):
    """Residual(x, cross-MHA(K=V=kv)) followed by Residual(., FFN), fused on-chip."""
    x = x_ref[0]                                                            # (Sq, Dq) f32

    # Cross-attention sublayer (K/V come from the RAW post-self-attention other modality,
    # matching the PyTorch closure semantics — not layer-normed).
    xn_bf = _layer_norm(x, g1_ref[...], b1_ref[...], eps).astype(jnp.bfloat16)
    att = _mha_block(xn_bf, kv_ref[0].astype(jnp.bfloat16), bias_ref[...],
                     wq_ref[...], bq_ref[...], wkv_ref[...], bkv_ref[...],
                     wo_ref[...], bo_ref[...], H=H, dm=dm, scale=scale)
    y = x + att                                                             # (Sq, Dq)

    # Feed-forward sublayer, intermediate `y` never leaves VMEM.
    yn_bf = _layer_norm(y, g2_ref[...], b2_ref[...], eps).astype(jnp.bfloat16)
    h = jnp.dot(yn_bf, w1_ref[...], preferred_element_type=jnp.float32) + c1_ref[...]
    h = jnp.maximum(h, 0.0)
    f = jnp.dot(h.astype(jnp.bfloat16), w2_ref[...],
                preferred_element_type=jnp.float32) + c2_ref[...]
    o_ref[0] = y + f                                                        # fused residual


# ----------------------------- pallas_call wrappers -----------------------------

def self_attention_sublayer(p, ln, x, bias, H):
    """ResidualConnection(x, LN -> MHA(Q=K=V=LN(x), key-mask bias)).  x:(B,S,D), bias:(B,1,S)."""
    B, S, D = x.shape
    dm = p['wq'].shape[1]
    dk = dm // H
    kernel = functools.partial(_self_attn_kernel, H=H, dm=dm,
                               scale=1.0 / math.sqrt(dk), eps=1e-5)
    w = lambda b: (0, 0)        # weights / LN params: constant block index -> fetched once
    return pl.pallas_call(
        kernel,
        out_shape=jax.ShapeDtypeStruct((B, S, D), jnp.float32),
        grid=(B,),
        in_specs=[
            pl.BlockSpec((1, S, D), lambda b: (b, 0, 0)),            # x (residual base)
            pl.BlockSpec((1, 1, S), lambda b: (b, 0, 0)),            # additive key mask
            pl.BlockSpec((1, D), w), pl.BlockSpec((1, D), w),        # LN gamma / beta
            pl.BlockSpec((D, dm), w), pl.BlockSpec((1, dm), w),      # wq / bq
            pl.BlockSpec((D, 2 * dm), w), pl.BlockSpec((1, 2 * dm), w),  # wkv / bkv (fused)
            pl.BlockSpec((H, dk, D), lambda b: (0, 0, 0)),           # wo (per-head layout)
            pl.BlockSpec((1, D), w),                                 # bo
        ],
        out_specs=pl.BlockSpec((1, S, D), lambda b: (b, 0, 0)),
        input_output_aliases={0: 0},        # x is dead after this sublayer -> write in place
        compiler_params=_cparams(),
    )(x, bias, ln['g'], ln['b'],
      p['wq'], p['bq'], p['wkv'], p['bkv'], p['wo'], p['bo'])


def cross_attn_ffn_sublayers(att_p, ff_p, ln_att, ln_ff, x, kv, bias, H):
    """Fused Residual(x, cross-MHA(K=V=kv)) + Residual(., FFN) in one pallas_call."""
    B, Sq, Dq = x.shape
    _, Sk, Dkv = kv.shape
    dm = att_p['wq'].shape[1]
    dk = dm // H
    d_ff = ff_p['w1'].shape[1]
    kernel = functools.partial(_cross_attn_ffn_kernel, H=H, dm=dm,
                               scale=1.0 / math.sqrt(dk), eps=1e-5)
    w = lambda b: (0, 0)
    return pl.pallas_call(
        kernel,
        out_shape=jax.ShapeDtypeStruct((B, Sq, Dq), jnp.float32),
        grid=(B,),
        in_specs=[
            pl.BlockSpec((1, Sq, Dq), lambda b: (b, 0, 0)),          # x (query / residual)
            pl.BlockSpec((1, Sk, Dkv), lambda b: (b, 0, 0)),         # other-modality K/V src
            pl.BlockSpec((1, 1, Sk), lambda b: (b, 0, 0)),           # additive key mask
            pl.BlockSpec((1, Dq), w), pl.BlockSpec((1, Dq), w),      # LN1 gamma / beta
            pl.BlockSpec((Dq, dm), w), pl.BlockSpec((1, dm), w),     # wq / bq
            pl.BlockSpec((Dkv, 2 * dm), w), pl.BlockSpec((1, 2 * dm), w),  # wkv / bkv
            pl.BlockSpec((H, dk, Dq), lambda b: (0, 0, 0)),          # wo (per-head layout)
            pl.BlockSpec((1, Dq), w),                                # bo
            pl.BlockSpec((1, Dq), w), pl.BlockSpec((1, Dq), w),      # LN2 gamma / beta
            pl.BlockSpec((Dq, d_ff), w), pl.BlockSpec((1, d_ff), w), # w1 / b1
            pl.BlockSpec((d_ff, Dq), w), pl.BlockSpec((1, Dq), w),   # w2 / b2
        ],
        out_specs=pl.BlockSpec((1, Sq, Dq), lambda b: (b, 0, 0)),
        # No input/output aliasing here: x (post-self-attention) is still live as the
        # sibling modality's K/V source; aliasing would just force an XLA copy.
        compiler_params=_cparams(),
    )(x, kv, bias, ln_att['g'], ln_att['b'],
      att_p['wq'], att_p['bq'], att_p['wkv'], att_p['bkv'], att_p['wo'], att_p['bo'],
      ln_ff['g'], ln_ff['b'], ff_p['w1'], ff_p['b1'], ff_p['w2'], ff_p['b2'])


# ----------------------------- module composition -----------------------------

def bimodal_encoder_layer(p, M1, M2, M1_bias, M2_bias, H):
    # Self-attention sublayers (Q=K=V=LayerNorm(x)).
    M1 = self_attention_sublayer(p['self_att_M1'], p['res_M1'][0], M1, M1_bias, H)
    M2 = self_attention_sublayer(p['self_att_M2'], p['res_M2'][0], M2, M2_bias, H)
    # Cross-attention (+ fused feed-forward).  The PyTorch closures bind M1/M2 late, so
    # K/V are the post-self-attention tensors (NOT layer-normed); the mask follows the
    # key/value modality (M2_bias for cross_att_M1, M1_bias for cross_att_M2).
    M1m2 = cross_attn_ffn_sublayers(p['cross_att_M1'], p['ff_M1'],
                                    p['res_M1'][1], p['res_M1'][2], M1, M2, M2_bias, H)
    M2m1 = cross_attn_ffn_sublayers(p['cross_att_M2'], p['ff_M2'],
                                    p['res_M2'][1], p['res_M2'][2], M2, M1, M1_bias, H)
    return M1m2, M2m1


def bimodal_encoder_tow(layer_params, AV, T, AV_bias, T_bias, H):
    """BiModalEncoderTow.forward with masks = (None, T_mask).  Dropout = identity (eval)."""
    M1, M2 = AV, T
    for p in layer_params:                                   # LayerStack (N independent layers)
        M1, M2 = bimodal_encoder_layer(p, M1, M2, AV_bias, T_bias, H)
    return M1, M2


# ----------------------------- deterministic parameter init -----------------------------

def _w(key, a, b):
    return (jax.random.normal(key, (a, b), jnp.float32) * 0.05).astype(jnp.float32)


def _b(key, b):
    return (jax.random.normal(key, (1, b), jnp.float32) * 0.05).astype(jnp.float32)


def init_mha(key, d_q, d_kv, d_model, H):
    assert d_model % H == 0
    ks = jax.random.split(key, 8)
    dk = d_model // H
    wq = _w(ks[0], d_q, d_model)
    wk = _w(ks[2], d_kv, d_model)
    wv = _w(ks[4], d_kv, d_model)
    wo = _w(ks[6], d_model, d_q)
    return {
        'wq': wq.astype(jnp.bfloat16), 'bq': _b(ks[1], d_model),
        'wkv': jnp.concatenate([wk, wv], axis=1).astype(jnp.bfloat16),     # fused K|V
        'bkv': jnp.concatenate([_b(ks[3], d_model), _b(ks[5], d_model)], axis=1),
        'wo': wo.reshape(H, dk, d_q).astype(jnp.bfloat16),  # per-head rows of the out proj
        'bo': _b(ks[7], d_q),
    }


def init_ff(key, d, d_ff):
    ks = jax.random.split(key, 4)
    return {'w1': _w(ks[0], d, d_ff).astype(jnp.bfloat16), 'b1': _b(ks[1], d_ff),
            'w2': _w(ks[2], d_ff, d).astype(jnp.bfloat16), 'b2': _b(ks[3], d)}


def init_ln(d):
    return {'g': jnp.ones((1, d), jnp.float32), 'b': jnp.zeros((1, d), jnp.float32)}


def init_bimodal_layer(key, d_M1, d_M2, d_model, d_ff_M1, d_ff_M2, H):
    ks = jax.random.split(key, 6)
    return {
        'self_att_M1':  init_mha(ks[0], d_M1, d_M1, d_model, H),
        'self_att_M2':  init_mha(ks[1], d_M2, d_M2, d_model, H),
        'cross_att_M1': init_mha(ks[2], d_M1, d_M2, d_model, H),
        'cross_att_M2': init_mha(ks[3], d_M2, d_M1, d_model, H),
        'ff_M1': init_ff(ks[4], d_M1, d_ff_M1),
        'ff_M2': init_ff(ks[5], d_M2, d_ff_M2),
        'res_M1': [init_ln(d_M1) for _ in range(3)],
        'res_M2': [init_ln(d_M2) for _ in range(3)],
    }


# ----------------------------- example run -----------------------------

if __name__ == "__main__":
    # AV (B, Sa, d_model_AV), T (B, St, d_model_T).
    B, Sa, St = 2, 12, 8
    d_model_AV, d_model_T, d_model = 32, 32, 32
    H, N = 4, 2
    d_ff_AV, d_ff_T = 64, 64

    key = jax.random.PRNGKey(0)
    k_av, k_t, k_params = jax.random.split(key, 3)
    AV = jax.random.normal(k_av, (B, Sa, d_model_AV), jnp.float32)
    T = jax.random.normal(k_t, (B, St, d_model_T), jnp.float32)

    # masks = {'T_mask': (B, 1, St)} ; AV mask is None in BiModalEncoderTow.forward.
    lengths = jnp.array([St, 5], dtype=jnp.int32)
    T_mask = (jnp.arange(St)[None, :] < lengths[:, None]).astype(jnp.float32)[:, None, :]
    NEG = jnp.float32(-1e30)   # stands in for masked_fill(mask==0, -inf) without NaN risk
    T_bias = jnp.where(T_mask == 0, NEG, jnp.float32(0.0))            # (B, 1, St)
    AV_bias = jnp.zeros((B, 1, Sa), jnp.float32)                       # mask=None => no masking

    layer_keys = jax.random.split(k_params, N)
    layer_params = [init_bimodal_layer(k, d_model_AV, d_model_T, d_model, d_ff_AV, d_ff_T, H)
                    for k in layer_keys]

    fwd = jax.jit(lambda params, av, t, avb, tb: bimodal_encoder_tow(params, av, t, avb, tb, H))
    AVt, Tav = fwd(layer_params, AV, T, AV_bias, T_bias)
    (AVt, Tav) = jax.block_until_ready((AVt, Tav))

    assert AVt.shape == (B, Sa, d_model_AV), AVt.shape
    assert Tav.shape == (B, St, d_model_T), Tav.shape
    assert jnp.all(jnp.isfinite(AVt)) and jnp.all(jnp.isfinite(Tav))
    print("KERNEL_OK")
</pallas_src>

<mosaic_0001>
module attributes {stable_mosaic.version = 11 : i64} {
  func.func @_self_attn_kernel(%arg0: i32, %arg1: memref<1x8x32xf32, #tpu.memory_space<vmem>>, %arg2: memref<1x1x8xf32, #tpu.memory_space<vmem>>, %arg3: memref<1x32xf32, #tpu.memory_space<vmem>>, %arg4: memref<1x32xf32, #tpu.memory_space<vmem>>, %arg5: memref<32x32xbf16, #tpu.memory_space<vmem>>, %arg6: memref<1x32xf32, #tpu.memory_space<vmem>>, %arg7: memref<32x64xbf16, #tpu.memory_space<vmem>>, %arg8: memref<1x64xf32, #tpu.memory_space<vmem>>, %arg9: memref<4x8x32xbf16, #tpu.memory_space<vmem>>, %arg10: memref<1x32xf32, #tpu.memory_space<vmem>>, %arg11: memref<1x8x32xf32, #tpu.memory_space<vmem>>) attributes {dimension_semantics = [#tpu.dimension_semantics<parallel>], iteration_bounds = array<i64: 2>, scalar_prefetch = 0 : i64, scratch_operands = 0 : i64, tpu.core_type = #tpu.core_type<tc>, window_params = [{transform_indices = @transform_0, window_bounds = array<i64: 1, 8, 32>}, {transform_indices = @transform_1, window_bounds = array<i64: 1, 1, 8>}, {pipeline_mode = #tpu.pipeline_mode<synchronous>, transform_indices = @transform_2, window_bounds = array<i64: 1, 32>}, {pipeline_mode = #tpu.pipeline_mode<synchronous>, transform_indices = @transform_3, window_bounds = array<i64: 1, 32>}, {pipeline_mode = #tpu.pipeline_mode<synchronous>, transform_indices = @transform_4, window_bounds = array<i64: 32, 32>}, {pipeline_mode = #tpu.pipeline_mode<synchronous>, transform_indices = @transform_5, window_bounds = array<i64: 1, 32>}, {pipeline_mode = #tpu.pipeline_mode<synchronous>, transform_indices = @transform_6, window_bounds = array<i64: 32, 64>}, {pipeline_mode = #tpu.pipeline_mode<synchronous>, transform_indices = @transform_7, window_bounds = array<i64: 1, 64>}, {pipeline_mode = #tpu.pipeline_mode<synchronous>, transform_indices = @transform_8, window_bounds = array<i64: 4, 8, 32>}, {pipeline_mode = #tpu.pipeline_mode<synchronous>, transform_indices = @transform_9, window_bounds = array<i64: 1, 32>}, {transform_indices = @transform_10, window_bounds = array<i64: 1, 8, 32>}]} {
    %c0 = arith.constant 0 : index
    %c0_0 = arith.constant 0 : index
    %c0_1 = arith.constant 0 : index
    %0 = vector.load %arg1[%c0, %c0_0, %c0_1] : memref<1x8x32xf32, #tpu.memory_space<vmem>>, vector<1x8x32xf32>
    %1 = vector.shape_cast %0 : vector<1x8x32xf32> to vector<8x32xf32>
    %c0_2 = arith.constant 0 : index
    %c0_3 = arith.constant 0 : index
    %2 = vector.load %arg3[%c0_2, %c0_3] : memref<1x32xf32, #tpu.memory_space<vmem>>, vector<1x32xf32>
    %c0_4 = arith.constant 0 : index
    %c0_5 = arith.constant 0 : index
    %3 = vector.load %arg4[%c0_4, %c0_5] : memref<1x32xf32, #tpu.memory_space<vmem>>, vector<1x32xf32>
    %cst = arith.constant dense<0.000000e+00> : vector<8xf32>
    %4 = vector.multi_reduction <add>, %1, %cst [1] : vector<8x32xf32> to vector<8xf32>
    %5 = vector.shape_cast %4 : vector<8xf32> to vector<8x1xf32>
    %cst_6 = arith.constant 3.200000e+01 : f32
    %6 = vector.broadcast %cst_6 : f32 to vector<8x1xf32>
    %7 = arith.divf %5, %6 : vector<8x1xf32>
    %8 = vector.broadcast %7 : vector<8x1xf32> to vector<8x32xf32>
    %9 = arith.subf %1, %8 : vector<8x32xf32>
    %10 = arith.mulf %9, %9 : vector<8x32xf32>
    %cst_7 = arith.constant dense<0.000000e+00> : vector<8xf32>
    %11 = vector.multi_reduction <add>, %10, %cst_7 [1] : vector<8x32xf32> to vector<8xf32>
    %12 = vector.shape_cast %11 : vector<8xf32> to vector<8x1xf32>
    %cst_8 = arith.constant 3.200000e+01 : f32
    %13 = vector.broadcast %cst_8 : f32 to vector<8x1xf32>
    %14 = arith.divf %12, %13 : vector<8x1xf32>
    %15 = vector.broadcast %7 : vector<8x1xf32> to vector<8x32xf32>
    %16 = arith.subf %1, %15 : vector<8x32xf32>
    %cst_9 = arith.constant 9.99999974E-6 : f32
    %17 = vector.broadcast %cst_9 : f32 to vector<8x1xf32>
    %18 = arith.addf %14, %17 : vector<8x1xf32>
    %19 = math.rsqrt %18 : vector<8x1xf32>
    %20 = vector.broadcast %19 : vector<8x1xf32> to vector<8x32xf32>
    %21 = arith.mulf %16, %20 : vector<8x32xf32>
    %22 = vector.broadcast %2 : vector<1x32xf32> to vector<8x32xf32>
    %23 = arith.mulf %21, %22 : vector<8x32xf32>
    %24 = vector.broadcast %3 : vector<1x32xf32> to vector<8x32xf32>
    %25 = arith.addf %23, %24 : vector<8x32xf32>
    %26 = arith.truncf %25 : vector<8x32xf32> to vector<8x32xbf16>
    %c0_10 = arith.constant 0 : index
    %c0_11 = arith.constant 0 : index
    %c0_12 = arith.constant 0 : index
    %27 = vector.load %arg2[%c0_10, %c0_11, %c0_12] : memref<1x1x8xf32, #tpu.memory_space<vmem>>, vector<1x1x8xf32>
    %c0_13 = arith.constant 0 : index
    %c0_14 = arith.constant 0 : index
    %28 = vector.load %arg5[%c0_13, %c0_14] : memref<32x32xbf16, #tpu.memory_space<vmem>>, vector<32x32xbf16>
    %c0_15 = arith.constant 0 : index
    %c0_16 = arith.constant 0 : index
    %29 = vector.load %arg6[%c0_15, %c0_16] : memref<1x32xf32, #tpu.memory_space<vmem>>, vector<1x32xf32>
    %c0_17 = arith.constant 0 : index
    %c0_18 = arith.constant 0 : index
    %30 = vector.load %arg7[%c0_17, %c0_18] : memref<32x64xbf16, #tpu.memory_space<vmem>>, vector<32x64xbf16>
    %c0_19 = arith.constant 0 : index
    %c0_20 = arith.constant 0 : index
    %31 = vector.load %arg8[%c0_19, %c0_20] : memref<1x64xf32, #tpu.memory_space<vmem>>, vector<1x64xf32>
    %c0_21 = arith.constant 0 : index
    %c0_22 = arith.constant 0 : index
    %c0_23 = arith.constant 0 : index
    %32 = vector.load %arg9[%c0_21, %c0_22, %c0_23] : memref<4x8x32xbf16, #tpu.memory_space<vmem>>, vector<4x8x32xbf16>
    %c0_24 = arith.constant 0 : index
    %c0_25 = arith.constant 0 : index
    %33 = vector.load %arg10[%c0_24, %c0_25] : memref<1x32xf32, #tpu.memory_space<vmem>>, vector<1x32xf32>
    %cst_26 = arith.constant dense<0.000000e+00> : vector<8x32xf32>
    %34 = tpu.matmul %26, %28, %cst_26 {dimension_numbers = #tpu.dot_dimension_numbers<[1], [0], [0], [1], [0, 0, 1, 1], [], []>} : vector<8x32xbf16>, vector<32x32xbf16>, vector<8x32xf32> -> vector<8x32xf32>
    %35 = vector.broadcast %29 : vector<1x32xf32> to vector<8x32xf32>
    %36 = arith.addf %34, %35 : vector<8x32xf32>
    %cst_27 = arith.constant dense<0.000000e+00> : vector<8x64xf32>
    %37 = tpu.matmul %26, %30, %cst_27 {dimension_numbers = #tpu.dot_dimension_numbers<[1], [0], [0], [1], [0, 0, 1, 1], [], []>} : vector<8x32xbf16>, vector<32x64xbf16>, vector<8x64xf32> -> vector<8x64xf32>
    %38 = vector.broadcast %31 : vector<1x64xf32> to vector<8x64xf32>
    %39 = arith.addf %37, %38 : vector<8x64xf32>
    %40 = vector.extract_strided_slice %39 {offsets = [0, 0], sizes = [8, 32], strides = [1, 1]} : vector<8x64xf32> to vector<8x32xf32>
    %41 = vector.extract_strided_slice %39 {offsets = [0, 32], sizes = [8, 32], strides = [1, 1]} : vector<8x64xf32> to vector<8x32xf32>
    %42 = vector.extract_strided_slice %36 {offsets = [0, 0], sizes = [8, 8], strides = [1, 1]} : vector<8x32xf32> to vector<8x8xf32>
    %43 = vector.extract_strided_slice %36 {offsets = [0, 8], sizes = [8, 8], strides = [1, 1]} : vector<8x32xf32> to vector<8x8xf32>
    %44 = vector.extract_strided_slice %36 {offsets = [0, 16], sizes = [8, 8], strides = [1, 1]} : vector<8x32xf32> to vector<8x8xf32>
    %45 = vector.extract_strided_slice %36 {offsets = [0, 24], sizes = [8, 8], strides = [1, 1]} : vector<8x32xf32> to vector<8x8xf32>
    %46 = vector.shape_cast %42 : vector<8x8xf32> to vector<1x8x8xf32>
    %47 = vector.shape_cast %43 : vector<8x8xf32> to vector<1x8x8xf32>
    %48 = vector.shape_cast %44 : vector<8x8xf32> to vector<1x8x8xf32>
    %49 = vector.shape_cast %45 : vector<8x8xf32> to vector<1x8x8xf32>
    %50 = tpu.concatenate %46, %47, %48, %49 in 0 : vector<1x8x8xf32>, vector<1x8x8xf32>, vector<1x8x8xf32>, vector<1x8x8xf32> -> vector<4x8x8xf32>
    %51 = arith.truncf %50 : vector<4x8x8xf32> to vector<4x8x8xbf16>
    %52 = vector.extract_strided_slice %40 {offsets = [0, 0], sizes = [8, 8], strides = [1, 1]} : vector<8x32xf32> to vector<8x8xf32>
    %53 = vector.extract_strided_slice %40 {offsets = [0, 8], sizes = [8, 8], strides = [1, 1]} : vector<8x32xf32> to vector<8x8xf32>
    %54 = vector.extract_strided_slice %40 {offsets = [0, 16], sizes = [8, 8], strides = [1, 1]} : vector<8x32xf32> to vector<8x8xf32>
    %55 = vector.extract_strided_slice %40 {offsets = [0, 24], sizes = [8, 8], strides = [1, 1]} : vector<8x32xf32> to vector<8x8xf32>
    %56 = vector.shape_cast %52 : vector<8x8xf32> to vector<1x8x8xf32>
    %57 = vector.shape_cast %53 : vector<8x8xf32> to vector<1x8x8xf32>
    %58 = vector.shape_cast %54 : vector<8x8xf32> to vector<1x8x8xf32>
    %59 = vector.shape_cast %55 : vector<8x8xf32> to vector<1x8x8xf32>
    %60 = tpu.concatenate %56, %57, %58, %59 in 0 : vector<1x8x8xf32>, vector<1x8x8xf32>, vector<1x8x8xf32>, vector<1x8x8xf32> -> vector<4x8x8xf32>
    %61 = arith.truncf %60 : vector<4x8x8xf32> to vector<4x8x8xbf16>
    %62 = vector.extract_strided_slice %41 {offsets = [0, 0], sizes = [8, 8], strides = [1, 1]} : vector<8x32xf32> to vector<8x8xf32>
    %63 = vector.extract_strided_slice %41 {offsets = [0, 8], sizes = [8, 8], strides = [1, 1]} : vector<8x32xf32> to vector<8x8xf32>
    %64 = vector.extract_strided_slice %41 {offsets = [0, 16], sizes = [8, 8], strides = [1, 1]} : vector<8x32xf32> to vector<8x8xf32>
    %65 = vector.extract_strided_slice %41 {offsets = [0, 24], sizes = [8, 8], strides = [1, 1]} : vector<8x32xf32> to vector<8x8xf32>
    %66 = vector.shape_cast %62 : vector<8x8xf32> to vector<1x8x8xf32>
    %67 = vector.shape_cast %63 : vector<8x8xf32> to vector<1x8x8xf32>
    %68 = vector.shape_cast %64 : vector<8x8xf32> to vector<1x8x8xf32>
    %69 = vector.shape_cast %65 : vector<8x8xf32> to vector<1x8x8xf32>
    %70 = tpu.concatenate %66, %67, %68, %69 in 0 : vector<1x8x8xf32>, vector<1x8x8xf32>, vector<1x8x8xf32>, vector<1x8x8xf32> -> vector<4x8x8xf32>
    %71 = arith.truncf %70 : vector<4x8x8xf32> to vector<4x8x8xbf16>
    "tpu.trace_start"() <{level = 10 : i32, message = "hqd,hkd->hqk"}> : () -> ()
    %cst_28 = arith.constant dense<0.000000e+00> : vector<4x8x8xf32>
    %72 = tpu.matmul %51, %61, %cst_28 {dimension_numbers = #tpu.dot_dimension_numbers<[2], [2], [1], [1], [0, 0, 0, 1, 1, 1], [0], [0]>} : vector<4x8x8xbf16>, vector<4x8x8xbf16>, vector<4x8x8xf32> -> vector<4x8x8xf32>
    "tpu.trace_stop"() : () -> ()
    %cst_29 = arith.constant 0.353553385 : f32
    %73 = vector.broadcast %cst_29 : f32 to vector<4x8x8xf32>
    %74 = arith.mulf %72, %73 : vector<4x8x8xf32>
    %75 = vector.broadcast %27 : vector<1x1x8xf32> to vector<4x8x8xf32>
    %76 = arith.addf %74, %75 : vector<4x8x8xf32>
    %cst_30 = arith.constant dense<0xFF800000> : vector<4x8xf32>
    %77 = vector.multi_reduction <maximumf>, %76, %cst_30 [2] : vector<4x8x8xf32> to vector<4x8xf32>
    %78 = vector.shape_cast %77 : vector<4x8xf32> to vector<4x8x1xf32>
    %79 = vector.broadcast %78 : vector<4x8x1xf32> to vector<4x8x8xf32>
    %80 = arith.subf %76, %79 : vector<4x8x8xf32>
    %81 = math.exp %80 : vector<4x8x8xf32>
    %cst_31 = arith.constant dense<0.000000e+00> : vector<4x8xf32>
    %82 = vector.multi_reduction <add>, %81, %cst_31 [2] : vector<4x8x8xf32> to vector<4x8xf32>
    %83 = vector.shape_cast %82 : vector<4x8xf32> to vector<4x8x1xf32>
    %84 = vector.broadcast %83 : vector<4x8x1xf32> to vector<4x8x8xf32>
    %85 = arith.divf %81, %84 : vector<4x8x8xf32>
    %86 = arith.truncf %85 : vector<4x8x8xf32> to vector<4x8x8xbf16>
    "tpu.trace_start"() <{level = 10 : i32, message = "hqk,hkd->hqd"}> : () -> ()
    %cst_32 = arith.constant dense<0.000000e+00> : vector<4x8x8xf32>
    %87 = tpu.matmul %86, %71, %cst_32 {dimension_numbers = #tpu.dot_dimension_numbers<[2], [1], [1], [2], [0, 0, 0, 1, 1, 2], [0], [0]>} : vector<4x8x8xbf16>, vector<4x8x8xbf16>, vector<4x8x8xf32> -> vector<4x8x8xf32>
    "tpu.trace_stop"() : () -> ()
    %88 = arith.truncf %87 : vector<4x8x8xf32> to vector<4x8x8xbf16>
    "tpu.trace_start"() <{level = 10 : i32, message = "hqd,hdo->hqo"}> : () -> ()
    %cst_33 = arith.constant dense<0.000000e+00> : vector<4x8x32xf32>
    %89 = tpu.matmul %88, %32, %cst_33 {dimension_numbers = #tpu.dot_dimension_numbers<[2], [1], [1], [2], [0, 0, 0, 1, 1, 2], [0], [0]>} : vector<4x8x8xbf16>, vector<4x8x32xbf16>, vector<4x8x32xf32> -> vector<4x8x32xf32>
    "tpu.trace_stop"() : () -> ()
    %90 = vector.extract_strided_slice %89 {offsets = [0, 0, 0], sizes = [1, 8, 32], strides = [1, 1, 1]} : vector<4x8x32xf32> to vector<1x8x32xf32>
    %91 = vector.shape_cast %90 : vector<1x8x32xf32> to vector<8x32xf32>
    %92 = vector.extract_strided_slice %89 {offsets = [1, 0, 0], sizes = [1, 8, 32], strides = [1, 1, 1]} : vector<4x8x32xf32> to vector<1x8x32xf32>
    %93 = vector.shape_cast %92 : vector<1x8x32xf32> to vector<8x32xf32>
    %94 = arith.addf %91, %93 : vector<8x32xf32>
    %95 = vector.extract_strided_slice %89 {offsets = [2, 0, 0], sizes = [1, 8, 32], strides = [1, 1, 1]} : vector<4x8x32xf32> to vector<1x8x32xf32>
    %96 = vector.shape_cast %95 : vector<1x8x32xf32> to vector<8x32xf32>
    %97 = arith.addf %94, %96 : vector<8x32xf32>
    %98 = vector.extract_strided_slice %89 {offsets = [3, 0, 0], sizes = [1, 8, 32], strides = [1, 1, 1]} : vector<4x8x32xf32> to vector<1x8x32xf32>
    %99 = vector.shape_cast %98 : vector<1x8x32xf32> to vector<8x32xf32>
    %100 = arith.addf %97, %99 : vector<8x32xf32>
    %101 = vector.broadcast %33 : vector<1x32xf32> to vector<8x32xf32>
    %102 = arith.addf %100, %101 : vector<8x32xf32>
    %103 = arith.addf %1, %102 : vector<8x32xf32>
    %c0_34 = arith.constant 0 : index
    %c0_35 = arith.constant 0 : index
    %c0_36 = arith.constant 0 : index
    %104 = vector.load %arg11[%c0_34, %c0_35, %c0_36] : memref<1x8x32xf32, #tpu.memory_space<vmem>>, vector<1x8x32xf32>
    %105 = vector.shape_cast %104 : vector<1x8x32xf32> to vector<8x32xf32>
    %106 = vector.shape_cast %103 : vector<8x32xf32> to vector<1x8x32xf32>
    tpu.vector_store %arg11[%c0_34, %c0_35, %c0_36], %106 {strides = array<i32>} : memref<1x8x32xf32, #tpu.memory_space<vmem>>, vector<1x8x32xf32>,
    return
  }
  func.func @transform_0(%arg0: i32) -> (i32, i32, i32) {
    %c0_i32 = arith.constant 0 : i32
    %c0_i32_0 = arith.constant 0 : i32
    %c0_i32_1 = arith.constant 0 : i32
    return %arg0, %c0_i32, %c0_i32_0 : i32, i32, i32
  }
  func.func @transform_1(%arg0: i32) -> (i32, i32, i32) {
    %c0_i32 = arith.constant 0 : i32
    %c0_i32_0 = arith.constant 0 : i32
    %c0_i32_1 = arith.constant 0 : i32
    return %arg0, %c0_i32, %c0_i32_0 : i32, i32, i32
  }
  func.func @transform_2(%arg0: i32) -> (i32, i32) {
    %c0_i32 = arith.constant 0 : i32
    %c0_i32_0 = arith.constant 0 : i32
    %c0_i32_1 = arith.constant 0 : i32
    return %c0_i32, %c0_i32_0 : i32, i32
  }
  func.func @transform_3(%arg0: i32) -> (i32, i32) {
    %c0_i32 = arith.constant 0 : i32
    %c0_i32_0 = arith.constant 0 : i32
    %c0_i32_1 = arith.constant 0 : i32
    return %c0_i32, %c0_i32_0 : i32, i32
  }
  func.func @transform_4(%arg0: i32) -> (i32, i32) {
    %c0_i32 = arith.constant 0 : i32
    %c0_i32_0 = arith.constant 0 : i32
    %c0_i32_1 = arith.constant 0 : i32
    return %c0_i32, %c0_i32_0 : i32, i32
  }
  func.func @transform_5(%arg0: i32) -> (i32, i32) {
    %c0_i32 = arith.constant 0 : i32
    %c0_i32_0 = arith.constant 0 : i32
    %c0_i32_1 = arith.constant 0 : i32
    return %c0_i32, %c0_i32_0 : i32, i32
  }
  func.func @transform_6(%arg0: i32) -> (i32, i32) {
    %c0_i32 = arith.constant 0 : i32
    %c0_i32_0 = arith.constant 0 : i32
    %c0_i32_1 = arith.constant 0 : i32
    return %c0_i32, %c0_i32_0 : i32, i32
  }
  func.func @transform_7(%arg0: i32) -> (i32, i32) {
    %c0_i32 = arith.constant 0 : i32
    %c0_i32_0 = arith.constant 0 : i32
    %c0_i32_1 = arith.constant 0 : i32
    return %c0_i32, %c0_i32_0 : i32, i32
  }
  func.func @transform_8(%arg0: i32) -> (i32, i32, i32) {
    %c0_i32 = arith.constant 0 : i32
    %c0_i32_0 = arith.constant 0 : i32
    %c0_i32_1 = arith.constant 0 : i32
    %c0_i32_2 = arith.constant 0 : i32
    return %c0_i32, %c0_i32_0, %c0_i32_1 : i32, i32, i32
  }
  func.func @transform_9(%arg0: i32) -> (i32, i32) {
    %c0_i32 = arith.constant 0 : i32
    %c0_i32_0 = arith.constant 0 : i32
    %c0_i32_1 = arith.constant 0 : i32
    return %c0_i32, %c0_i32_0 : i32, i32
  }
  func.func @transform_10(%arg0: i32) -> (i32, i32, i32) {
    %c0_i32 = arith.constant 0 : i32
    %c0_i32_0 = arith.constant 0 : i32
    %c0_i32_1 = arith.constant 0 : i32
    return %arg0, %c0_i32, %c0_i32_0 : i32, i32, i32
  }
}

module attributes {stable_mosaic.version = 11 : i64} {
  func.func @_self_attn_kernel(%arg0: i32, %arg1: memref<1x12x32xf32, #tpu.memory_space<vmem>>, %arg2: memref<1x1x12xf32, #tpu.memory_space<vmem>>, %arg3: memref<1x32xf32, #tpu.memory_space<vmem>>, %arg4: memref<1x32xf32, #tpu.memory_space<vmem>>, %arg5: memref<32x32xbf16, #tpu.memory_space<vmem>>, %arg6: memref<1x32xf32, #tpu.memory_space<vmem>>, %arg7: memref<32x64xbf16, #tpu.memory_space<vmem>>, %arg8: memref<1x64xf32, #tpu.memory_space<vmem>>, %arg9: memref<4x8x32xbf16, #tpu.memory_space<vmem>>, %arg10: memref<1x32xf32, #tpu.memory_space<vmem>>, %arg11: memref<1x12x32xf32, #tpu.memory_space<vmem>>) attributes {dimension_semantics = [#tpu.dimension_semantics<parallel>], iteration_bounds = array<i64: 2>, scalar_prefetch = 0 : i64, scratch_operands = 0 : i64, tpu.core_type = #tpu.core_type<tc>, window_params = [{transform_indices = @transform_0, window_bounds = array<i64: 1, 12, 32>}, {transform_indices = @transform_1, window_bounds = array<i64: 1, 1, 12>}, {pipeline_mode = #tpu.pipeline_mode<synchronous>, transform_indices = @transform_2, window_bounds = array<i64: 1, 32>}, {pipeline_mode = #tpu.pipeline_mode<synchronous>, transform_indices = @transform_3, window_bounds = array<i64: 1, 32>}, {pipeline_mode = #tpu.pipeline_mode<synchronous>, transform_indices = @transform_4, window_bounds = array<i64: 32, 32>}, {pipeline_mode = #tpu.pipeline_mode<synchronous>, transform_indices = @transform_5, window_bounds = array<i64: 1, 32>}, {pipeline_mode = #tpu.pipeline_mode<synchronous>, transform_indices = @transform_6, window_bounds = array<i64: 32, 64>}, {pipeline_mode = #tpu.pipeline_mode<synchronous>, transform_indices = @transform_7, window_bounds = array<i64: 1, 64>}, {pipeline_mode = #tpu.pipeline_mode<synchronous>, transform_indices = @transform_8, window_bounds = array<i64: 4, 8, 32>}, {pipeline_mode = #tpu.pipeline_mode<synchronous>, transform_indices = @transform_9, window_bounds = array<i64: 1, 32>}, {transform_indices = @transform_10, window_bounds = array<i64: 1, 12, 32>}]} {
    %c0 = arith.constant 0 : index
    %c0_0 = arith.constant 0 : index
    %c0_1 = arith.constant 0 : index
    %0 = vector.load %arg1[%c0, %c0_0, %c0_1] : memref<1x12x32xf32, #tpu.memory_space<vmem>>, vector<1x12x32xf32>
    %1 = vector.shape_cast %0 : vector<1x12x32xf32> to vector<12x32xf32>
    %c0_2 = arith.constant 0 : index
    %c0_3 = arith.constant 0 : index
    %2 = vector.load %arg3[%c0_2, %c0_3] : memref<1x32xf32, #tpu.memory_space<vmem>>, vector<1x32xf32>
    %c0_4 = arith.constant 0 : index
    %c0_5 = arith.constant 0 : index
    %3 = vector.load %arg4[%c0_4, %c0_5] : memref<1x32xf32, #tpu.memory_space<vmem>>, vector<1x32xf32>
    %cst = arith.constant dense<0.000000e+00> : vector<12xf32>
    %4 = vector.multi_reduction <add>, %1, %cst [1] : vector<12x32xf32> to vector<12xf32>
    %5 = vector.shape_cast %4 : vector<12xf32> to vector<12x1xf32>
    %cst_6 = arith.constant 3.200000e+01 : f32
    %6 = vector.broadcast %cst_6 : f32 to vector<12x1xf32>
    %7 = arith.divf %5, %6 : vector<12x1xf32>
    %8 = vector.broadcast %7 : vector<12x1xf32> to vector<12x32xf32>
    %9 = arith.subf %1, %8 : vector<12x32xf32>
    %10 = arith.mulf %9, %9 : vector<12x32xf32>
    %cst_7 = arith.constant dense<0.000000e+00> : vector<12xf32>
    %11 = vector.multi_reduction <add>, %10, %cst_7 [1] : vector<12x32xf32> to vector<12xf32>
    %12 = vector.shape_cast %11 : vector<12xf32> to vector<12x1xf32>
    %cst_8 = arith.constant 3.200000e+01 : f32
    %13 = vector.broadcast %cst_8 : f32 to vector<12x1xf32>
    %14 = arith.divf %12, %13 : vector<12x1xf32>
    %15 = vector.broadcast %7 : vector<12x1xf32> to vector<12x32xf32>
    %16 = arith.subf %1, %15 : vector<12x32xf32>
    %cst_9 = arith.constant 9.99999974E-6 : f32
    %17 = vector.broadcast %cst_9 : f32 to vector<12x1xf32>
    %18 = arith.addf %14, %17 : vector<12x1xf32>
    %19 = math.rsqrt %18 : vector<12x1xf32>
    %20 = vector.broadcast %19 : vector<12x1xf32> to vector<12x32xf32>
    %21 = arith.mulf %16, %20 : vector<12x32xf32>
    %22 = vector.broadcast %2 : vector<1x32xf32> to vector<12x32xf32>
    %23 = arith.mulf %21, %22 : vector<12x32xf32>
    %24 = vector.broadcast %3 : vector<1x32xf32> to vector<12x32xf32>
    %25 = arith.addf %23, %24 : vector<12x32xf32>
    %26 = arith.truncf %25 : vector<12x32xf32> to vector<12x32xbf16>
    %c0_10 = arith.constant 0 : index
    %c0_11 = arith.constant 0 : index
    %c0_12 = arith.constant 0 : index
    %27 = vector.load %arg2[%c0_10, %c0_11, %c0_12] : memref<1x1x12xf32, #tpu.memory_space<vmem>>, vector<1x1x12xf32>
    %c0_13 = arith.constant 0 : index
    %c0_14 = arith.constant 0 : index
    %28 = vector.load %arg5[%c0_13, %c0_14] : memref<32x32xbf16, #tpu.memory_space<vmem>>, vector<32x32xbf16>
    %c0_15 = arith.constant 0 : index
    %c0_16 = arith.constant 0 : index
    %29 = vector.load %arg6[%c0_15, %c0_16] : memref<1x32xf32, #tpu.memory_space<vmem>>, vector<1x32xf32>
    %c0_17 = arith.constant 0 : index
    %c0_18 = arith.constant 0 : index
    %30 = vector.load %arg7[%c0_17, %c0_18] : memref<32x64xbf16, #tpu.memory_space<vmem>>, vector<32x64xbf16>
    %c0_19 = arith.constant 0 : index
    %c0_20 = arith.constant 0 : index
    %31 = vector.load %arg8[%c0_19, %c0_20] : memref<1x64xf32, #tpu.memory_space<vmem>>, vector<1x64xf32>
    %c0_21 = arith.constant 0 : index
    %c0_22 = arith.constant 0 : index
    %c0_23 = arith.constant 0 : index
    %32 = vector.load %arg9[%c0_21, %c0_22, %c0_23] : memref<4x8x32xbf16, #tpu.memory_space<vmem>>, vector<4x8x32xbf16>
    %c0_24 = arith.constant 0 : index
    %c0_25 = arith.constant 0 : index
    %33 = vector.load %arg10[%c0_24, %c0_25] : memref<1x32xf32, #tpu.memory_space<vmem>>, vector<1x32xf32>
    %cst_26 = arith.constant dense<0.000000e+00> : vector<12x32xf32>
    %34 = tpu.matmul %26, %28, %cst_26 {dimension_numbers = #tpu.dot_dimension_numbers<[1], [0], [0], [1], [0, 0, 1, 1], [], []>} : vector<12x32xbf16>, vector<32x32xbf16>, vector<12x32xf32> -> vector<12x32xf32>
    %35 = vector.broadcast %29 : vector<1x32xf32> to vector<12x32xf32>
    %36 = arith.addf %34, %35 : vector<12x32xf32>
    %cst_27 = arith.constant dense<0.000000e+00> : vector<12x64xf32>
    %37 = tpu.matmul %26, %30, %cst_27 {dimension_numbers = #tpu.dot_dimension_numbers<[1], [0], [0], [1], [0, 0, 1, 1], [], []>} : vector<12x32xbf16>, vector<32x64xbf16>, vector<12x64xf32> -> vector<12x64xf32>
    %38 = vector.broadcast %31 : vector<1x64xf32> to vector<12x64xf32>
    %39 = arith.addf %37, %38 : vector<12x64xf32>
    %40 = vector.extract_strided_slice %39 {offsets = [0, 0], sizes = [12, 32], strides = [1, 1]} : vector<12x64xf32> to vector<12x32xf32>
    %41 = vector.extract_strided_slice %39 {offsets = [0, 32], sizes = [12, 32], strides = [1, 1]} : vector<12x64xf32> to vector<12x32xf32>
    %42 = vector.extract_strided_slice %36 {offsets = [0, 0], sizes = [12, 8], strides = [1, 1]} : vector<12x32xf32> to vector<12x8xf32>
    %43 = vector.extract_strided_slice %36 {offsets = [0, 8], sizes = [12, 8], strides = [1, 1]} : vector<12x32xf32> to vector<12x8xf32>
    %44 = vector.extract_strided_slice %36 {offsets = [0, 16], sizes = [12, 8], strides = [1, 1]} : vector<12x32xf32> to vector<12x8xf32>
    %45 = vector.extract_strided_slice %36 {offsets = [0, 24], sizes = [12, 8], strides = [1, 1]} : vector<12x32xf32> to vector<12x8xf32>
    %46 = vector.shape_cast %42 : vector<12x8xf32> to vector<1x12x8xf32>
    %47 = vector.shape_cast %43 : vector<12x8xf32> to vector<1x12x8xf32>
    %48 = vector.shape_cast %44 : vector<12x8xf32> to vector<1x12x8xf32>
    %49 = vector.shape_cast %45 : vector<12x8xf32> to vector<1x12x8xf32>
    %50 = tpu.concatenate %46, %47, %48, %49 in 0 : vector<1x12x8xf32>, vector<1x12x8xf32>, vector<1x12x8xf32>, vector<1x12x8xf32> -> vector<4x12x8xf32>
    %51 = arith.truncf %50 : vector<4x12x8xf32> to vector<4x12x8xbf16>
    %52 = vector.extract_strided_slice %40 {offsets = [0, 0], sizes = [12, 8], strides = [1, 1]} : vector<12x32xf32> to vector<12x8xf32>
    %53 = vector.extract_strided_slice %40 {offsets = [0, 8], sizes = [12, 8], strides = [1, 1]} : vector<12x32xf32> to vector<12x8xf32>
    %54 = vector.extract_strided_slice %40 {offsets = [0, 16], sizes = [12, 8], strides = [1, 1]} : vector<12x32xf32> to vector<12x8xf32>
    %55 = vector.extract_strided_slice %40 {offsets = [0, 24], sizes = [12, 8], strides = [1, 1]} : vector<12x32xf32> to vector<12x8xf32>
    %56 = vector.shape_cast %52 : vector<12x8xf32> to vector<1x12x8xf32>
    %57 = vector.shape_cast %53 : vector<12x8xf32> to vector<1x12x8xf32>
    %58 = vector.shape_cast %54 : vector<12x8xf32> to vector<1x12x8xf32>
    %59 = vector.shape_cast %55 : vector<12x8xf32> to vector<1x12x8xf32>
    %60 = tpu.concatenate %56, %57, %58, %59 in 0 : vector<1x12x8xf32>, vector<1x12x8xf32>, vector<1x12x8xf32>, vector<1x12x8xf32> -> vector<4x12x8xf32>
    %61 = arith.truncf %60 : vector<4x12x8xf32> to vector<4x12x8xbf16>
    %62 = vector.extract_strided_slice %41 {offsets = [0, 0], sizes = [12, 8], strides = [1, 1]} : vector<12x32xf32> to vector<12x8xf32>
    %63 = vector.extract_strided_slice %41 {offsets = [0, 8], sizes = [12, 8], strides = [1, 1]} : vector<12x32xf32> to vector<12x8xf32>
    %64 = vector.extract_strided_slice %41 {offsets = [0, 16], sizes = [12, 8], strides = [1, 1]} : vector<12x32xf32> to vector<12x8xf32>
    %65 = vector.extract_strided_slice %41 {offsets = [0, 24], sizes = [12, 8], strides = [1, 1]} : vector<12x32xf32> to vector<12x8xf32>
    %66 = vector.shape_cast %62 : vector<12x8xf32> to vector<1x12x8xf32>
    %67 = vector.shape_cast %63 : vector<12x8xf32> to vector<1x12x8xf32>
    %68 = vector.shape_cast %64 : vector<12x8xf32> to vector<1x12x8xf32>
    %69 = vector.shape_cast %65 : vector<12x8xf32> to vector<1x12x8xf32>
    %70 = tpu.concatenate %66, %67, %68, %69 in 0 : vector<1x12x8xf32>, vector<1x12x8xf32>, vector<1x12x8xf32>, vector<1x12x8xf32> -> vector<4x12x8xf32>
    %71 = arith.truncf %70 : vector<4x12x8xf32> to vector<4x12x8xbf16>
    "tpu.trace_start"() <{level = 10 : i32, message = "hqd,hkd->hqk"}> : () -> ()
    %cst_28 = arith.constant dense<0.000000e+00> : vector<4x12x12xf32>
    %72 = tpu.matmul %51, %61, %cst_28 {dimension_numbers = #tpu.dot_dimension_numbers<[2], [2], [1], [1], [0, 0, 0, 1, 1, 1], [0], [0]>} : vector<4x12x8xbf16>, vector<4x12x8xbf16>, vector<4x12x12xf32> -> vector<4x12x12xf32>
    "tpu.trace_stop"() : () -> ()
    %cst_29 = arith.constant 0.353553385 : f32
    %73 = vector.broadcast %cst_29 : f32 to vector<4x12x12xf32>
    %74 = arith.mulf %72, %73 : vector<4x12x12xf32>
    %75 = vector.broadcast %27 : vector<1x1x12xf32> to vector<4x12x12xf32>
    %76 = arith.addf %74, %75 : vector<4x12x12xf32>
    %cst_30 = arith.constant dense<0xFF800000> : vector<4x12xf32>
    %77 = vector.multi_reduction <maximumf>, %76, %cst_30 [2] : vector<4x12x12xf32> to vector<4x12xf32>
    %78 = vector.shape_cast %77 : vector<4x12xf32> to vector<4x12x1xf32>
    %79 = vector.broadcast %78 : vector<4x12x1xf32> to vector<4x12x12xf32>
    %80 = arith.subf %76, %79 : vector<4x12x12xf32>
    %81 = math.exp %80 : vector<4x12x12xf32>
    %cst_31 = arith.constant dense<0.000000e+00> : vector<4x12xf32>
    %82 = vector.multi_reduction <add>, %81, %cst_31 [2] : vector<4x12x12xf32> to vector<4x12xf32>
    %83 = vector.shape_cast %82 : vector<4x12xf32> to vector<4x12x1xf32>
    %84 = vector.broadcast %83 : vector<4x12x1xf32> to vector<4x12x12xf32>
    %85 = arith.divf %81, %84 : vector<4x12x12xf32>
    %86 = arith.truncf %85 : vector<4x12x12xf32> to vector<4x12x12xbf16>
    "tpu.trace_start"() <{level = 10 : i32, message = "hqk,hkd->hqd"}> : () -> ()
    %cst_32 = arith.constant dense<0.000000e+00> : vector<4x12x8xf32>
    %87 = tpu.matmul %86, %71, %cst_32 {dimension_numbers = #tpu.dot_dimension_numbers<[2], [1], [1], [2], [0, 0, 0, 1, 1, 2], [0], [0]>} : vector<4x12x12xbf16>, vector<4x12x8xbf16>, vector<4x12x8xf32> -> vector<4x12x8xf32>
    "tpu.trace_stop"() : () -> ()
    %88 = arith.truncf %87 : vector<4x12x8xf32> to vector<4x12x8xbf16>
    "tpu.trace_start"() <{level = 10 : i32, message = "hqd,hdo->hqo"}> : () -> ()
    %cst_33 = arith.constant dense<0.000000e+00> : vector<4x12x32xf32>
    %89 = tpu.matmul %88, %32, %cst_33 {dimension_numbers = #tpu.dot_dimension_numbers<[2], [1], [1], [2], [0, 0, 0, 1, 1, 2], [0], [0]>} : vector<4x12x8xbf16>, vector<4x8x32xbf16>, vector<4x12x32xf32> -> vector<4x12x32xf32>
    "tpu.trace_stop"() : () -> ()
    %90 = vector.extract_strided_slice %89 {offsets = [0, 0, 0], sizes = [1, 12, 32], strides = [1, 1, 1]} : vector<4x12x32xf32> to vector<1x12x32xf32>
    %91 = vector.shape_cast %90 : vector<1x12x32xf32> to vector<12x32xf32>
    %92 = vector.extract_strided_slice %89 {offsets = [1, 0, 0], sizes = [1, 12, 32], strides = [1, 1, 1]} : vector<4x12x32xf32> to vector<1x12x32xf32>
    %93 = vector.shape_cast %92 : vector<1x12x32xf32> to vector<12x32xf32>
    %94 = arith.addf %91, %93 : vector<12x32xf32>
    %95 = vector.extract_strided_slice %89 {offsets = [2, 0, 0], sizes = [1, 12, 32], strides = [1, 1, 1]} : vector<4x12x32xf32> to vector<1x12x32xf32>
    %96 = vector.shape_cast %95 : vector<1x12x32xf32> to vector<12x32xf32>
    %97 = arith.addf %94, %96 : vector<12x32xf32>
    %98 = vector.extract_strided_slice %89 {offsets = [3, 0, 0], sizes = [1, 12, 32], strides = [1, 1, 1]} : vector<4x12x32xf32> to vector<1x12x32xf32>
    %99 = vector.shape_cast %98 : vector<1x12x32xf32> to vector<12x32xf32>
    %100 = arith.addf %97, %99 : vector<12x32xf32>
    %101 = vector.broadcast %33 : vector<1x32xf32> to vector<12x32xf32>
    %102 = arith.addf %100, %101 : vector<12x32xf32>
    %103 = arith.addf %1, %102 : vector<12x32xf32>
    %c0_34 = arith.constant 0 : index
    %c0_35 = arith.constant 0 : index
    %c0_36 = arith.constant 0 : index
    %104 = vector.load %arg11[%c0_34, %c0_35, %c0_36] : memref<1x12x32xf32, #tpu.memory_space<vmem>>, vector<1x12x32xf32>
    %105 = vector.shape_cast %104 : vector<1x12x32xf32> to vector<12x32xf32>
    %106 = vector.shape_cast %103 : vector<12x32xf32> to vector<1x12x32xf32>
    tpu.vector_store %arg11[%c0_34, %c0_35, %c0_36], %106 {strides = array<i32>} : memref<1x12x32xf32, #tpu.memory_space<vmem>>, vector<1x12x32xf32>,
    return
  }
  func.func @transform_0(%arg0: i32) -> (i32, i32, i32) {
    %c0_i32 = arith.constant 0 : i32
    %c0_i32_0 = arith.constant 0 : i32
    %c0_i32_1 = arith.constant 0 : i32
    return %arg0, %c0_i32, %c0_i32_0 : i32, i32, i32
  }
  func.func @transform_1(%arg0: i32) -> (i32, i32, i32) {
    %c0_i32 = arith.constant 0 : i32
    %c0_i32_0 = arith.constant 0 : i32
    %c0_i32_1 = arith.constant 0 : i32
    return %arg0, %c0_i32, %c0_i32_0 : i32, i32, i32
  }
  func.func @transform_2(%arg0: i32) -> (i32, i32) {
    %c0_i32 = arith.constant 0 : i32
    %c0_i32_0 = arith.constant 0 : i32
    %c0_i32_1 = arith.constant 0 : i32
    return %c0_i32, %c0_i32_0 : i32, i32
  }
  func.func @transform_3(%arg0: i32) -> (i32, i32) {
    %c0_i32 = arith.constant 0 : i32
    %c0_i32_0 = arith.constant 0 : i32
    %c0_i32_1 = arith.constant 0 : i32
    return %c0_i32, %c0_i32_0 : i32, i32
  }
  func.func @transform_4(%arg0: i32) -> (i32, i32) {
    %c0_i32 = arith.constant 0 : i32
    %c0_i32_0 = arith.constant 0 : i32
    %c0_i32_1 = arith.constant 0 : i32
    return %c0_i32, %c0_i32_0 : i32, i32
  }
  func.func @transform_5(%arg0: i32) -> (i32, i32) {
    %c0_i32 = arith.constant 0 : i32
    %c0_i32_0 = arith.constant 0 : i32
    %c0_i32_1 = arith.constant 0 : i32
    return %c0_i32, %c0_i32_0 : i32, i32
  }
  func.func @transform_6(%arg0: i32) -> (i32, i32) {
    %c0_i32 = arith.constant 0 : i32
    %c0_i32_0 = arith.constant 0 : i32
    %c0_i32_1 = arith.constant 0 : i32
    return %c0_i32, %c0_i32_0 : i32, i32
  }
  func.func @transform_7(%arg0: i32) -> (i32, i32) {
    %c0_i32 = arith.constant 0 : i32
    %c0_i32_0 = arith.constant 0 : i32
    %c0_i32_1 = arith.constant 0 : i32
    return %c0_i32, %c0_i32_0 : i32, i32
  }
  func.func @transform_8(%arg0: i32) -> (i32, i32, i32) {
    %c0_i32 = arith.constant 0 : i32
    %c0_i32_0 = arith.constant 0 : i32
    %c0_i32_1 = arith.constant 0 : i32
    %c0_i32_2 = arith.constant 0 : i32
    return %c0_i32, %c0_i32_0, %c0_i32_1 : i32, i32, i32
  }
  func.func @transform_9(%arg0: i32) -> (i32, i32) {
    %c0_i32 = arith.constant 0 : i32
    %c0_i32_0 = arith.constant 0 : i32
    %c0_i32_1 = arith.constant 0 : i32
    return %c0_i32, %c0_i32_0 : i32, i32
  }
  func.func @transform_10(%arg0: i32) -> (i32, i32, i32) {
    %c0_i32 = arith.constant 0 : i32
    %c0_i32_0 = arith.constant 0 : i32
    %c0_i32_1 = arith.constant 0 : i32
    return %arg0, %c0_i32, %c0_i32_0 : i32, i32, i32
  }
}

module attributes {stable_mosaic.version = 11 : i64} {
  func.func @_cross_attn_ffn_kernel(%arg0: i32, %arg1: memref<1x12x32xf32, #tpu.memory_space<vmem>>, %arg2: memref<1x8x32xf32, #tpu.memory_space<vmem>>, %arg3: memref<1x1x8xf32, #tpu.memory_space<vmem>>, %arg4: memref<1x32xf32, #tpu.memory_space<vmem>>, %arg5: memref<1x32xf32, #tpu.memory_space<vmem>>, %arg6: memref<32x32xbf16, #tpu.memory_space<vmem>>, %arg7: memref<1x32xf32, #tpu.memory_space<vmem>>, %arg8: memref<32x64xbf16, #tpu.memory_space<vmem>>, %arg9: memref<1x64xf32, #tpu.memory_space<vmem>>, %arg10: memref<4x8x32xbf16, #tpu.memory_space<vmem>>, %arg11: memref<1x32xf32, #tpu.memory_space<vmem>>, %arg12: memref<1x32xf32, #tpu.memory_space<vmem>>, %arg13: memref<1x32xf32, #tpu.memory_space<vmem>>, %arg14: memref<32x64xbf16, #tpu.memory_space<vmem>>, %arg15: memref<1x64xf32, #tpu.memory_space<vmem>>, %arg16: memref<64x32xbf16, #tpu.memory_space<vmem>>, %arg17: memref<1x32xf32, #tpu.memory_space<vmem>>, %arg18: memref<1x12x32xf32, #tpu.memory_space<vmem>>) attributes {dimension_semantics = [#tpu.dimension_semantics<parallel>], iteration_bounds = array<i64: 2>, scalar_prefetch = 0 : i64, scratch_operands = 0 : i64, tpu.core_type = #tpu.core_type<tc>, window_params = [{transform_indices = @transform_0, window_bounds = array<i64: 1, 12, 32>}, {transform_indices = @transform_1, window_bounds = array<i64: 1, 8, 32>}, {transform_indices = @transform_2, window_bounds = array<i64: 1, 1, 8>}, {pipeline_mode = #tpu.pipeline_mode<synchronous>, transform_indices = @transform_3, window_bounds = array<i64: 1, 32>}, {pipeline_mode = #tpu.pipeline_mode<synchronous>, transform_indices = @transform_4, window_bounds = array<i64: 1, 32>}, {pipeline_mode = #tpu.pipeline_mode<synchronous>, transform_indices = @transform_5, window_bounds = array<i64: 32, 32>}, {pipeline_mode = #tpu.pipeline_mode<synchronous>, transform_indices = @transform_6, window_bounds = array<i64: 1, 32>}, {pipeline_mode = #tpu.pipeline_mode<synchronous>, transform_indices = @transform_7, window_bounds = array<i64: 32, 64>}, {pipeline_mode = #tpu.pipeline_mode<synchronous>, transform_indices = @transform_8, window_bounds = array<i64: 1, 64>}, {pipeline_mode = #tpu.pipeline_mode<synchronous>, transform_indices = @transform_9, window_bounds = array<i64: 4, 8, 32>}, {pipeline_mode = #tpu.pipeline_mode<synchronous>, transform_indices = @transform_10, window_bounds = array<i64: 1, 32>}, {pipeline_mode = #tpu.pipeline_mode<synchronous>, transform_indices = @transform_11, window_bounds = array<i64: 1, 32>}, {pipeline_mode = #tpu.pipeline_mode<synchronous>, transform_indices = @transform_12, window_bounds = array<i64: 1, 32>}, {pipeline_mode = #tpu.pipeline_mode<synchronous>, transform_indices = @transform_13, window_bounds = array<i64: 32, 64>}, {pipeline_mode = #tpu.pipeline_mode<synchronous>, transform_indices = @transform_14, window_bounds = array<i64: 1, 64>}, {pipeline_mode = #tpu.pipeline_mode<synchronous>, transform_indices = @transform_15, window_bounds = array<i64: 64, 32>}, {pipeline_mode = #tpu.pipeline_mode<synchronous>, transform_indices = @transform_16, window_bounds = array<i64: 1, 32>}, {transform_indices = @transform_17, window_bounds = array<i64: 1, 12, 32>}]} {
    %c0 = arith.constant 0 : index
    %c0_0 = arith.constant 0 : index
    %c0_1 = arith.constant 0 : index
    %0 = vector.load %arg1[%c0, %c0_0, %c0_1] : memref<1x12x32xf32, #tpu.memory_space<vmem>>, vector<1x12x32xf32>
    %1 = vector.shape_cast %0 : vector<1x12x32xf32> to vector<12x32xf32>
    %c0_2 = arith.constant 0 : index
    %c0_3 = arith.constant 0 : index
    %2 = vector.load %arg4[%c0_2, %c0_3] : memref<1x32xf32, #tpu.memory_space<vmem>>, vector<1x32xf32>
    %c0_4 = arith.constant 0 : index
    %c0_5 = arith.constant 0 : index
    %3 = vector.load %arg5[%c0_4, %c0_5] : memref<1x32xf32, #tpu.memory_space<vmem>>, vector<1x32xf32>
    %cst = arith.constant dense<0.000000e+00> : vector<12xf32>
    %4 = vector.multi_reduction <add>, %1, %cst [1] : vector<12x32xf32> to vector<12xf32>
    %5 = vector.shape_cast %4 : vector<12xf32> to vector<12x1xf32>
    %cst_6 = arith.constant 3.200000e+01 : f32
    %6 = vector.broadcast %cst_6 : f32 to vector<12x1xf32>
    %7 = arith.divf %5, %6 : vector<12x1xf32>
    %8 = vector.broadcast %7 : vector<12x1xf32> to vector<12x32xf32>
    %9 = arith.subf %1, %8 : vector<12x32xf32>
    %10 = arith.mulf %9, %9 : vector<12x32xf32>
    %cst_7 = arith.constant dense<0.000000e+00> : vector<12xf32>
    %11 = vector.multi_reduction <add>, %10, %cst_7 [1] : vector<12x32xf32> to vector<12xf32>
    %12 = vector.shape_cast %11 : vector<12xf32> to vector<12x1xf32>
    %cst_8 = arith.constant 3.200000e+01 : f32
    %13 = vector.broadcast %cst_8 : f32 to vector<12x1xf32>
    %14 = arith.divf %12, %13 : vector<12x1xf32>
    %15 = vector.broadcast %7 : vector<12x1xf32> to vector<12x32xf32>
    %16 = arith.subf %1, %15 : vector<12x32xf32>
    %cst_9 = arith.constant 9.99999974E-6 : f32
    %17 = vector.broadcast %cst_9 : f32 to vector<12x1xf32>
    %18 = arith.addf %14, %17 : vector<12x1xf32>
    %19 = math.rsqrt %18 : vector<12x1xf32>
    %20 = vector.broadcast %19 : vector<12x1xf32> to vector<12x32xf32>
    %21 = arith.mulf %16, %20 : vector<12x32xf32>
    %22 = vector.broadcast %2 : vector<1x32xf32> to vector<12x32xf32>
    %23 = arith.mulf %21, %22 : vector<12x32xf32>
    %24 = vector.broadcast %3 : vector<1x32xf32> to vector<12x32xf32>
    %25 = arith.addf %23, %24 : vector<12x32xf32>
    %26 = arith.truncf %25 : vector<12x32xf32> to vector<12x32xbf16>
    %c0_10 = arith.constant 0 : index
    %c0_11 = arith.constant 0 : index
    %c0_12 = arith.constant 0 : index
    %27 = vector.load %arg2[%c0_10, %c0_11, %c0_12] : memref<1x8x32xf32, #tpu.memory_space<vmem>>, vector<1x8x32xf32>
    %28 = vector.shape_cast %27 : vector<1x8x32xf32> to vector<8x32xf32>
    %29 = arith.truncf %28 : vector<8x32xf32> to vector<8x32xbf16>
    %c0_13 = arith.constant 0 : index
    %c0_14 = arith.constant 0 : index
    %c0_15 = arith.constant 0 : index
    %30 = vector.load %arg3[%c0_13, %c0_14, %c0_15] : memref<1x1x8xf32, #tpu.memory_space<vmem>>, vector<1x1x8xf32>
    %c0_16 = arith.constant 0 : index
    %c0_17 = arith.constant 0 : index
    %31 = vector.load %arg6[%c0_16, %c0_17] : memref<32x32xbf16, #tpu.memory_space<vmem>>, vector<32x32xbf16>
    %c0_18 = arith.constant 0 : index
    %c0_19 = arith.constant 0 : index
    %32 = vector.load %arg7[%c0_18, %c0_19] : memref<1x32xf32, #tpu.memory_space<vmem>>, vector<1x32xf32>
    %c0_20 = arith.constant 0 : index
    %c0_21 = arith.constant 0 : index
    %33 = vector.load %arg8[%c0_20, %c0_21] : memref<32x64xbf16, #tpu.memory_space<vmem>>, vector<32x64xbf16>
    %c0_22 = arith.constant 0 : index
    %c0_23 = arith.constant 0 : index
    %34 = vector.load %arg9[%c0_22, %c0_23] : memref<1x64xf32, #tpu.memory_space<vmem>>, vector<1x64xf32>
    %c0_24 = arith.constant 0 : index
    %c0_25 = arith.constant 0 : index
    %c0_26 = arith.constant 0 : index
    %35 = vector.load %arg10[%c0_24, %c0_25, %c0_26] : memref<4x8x32xbf16, #tpu.memory_space<vmem>>, vector<4x8x32xbf16>
    %c0_27 = arith.constant 0 : index
    %c0_28 = arith.constant 0 : index
    %36 = vector.load %arg11[%c0_27, %c0_28] : memref<1x32xf32, #tpu.memory_space<vmem>>, vector<1x32xf32>
    %cst_29 = arith.constant dense<0.000000e+00> : vector<12x32xf32>
    %37 = tpu.matmul %26, %31, %cst_29 {dimension_numbers = #tpu.dot_dimension_numbers<[1], [0], [0], [1], [0, 0, 1, 1], [], []>} : vector<12x32xbf16>, vector<32x32xbf16>, vector<12x32xf32> -> vector<12x32xf32>
    %38 = vector.broadcast %32 : vector<1x32xf32> to vector<12x32xf32>
    %39 = arith.addf %37, %38 : vector<12x32xf32>
    %cst_30 = arith.constant dense<0.000000e+00> : vector<8x64xf32>
    %40 = tpu.matmul %29, %33, %cst_30 {dimension_numbers = #tpu.dot_dimension_numbers<[1], [0], [0], [1], [0, 0, 1, 1], [], []>} : vector<8x32xbf16>, vector<32x64xbf16>, vector<8x64xf32> -> vector<8x64xf32>
    %41 = vector.broadcast %34 : vector<1x64xf32> to vector<8x64xf32>
    %42 = arith.addf %40, %41 : vector<8x64xf32>
    %43 = vector.extract_strided_slice %42 {offsets = [0, 0], sizes = [8, 32], strides = [1, 1]} : vector<8x64xf32> to vector<8x32xf32>
    %44 = vector.extract_strided_slice %42 {offsets = [0, 32], sizes = [8, 32], strides = [1, 1]} : vector<8x64xf32> to vector<8x32xf32>
    %45 = vector.extract_strided_slice %39 {offsets = [0, 0], sizes = [12, 8], strides = [1, 1]} : vector<12x32xf32> to vector<12x8xf32>
    %46 = vector.extract_strided_slice %39 {offsets = [0, 8], sizes = [12, 8], strides = [1, 1]} : vector<12x32xf32> to vector<12x8xf32>
    %47 = vector.extract_strided_slice %39 {offsets = [0, 16], sizes = [12, 8], strides = [1, 1]} : vector<12x32xf32> to vector<12x8xf32>
    %48 = vector.extract_strided_slice %39 {offsets = [0, 24], sizes = [12, 8], strides = [1, 1]} : vector<12x32xf32> to vector<12x8xf32>
    %49 = vector.shape_cast %45 : vector<12x8xf32> to vector<1x12x8xf32>
    %50 = vector.shape_cast %46 : vector<12x8xf32> to vector<1x12x8xf32>
    %51 = vector.shape_cast %47 : vector<12x8xf32> to vector<1x12x8xf32>
    %52 = vector.shape_cast %48 : vector<12x8xf32> to vector<1x12x8xf32>
    %53 = tpu.concatenate %49, %50, %51, %52 in 0 : vector<1x12x8xf32>, vector<1x12x8xf32>, vector<1x12x8xf32>, vector<1x12x8xf32> -> vector<4x12x8xf32>
    %54 = arith.truncf %53 : vector<4x12x8xf32> to vector<4x12x8xbf16>
    %55 = vector.extract_strided_slice %43 {offsets = [0, 0], sizes = [8, 8], strides = [1, 1]} : vector<8x32xf32> to vector<8x8xf32>
    %56 = vector.extract_strided_slice %43 {offsets = [0, 8], sizes = [8, 8], strides = [1, 1]} : vector<8x32xf32> to vector<8x8xf32>
    %57 = vector.extract_strided_slice %43 {offsets = [0, 16], sizes = [8, 8], strides = [1, 1]} : vector<8x32xf32> to vector<8x8xf32>
    %58 = vector.extract_strided_slice %43 {offsets = [0, 24], sizes = [8, 8], strides = [1, 1]} : vector<8x32xf32> to vector<8x8xf32>
    %59 = vector.shape_cast %55 : vector<8x8xf32> to vector<1x8x8xf32>
    %60 = vector.shape_cast %56 : vector<8x8xf32> to vector<1x8x8xf32>
    %61 = vector.shape_cast %57 : vector<8x8xf32> to vector<1x8x8xf32>
    %62 = vector.shape_cast %58 : vector<8x8xf32> to vector<1x8x8xf32>
    %63 = tpu.concatenate %59, %60, %61, %62 in 0 : vector<1x8x8xf32>, vector<1x8x8xf32>, vector<1x8x8xf32>, vector<1x8x8xf32> -> vector<4x8x8xf32>
    %64 = arith.truncf %63 : vector<4x8x8xf32> to vector<4x8x8xbf16>
    %65 = vector.extract_strided_slice %44 {offsets = [0, 0], sizes = [8, 8], strides = [1, 1]} : vector<8x32xf32> to vector<8x8xf32>
    %66 = vector.extract_strided_slice %44 {offsets = [0, 8], sizes = [8, 8], strides = [1, 1]} : vector<8x32xf32> to vector<8x8xf32>
    %67 = vector.extract_strided_slice %44 {offsets = [0, 16], sizes = [8, 8], strides = [1, 1]} : vector<8x32xf32> to vector<8x8xf32>
    %68 = vector.extract_strided_slice %44 {offsets = [0, 24], sizes = [8, 8], strides = [1, 1]} : vector<8x32xf32> to vector<8x8xf32>
    %69 = vector.shape_cast %65 : vector<8x8xf32> to vector<1x8x8xf32>
    %70 = vector.shape_cast %66 : vector<8x8xf32> to vector<1x8x8xf32>
    %71 = vector.shape_cast %67 : vector<8x8xf32> to vector<1x8x8xf32>
    %72 = vector.shape_cast %68 : vector<8x8xf32> to vector<1x8x8xf32>
    %73 = tpu.concatenate %69, %70, %71, %72 in 0 : vector<1x8x8xf32>, vector<1x8x8xf32>, vector<1x8x8xf32>, vector<1x8x8xf32> -> vector<4x8x8xf32>
    %74 = arith.truncf %73 : vector<4x8x8xf32> to vector<4x8x8xbf16>
    "tpu.trace_start"() <{level = 10 : i32, message = "hqd,hkd->hqk"}> : () -> ()
    %cst_31 = arith.constant dense<0.000000e+00> : vector<4x12x8xf32>
    %75 = tpu.matmul %54, %64, %cst_31 {dimension_numbers = #tpu.dot_dimension_numbers<[2], [2], [1], [1], [0, 0, 0, 1, 1, 1], [0], [0]>} : vector<4x12x8xbf16>, vector<4x8x8xbf16>, vector<4x12x8xf32> -> vector<4x12x8xf32>
    "tpu.trace_stop"() : () -> ()
    %cst_32 = arith.constant 0.353553385 : f32
    %76 = vector.broadcast %cst_32 : f32 to vector<4x12x8xf32>
    %77 = arith.mulf %75, %76 : vector<4x12x8xf32>
    %78 = vector.broadcast %30 : vector<1x1x8xf32> to vector<4x12x8xf32>
    %79 = arith.addf %77, %78 : vector<4x12x8xf32>
    %cst_33 = arith.constant dense<0xFF800000> : vector<4x12xf32>
    %80 = vector.multi_reduction <maximumf>, %79, %cst_33 [2] : vector<4x12x8xf32> to vector<4x12xf32>
    %81 = vector.shape_cast %80 : vector<4x12xf32> to vector<4x12x1xf32>
    %82 = vector.broadcast %81 : vector<4x12x1xf32> to vector<4x12x8xf32>
    %83 = arith.subf %79, %82 : vector<4x12x8xf32>
    %84 = math.exp %83 : vector<4x12x8xf32>
    %cst_34 = arith.constant dense<0.000000e+00> : vector<4x12xf32>
    %85 = vector.multi_reduction <add>, %84, %cst_34 [2] : vector<4x12x8xf32> to vector<4x12xf32>
    %86 = vector.shape_cast %85 : vector<4x12xf32> to vector<4x12x1xf32>
    %87 = vector.broadcast %86 : vector<4x12x1xf32> to vector<4x12x8xf32>
    %88 = arith.divf %84, %87 : vector<4x12x8xf32>
    %89 = arith.truncf %88 : vector<4x12x8xf32> to vector<4x12x8xbf16>
    "tpu.trace_start"() <{level = 10 : i32, message = "hqk,hkd->hqd"}> : () -> ()
    %cst_35 = arith.constant dense<0.000000e+00> : vector<4x12x8xf32>
    %90 = tpu.matmul %89, %74, %cst_35 {dimension_numbers = #tpu.dot_dimension_numbers<[2], [1], [1], [2], [0, 0, 0, 1, 1, 2], [0], [0]>} : vector<4x12x8xbf16>, vector<4x8x8xbf16>, vector<4x12x8xf32> -> vector<4x12x8xf32>
    "tpu.trace_stop"() : () -> ()
    %91 = arith.truncf %90 : vector<4x12x8xf32> to vector<4x12x8xbf16>
    "tpu.trace_start"() <{level = 10 : i32, message = "hqd,hdo->hqo"}> : () -> ()
    %cst_36 = arith.constant dense<0.000000e+00> : vector<4x12x32xf32>
    %92 = tpu.matmul %91, %35, %cst_36 {dimension_numbers = #tpu.dot_dimension_numbers<[2], [1], [1], [2], [0, 0, 0, 1, 1, 2], [0], [0]>} : vector<4x12x8xbf16>, vector<4x8x32xbf16>, vector<4x12x32xf32> -> vector<4x12x32xf32>
    "tpu.trace_stop"() : () -> ()
    %93 = vector.extract_strided_slice %92 {offsets = [0, 0, 0], sizes = [1, 12, 32], strides = [1, 1, 1]} : vector<4x12x32xf32> to vector<1x12x32xf32>
    %94 = vector.shape_cast %93 : vector<1x12x32xf32> to vector<12x32xf32>
    %95 = vector.extract_strided_slice %92 {offsets = [1, 0, 0], sizes = [1, 12, 32], strides = [1, 1, 1]} : vector<4x12x32xf32> to vector<1x12x32xf32>
    %96 = vector.shape_cast %95 : vector<1x12x32xf32> to vector<12x32xf32>
    %97 = arith.addf %94, %96 : vector<12x32xf32>
    %98 = vector.extract_strided_slice %92 {offsets = [2, 0, 0], sizes = [1, 12, 32], strides = [1, 1, 1]} : vector<4x12x32xf32> to vector<1x12x32xf32>
    %99 = vector.shape_cast %98 : vector<1x12x32xf32> to vector<12x32xf32>
    %100 = arith.addf %97, %99 : vector<12x32xf32>
    %101 = vector.extract_strided_slice %92 {offsets = [3, 0, 0], sizes = [1, 12, 32], strides = [1, 1, 1]} : vector<4x12x32xf32> to vector<1x12x32xf32>
    %102 = vector.shape_cast %101 : vector<1x12x32xf32> to vector<12x32xf32>
    %103 = arith.addf %100, %102 : vector<12x32xf32>
    %104 = vector.broadcast %36 : vector<1x32xf32> to vector<12x32xf32>
    %105 = arith.addf %103, %104 : vector<12x32xf32>
    %106 = arith.addf %1, %105 : vector<12x32xf32>
    %c0_37 = arith.constant 0 : index
    %c0_38 = arith.constant 0 : index
    %107 = vector.load %arg12[%c0_37, %c0_38] : memref<1x32xf32, #tpu.memory_space<vmem>>, vector<1x32xf32>
    %c0_39 = arith.constant 0 : index
    %c0_40 = arith.constant 0 : index
    %108 = vector.load %arg13[%c0_39, %c0_40] : memref<1x32xf32, #tpu.memory_space<vmem>>, vector<1x32xf32>
    %cst_41 = arith.constant dense<0.000000e+00> : vector<12xf32>
    %109 = vector.multi_reduction <add>, %106, %cst_41 [1] : vector<12x32xf32> to vector<12xf32>
    %110 = vector.shape_cast %109 : vector<12xf32> to vector<12x1xf32>
    %cst_42 = arith.constant 3.200000e+01 : f32
    %111 = vector.broadcast %cst_42 : f32 to vector<12x1xf32>
    %112 = arith.divf %110, %111 : vector<12x1xf32>
    %113 = vector.broadcast %112 : vector<12x1xf32> to vector<12x32xf32>
    %114 = arith.subf %106, %113 : vector<12x32xf32>
    %115 = arith.mulf %114, %114 : vector<12x32xf32>
    %cst_43 = arith.constant dense<0.000000e+00> : vector<12xf32>
    %116 = vector.multi_reduction <add>, %115, %cst_43 [1] : vector<12x32xf32> to vector<12xf32>
    %117 = vector.shape_cast %116 : vector<12xf32> to vector<12x1xf32>
    %cst_44 = arith.constant 3.200000e+01 : f32
    %118 = vector.broadcast %cst_44 : f32 to vector<12x1xf32>
    %119 = arith.divf %117, %118 : vector<12x1xf32>
    %120 = vector.broadcast %112 : vector<12x1xf32> to vector<12x32xf32>
    %121 = arith.subf %106, %120 : vector<12x32xf32>
    %cst_45 = arith.constant 9.99999974E-6 : f32
    %122 = vector.broadcast %cst_45 : f32 to vector<12x1xf32>
    %123 = arith.addf %119, %122 : vector<12x1xf32>
    %124 = math.rsqrt %123 : vector<12x1xf32>
    %125 = vector.broadcast %124 : vector<12x1xf32> to vector<12x32xf32>
    %126 = arith.mulf %121, %125 : vector<12x32xf32>
    %127 = vector.broadcast %107 : vector<1x32xf32> to vector<12x32xf32>
    %128 = arith.mulf %126, %127 : vector<12x32xf32>
    %129 = vector.broadcast %108 : vector<1x32xf32> to vector<12x32xf32>
    %130 = arith.addf %128, %129 : vector<12x32xf32>
    %131 = arith.truncf %130 : vector<12x32xf32> to vector<12x32xbf16>
    %c0_46 = arith.constant 0 : index
    %c0_47 = arith.constant 0 : index
    %132 = vector.load %arg14[%c0_46, %c0_47] : memref<32x64xbf16, #tpu.memory_space<vmem>>, vector<32x64xbf16>
    %cst_48 = arith.constant dense<0.000000e+00> : vector<12x64xf32>
    %133 = tpu.matmul %131, %132, %cst_48 {dimension_numbers = #tpu.dot_dimension_numbers<[1], [0], [0], [1], [0, 0, 1, 1], [], []>} : vector<12x32xbf16>, vector<32x64xbf16>, vector<12x64xf32> -> vector<12x64xf32>
    %c0_49 = arith.constant 0 : index
    %c0_50 = arith.constant 0 : index
    %134 = vector.load %arg15[%c0_49, %c0_50] : memref<1x64xf32, #tpu.memory_space<vmem>>, vector<1x64xf32>
    %135 = vector.broadcast %134 : vector<1x64xf32> to vector<12x64xf32>
    %136 = arith.addf %133, %135 : vector<12x64xf32>
    %cst_51 = arith.constant 0.000000e+00 : f32
    %137 = vector.broadcast %cst_51 : f32 to vector<12x64xf32>
    %138 = arith.maximumf %136, %137 : vector<12x64xf32>
    %139 = arith.truncf %138 : vector<12x64xf32> to vector<12x64xbf16>
    %c0_52 = arith.constant 0 : index
    %c0_53 = arith.constant 0 : index
    %140 = vector.load %arg16[%c0_52, %c0_53] : memref<64x32xbf16, #tpu.memory_space<vmem>>, vector<64x32xbf16>
    %cst_54 = arith.constant dense<0.000000e+00> : vector<12x32xf32>
    %141 = tpu.matmul %139, %140, %cst_54 {dimension_numbers = #tpu.dot_dimension_numbers<[1], [0], [0], [1], [0, 0, 1, 1], [], []>} : vector<12x64xbf16>, vector<64x32xbf16>, vector<12x32xf32> -> vector<12x32xf32>
    %c0_55 = arith.constant 0 : index
    %c0_56 = arith.constant 0 : index
    %142 = vector.load %arg17[%c0_55, %c0_56] : memref<1x32xf32, #tpu.memory_space<vmem>>, vector<1x32xf32>
    %143 = vector.broadcast %142 : vector<1x32xf32> to vector<12x32xf32>
    %144 = arith.addf %141, %143 : vector<12x32xf32>
    %145 = arith.addf %106, %144 : vector<12x32xf32>
    %c0_57 = arith.constant 0 : index
    %c0_58 = arith.constant 0 : index
    %c0_59 = arith.constant 0 : index
    %146 = vector.load %arg18[%c0_57, %c0_58, %c0_59] : memref<1x12x32xf32, #tpu.memory_space<vmem>>, vector<1x12x32xf32>
    %147 = vector.shape_cast %146 : vector<1x12x32xf32> to vector<12x32xf32>
    %148 = vector.shape_cast %145 : vector<12x32xf32> to vector<1x12x32xf32>
    tpu.vector_store %arg18[%c0_57, %c0_58, %c0_59], %148 {strides = array<i32>} : memref<1x12x32xf32, #tpu.memory_space<vmem>>, vector<1x12x32xf32>,
    return
  }
  func.func @transform_0(%arg0: i32) -> (i32, i32, i32) {
    %c0_i32 = arith.constant 0 : i32
    %c0_i32_0 = arith.constant 0 : i32
    %c0_i32_1 = arith.constant 0 : i32
    return %arg0, %c0_i32, %c0_i32_0 : i32, i32, i32
  }
  func.func @transform_1(%arg0: i32) -> (i32, i32, i32) {
    %c0_i32 = arith.constant 0 : i32
    %c0_i32_0 = arith.constant 0 : i32
    %c0_i32_1 = arith.constant 0 : i32
    return %arg0, %c0_i32, %c0_i32_0 : i32, i32, i32
  }
  func.func @transform_2(%arg0: i32) -> (i32, i32, i32) {
    %c0_i32 = arith.constant 0 : i32
    %c0_i32_0 = arith.constant 0 : i32
    %c0_i32_1 = arith.constant 0 : i32
    return %arg0, %c0_i32, %c0_i32_0 : i32, i32, i32
  }
  func.func @transform_3(%arg0: i32) -> (i32, i32) {
    %c0_i32 = arith.constant 0 : i32
    %c0_i32_0 = arith.constant 0 : i32
    %c0_i32_1 = arith.constant 0 : i32
    return %c0_i32, %c0_i32_0 : i32, i32
  }
  func.func @transform_4(%arg0: i32) -> (i32, i32) {
    %c0_i32 = arith.constant 0 : i32
    %c0_i32_0 = arith.constant 0 : i32
    %c0_i32_1 = arith.constant 0 : i32
    return %c0_i32, %c0_i32_0 : i32, i32
  }
  func.func @transform_5(%arg0: i32) -> (i32, i32) {
    %c0_i32 = arith.constant 0 : i32
    %c0_i32_0 = arith.constant 0 : i32
    %c0_i32_1 = arith.constant 0 : i32
    return %c0_i32, %c0_i32_0 : i32, i32
  }
  func.func @transform_6(%arg0: i32) -> (i32, i32) {
    %c0_i32 = arith.constant 0 : i32
    %c0_i32_0 = arith.constant 0 : i32
    %c0_i32_1 = arith.constant 0 : i32
    return %c0_i32, %c0_i32_0 : i32, i32
  }
  func.func @transform_7(%arg0: i32) -> (i32, i32) {
    %c0_i32 = arith.constant 0 : i32
    %c0_i32_0 = arith.constant 0 : i32
    %c0_i32_1 = arith.constant 0 : i32
    return %c0_i32, %c0_i32_0 : i32, i32
  }
  func.func @transform_8(%arg0: i32) -> (i32, i32) {
    %c0_i32 = arith.constant 0 : i32
    %c0_i32_0 = arith.constant 0 : i32
    %c0_i32_1 = arith.constant 0 : i32
    return %c0_i32, %c0_i32_0 : i32, i32
  }
  func.func @transform_9(%arg0: i32) -> (i32, i32, i32) {
    %c0_i32 = arith.constant 0 : i32
    %c0_i32_0 = arith.constant 0 : i32
    %c0_i32_1 = arith.constant 0 : i32
    %c0_i32_2 = arith.constant 0 : i32
    return %c0_i32, %c0_i32_0, %c0_i32_1 : i32, i32, i32
  }
  func.func @transform_10(%arg0: i32) -> (i32, i32) {
    %c0_i32 = arith.constant 0 : i32
    %c0_i32_0 = arith.constant 0 : i32
    %c0_i32_1 = arith.constant 0 : i32
    return %c0_i32, %c0_i32_0 : i32, i32
  }
  func.func @transform_11(%arg0: i32) -> (i32, i32) {
    %c0_i32 = arith.constant 0 : i32
    %c0_i32_0 = arith.constant 0 : i32
    %c0_i32_1 = arith.constant 0 : i32
    return %c0_i32, %c0_i32_0 : i32, i32
  }
  func.func @transform_12(%arg0: i32) -> (i32, i32) {
    %c0_i32 = arith.constant 0 : i32
    %c0_i32_0 = arith.constant 0 : i32
    %c0_i32_1 = arith.constant 0 : i32
    return %c0_i32, %c0_i32_0 : i32, i32
  }
  func.func @transform_13(%arg0: i32) -> (i32, i32) {
    %c0_i32 = arith.constant 0 : i32
    %c0_i32_0 = arith.constant 0 : i32
    %c0_i32_1 = arith.constant 0 : i32
    return %c0_i32, %c0_i32_0 : i32, i32
  }
  func.func @transform_14(%arg0: i32) -> (i32, i32) {
    %c0_i32 = arith.constant 0 : i32
    %c0_i32_0 = arith.constant 0 : i32
    %c0_i32_1 = arith.constant 0 : i32
    return %c0_i32, %c0_i32_0 : i32, i32
  }
  func.func @transform_15(%arg0: i32) -> (i32, i32) {
    %c0_i32 = arith.constant 0 : i32
    %c0_i32_0 = arith.constant 0 : i32
    %c0_i32_1 = arith.constant 0 : i32
    return %c0_i32, %c0_i32_0 : i32, i32
  }
  func.func @transform_16(%arg0: i32) -> (i32, i32) {
    %c0_i32 = arith.constant 0 : i32
    %c0_i32_0 = arith.constant 0 : i32
    %c0_i32_1 = arith.constant 0 : i32
    return %c0_i32, %c0_i32_0 : i32, i32
  }
  func.func @transform_17(%arg0: i32) -> (i32, i32, i32) {
    %c0_i32 = arith.constant 0 : i32
    %c0_i32_0 = arith.constant 0 : i32
    %c0_i32_1 = arith.constant 0 : i32
    return %arg0, %c0_i32, %c0_i32_0 : i32, i32, i32
  }
}

module attributes {stable_mosaic.version = 11 : i64} {
  func.func @_cross_attn_ffn_kernel(%arg0: i32, %arg1: memref<1x8x32xf32, #tpu.memory_space<vmem>>, %arg2: memref<1x12x32xf32, #tpu.memory_space<vmem>>, %arg3: memref<1x1x12xf32, #tpu.memory_space<vmem>>, %arg4: memref<1x32xf32, #tpu.memory_space<vmem>>, %arg5: memref<1x32xf32, #tpu.memory_space<vmem>>, %arg6: memref<32x32xbf16, #tpu.memory_space<vmem>>, %arg7: memref<1x32xf32, #tpu.memory_space<vmem>>, %arg8: memref<32x64xbf16, #tpu.memory_space<vmem>>, %arg9: memref<1x64xf32, #tpu.memory_space<vmem>>, %arg10: memref<4x8x32xbf16, #tpu.memory_space<vmem>>, %arg11: memref<1x32xf32, #tpu.memory_space<vmem>>, %arg12: memref<1x32xf32, #tpu.memory_space<vmem>>, %arg13: memref<1x32xf32, #tpu.memory_space<vmem>>, %arg14: memref<32x64xbf16, #tpu.memory_space<vmem>>, %arg15: memref<1x64xf32, #tpu.memory_space<vmem>>, %arg16: memref<64x32xbf16, #tpu.memory_space<vmem>>, %arg17: memref<1x32xf32, #tpu.memory_space<vmem>>, %arg18: memref<1x8x32xf32, #tpu.memory_space<vmem>>) attributes {dimension_semantics = [#tpu.dimension_semantics<parallel>], iteration_bounds = array<i64: 2>, scalar_prefetch = 0 : i64, scratch_operands = 0 : i64, tpu.core_type = #tpu.core_type<tc>, window_params = [{transform_indices = @transform_0, window_bounds = array<i64: 1, 8, 32>}, {transform_indices = @transform_1, window_bounds = array<i64: 1, 12, 32>}, {transform_indices = @transform_2, window_bounds = array<i64: 1, 1, 12>}, {pipeline_mode = #tpu.pipeline_mode<synchronous>, transform_indices = @transform_3, window_bounds = array<i64: 1, 32>}, {pipeline_mode = #tpu.pipeline_mode<synchronous>, transform_indices = @transform_4, window_bounds = array<i64: 1, 32>}, {pipeline_mode = #tpu.pipeline_mode<synchronous>, transform_indices = @transform_5, window_bounds = array<i64: 32, 32>}, {pipeline_mode = #tpu.pipeline_mode<synchronous>, transform_indices = @transform_6, window_bounds = array<i64: 1, 32>}, {pipeline_mode = #tpu.pipeline_mode<synchronous>, transform_indices = @transform_7, window_bounds = array<i64: 32, 64>}, {pipeline_mode = #tpu.pipeline_mode<synchronous>, transform_indices = @transform_8, window_bounds = array<i64: 1, 64>}, {pipeline_mode = #tpu.pipeline_mode<synchronous>, transform_indices = @transform_9, window_bounds = array<i64: 4, 8, 32>}, {pipeline_mode = #tpu.pipeline_mode<synchronous>, transform_indices = @transform_10, window_bounds = array<i64: 1, 32>}, {pipeline_mode = #tpu.pipeline_mode<synchronous>, transform_indices = @transform_11, window_bounds = array<i64: 1, 32>}, {pipeline_mode = #tpu.pipeline_mode<synchronous>, transform_indices = @transform_12, window_bounds = array<i64: 1, 32>}, {pipeline_mode = #tpu.pipeline_mode<synchronous>, transform_indices = @transform_13, window_bounds = array<i64: 32, 64>}, {pipeline_mode = #tpu.pipeline_mode<synchronous>, transform_indices = @transform_14, window_bounds = array<i64: 1, 64>}, {pipeline_mode = #tpu.pipeline_mode<synchronous>, transform_indices = @transform_15, window_bounds = array<i64: 64, 32>}, {pipeline_mode = #tpu.pipeline_mode<synchronous>, transform_indices = @transform_16, window_bounds = array<i64: 1, 32>}, {transform_indices = @transform_17, window_bounds = array<i64: 1, 8, 32>}]} {
    %c0 = arith.constant 0 : index
    %c0_0 = arith.constant 0 : index
    %c0_1 = arith.constant 0 : index
    %0 = vector.load %arg1[%c0, %c0_0, %c0_1] : memref<1x8x32xf32, #tpu.memory_space<vmem>>, vector<1x8x32xf32>
    %1 = vector.shape_cast %0 : vector<1x8x32xf32> to vector<8x32xf32>
    %c0_2 = arith.constant 0 : index
    %c0_3 = arith.constant 0 : index
    %2 = vector.load %arg4[%c0_2, %c0_3] : memref<1x32xf32, #tpu.memory_space<vmem>>, vector<1x32xf32>
    %c0_4 = arith.constant 0 : index
    %c0_5 = arith.constant 0 : index
    %3 = vector.load %arg5[%c0_4, %c0_5] : memref<1x32xf32, #tpu.memory_space<vmem>>, vector<1x32xf32>
    %cst = arith.constant dense<0.000000e+00> : vector<8xf32>
    %4 = vector.multi_reduction <add>, %1, %cst [1] : vector<8x32xf32> to vector<8xf32>
    %5 = vector.shape_cast %4 : vector<8xf32> to vector<8x1xf32>
    %cst_6 = arith.constant 3.200000e+01 : f32
    %6 = vector.broadcast %cst_6 : f32 to vector<8x1xf32>
    %7 = arith.divf %5, %6 : vector<8x1xf32>
    %8 = vector.broadcast %7 : vector<8x1xf32> to vector<8x32xf32>
    %9 = arith.subf %1, %8 : vector<8x32xf32>
    %10 = arith.mulf %9, %9 : vector<8x32xf32>
    %cst_7 = arith.constant dense<0.000000e+00> : vector<8xf32>
    %11 = vector.multi_reduction <add>, %10, %cst_7 [1] : vector<8x32xf32> to vector<8xf32>
    %12 = vector.shape_cast %11 : vector<8xf32> to vector<8x1xf32>
    %cst_8 = arith.constant 3.200000e+01 : f32
    %13 = vector.broadcast %cst_8 : f32 to vector<8x1xf32>
    %14 = arith.divf %12, %13 : vector<8x1xf32>
    %15 = vector.broadcast %7 : vector<8x1xf32> to vector<8x32xf32>
    %16 = arith.subf %1, %15 : vector<8x32xf32>
    %cst_9 = arith.constant 9.99999974E-6 : f32
    %17 = vector.broadcast %cst_9 : f32 to vector<8x1xf32>
    %18 = arith.addf %14, %17 : vector<8x1xf32>
    %19 = math.rsqrt %18 : vector<8x1xf32>
    %20 = vector.broadcast %19 : vector<8x1xf32> to vector<8x32xf32>
    %21 = arith.mulf %16, %20 : vector<8x32xf32>
    %22 = vector.broadcast %2 : vector<1x32xf32> to vector<8x32xf32>
    %23 = arith.mulf %21, %22 : vector<8x32xf32>
    %24 = vector.broadcast %3 : vector<1x32xf32> to vector<8x32xf32>
    %25 = arith.addf %23, %24 : vector<8x32xf32>
    %26 = arith.truncf %25 : vector<8x32xf32> to vector<8x32xbf16>
    %c0_10 = arith.constant 0 : index
    %c0_11 = arith.constant 0 : index
    %c0_12 = arith.constant 0 : index
    %27 = vector.load %arg2[%c0_10, %c0_11, %c0_12] : memref<1x12x32xf32, #tpu.memory_space<vmem>>, vector<1x12x32xf32>
    %28 = vector.shape_cast %27 : vector<1x12x32xf32> to vector<12x32xf32>
    %29 = arith.truncf %28 : vector<12x32xf32> to vector<12x32xbf16>
    %c0_13 = arith.constant 0 : index
    %c0_14 = arith.constant 0 : index
    %c0_15 = arith.constant 0 : index
    %30 = vector.load %arg3[%c0_13, %c0_14, %c0_15] : memref<1x1x12xf32, #tpu.memory_space<vmem>>, vector<1x1x12xf32>
    %c0_16 = arith.constant 0 : index
    %c0_17 = arith.constant 0 : index
    %31 = vector.load %arg6[%c0_16, %c0_17] : memref<32x32xbf16, #tpu.memory_space<vmem>>, vector<32x32xbf16>
    %c0_18 = arith.constant 0 : index
    %c0_19 = arith.constant 0 : index
    %32 = vector.load %arg7[%c0_18, %c0_19] : memref<1x32xf32, #tpu.memory_space<vmem>>, vector<1x32xf32>
    %c0_20 = arith.constant 0 : index
    %c0_21 = arith.constant 0 : index
    %33 = vector.load %arg8[%c0_20, %c0_21] : memref<32x64xbf16, #tpu.memory_space<vmem>>, vector<32x64xbf16>
    %c0_22 = arith.constant 0 : index
    %c0_23 = arith.constant 0 : index
    %34 = vector.load %arg9[%c0_22, %c0_23] : memref<1x64xf32, #tpu.memory_space<vmem>>, vector<1x64xf32>
    %c0_24 = arith.constant 0 : index
    %c0_25 = arith.constant 0 : index
    %c0_26 = arith.constant 0 : index
    %35 = vector.load %arg10[%c0_24, %c0_25, %c0_26] : memref<4x8x32xbf16, #tpu.memory_space<vmem>>, vector<4x8x32xbf16>
    %c0_27 = arith.constant 0 : index
    %c0_28 = arith.constant 0 : index
    %36 = vector.load %arg11[%c0_27, %c0_28] : memref<1x32xf32, #tpu.memory_space<vmem>>, vector<1x32xf32>
    %cst_29 = arith.constant dense<0.000000e+00> : vector<8x32xf32>
    %37 = tpu.matmul %26, %31, %cst_29 {dimension_numbers = #tpu.dot_dimension_numbers<[1], [0], [0], [1], [0, 0, 1, 1], [], []>} : vector<8x32xbf16>, vector<32x32xbf16>, vector<8x32xf32> -> vector<8x32xf32>
    %38 = vector.broadcast %32 : vector<1x32xf32> to vector<8x32xf32>
    %39 = arith.addf %37, %38 : vector<8x32xf32>
    %cst_30 = arith.constant dense<0.000000e+00> : vector<12x64xf32>
    %40 = tpu.matmul %29, %33, %cst_30 {dimension_numbers = #tpu.dot_dimension_numbers<[1], [0], [0], [1], [0, 0, 1, 1], [], []>} : vector<12x32xbf16>, vector<32x64xbf16>, vector<12x64xf32> -> vector<12x64xf32>
    %41 = vector.broadcast %34 : vector<1x64xf32> to vector<12x64xf32>
    %42 = arith.addf %40, %41 : vector<12x64xf32>
    %43 = vector.extract_strided_slice %42 {offsets = [0, 0], sizes = [12, 32], strides = [1, 1]} : vector<12x64xf32> to vector<12x32xf32>
    %44 = vector.extract_strided_slice %42 {offsets = [0, 32], sizes = [12, 32], strides = [1, 1]} : vector<12x64xf32> to vector<12x32xf32>
    %45 = vector.extract_strided_slice %39 {offsets = [0, 0], sizes = [8, 8], strides = [1, 1]} : vector<8x32xf32> to vector<8x8xf32>
    %46 = vector.extract_strided_slice %39 {offsets = [0, 8], sizes = [8, 8], strides = [1, 1]} : vector<8x32xf32> to vector<8x8xf32>
    %47 = vector.extract_strided_slice %39 {offsets = [0, 16], sizes = [8, 8], strides = [1, 1]} : vector<8x32xf32> to vector<8x8xf32>
    %48 = vector.extract_strided_slice %39 {offsets = [0, 24], sizes = [8, 8], strides = [1, 1]} : vector<8x32xf32> to vector<8x8xf32>
    %49 = vector.shape_cast %45 : vector<8x8xf32> to vector<1x8x8xf32>
    %50 = vector.shape_cast %46 : vector<8x8xf32> to vector<1x8x8xf32>
    %51 = vector.shape_cast %47 : vector<8x8xf32> to vector<1x8x8xf32>
    %52 = vector.shape_cast %48 : vector<8x8xf32> to vector<1x8x8xf32>
    %53 = tpu.concatenate %49, %50, %51, %52 in 0 : vector<1x8x8xf32>, vector<1x8x8xf32>, vector<1x8x8xf32>, vector<1x8x8xf32> -> vector<4x8x8xf32>
    %54 = arith.truncf %53 : vector<4x8x8xf32> to vector<4x8x8xbf16>
    %55 = vector.extract_strided_slice %43 {offsets = [0, 0], sizes = [12, 8], strides = [1, 1]} : vector<12x32xf32> to vector<12x8xf32>
    %56 = vector.extract_strided_slice %43 {offsets = [0, 8], sizes = [12, 8], strides = [1, 1]} : vector<12x32xf32> to vector<12x8xf32>
    %57 = vector.extract_strided_slice %43 {offsets = [0, 16], sizes = [12, 8], strides = [1, 1]} : vector<12x32xf32> to vector<12x8xf32>
    %58 = vector.extract_strided_slice %43 {offsets = [0, 24], sizes = [12, 8], strides = [1, 1]} : vector<12x32xf32> to vector<12x8xf32>
    %59 = vector.shape_cast %55 : vector<12x8xf32> to vector<1x12x8xf32>
    %60 = vector.shape_cast %56 : vector<12x8xf32> to vector<1x12x8xf32>
    %61 = vector.shape_cast %57 : vector<12x8xf32> to vector<1x12x8xf32>
    %62 = vector.shape_cast %58 : vector<12x8xf32> to vector<1x12x8xf32>
    %63 = tpu.concatenate %59, %60, %61, %62 in 0 : vector<1x12x8xf32>, vector<1x12x8xf32>, vector<1x12x8xf32>, vector<1x12x8xf32> -> vector<4x12x8xf32>
    %64 = arith.truncf %63 : vector<4x12x8xf32> to vector<4x12x8xbf16>
    %65 = vector.extract_strided_slice %44 {offsets = [0, 0], sizes = [12, 8], strides = [1, 1]} : vector<12x32xf32> to vector<12x8xf32>
    %66 = vector.extract_strided_slice %44 {offsets = [0, 8], sizes = [12, 8], strides = [1, 1]} : vector<12x32xf32> to vector<12x8xf32>
    %67 = vector.extract_strided_slice %44 {offsets = [0, 16], sizes = [12, 8], strides = [1, 1]} : vector<12x32xf32> to vector<12x8xf32>
    %68 = vector.extract_strided_slice %44 {offsets = [0, 24], sizes = [12, 8], strides = [1, 1]} : vector<12x32xf32> to vector<12x8xf32>
    %69 = vector.shape_cast %65 : vector<12x8xf32> to vector<1x12x8xf32>
    %70 = vector.shape_cast %66 : vector<12x8xf32> to vector<1x12x8xf32>
    %71 = vector.shape_cast %67 : vector<12x8xf32> to vector<1x12x8xf32>
    %72 = vector.shape_cast %68 : vector<12x8xf32> to vector<1x12x8xf32>
    %73 = tpu.concatenate %69, %70, %71, %72 in 0 : vector<1x12x8xf32>, vector<1x12x8xf32>, vector<1x12x8xf32>, vector<1x12x8xf32> -> vector<4x12x8xf32>
    %74 = arith.truncf %73 : vector<4x12x8xf32> to vector<4x12x8xbf16>
    "tpu.trace_start"() <{level = 10 : i32, message = "hqd,hkd->hqk"}> : () -> ()
    %cst_31 = arith.constant dense<0.000000e+00> : vector<4x8x12xf32>
    %75 = tpu.matmul %54, %64, %cst_31 {dimension_numbers = #tpu.dot_dimension_numbers<[2], [2], [1], [1], [0, 0, 0, 1, 1, 1], [0], [0]>} : vector<4x8x8xbf16>, vector<4x12x8xbf16>, vector<4x8x12xf32> -> vector<4x8x12xf32>
    "tpu.trace_stop"() : () -> ()
    %cst_32 = arith.constant 0.353553385 : f32
    %76 = vector.broadcast %cst_32 : f32 to vector<4x8x12xf32>
    %77 = arith.mulf %75, %76 : vector<4x8x12xf32>
    %78 = vector.broadcast %30 : vector<1x1x12xf32> to vector<4x8x12xf32>
    %79 = arith.addf %77, %78 : vector<4x8x12xf32>
    %cst_33 = arith.constant dense<0xFF800000> : vector<4x8xf32>
    %80 = vector.multi_reduction <maximumf>, %79, %cst_33 [2] : vector<4x8x12xf32> to vector<4x8xf32>
    %81 = vector.shape_cast %80 : vector<4x8xf32> to vector<4x8x1xf32>
    %82 = vector.broadcast %81 : vector<4x8x1xf32> to vector<4x8x12xf32>
    %83 = arith.subf %79, %82 : vector<4x8x12xf32>
    %84 = math.exp %83 : vector<4x8x12xf32>
    %cst_34 = arith.constant dense<0.000000e+00> : vector<4x8xf32>
    %85 = vector.multi_reduction <add>, %84, %cst_34 [2] : vector<4x8x12xf32> to vector<4x8xf32>
    %86 = vector.shape_cast %85 : vector<4x8xf32> to vector<4x8x1xf32>
    %87 = vector.broadcast %86 : vector<4x8x1xf32> to vector<4x8x12xf32>
    %88 = arith.divf %84, %87 : vector<4x8x12xf32>
    %89 = arith.truncf %88 : vector<4x8x12xf32> to vector<4x8x12xbf16>
    "tpu.trace_start"() <{level = 10 : i32, message = "hqk,hkd->hqd"}> : () -> ()
    %cst_35 = arith.constant dense<0.000000e+00> : vector<4x8x8xf32>
    %90 = tpu.matmul %89, %74, %cst_35 {dimension_numbers = #tpu.dot_dimension_numbers<[2], [1], [1], [2], [0, 0, 0, 1, 1, 2], [0], [0]>} : vector<4x8x12xbf16>, vector<4x12x8xbf16>, vector<4x8x8xf32> -> vector<4x8x8xf32>
    "tpu.trace_stop"() : () -> ()
    %91 = arith.truncf %90 : vector<4x8x8xf32> to vector<4x8x8xbf16>
    "tpu.trace_start"() <{level = 10 : i32, message = "hqd,hdo->hqo"}> : () -> ()
    %cst_36 = arith.constant dense<0.000000e+00> : vector<4x8x32xf32>
    %92 = tpu.matmul %91, %35, %cst_36 {dimension_numbers = #tpu.dot_dimension_numbers<[2], [1], [1], [2], [0, 0, 0, 1, 1, 2], [0], [0]>} : vector<4x8x8xbf16>, vector<4x8x32xbf16>, vector<4x8x32xf32> -> vector<4x8x32xf32>
    "tpu.trace_stop"() : () -> ()
    %93 = vector.extract_strided_slice %92 {offsets = [0, 0, 0], sizes = [1, 8, 32], strides = [1, 1, 1]} : vector<4x8x32xf32> to vector<1x8x32xf32>
    %94 = vector.shape_cast %93 : vector<1x8x32xf32> to vector<8x32xf32>
    %95 = vector.extract_strided_slice %92 {offsets = [1, 0, 0], sizes = [1, 8, 32], strides = [1, 1, 1]} : vector<4x8x32xf32> to vector<1x8x32xf32>
    %96 = vector.shape_cast %95 : vector<1x8x32xf32> to vector<8x32xf32>
    %97 = arith.addf %94, %96 : vector<8x32xf32>
    %98 = vector.extract_strided_slice %92 {offsets = [2, 0, 0], sizes = [1, 8, 32], strides = [1, 1, 1]} : vector<4x8x32xf32> to vector<1x8x32xf32>
    %99 = vector.shape_cast %98 : vector<1x8x32xf32> to vector<8x32xf32>
    %100 = arith.addf %97, %99 : vector<8x32xf32>
    %101 = vector.extract_strided_slice %92 {offsets = [3, 0, 0], sizes = [1, 8, 32], strides = [1, 1, 1]} : vector<4x8x32xf32> to vector<1x8x32xf32>
    %102 = vector.shape_cast %101 : vector<1x8x32xf32> to vector<8x32xf32>
    %103 = arith.addf %100, %102 : vector<8x32xf32>
    %104 = vector.broadcast %36 : vector<1x32xf32> to vector<8x32xf32>
    %105 = arith.addf %103, %104 : vector<8x32xf32>
    %106 = arith.addf %1, %105 : vector<8x32xf32>
    %c0_37 = arith.constant 0 : index
    %c0_38 = arith.constant 0 : index
    %107 = vector.load %arg12[%c0_37, %c0_38] : memref<1x32xf32, #tpu.memory_space<vmem>>, vector<1x32xf32>
    %c0_39 = arith.constant 0 : index
    %c0_40 = arith.constant 0 : index
    %108 = vector.load %arg13[%c0_39, %c0_40] : memref<1x32xf32, #tpu.memory_space<vmem>>, vector<1x32xf32>
    %cst_41 = arith.constant dense<0.000000e+00> : vector<8xf32>
    %109 = vector.multi_reduction <add>, %106, %cst_41 [1] : vector<8x32xf32> to vector<8xf32>
    %110 = vector.shape_cast %109 : vector<8xf32> to vector<8x1xf32>
    %cst_42 = arith.constant 3.200000e+01 : f32
    %111 = vector.broadcast %cst_42 : f32 to vector<8x1xf32>
    %112 = arith.divf %110, %111 : vector<8x1xf32>
    %113 = vector.broadcast %112 : vector<8x1xf32> to vector<8x32xf32>
    %114 = arith.subf %106, %113 : vector<8x32xf32>
    %115 = arith.mulf %114, %114 : vector<8x32xf32>
    %cst_43 = arith.constant dense<0.000000e+00> : vector<8xf32>
    %116 = vector.multi_reduction <add>, %115, %cst_43 [1] : vector<8x32xf32> to vector<8xf32>
    %117 = vector.shape_cast %116 : vector<8xf32> to vector<8x1xf32>
    %cst_44 = arith.constant 3.200000e+01 : f32
    %118 = vector.broadcast %cst_44 : f32 to vector<8x1xf32>
    %119 = arith.divf %117, %118 : vector<8x1xf32>
    %120 = vector.broadcast %112 : vector<8x1xf32> to vector<8x32xf32>
    %121 = arith.subf %106, %120 : vector<8x32xf32>
    %cst_45 = arith.constant 9.99999974E-6 : f32
    %122 = vector.broadcast %cst_45 : f32 to vector<8x1xf32>
    %123 = arith.addf %119, %122 : vector<8x1xf32>
    %124 = math.rsqrt %123 : vector<8x1xf32>
    %125 = vector.broadcast %124 : vector<8x1xf32> to vector<8x32xf32>
    %126 = arith.mulf %121, %125 : vector<8x32xf32>
    %127 = vector.broadcast %107 : vector<1x32xf32> to vector<8x32xf32>
    %128 = arith.mulf %126, %127 : vector<8x32xf32>
    %129 = vector.broadcast %108 : vector<1x32xf32> to vector<8x32xf32>
    %130 = arith.addf %128, %129 : vector<8x32xf32>
    %131 = arith.truncf %130 : vector<8x32xf32> to vector<8x32xbf16>
    %c0_46 = arith.constant 0 : index
    %c0_47 = arith.constant 0 : index
    %132 = vector.load %arg14[%c0_46, %c0_47] : memref<32x64xbf16, #tpu.memory_space<vmem>>, vector<32x64xbf16>
    %cst_48 = arith.constant dense<0.000000e+00> : vector<8x64xf32>
    %133 = tpu.matmul %131, %132, %cst_48 {dimension_numbers = #tpu.dot_dimension_numbers<[1], [0], [0], [1], [0, 0, 1, 1], [], []>} : vector<8x32xbf16>, vector<32x64xbf16>, vector<8x64xf32> -> vector<8x64xf32>
    %c0_49 = arith.constant 0 : index
    %c0_50 = arith.constant 0 : index
    %134 = vector.load %arg15[%c0_49, %c0_50] : memref<1x64xf32, #tpu.memory_space<vmem>>, vector<1x64xf32>
    %135 = vector.broadcast %134 : vector<1x64xf32> to vector<8x64xf32>
    %136 = arith.addf %133, %135 : vector<8x64xf32>
    %cst_51 = arith.constant 0.000000e+00 : f32
    %137 = vector.broadcast %cst_51 : f32 to vector<8x64xf32>
    %138 = arith.maximumf %136, %137 : vector<8x64xf32>
    %139 = arith.truncf %138 : vector<8x64xf32> to vector<8x64xbf16>
    %c0_52 = arith.constant 0 : index
    %c0_53 = arith.constant 0 : index
    %140 = vector.load %arg16[%c0_52, %c0_53] : memref<64x32xbf16, #tpu.memory_space<vmem>>, vector<64x32xbf16>
    %cst_54 = arith.constant dense<0.000000e+00> : vector<8x32xf32>
    %141 = tpu.matmul %139, %140, %cst_54 {dimension_numbers = #tpu.dot_dimension_numbers<[1], [0], [0], [1], [0, 0, 1, 1], [], []>} : vector<8x64xbf16>, vector<64x32xbf16>, vector<8x32xf32> -> vector<8x32xf32>
    %c0_55 = arith.constant 0 : index
    %c0_56 = arith.constant 0 : index
    %142 = vector.load %arg17[%c0_55, %c0_56] : memref<1x32xf32, #tpu.memory_space<vmem>>, vector<1x32xf32>
    %143 = vector.broadcast %142 : vector<1x32xf32> to vector<8x32xf32>
    %144 = arith.addf %141, %143 : vector<8x32xf32>
    %145 = arith.addf %106, %144 : vector<8x32xf32>
    %c0_57 = arith.constant 0 : index
    %c0_58 = arith.constant 0 : index
    %c0_59 = arith.constant 0 : index
    %146 = vector.load %arg18[%c0_57, %c0_58, %c0_59] : memref<1x8x32xf32, #tpu.memory_space<vmem>>, vector<1x8x32xf32>
    %147 = vector.shape_cast %146 : vector<1x8x32xf32> to vector<8x32xf32>
    %148 = vector.shape_cast %145 : vector<8x32xf32> to vector<1x8x32xf32>
    tpu.vector_store %arg18[%c0_57, %c0_58, %c0_59], %148 {strides = array<i32>} : memref<1x8x32xf32, #tpu.memory_space<vmem>>, vector<1x8x32xf32>,
    return
  }
  func.func @transform_0(%arg0: i32) -> (i32, i32, i32) {
    %c0_i32 = arith.constant 0 : i32
    %c0_i32_0 = arith.constant 0 : i32
    %c0_i32_1 = arith.constant 0 : i32
    return %arg0, %c0_i32, %c0_i32_0 : i32, i32, i32
  }
  func.func @transform_1(%arg0: i32) -> (i32, i32, i32) {
    %c0_i32 = arith.constant 0 : i32
    %c0_i32_0 = arith.constant 0 : i32
    %c0_i32_1 = arith.constant 0 : i32
    return %arg0, %c0_i32, %c0_i32_0 : i32, i32, i32
  }
  func.func @transform_2(%arg0: i32) -> (i32, i32, i32) {
    %c0_i32 = arith.constant 0 : i32
    %c0_i32_0 = arith.constant 0 : i32
    %c0_i32_1 = arith.constant 0 : i32
    return %arg0, %c0_i32, %c0_i32_0 : i32, i32, i32
  }
  func.func @transform_3(%arg0: i32) -> (i32, i32) {
    %c0_i32 = arith.constant 0 : i32
    %c0_i32_0 = arith.constant 0 : i32
    %c0_i32_1 = arith.constant 0 : i32
    return %c0_i32, %c0_i32_0 : i32, i32
  }
  func.func @transform_4(%arg0: i32) -> (i32, i32) {
    %c0_i32 = arith.constant 0 : i32
    %c0_i32_0 = arith.constant 0 : i32
    %c0_i32_1 = arith.constant 0 : i32
    return %c0_i32, %c0_i32_0 : i32, i32
  }
  func.func @transform_5(%arg0: i32) -> (i32, i32) {
    %c0_i32 = arith.constant 0 : i32
    %c0_i32_0 = arith.constant 0 : i32
    %c0_i32_1 = arith.constant 0 : i32
    return %c0_i32, %c0_i32_0 : i32, i32
  }
  func.func @transform_6(%arg0: i32) -> (i32, i32) {
    %c0_i32 = arith.constant 0 : i32
    %c0_i32_0 = arith.constant 0 : i32
    %c0_i32_1 = arith.constant 0 : i32
    return %c0_i32, %c0_i32_0 : i32, i32
  }
  func.func @transform_7(%arg0: i32) -> (i32, i32) {
    %c0_i32 = arith.constant 0 : i32
    %c0_i32_0 = arith.constant 0 : i32
    %c0_i32_1 = arith.constant 0 : i32
    return %c0_i32, %c0_i32_0 : i32, i32
  }
  func.func @transform_8(%arg0: i32) -> (i32, i32) {
    %c0_i32 = arith.constant 0 : i32
    %c0_i32_0 = arith.constant 0 : i32
    %c0_i32_1 = arith.constant 0 : i32
    return %c0_i32, %c0_i32_0 : i32, i32
  }
  func.func @transform_9(%arg0: i32) -> (i32, i32, i32) {
    %c0_i32 = arith.constant 0 : i32
    %c0_i32_0 = arith.constant 0 : i32
    %c0_i32_1 = arith.constant 0 : i32
    %c0_i32_2 = arith.constant 0 : i32
    return %c0_i32, %c0_i32_0, %c0_i32_1 : i32, i32, i32
  }
  func.func @transform_10(%arg0: i32) -> (i32, i32) {
    %c0_i32 = arith.constant 0 : i32
    %c0_i32_0 = arith.constant 0 : i32
    %c0_i32_1 = arith.constant 0 : i32
    return %c0_i32, %c0_i32_0 : i32, i32
  }
  func.func @transform_11(%arg0: i32) -> (i32, i32) {
    %c0_i32 = arith.constant 0 : i32
    %c0_i32_0 = arith.constant 0 : i32
    %c0_i32_1 = arith.constant 0 : i32
    return %c0_i32, %c0_i32_0 : i32, i32
  }
  func.func @transform_12(%arg0: i32) -> (i32, i32) {
    %c0_i32 = arith.constant 0 : i32
    %c0_i32_0 = arith.constant 0 : i32
    %c0_i32_1 = arith.constant 0 : i32
    return %c0_i32, %c0_i32_0 : i32, i32
  }
  func.func @transform_13(%arg0: i32) -> (i32, i32) {
    %c0_i32 = arith.constant 0 : i32
    %c0_i32_0 = arith.constant 0 : i32
    %c0_i32_1 = arith.constant 0 : i32
    return %c0_i32, %c0_i32_0 : i32, i32
  }
  func.func @transform_14(%arg0: i32) -> (i32, i32) {
    %c0_i32 = arith.constant 0 : i32
    %c0_i32_0 = arith.constant 0 : i32
    %c0_i32_1 = arith.constant 0 : i32
    return %c0_i32, %c0_i32_0 : i32, i32
  }
  func.func @transform_15(%arg0: i32) -> (i32, i32) {
    %c0_i32 = arith.constant 0 : i32
    %c0_i32_0 = arith.constant 0 : i32
    %c0_i32_1 = arith.constant 0 : i32
    return %c0_i32, %c0_i32_0 : i32, i32
  }
  func.func @transform_16(%arg0: i32) -> (i32, i32) {
    %c0_i32 = arith.constant 0 : i32
    %c0_i32_0 = arith.constant 0 : i32
    %c0_i32_1 = arith.constant 0 : i32
    return %c0_i32, %c0_i32_0 : i32, i32
  }
  func.func @transform_17(%arg0: i32) -> (i32, i32, i32) {
    %c0_i32 = arith.constant 0 : i32
    %c0_i32_0 = arith.constant 0 : i32
    %c0_i32_1 = arith.constant 0 : i32
    return %arg0, %c0_i32, %c0_i32_0 : i32, i32, i32
  }
}

module attributes {stable_mosaic.version = 11 : i64} {
  func.func @_cross_attn_ffn_kernel(%arg0: i32, %arg1: memref<1x8x32xf32, #tpu.memory_space<vmem>>, %arg2: memref<1x12x32xf32, #tpu.memory_space<vmem>>, %arg3: memref<1x1x12xf32, #tpu.memory_space<vmem>>, %arg4: memref<1x32xf32, #tpu.memory_space<vmem>>, %arg5: memref<1x32xf32, #tpu.memory_space<vmem>>, %arg6: memref<32x32xbf16, #tpu.memory_space<vmem>>, %arg7: memref<1x32xf32, #tpu.memory_space<vmem>>, %arg8: memref<32x64xbf16, #tpu.memory_space<vmem>>, %arg9: memref<1x64xf32, #tpu.memory_space<vmem>>, %arg10: memref<4x8x32xbf16, #tpu.memory_space<vmem>>, %arg11: memref<1x32xf32, #tpu.memory_space<vmem>>, %arg12: memref<1x32xf32, #tpu.memory_space<vmem>>, %arg13: memref<1x32xf32, #tpu.memory_space<vmem>>, %arg14: memref<32x64xbf16, #tpu.memory_space<vmem>>, %arg15: memref<1x64xf32, #tpu.memory_space<vmem>>, %arg16: memref<64x32xbf16, #tpu.memory_space<vmem>>, %arg17: memref<1x32xf32, #tpu.memory_space<vmem>>, %arg18: memref<1x8x32xf32, #tpu.memory_space<vmem>>) attributes {dimension_semantics = [#tpu.dimension_semantics<parallel>], iteration_bounds = array<i64: 2>, scalar_prefetch = 0 : i64, scratch_operands = 0 : i64, tpu.core_type = #tpu.core_type<tc>, window_params = [{transform_indices = @transform_0, window_bounds = array<i64: 1, 8, 32>}, {transform_indices = @transform_1, window_bounds = array<i64: 1, 12, 32>}, {transform_indices = @transform_2, window_bounds = array<i64: 1, 1, 12>}, {pipeline_mode = #tpu.pipeline_mode<synchronous>, transform_indices = @transform_3, window_bounds = array<i64: 1, 32>}, {pipeline_mode = #tpu.pipeline_mode<synchronous>, transform_indices = @transform_4, window_bounds = array<i64: 1, 32>}, {pipeline_mode = #tpu.pipeline_mode<synchronous>, transform_indices = @transform_5, window_bounds = array<i64: 32, 32>}, {pipeline_mode = #tpu.pipeline_mode<synchronous>, transform_indices = @transform_6, window_bounds = array<i64: 1, 32>}, {pipeline_mode = #tpu.pipeline_mode<synchronous>, transform_indices = @transform_7, window_bounds = array<i64: 32, 64>}, {pipeline_mode = #tpu.pipeline_mode<synchronous>, transform_indices = @transform_8, window_bounds = array<i64: 1, 64>}, {pipeline_mode = #tpu.pipeline_mode<synchronous>, transform_indices = @transform_9, window_bounds = array<i64: 4, 8, 32>}, {pipeline_mode = #tpu.pipeline_mode<synchronous>, transform_indices = @transform_10, window_bounds = array<i64: 1, 32>}, {pipeline_mode = #tpu.pipeline_mode<synchronous>, transform_indices = @transform_11, window_bounds = array<i64: 1, 32>}, {pipeline_mode = #tpu.pipeline_mode<synchronous>, transform_indices = @transform_12, window_bounds = array<i64: 1, 32>}, {pipeline_mode = #tpu.pipeline_mode<synchronous>, transform_indices = @transform_13, window_bounds = array<i64: 32, 64>}, {pipeline_mode = #tpu.pipeline_mode<synchronous>, transform_indices = @transform_14, window_bounds = array<i64: 1, 64>}, {pipeline_mode = #tpu.pipeline_mode<synchronous>, transform_indices = @transform_15, window_bounds = array<i64: 64, 32>}, {pipeline_mode = #tpu.pipeline_mode<synchronous>, transform_indices = @transform_16, window_bounds = array<i64: 1, 32>}, {transform_indices = @transform_17, window_bounds = array<i64: 1, 8, 32>}]} {
    %c0 = arith.constant 0 : index
    %c0_0 = arith.constant 0 : index
    %c0_1 = arith.constant 0 : index
    %0 = vector.load %arg1[%c0, %c0_0, %c0_1] : memref<1x8x32xf32, #tpu.memory_space<vmem>>, vector<1x8x32xf32>
    %1 = vector.shape_cast %0 : vector<1x8x32xf32> to vector<8x32xf32>
    %c0_2 = arith.constant 0 : index
    %c0_3 = arith.constant 0 : index
    %2 = vector.load %arg4[%c0_2, %c0_3] : memref<1x32xf32, #tpu.memory_space<vmem>>, vector<1x32xf32>
    %c0_4 = arith.constant 0 : index
    %c0_5 = arith.constant 0 : index
    %3 = vector.load %arg5[%c0_4, %c0_5] : memref<1x32xf32, #tpu.memory_space<vmem>>, vector<1x32xf32>
    %cst = arith.constant dense<0.000000e+00> : vector<8xf32>
    %4 = vector.multi_reduction <add>, %1, %cst [1] : vector<8x32xf32> to vector<8xf32>
    %5 = vector.shape_cast %4 : vector<8xf32> to vector<8x1xf32>
    %cst_6 = arith.constant 3.200000e+01 : f32
    %6 = vector.broadcast %cst_6 : f32 to vector<8x1xf32>
    %7 = arith.divf %5, %6 : vector<8x1xf32>
    %8 = vector.broadcast %7 : vector<8x1xf32> to vector<8x32xf32>
    %9 = arith.subf %1, %8 : vector<8x32xf32>
    %10 = arith.mulf %9, %9 : vector<8x32xf32>
    %cst_7 = arith.constant dense<0.000000e+00> : vector<8xf32>
    %11 = vector.multi_reduction <add>, %10, %cst_7 [1] : vector<8x32xf32> to vector<8xf32>
    %12 = vector.shape_cast %11 : vector<8xf32> to vector<8x1xf32>
    %cst_8 = arith.constant 3.200000e+01 : f32
    %13 = vector.broadcast %cst_8 : f32 to vector<8x1xf32>
    %14 = arith.divf %12, %13 : vector<8x1xf32>
    %15 = vector.broadcast %7 : vector<8x1xf32> to vector<8x32xf32>
    %16 = arith.subf %1, %15 : vector<8x32xf32>
    %cst_9 = arith.constant 9.99999974E-6 : f32
    %17 = vector.broadcast %cst_9 : f32 to vector<8x1xf32>
    %18 = arith.addf %14, %17 : vector<8x1xf32>
    %19 = math.rsqrt %18 : vector<8x1xf32>
    %20 = vector.broadcast %19 : vector<8x1xf32> to vector<8x32xf32>
    %21 = arith.mulf %16, %20 : vector<8x32xf32>
    %22 = vector.broadcast %2 : vector<1x32xf32> to vector<8x32xf32>
    %23 = arith.mulf %21, %22 : vector<8x32xf32>
    %24 = vector.broadcast %3 : vector<1x32xf32> to vector<8x32xf32>
    %25 = arith.addf %23, %24 : vector<8x32xf32>
    %26 = arith.truncf %25 : vector<8x32xf32> to vector<8x32xbf16>
    %c0_10 = arith.constant 0 : index
    %c0_11 = arith.constant 0 : index
    %c0_12 = arith.constant 0 : index
    %27 = vector.load %arg2[%c0_10, %c0_11, %c0_12] : memref<1x12x32xf32, #tpu.memory_space<vmem>>, vector<1x12x32xf32>
    %28 = vector.shape_cast %27 : vector<1x12x32xf32> to vector<12x32xf32>
    %29 = arith.truncf %28 : vector<12x32xf32> to vector<12x32xbf16>
    %c0_13 = arith.constant 0 : index
    %c0_14 = arith.constant 0 : index
    %c0_15 = arith.constant 0 : index
    %30 = vector.load %arg3[%c0_13, %c0_14, %c0_15] : memref<1x1x12xf32, #tpu.memory_space<vmem>>, vector<1x1x12xf32>
    %c0_16 = arith.constant 0 : index
    %c0_17 = arith.constant 0 : index
    %31 = vector.load %arg6[%c0_16, %c0_17] : memref<32x32xbf16, #tpu.memory_space<vmem>>, vector<32x32xbf16>
    %c0_18 = arith.constant 0 : index
    %c0_19 = arith.constant 0 : index
    %32 = vector.load %arg7[%c0_18, %c0_19] : memref<1x32xf32, #tpu.memory_space<vmem>>, vector<1x32xf32>
    %c0_20 = arith.constant 0 : index
    %c0_21 = arith.constant 0 : index
    %33 = vector.load %arg8[%c0_20, %c0_21] : memref<32x64xbf16, #tpu.memory_space<vmem>>, vector<32x64xbf16>
    %c0_22 = arith.constant 0 : index
    %c0_23 = arith.constant 0 : index
    %34 = vector.load %arg9[%c0_22, %c0_23] : memref<1x64xf32, #tpu.memory_space<vmem>>, vector<1x64xf32>
    %c0_24 = arith.constant 0 : index
    %c0_25 = arith.constant 0 : index
    %c0_26 = arith.constant 0 : index
    %35 = vector.load %arg10[%c0_24, %c0_25, %c0_26] : memref<4x8x32xbf16, #tpu.memory_space<vmem>>, vector<4x8x32xbf16>
    %c0_27 = arith.constant 0 : index
    %c0_28 = arith.constant 0 : index
    %36 = vector.load %arg11[%c0_27, %c0_28] : memref<1x32xf32, #tpu.memory_space<vmem>>, vector<1x32xf32>
    %cst_29 = arith.constant dense<0.000000e+00> : vector<8x32xf32>
    %37 = tpu.matmul %26, %31, %cst_29 {dimension_numbers = #tpu.dot_dimension_numbers<[1], [0], [0], [1], [0, 0, 1, 1], [], []>} : vector<8x32xbf16>, vector<32x32xbf16>, vector<8x32xf32> -> vector<8x32xf32>
    %38 = vector.broadcast %32 : vector<1x32xf32> to vector<8x32xf32>
    %39 = arith.addf %37, %38 : vector<8x32xf32>
    %cst_30 = arith.constant dense<0.000000e+00> : vector<12x64xf32>
    %40 = tpu.matmul %29, %33, %cst_30 {dimension_numbers = #tpu.dot_dimension_numbers<[1], [0], [0], [1], [0, 0, 1, 1], [], []>} : vector<12x32xbf16>, vector<32x64xbf16>, vector<12x64xf32> -> vector<12x64xf32>
    %41 = vector.broadcast %34 : vector<1x64xf32> to vector<12x64xf32>
    %42 = arith.addf %40, %41 : vector<12x64xf32>
    %43 = vector.extract_strided_slice %42 {offsets = [0, 0], sizes = [12, 32], strides = [1, 1]} : vector<12x64xf32> to vector<12x32xf32>
    %44 = vector.extract_strided_slice %42 {offsets = [0, 32], sizes = [12, 32], strides = [1, 1]} : vector<12x64xf32> to vector<12x32xf32>
    %45 = vector.extract_strided_slice %39 {offsets = [0, 0], sizes = [8, 8], strides = [1, 1]} : vector<8x32xf32> to vector<8x8xf32>
    %46 = vector.extract_strided_slice %39 {offsets = [0, 8], sizes = [8, 8], strides = [1, 1]} : vector<8x32xf32> to vector<8x8xf32>
    %47 = vector.extract_strided_slice %39 {offsets = [0, 16], sizes = [8, 8], strides = [1, 1]} : vector<8x32xf32> to vector<8x8xf32>
    %48 = vector.extract_strided_slice %39 {offsets = [0, 24], sizes = [8, 8], strides = [1, 1]} : vector<8x32xf32> to vector<8x8xf32>
    %49 = vector.shape_cast %45 : vector<8x8xf32> to vector<1x8x8xf32>
    %50 = vector.shape_cast %46 : vector<8x8xf32> to vector<1x8x8xf32>
    %51 = vector.shape_cast %47 : vector<8x8xf32> to vector<1x8x8xf32>
    %52 = vector.shape_cast %48 : vector<8x8xf32> to vector<1x8x8xf32>
    %53 = tpu.concatenate %49, %50, %51, %52 in 0 : vector<1x8x8xf32>, vector<1x8x8xf32>, vector<1x8x8xf32>, vector<1x8x8xf32> -> vector<4x8x8xf32>
    %54 = arith.truncf %53 : vector<4x8x8xf32> to vector<4x8x8xbf16>
    %55 = vector.extract_strided_slice %43 {offsets = [0, 0], sizes = [12, 8], strides = [1, 1]} : vector<12x32xf32> to vector<12x8xf32>
    %56 = vector.extract_strided_slice %43 {offsets = [0, 8], sizes = [12, 8], strides = [1, 1]} : vector<12x32xf32> to vector<12x8xf32>
    %57 = vector.extract_strided_slice %43 {offsets = [0, 16], sizes = [12, 8], strides = [1, 1]} : vector<12x32xf32> to vector<12x8xf32>
    %58 = vector.extract_strided_slice %43 {offsets = [0, 24], sizes = [12, 8], strides = [1, 1]} : vector<12x32xf32> to vector<12x8xf32>
    %59 = vector.shape_cast %55 : vector<12x8xf32> to vector<1x12x8xf32>
    %60 = vector.shape_cast %56 : vector<12x8xf32> to vector<1x12x8xf32>
    %61 = vector.shape_cast %57 : vector<12x8xf32> to vector<1x12x8xf32>
    %62 = vector.shape_cast %58 : vector<12x8xf32> to vector<1x12x8xf32>
    %63 = tpu.concatenate %59, %60, %61, %62 in 0 : vector<1x12x8xf32>, vector<1x12x8xf32>, vector<1x12x8xf32>, vector<1x12x8xf32> -> vector<4x12x8xf32>
    %64 = arith.truncf %63 : vector<4x12x8xf32> to vector<4x12x8xbf16>
    %65 = vector.extract_strided_slice %44 {offsets = [0, 0], sizes = [12, 8], strides = [1, 1]} : vector<12x32xf32> to vector<12x8xf32>
    %66 = vector.extract_strided_slice %44 {offsets = [0, 8], sizes = [12, 8], strides = [1, 1]} : vector<12x32xf32> to vector<12x8xf32>
    %67 = vector.extract_strided_slice %44 {offsets = [0, 16], sizes = [12, 8], strides = [1, 1]} : vector<12x32xf32> to vector<12x8xf32>
    %68 = vector.extract_strided_slice %44 {offsets = [0, 24], sizes = [12, 8], strides = [1, 1]} : vector<12x32xf32> to vector<12x8xf32>
    %69 = vector.shape_cast %65 : vector<12x8xf32> to vector<1x12x8xf32>
    %70 = vector.shape_cast %66 : vector<12x8xf32> to vector<1x12x8xf32>
    %71 = vector.shape_cast %67 : vector<12x8xf32> to vector<1x12x8xf32>
    %72 = vector.shape_cast %68 : vector<12x8xf32> to vector<1x12x8xf32>
    %73 = tpu.concatenate %69, %70, %71, %72 in 0 : vector<1x12x8xf32>, vector<1x12x8xf32>, vector<1x12x8xf32>, vector<1x12x8xf32> -> vector<4x12x8xf32>
    %74 = arith.truncf %73 : vector<4x12x8xf32> to vector<4x12x8xbf16>
    "tpu.trace_start"() <{level = 10 : i32, message = "hqd,hkd->hqk"}> : () -> ()
    %cst_31 = arith.constant dense<0.000000e+00> : vector<4x8x12xf32>
    %75 = tpu.matmul %54, %64, %cst_31 {dimension_numbers = #tpu.dot_dimension_numbers<[2], [2], [1], [1], [0, 0, 0, 1, 1, 1], [0], [0]>} : vector<4x8x8xbf16>, vector<4x12x8xbf16>, vector<4x8x12xf32> -> vector<4x8x12xf32>
    "tpu.trace_stop"() : () -> ()
    %cst_32 = arith.constant 0.353553385 : f32
    %76 = vector.broadcast %cst_32 : f32 to vector<4x8x12xf32>
    %77 = arith.mulf %75, %76 : vector<4x8x12xf32>
    %78 = vector.broadcast %30 : vector<1x1x12xf32> to vector<4x8x12xf32>
    %79 = arith.addf %77, %78 : vector<4x8x12xf32>
    %cst_33 = arith.constant dense<0xFF800000> : vector<4x8xf32>
    %80 = vector.multi_reduction <maximumf>, %79, %cst_33 [2] : vector<4x8x12xf32> to vector<4x8xf32>
    %81 = vector.shape_cast %80 : vector<4x8xf32> to vector<4x8x1xf32>
    %82 = vector.broadcast %81 : vector<4x8x1xf32> to vector<4x8x12xf32>
    %83 = arith.subf %79, %82 : vector<4x8x12xf32>
    %84 = math.exp %83 : vector<4x8x12xf32>
    %cst_34 = arith.constant dense<0.000000e+00> : vector<4x8xf32>
    %85 = vector.multi_reduction <add>, %84, %cst_34 [2] : vector<4x8x12xf32> to vector<4x8xf32>
    %86 = vector.shape_cast %85 : vector<4x8xf32> to vector<4x8x1xf32>
    %87 = vector.broadcast %86 : vector<4x8x1xf32> to vector<4x8x12xf32>
    %88 = arith.divf %84, %87 : vector<4x8x12xf32>
    %89 = arith.truncf %88 : vector<4x8x12xf32> to vector<4x8x12xbf16>
    "tpu.trace_start"() <{level = 10 : i32, message = "hqk,hkd->hqd"}> : () -> ()
    %cst_35 = arith.constant dense<0.000000e+00> : vector<4x8x8xf32>
    %90 = tpu.matmul %89, %74, %cst_35 {dimension_numbers = #tpu.dot_dimension_numbers<[2], [1], [1], [2], [0, 0, 0, 1, 1, 2], [0], [0]>} : vector<4x8x12xbf16>, vector<4x12x8xbf16>, vector<4x8x8xf32> -> vector<4x8x8xf32>
    "tpu.trace_stop"() : () -> ()
    %91 = arith.truncf %90 : vector<4x8x8xf32> to vector<4x8x8xbf16>
    "tpu.trace_start"() <{level = 10 : i32, message = "hqd,hdo->hqo"}> : () -> ()
    %cst_36 = arith.constant dense<0.000000e+00> : vector<4x8x32xf32>
    %92 = tpu.matmul %91, %35, %cst_36 {dimension_numbers = #tpu.dot_dimension_numbers<[2], [1], [1], [2], [0, 0, 0, 1, 1, 2], [0], [0]>} : vector<4x8x8xbf16>, vector<4x8x32xbf16>, vector<4x8x32xf32> -> vector<4x8x32xf32>
    "tpu.trace_stop"() : () -> ()
    %93 = vector.extract_strided_slice %92 {offsets = [0, 0, 0], sizes = [1, 8, 32], strides = [1, 1, 1]} : vector<4x8x32xf32> to vector<1x8x32xf32>
    %94 = vector.shape_cast %93 : vector<1x8x32xf32> to vector<8x32xf32>
    %95 = vector.extract_strided_slice %92 {offsets = [1, 0, 0], sizes = [1, 8, 32], strides = [1, 1, 1]} : vector<4x8x32xf32> to vector<1x8x32xf32>
    %96 = vector.shape_cast %95 : vector<1x8x32xf32> to vector<8x32xf32>
    %97 = arith.addf %94, %96 : vector<8x32xf32>
    %98 = vector.extract_strided_slice %92 {offsets = [2, 0, 0], sizes = [1, 8, 32], strides = [1, 1, 1]} : vector<4x8x32xf32> to vector<1x8x32xf32>
    %99 = vector.shape_cast %98 : vector<1x8x32xf32> to vector<8x32xf32>
    %100 = arith.addf %97, %99 : vector<8x32xf32>
    %101 = vector.extract_strided_slice %92 {offsets = [3, 0, 0], sizes = [1, 8, 32], strides = [1, 1, 1]} : vector<4x8x32xf32> to vector<1x8x32xf32>
    %102 = vector.shape_cast %101 : vector<1x8x32xf32> to vector<8x32xf32>
    %103 = arith.addf %100, %102 : vector<8x32xf32>
    %104 = vector.broadcast %36 : vector<1x32xf32> to vector<8x32xf32>
    %105 = arith.addf %103, %104 : vector<8x32xf32>
    %106 = arith.addf %1, %105 : vector<8x32xf32>
    %c0_37 = arith.constant 0 : index
    %c0_38 = arith.constant 0 : index
    %107 = vector.load %arg12[%c0_37, %c0_38] : memref<1x32xf32, #tpu.memory_space<vmem>>, vector<1x32xf32>
    %c0_39 = arith.constant 0 : index
    %c0_40 = arith.constant 0 : index
    %108 = vector.load %arg13[%c0_39, %c0_40] : memref<1x32xf32, #tpu.memory_space<vmem>>, vector<1x32xf32>
    %cst_41 = arith.constant dense<0.000000e+00> : vector<8xf32>
    %109 = vector.multi_reduction <add>, %106, %cst_41 [1] : vector<8x32xf32> to vector<8xf32>
    %110 = vector.shape_cast %109 : vector<8xf32> to vector<8x1xf32>
    %cst_42 = arith.constant 3.200000e+01 : f32
    %111 = vector.broadcast %cst_42 : f32 to vector<8x1xf32>
    %112 = arith.divf %110, %111 : vector<8x1xf32>
    %113 = vector.broadcast %112 : vector<8x1xf32> to vector<8x32xf32>
    %114 = arith.subf %106, %113 : vector<8x32xf32>
    %115 = arith.mulf %114, %114 : vector<8x32xf32>
    %cst_43 = arith.constant dense<0.000000e+00> : vector<8xf32>
    %116 = vector.multi_reduction <add>, %115, %cst_43 [1] : vector<8x32xf32> to vector<8xf32>
    %117 = vector.shape_cast %116 : vector<8xf32> to vector<8x1xf32>
    %cst_44 = arith.constant 3.200000e+01 : f32
    %118 = vector.broadcast %cst_44 : f32 to vector<8x1xf32>
    %119 = arith.divf %117, %118 : vector<8x1xf32>
    %120 = vector.broadcast %112 : vector<8x1xf32> to vector<8x32xf32>
    %121 = arith.subf %106, %120 : vector<8x32xf32>
    %cst_45 = arith.constant 9.99999974E-6 : f32
    %122 = vector.broadcast %cst_45 : f32 to vector<8x1xf32>
    %123 = arith.addf %119, %122 : vector<8x1xf32>
    %124 = math.rsqrt %123 : vector<8x1xf32>
    %125 = vector.broadcast %124 : vector<8x1xf32> to vector<8x32xf32>
    %126 = arith.mulf %121, %125 : vector<8x32xf32>
    %127 = vector.broadcast %107 : vector<1x32xf32> to vector<8x32xf32>
    %128 = arith.mulf %126, %127 : vector<8x32xf32>
    %129 = vector.broadcast %108 : vector<1x32xf32> to vector<8x32xf32>
    %130 = arith.addf %128, %129 : vector<8x32xf32>
    %131 = arith.truncf %130 : vector<8x32xf32> to vector<8x32xbf16>
    %c0_46 = arith.constant 0 : index
    %c0_47 = arith.constant 0 : index
    %132 = vector.load %arg14[%c0_46, %c0_47] : memref<32x64xbf16, #tpu.memory_space<vmem>>, vector<32x64xbf16>
    %cst_48 = arith.constant dense<0.000000e+00> : vector<8x64xf32>
    %133 = tpu.matmul %131, %132, %cst_48 {dimension_numbers = #tpu.dot_dimension_numbers<[1], [0], [0], [1], [0, 0, 1, 1], [], []>} : vector<8x32xbf16>, vector<32x64xbf16>, vector<8x64xf32> -> vector<8x64xf32>
    %c0_49 = arith.constant 0 : index
    %c0_50 = arith.constant 0 : index
    %134 = vector.load %arg15[%c0_49, %c0_50] : memref<1x64xf32, #tpu.memory_space<vmem>>, vector<1x64xf32>
    %135 = vector.broadcast %134 : vector<1x64xf32> to vector<8x64xf32>
    %136 = arith.addf %133, %135 : vector<8x64xf32>
    %cst_51 = arith.constant 0.000000e+00 : f32
    %137 = vector.broadcast %cst_51 : f32 to vector<8x64xf32>
    %138 = arith.maximumf %136, %137 : vector<8x64xf32>
    %139 = arith.truncf %138 : vector<8x64xf32> to vector<8x64xbf16>
    %c0_52 = arith.constant 0 : index
    %c0_53 = arith.constant 0 : index
    %140 = vector.load %arg16[%c0_52, %c0_53] : memref<64x32xbf16, #tpu.memory_space<vmem>>, vector<64x32xbf16>
    %cst_54 = arith.constant dense<0.000000e+00> : vector<8x32xf32>
    %141 = tpu.matmul %139, %140, %cst_54 {dimension_numbers = #tpu.dot_dimension_numbers<[1], [0], [0], [1], [0, 0, 1, 1], [], []>} : vector<8x64xbf16>, vector<64x32xbf16>, vector<8x32xf32> -> vector<8x32xf32>
    %c0_55 = arith.constant 0 : index
    %c0_56 = arith.constant 0 : index
    %142 = vector.load %arg17[%c0_55, %c0_56] : memref<1x32xf32, #tpu.memory_space<vmem>>, vector<1x32xf32>
    %143 = vector.broadcast %142 : vector<1x32xf32> to vector<8x32xf32>
    %144 = arith.addf %141, %143 : vector<8x32xf32>
    %145 = arith.addf %106, %144 : vector<8x32xf32>
    %c0_57 = arith.constant 0 : index
    %c0_58 = arith.constant 0 : index
    %c0_59 = arith.constant 0 : index
    %146 = vector.load %arg18[%c0_57, %c0_58, %c0_59] : memref<1x8x32xf32, #tpu.memory_space<vmem>>, vector<1x8x32xf32>
    %147 = vector.shape_cast %146 : vector<1x8x32xf32> to vector<8x32xf32>
    %148 = vector.shape_cast %145 : vector<8x32xf32> to vector<1x8x32xf32>
    tpu.vector_store %arg18[%c0_57, %c0_58, %c0_59], %148 {strides = array<i32>} : memref<1x8x32xf32, #tpu.memory_space<vmem>>, vector<1x8x32xf32>,
    return
  }
  func.func @transform_0(%arg0: i32) -> (i32, i32, i32) {
    %c0_i32 = arith.constant 0 : i32
    %c0_i32_0 = arith.constant 0 : i32
    %c0_i32_1 = arith.constant 0 : i32
    return %arg0, %c0_i32, %c0_i32_0 : i32, i32, i32
  }
  func.func @transform_1(%arg0: i32) -> (i32, i32, i32) {
    %c0_i32 = arith.constant 0 : i32
    %c0_i32_0 = arith.constant 0 : i32
    %c0_i32_1 = arith.constant 0 : i32
    return %arg0, %c0_i32, %c0_i32_0 : i32, i32, i32
  }
  func.func @transform_2(%arg0: i32) -> (i32, i32, i32) {
    %c0_i32 = arith.constant 0 : i32
    %c0_i32_0 = arith.constant 0 : i32
    %c0_i32_1 = arith.constant 0 : i32
    return %arg0, %c0_i32, %c0_i32_0 : i32, i32, i32
  }
  func.func @transform_3(%arg0: i32) -> (i32, i32) {
    %c0_i32 = arith.constant 0 : i32
    %c0_i32_0 = arith.constant 0 : i32
    %c0_i32_1 = arith.constant 0 : i32
    return %c0_i32, %c0_i32_0 : i32, i32
  }
  func.func @transform_4(%arg0: i32) -> (i32, i32) {
    %c0_i32 = arith.constant 0 : i32
    %c0_i32_0 = arith.constant 0 : i32
    %c0_i32_1 = arith.constant 0 : i32
    return %c0_i32, %c0_i32_0 : i32, i32
  }
  func.func @transform_5(%arg0: i32) -> (i32, i32) {
    %c0_i32 = arith.constant 0 : i32
    %c0_i32_0 = arith.constant 0 : i32
    %c0_i32_1 = arith.constant 0 : i32
    return %c0_i32, %c0_i32_0 : i32, i32
  }
  func.func @transform_6(%arg0: i32) -> (i32, i32) {
    %c0_i32 = arith.constant 0 : i32
    %c0_i32_0 = arith.constant 0 : i32
    %c0_i32_1 = arith.constant 0 : i32
    return %c0_i32, %c0_i32_0 : i32, i32
  }
  func.func @transform_7(%arg0: i32) -> (i32, i32) {
    %c0_i32 = arith.constant 0 : i32
    %c0_i32_0 = arith.constant 0 : i32
    %c0_i32_1 = arith.constant 0 : i32
    return %c0_i32, %c0_i32_0 : i32, i32
  }
  func.func @transform_8(%arg0: i32) -> (i32, i32) {
    %c0_i32 = arith.constant 0 : i32
    %c0_i32_0 = arith.constant 0 : i32
    %c0_i32_1 = arith.constant 0 : i32
    return %c0_i32, %c0_i32_0 : i32, i32
  }
  func.func @transform_9(%arg0: i32) -> (i32, i32, i32) {
    %c0_i32 = arith.constant 0 : i32
    %c0_i32_0 = arith.constant 0 : i32
    %c0_i32_1 = arith.constant 0 : i32
    %c0_i32_2 = arith.constant 0 : i32
    return %c0_i32, %c0_i32_0, %c0_i32_1 : i32, i32, i32
  }
  func.func @transform_10(%arg0: i32) -> (i32, i32) {
    %c0_i32 = arith.constant 0 : i32
    %c0_i32_0 = arith.constant 0 : i32
    %c0_i32_1 = arith.constant 0 : i32
    return %c0_i32, %c0_i32_0 : i32, i32
  }
  func.func @transform_11(%arg0: i32) -> (i32, i32) {
    %c0_i32 = arith.constant 0 : i32
    %c0_i32_0 = arith.constant 0 : i32
    %c0_i32_1 = arith.constant 0 : i32
    return %c0_i32, %c0_i32_0 : i32, i32
  }
  func.func @transform_12(%arg0: i32) -> (i32, i32) {
    %c0_i32 = arith.constant 0 : i32
    %c0_i32_0 = arith.constant 0 : i32
    %c0_i32_1 = arith.constant 0 : i32
    return %c0_i32, %c0_i32_0 : i32, i32
  }
  func.func @transform_13(%arg0: i32) -> (i32, i32) {
    %c0_i32 = arith.constant 0 : i32
    %c0_i32_0 = arith.constant 0 : i32
    %c0_i32_1 = arith.constant 0 : i32
    return %c0_i32, %c0_i32_0 : i32, i32
  }
  func.func @transform_14(%arg0: i32) -> (i32, i32) {
    %c0_i32 = arith.constant 0 : i32
    %c0_i32_0 = arith.constant 0 : i32
    %c0_i32_1 = arith.constant 0 : i32
    return %c0_i32, %c0_i32_0 : i32, i32
  }
  func.func @transform_15(%arg0: i32) -> (i32, i32) {
    %c0_i32 = arith.constant 0 : i32
    %c0_i32_0 = arith.constant 0 : i32
    %c0_i32_1 = arith.constant 0 : i32
    return %c0_i32, %c0_i32_0 : i32, i32
  }
  func.func @transform_16(%arg0: i32) -> (i32, i32) {
    %c0_i32 = arith.constant 0 : i32
    %c0_i32_0 = arith.constant 0 : i32
    %c0_i32_1 = arith.constant 0 : i32
    return %c0_i32, %c0_i32_0 : i32, i32
  }
  func.func @transform_17(%arg0: i32) -> (i32, i32, i32) {
    %c0_i32 = arith.constant 0 : i32
    %c0_i32_0 = arith.constant 0 : i32
    %c0_i32_1 = arith.constant 0 : i32
    return %arg0, %c0_i32, %c0_i32_0 : i32, i32, i32
  }
}

</mosaic_0001>

<llo_original>
// kernel: _lambda_.9
$region0: #{_lambda_.9}
  #allocation0 [shape = 'u32[]', space=smem, size = 0x4, offset = 0x4, fixed_abs, tag = 'smem constant byte address 0x4 - core index']
  #allocation1 [shape = 'u32[144,128]{1,0:T(1,128)}', space=vmem, size = 0x12000, scoped, tag = 'internal scratch']
  %s0 = inlined_call_operand.vmem [shape: f32[2,8,32], index: 0, kind: input, shape index: {}, may-alias: {0,10}]
  %s1 = inlined_call_operand.vmem [shape: f32[2,1,8], index: 1, kind: input, shape index: {}]
  %s2 = inlined_call_operand.vmem [shape: f32[1,32], index: 2, kind: input, shape index: {}]
  %s3 = inlined_call_operand.vmem [shape: f32[1,32], index: 3, kind: input, shape index: {}]
  %s4 = inlined_call_operand.vmem [shape: bf16[32,32], index: 4, kind: input, shape index: {}]
  %s5 = inlined_call_operand.vmem [shape: f32[1,32], index: 5, kind: input, shape index: {}]
  %s6 = inlined_call_operand.vmem [shape: bf16[32,64], index: 6, kind: input, shape index: {}]
  %s7 = inlined_call_operand.vmem [shape: f32[1,64], index: 7, kind: input, shape index: {}]
  %s8 = inlined_call_operand.vmem [shape: bf16[4,8,32], index: 8, kind: input, shape index: {}]
  %s9 = inlined_call_operand.vmem [shape: f32[1,32], index: 9, kind: input, shape index: {}]
  %s10 = inlined_call_operand.vmem [shape: f32[2,8,32], index: 10, kind: output, shape index: {}, may-alias: {0,10}]
  %s11 = sld [smem:[#allocation0]]
  $region73: #{_lambda_.9} parent=0
    _
  %s13 = ssub.s32 1, %s11
  %s14 = scalar_select 0, %s13, %s11
  loop: start=0, step=1, limit=4
  $region2: #{_lambda_.9} parent=0 // loop_pre_header
    _
  $region3: #{_lambda_.9} parent=0 // loop_header
    %s16 = sphi 0, %s20
    %p17 = scmp.ge.s32.totalorder %s16, 4
    %s26 = sphi 0, %s28
    %s29 = sphi 0, %s26
    %s30 = sphi 0, %s29
    %s46 = sphi 0, %s30
    %s52 = sphi 0, %s54
    %s55 = sphi 0, %s52
    %s56 = sphi 0, %s55
    %s72 = sphi 0, %s56
    %s76 = sphi 0, %s76
    %s78 = sphi 0, %s76
    %s79 = sphi 0, %s78
    %s93 = sphi 0, %s79
    %s97 = sphi 0, %s97
    %s99 = sphi 0, %s97
    %s100 = sphi 0, %s99
    %s114 = sphi 0, %s100
    %s118 = sphi 0, %s118
    %s120 = sphi 0, %s118
    %s121 = sphi 0, %s120
    %s135 = sphi 0, %s121
    %s139 = sphi 0, %s139
    %s141 = sphi 0, %s139
    %s142 = sphi 0, %s141
    %s156 = sphi 0, %s142
    %s160 = sphi 0, %s160
    %s162 = sphi 0, %s160
    %s163 = sphi 0, %s162
    %s177 = sphi 0, %s163
    %s181 = sphi 0, %s181
    %s183 = sphi 0, %s181
    %s184 = sphi 0, %s183
    %s198 = sphi 0, %s184
    %s202 = sphi 0, %s202
    %s204 = sphi 0, %s202
    %s205 = sphi 0, %s204
    %s219 = sphi 0, %s205
    %s223 = sphi 0, %s223
    %s225 = sphi 0, %s223
    %s226 = sphi 0, %s225
    %s240 = sphi 0, %s226
    %s246 = sphi 0, %s248
    %s249 = sphi 0, %s246
    %s250 = sphi 0, %s249
    %s266 = sphi 0, %s250
  $region4: #{_lambda_.9} parent=0 // loop_header_branch
    %19 = sbr.rel (%p17) target = $region8
  $region5: #{_lambda_.9} parent=0 // loop_body
    %s21 = ssub.s32 %s16, 1
    %s22 = ssub.s32 %s16, 2
    %s23 = sadd.s32 %s16, 1
    %s24 = ssub.s32 %s16, %s23
    %p25 = scmp.eq.s32.totalorder %s24, 0
    %s27 = sadd.s32 %s26, 1
    %s28 = scalar_select %p25, %s26, %s27
    %p31 = pneg %p25
    %p32 = scmp.eq.s32.totalorder %s16, 1
    %p33 = por %p31, %p32
    %p34 = scmp.ne.s32.totalorder %s26, %s29
    %p35 = scmp.eq.s32.totalorder %s16, 0
    %p36 = por %p34, %p35
    %p37 = scmp.ne.s32.totalorder %s26, %s29
    %p38 = scmp.eq.s32.totalorder %s21, 1
    %p39 = por %p37, %p38
    %p40 = scmp.ne.s32.totalorder %s29, %s30
    %p41 = scmp.eq.s32.totalorder %s21, 0
    %p42 = por %p40, %p41
    %p43 = scmp.ne.s32.totalorder %s29, %s30
    %p44 = scmp.eq.s32.totalorder %s22, 1
    %p45 = por %p43, %p44
    %p47 = scmp.ne.s32.totalorder %s30, %s46
    %p48 = scmp.eq.s32.totalorder %s22, 0
    %p49 = por %p47, %p48
    %s50 = ssub.s32 %s16, %s23
    %p51 = scmp.eq.s32.totalorder %s50, 0
    %s53 = sadd.s32 %s52, 1
    %s54 = scalar_select %p51, %s52, %s53
    %p57 = pneg %p51
    %p58 = scmp.eq.s32.totalorder %s16, 1
    %p59 = por %p57, %p58
    %p60 = scmp.ne.s32.totalorder %s52, %s55
    %p61 = scmp.eq.s32.totalorder %s16, 0
    %p62 = por %p60, %p61
    %p63 = scmp.ne.s32.totalorder %s52, %s55
    %p64 = scmp.eq.s32.totalorder %s21, 1
    %p65 = por %p63, %p64
    %p66 = scmp.ne.s32.totalorder %s55, %s56
    %p67 = scmp.eq.s32.totalorder %s21, 0
    %p68 = por %p66, %p67
    %p69 = scmp.ne.s32.totalorder %s55, %s56
    %p70 = scmp.eq.s32.totalorder %s22, 1
    %p71 = por %p69, %p70
    %p73 = scmp.ne.s32.totalorder %s56, %s72
    %p74 = scmp.eq.s32.totalorder %s22, 0
    %p75 = por %p73, %p74
    %s77 = sadd.s32 %s76, 1
    %p80 = scmp.eq.s32.totalorder %s16, 1
    %p81 = scmp.ne.s32.totalorder %s76, %s78
    %p82 = scmp.eq.s32.totalorder %s16, 0
    %p83 = por %p81, %p82
    %p84 = scmp.ne.s32.totalorder %s76, %s78
    %p85 = scmp.eq.s32.totalorder %s21, 1
    %p86 = por %p84, %p85
    %p87 = scmp.ne.s32.totalorder %s78, %s79
    %p88 = scmp.eq.s32.totalorder %s21, 0
    %p89 = por %p87, %p88
    %p90 = scmp.ne.s32.totalorder %s78, %s79
    %p91 = scmp.eq.s32.totalorder %s22, 1
    %p92 = por %p90, %p91
    %p94 = scmp.ne.s32.totalorder %s79, %s93
    %p95 = scmp.eq.s32.totalorder %s22, 0
    %p96 = por %p94, %p95
    %s98 = sadd.s32 %s97, 1
    %p101 = scmp.eq.s32.totalorder %s16, 1
    %p102 = scmp.ne.s32.totalorder %s97, %s99
    %p103 = scmp.eq.s32.totalorder %s16, 0
    %p104 = por %p102, %p103
    %p105 = scmp.ne.s32.totalorder %s97, %s99
    %p106 = scmp.eq.s32.totalorder %s21, 1
    %p107 = por %p105, %p106
    %p108 = scmp.ne.s32.totalorder %s99, %s100
    %p109 = scmp.eq.s32.totalorder %s21, 0
    %p110 = por %p108, %p109
    %p111 = scmp.ne.s32.totalorder %s99, %s100
    %p112 = scmp.eq.s32.totalorder %s22, 1
    %p113 = por %p111, %p112
    %p115 = scmp.ne.s32.totalorder %s100, %s114
    %p116 = scmp.eq.s32.totalorder %s22, 0
    %p117 = por %p115, %p116
    %s119 = sadd.s32 %s118, 1
    %p122 = scmp.eq.s32.totalorder %s16, 1
    %p123 = scmp.ne.s32.totalorder %s118, %s120
    %p124 = scmp.eq.s32.totalorder %s16, 0
    %p125 = por %p123, %p124
    %p126 = scmp.ne.s32.totalorder %s118, %s120
    %p127 = scmp.eq.s32.totalorder %s21, 1
    %p128 = por %p126, %p127
    %p129 = scmp.ne.s32.totalorder %s120, %s121
    %p130 = scmp.eq.s32.totalorder %s21, 0
    %p131 = por %p129, %p130
    %p132 = scmp.ne.s32.totalorder %s120, %s121
    %p133 = scmp.eq.s32.totalorder %s22, 1
    %p134 = por %p132, %p133
    %p136 = scmp.ne.s32.totalorder %s121, %s135
    %p137 = scmp.eq.s32.totalorder %s22, 0
    %p138 = por %p136, %p137
    %s140 = sadd.s32 %s139, 1
    %p143 = scmp.eq.s32.totalorder %s16, 1
    %p144 = scmp.ne.s32.totalorder %s139, %s141
    %p145 = scmp.eq.s32.totalorder %s16, 0
    %p146 = por %p144, %p145
    %p147 = scmp.ne.s32.totalorder %s139, %s141
    %p148 = scmp.eq.s32.totalorder %s21, 1
    %p149 = por %p147, %p148
    %p150 = scmp.ne.s32.totalorder %s141, %s142
    %p151 = scmp.eq.s32.totalorder %s21, 0
    %p152 = por %p150, %p151
    %p153 = scmp.ne.s32.totalorder %s141, %s142
    %p154 = scmp.eq.s32.totalorder %s22, 1
    %p155 = por %p153, %p154
    %p157 = scmp.ne.s32.totalorder %s142, %s156
    %p158 = scmp.eq.s32.totalorder %s22, 0
    %p159 = por %p157, %p158
    %s161 = sadd.s32 %s160, 1
    %p164 = scmp.eq.s32.totalorder %s16, 1
    %p165 = scmp.ne.s32.totalorder %s160, %s162
    %p166 = scmp.eq.s32.totalorder %s16, 0
    %p167 = por %p165, %p166
    %p168 = scmp.ne.s32.totalorder %s160, %s162
    %p169 = scmp.eq.s32.totalorder %s21, 1
    %p170 = por %p168, %p169
    %p171 = scmp.ne.s32.totalorder %s162, %s163
    %p172 = scmp.eq.s32.totalorder %s21, 0
    %p173 = por %p171, %p172
    %p174 = scmp.ne.s32.totalorder %s162, %s163
    %p175 = scmp.eq.s32.totalorder %s22, 1
    %p176 = por %p174, %p175
    %p178 = scmp.ne.s32.totalorder %s163, %s177
    %p179 = scmp.eq.s32.totalorder %s22, 0
    %p180 = por %p178, %p179
    %s182 = sadd.s32 %s181, 1
    %p185 = scmp.eq.s32.totalorder %s16, 1
    %p186 = scmp.ne.s32.totalorder %s181, %s183
    %p187 = scmp.eq.s32.totalorder %s16, 0
    %p188 = por %p186, %p187
    %p189 = scmp.ne.s32.totalorder %s181, %s183
    %p190 = scmp.eq.s32.totalorder %s21, 1
    %p191 = por %p189, %p190
    %p192 = scmp.ne.s32.totalorder %s183, %s184
    %p193 = scmp.eq.s32.totalorder %s21, 0
    %p194 = por %p192, %p193
    %p195 = scmp.ne.s32.totalorder %s183, %s184
    %p196 = scmp.eq.s32.totalorder %s22, 1
    %p197 = por %p195, %p196
    %p199 = scmp.ne.s32.totalorder %s184, %s198
    %p200 = scmp.eq.s32.totalorder %s22, 0
    %p201 = por %p199, %p200
    %s203 = sadd.s32 %s202, 1
    %p206 = scmp.eq.s32.totalorder %s16, 1
    %p207 = scmp.ne.s32.totalorder %s202, %s204
    %p208 = scmp.eq.s32.totalorder %s16, 0
    %p209 = por %p207, %p208
    %p210 = scmp.ne.s32.totalorder %s202, %s204
    %p211 = scmp.eq.s32.totalorder %s21, 1
    %p212 = por %p210, %p211
    %p213 = scmp.ne.s32.totalorder %s204, %s205
    %p214 = scmp.eq.s32.totalorder %s21, 0
    %p215 = por %p213, %p214
    %p216 = scmp.ne.s32.totalorder %s204, %s205
    %p217 = scmp.eq.s32.totalorder %s22, 1
    %p218 = por %p216, %p217
    %p220 = scmp.ne.s32.totalorder %s205, %s219
    %p221 = scmp.eq.s32.totalorder %s22, 0
    %p222 = por %p220, %p221
    %s224 = sadd.s32 %s223, 1
    %p227 = scmp.eq.s32.totalorder %s16, 1
    %p228 = scmp.ne.s32.totalorder %s223, %s225
    %p229 = scmp.eq.s32.totalorder %s16, 0
    %p230 = por %p228, %p229
    %p231 = scmp.ne.s32.totalorder %s223, %s225
    %p232 = scmp.eq.s32.totalorder %s21, 1
    %p233 = por %p231, %p232
    %p234 = scmp.ne.s32.totalorder %s225, %s226
    %p235 = scmp.eq.s32.totalorder %s21, 0
    %p236 = por %p234, %p235
    %p237 = scmp.ne.s32.totalorder %s225, %s226
    %p238 = scmp.eq.s32.totalorder %s22, 1
    %p239 = por %p237, %p238
    %p241 = scmp.ne.s32.totalorder %s226, %s240
    %p242 = scmp.eq.s32.totalorder %s22, 0
    %p243 = por %p241, %p242
    %s244 = ssub.s32 %s16, %s23
    %p245 = scmp.eq.s32.totalorder %s244, 0
    %s247 = sadd.s32 %s246, 1
    %s248 = scalar_select %p245, %s246, %s247
    %p251 = pneg %p245
    %p252 = scmp.eq.s32.totalorder %s16, 1
    %p253 = por %p251, %p252
    %p254 = scmp.ne.s32.totalorder %s246, %s249
    %p255 = scmp.eq.s32.totalorder %s16, 0
    %p256 = por %p254, %p255
    %p257 = scmp.ne.s32.totalorder %s246, %s249
    %p258 = scmp.eq.s32.totalorder %s21, 1
    %p259 = por %p257, %p258
    %p260 = scmp.ne.s32.totalorder %s249, %s250
    %p261 = scmp.eq.s32.totalorder %s21, 0
    %p262 = por %p260, %p261
    %p263 = scmp.ne.s32.totalorder %s249, %s250
    %p264 = scmp.eq.s32.totalorder %s22, 1
    %p265 = por %p263, %p264
    %p267 = scmp.ne.s32.totalorder %s250, %s266
    %p268 = scmp.eq.s32.totalorder %s22, 0
    %p269 = por %p267, %p268
    %p270 = scmp.le.s32.totalorder 1, %s16
    %p271 = scmp.lt.s32.totalorder %s16, 3
    %p272 = pnand %p270, %p271
    %p273 = pneg %p272
    // Predicated region
    $region9: #{_lambda_.9} parent=5 // pred_check
      _
    $region10: #{_lambda_.9} parent=5 // pred_check_branch
      %275 = sbr.rel (%p272) target = $region12
    $region11: #{_lambda_.9} parent=5 // pred_region
      %s276 = ssub.s32 %s16, 1
      // Predicated region
      $region13: #{_lambda_.9} parent=11 // pred_check
        %p277 = pneg %p89
      $region14: #{_lambda_.9} parent=11 // pred_check_branch
        %279 = sbr.rel (%p277) target = $region16
      $region15: #{_lambda_.9} parent=11 // pred_region
        _
      $region16: #{_lambda_.9} parent=11 // pred_fallthru
        _
      // Predicated region
      $region17: #{_lambda_.9} parent=11 // pred_check
        %p280 = pneg %p110
      $region18: #{_lambda_.9} parent=11 // pred_check_branch
        %282 = sbr.rel (%p280) target = $region20
      $region19: #{_lambda_.9} parent=11 // pred_region
        _
      $region20: #{_lambda_.9} parent=11 // pred_fallthru
        _
      // Predicated region
      $region21: #{_lambda_.9} parent=11 // pred_check
        %p283 = pneg %p131
      $region22: #{_lambda_.9} parent=11 // pred_check_branch
        %285 = sbr.rel (%p283) target = $region24
      $region23: #{_lambda_.9} parent=11 // pred_region
        _
      $region24: #{_lambda_.9} parent=11 // pred_fallthru
        _
      // Predicated region
      $region25: #{_lambda_.9} parent=11 // pred_check
        %p286 = pneg %p152
      $region26: #{_lambda_.9} parent=11 // pred_check_branch
        %288 = sbr.rel (%p286) target = $region28
      $region27: #{_lambda_.9} parent=11 // pred_region
        _
      $region28: #{_lambda_.9} parent=11 // pred_fallthru
        _
      // Predicated region
      $region29: #{_lambda_.9} parent=11 // pred_check
        %p289 = pneg %p173
      $region30: #{_lambda_.9} parent=11 // pred_check_branch
        %291 = sbr.rel (%p289) target = $region32
      $region31: #{_lambda_.9} parent=11 // pred_region
        _
      $region32: #{_lambda_.9} parent=11 // pred_fallthru
        _
      // Predicated region
      $region33: #{_lambda_.9} parent=11 // pred_check
        %p292 = pneg %p194
      $region34: #{_lambda_.9} parent=11 // pred_check_branch
        %294 = sbr.rel (%p292) target = $region36
      $region35: #{_lambda_.9} parent=11 // pred_region
        _
      $region36: #{_lambda_.9} parent=11 // pred_fallthru
        _
      // Predicated region
      $region37: #{_lambda_.9} parent=11 // pred_check
        %p295 = pneg %p215
      $region38: #{_lambda_.9} parent=11 // pred_check_branch
        %297 = sbr.rel (%p295) target = $region40
      $region39: #{_lambda_.9} parent=11 // pred_region
        _
      $region40: #{_lambda_.9} parent=11 // pred_fallthru
        _
      // Predicated region
      $region41: #{_lambda_.9} parent=11 // pred_check
        %p298 = pneg %p236
      $region42: #{_lambda_.9} parent=11 // pred_check_branch
        %300 = sbr.rel (%p298) target = $region44
      $region43: #{_lambda_.9} parent=11 // pred_region
        _
      $region44: #{_lambda_.9} parent=11 // pred_fallthru
        _
    $region12: #{_lambda_.9} parent=5 // pred_fallthru
      _
    %p301 = scmp.lt.s32.totalorder %s16, 2
    // Predicated region
    $region45: #{_lambda_.9} parent=5 // pred_check
      %p302 = pneg %p301
    $region46: #{_lambda_.9} parent=5 // pred_check_branch
      %304 = sbr.rel (%p302) target = $region48
    $region47: #{_lambda_.9} parent=5 // pred_region
      // Predicated region
      $region49: #{_lambda_.9} parent=47 // pred_check
        %p305 = pneg %p36
      $region50: #{_lambda_.9} parent=47 // pred_check_branch
        %307 = sbr.rel (%p305) target = $region52
      $region51: #{_lambda_.9} parent=47 // pred_region
        %p308 = scmp.lt.s32.totalorder %s16, 1
        %s309 = scalar_select %p308, %s16, 1
        %s310 = smul.addr %s309, 8
        %s311 = scalar_lea.vmem %s0, %s310
      $region52: #{_lambda_.9} parent=47 // pred_fallthru
        _
      // Predicated region
      $region53: #{_lambda_.9} parent=47 // pred_check
        %p312 = pneg %p62
      $region54: #{_lambda_.9} parent=47 // pred_check_branch
        %314 = sbr.rel (%p312) target = $region56
      $region55: #{_lambda_.9} parent=47 // pred_region
        %p315 = scmp.lt.s32.totalorder %s16, 1
        %s316 = scalar_select %p315, %s16, 1
        %s317 = scalar_lea.vmem %s1, %s316
      $region56: #{_lambda_.9} parent=47 // pred_fallthru
        _
    $region48: #{_lambda_.9} parent=5 // pred_fallthru
      _
    %p318 = scmp.le.s32.totalorder 1, %s16
    %p319 = scmp.lt.s32.totalorder %s16, 3
    %p320 = pnand %p318, %p319
    %p321 = pneg %p320
    // Predicated region
    $region57: #{_lambda_.9} parent=5 // pred_check
      _
    $region58: #{_lambda_.9} parent=5 // pred_check_branch
      %323 = sbr.rel (%p320) target = $region60
    $region59: #{_lambda_.9} parent=5 // pred_region
      %s324 = ssub.s32 %s16, 1
      %p325 = scmp.lt.s32.totalorder %s21, 1
      %s326 = scalar_select %p325, %s21, 1
      %s327 = smul.addr %s326, 8
      %s328 = scalar_lea.vmem %s0, %s327
      %p329 = pneg %p42
      %p330 = pneg %p39
      %p331 = scmp.lt.s32.totalorder %s21, 1
      %s332 = scalar_select %p331, %s21, 1
      %s333 = scalar_lea.vmem %s1, %s332
      %p334 = pneg %p68
      %p335 = pneg %p65
      %p336 = pneg %p89
      %p337 = pneg %p86
      %p338 = pneg %p110
      %p339 = pneg %p107
      %p340 = pneg %p131
      %p341 = pneg %p128
      %p342 = pneg %p152
      %p343 = pneg %p149
      %p344 = pneg %p173
      %p345 = pneg %p170
      %p346 = pneg %p194
      %p347 = pneg %p191
      %p348 = pneg %p215
      %p349 = pneg %p212
      %p350 = pneg %p236
      %p351 = pneg %p233
      %p352 = pneg %p262
      %p353 = pneg %p259
      %p354 = scmp.lt.s32.totalorder %s21, 1
      %s355 = scalar_select %p354, %s21, 1
      %s356 = smul.addr %s355, 8
      %s357 = scalar_lea.vmem %s10, %s356
      %p358 = scmp.lt.s32.totalorder %s21, 1
      %s359 = scalar_select %p358, %s21, 1
      %s360 = smul.addr %s359, 8
      %s361 = scalar_lea.vmem %s0, %s360
      %p362 = scmp.lt.s32.totalorder %s21, 1
      %s363 = scalar_select %p362, %s21, 1
      %s364 = scalar_lea.vmem %s1, %s363
      %p365 = scmp.lt.s32.totalorder %s21, 1
      %s366 = scalar_select %p365, %s21, 1
      %s367 = smul.addr %s366, 8
      %s368 = scalar_lea.vmem %s10, %s367
      %v370 = vld [vmem:[%s361] sm:$0xff]
      %v371 = vld [vmem:[%s2] sm:$0x1]
      %v372 = vld [vmem:[%s3] sm:$0x1]
      %vm373 = vcmask 261120
      %v374 = vsel %vm373, %v370, 0.0
      %375 = vadd.xlane.f32.xlu0 %v374
      %v376 = vpop.xlane.xlu0 %375
      %v377 = vrcp.pop 32.0
      %v378 = vmul.f32 %v376, %v377
      %v379 = vsub.f32 %v370, %v378
      %v380 = vmul.f32 %v379, %v379
      %v381 = vsel %vm373, %v380, 0.0
      %382 = vadd.xlane.f32.xlu0 %v381
      %v383 = vpop.xlane.xlu0 %382
      %v384 = vmul.f32 %v383, %v377
      %v385 = vadd.f32 %v384, 1e-05
      %v386 = vrsqrt.pop %v385
      %v387 = vmul.f32 %v379, %v386
      %v389 = vlaneseq
      %v390 = vshrl.u32 %v389, 7
      %v391 = vsub.s32 0, %v390
      %v392 = vrot.slane %v371, %v391
      %v394 = vmul.f32 %v387, %v392
      %v396 = vlaneseq
      %v397 = vshrl.u32 %v396, 7
      %v398 = vsub.s32 0, %v397
      %v399 = vrot.slane %v372, %v398
      %v401 = vadd.f32 %v394, %v399
      %v402 = vpack.c.bf16 %v401, %v401
      %v403 = vld [vmem:[%s364] sm:$0x1]
      %v404 = vld [vmem:[%s4] sm:$0xf]
      %v405 = vld [vmem:[%s4 + $0x4] sm:$0xf]
      %v406 = vld [vmem:[%s4 + $0x8] sm:$0xf]
      %v407 = vld [vmem:[%s4 + $0xc] sm:$0xf]
      %v408 = vld [vmem:[%s5] sm:$0x1]
      %v409 = vld [vmem:[%s6] sm:$0xf]
      %v410 = vld [vmem:[%s6 + $0x4] sm:$0xf]
      %v411 = vld [vmem:[%s6 + $0x8] sm:$0xf]
      %v412 = vld [vmem:[%s6 + $0xc] sm:$0xf]
      %v413 = vld [vmem:[%s7] sm:$0x1]
      %v414 = vld [vmem:[%s8] sm:$0xf]
      %v415 = vld [vmem:[%s8 + $0x4] sm:$0xf]
      %v416 = vld [vmem:[%s8 + $0x8] sm:$0xf]
      %v417 = vld [vmem:[%s8 + $0xc] sm:$0xf]
      %v418 = vld [vmem:[%s9] sm:$0x1]
      %v420 = vlaneseq
      %v421 = vshrl.u32 %v420, 7
      %v422 = vsub.s32 0, %v421
      %v423 = vrot.slane %v408, %v422
      %v429 = vunpack.c.l.b16 %v404
      %v430 = vunpack.c.l.b16 %v405
      %v431 = vunpack.c.l.b16 %v406
      %v432 = vunpack.c.l.b16 %v407
      %v433 = vpack.c.b16 %v430, %v429
      %v434 = vpack.c.b16 %v432, %v431
      %v438 = vsel %vm373, %v402, 0
      %440 = vmatprep.subr.bf16.mxu0 0
      %441 = vmatpush1.bf16.msra.mxu0 %v433
      %442 = vmatprep.subr.bf16.mxu0 0
      %443 = vmatpush1.bf16.msra.mxu0 %v434
      %444 = vmatprep.subr.bf16.mxu0 0
      %445 = vmatpush1.bf16.msra.mxu0 0
      %446 = vmatprep.subr.bf16.mxu0 0
      %447 = vmatpush1.bf16.msra.mxu0 0
      %448 = vmatprep.subr.bf16.mxu0 0
      %449 = vmatpush1.bf16.msra.mxu0 0
      %450 = vmatprep.subr.bf16.mxu0 0
      %451 = vmatpush1.bf16.msra.mxu0 0
      %452 = vmatprep.subr.bf16.mxu0 0
      %453 = vmatpush1.bf16.msra.mxu0 0
      %454 = vmatprep.subr.bf16.mxu0 0
      %455 = vmatpush1.bf16.msra.mxu0 0
      %456 = vmatprep.subr.bf16.mxu0 0
      %457 = vmatpush1.bf16.msra.mxu0 0
      %458 = vmatprep.subr.bf16.mxu0 0
      %459 = vmatpush1.bf16.msra.mxu0 0
      %460 = vmatprep.subr.bf16.mxu0 0
      %461 = vmatpush1.bf16.msra.mxu0 0
      %462 = vmatprep.subr.bf16.mxu0 0
      %463 = vmatpush1.bf16.msra.mxu0 0
      %464 = vmatprep.subr.bf16.mxu0 0
      %465 = vmatpush1.bf16.msra.mxu0 0
      %466 = vmatprep.subr.bf16.mxu0 0
      %467 = vmatpush1.bf16.msra.mxu0 0
      %468 = vmatprep.subr.bf16.mxu0 0
      %469 = vmatpush1.bf16.msra.mxu0 0
      %470 = vmatprep.subr.bf16.mxu0 0
      %471 = vmatpush1.bf16.msra.mxu0 0
      %472 = vmatprep.mubr.bf16.mxu0 0
      %473 = vmatmul.mubr.bf16.gmra.mrb[0].mxu0 %v438
      %v474 = vpop.f32.mrb[0].mxu0
      %v475 = vadd.f32 %v423, %v474
      %v476 = vpop.f32.mrb[0].mxu0
      %v477 = vpop.f32.mrb[0].mxu0
      %v478 = vpop.f32.mrb[0].mxu0
      %479 = vdwg.mxu0
      %v481 = vlaneseq
      %v482 = vshrl.u32 %v481, 7
      %v483 = vsub.s32 0, %v482
      %v484 = vrot.slane %v413, %v483
      %v490 = vunpack.c.l.b16 %v409
      %v491 = vunpack.c.l.b16 %v410
      %v492 = vunpack.c.l.b16 %v411
      %v493 = vunpack.c.l.b16 %v412
      %v494 = vpack.c.b16 %v491, %v490
      %v495 = vpack.c.b16 %v493, %v492
      %498 = vmatprep.subr.bf16.mxu0 0
      %499 = vmatpush1.bf16.msra.mxu0 %v494
      %500 = vmatprep.subr.bf16.mxu0 0
      %501 = vmatpush1.bf16.msra.mxu0 %v495
      %502 = vmatprep.subr.bf16.mxu0 0
      %503 = vmatpush1.bf16.msra.mxu0 0
      %504 = vmatprep.subr.bf16.mxu0 0
      %505 = vmatpush1.bf16.msra.mxu0 0
      %506 = vmatprep.subr.bf16.mxu0 0
      %507 = vmatpush1.bf16.msra.mxu0 0
      %508 = vmatprep.subr.bf16.mxu0 0
      %509 = vmatpush1.bf16.msra.mxu0 0
      %510 = vmatprep.subr.bf16.mxu0 0
      %511 = vmatpush1.bf16.msra.mxu0 0
      %512 = vmatprep.subr.bf16.mxu0 0
      %513 = vmatpush1.bf16.msra.mxu0 0
      %514 = vmatprep.subr.bf16.mxu0 0
      %515 = vmatpush1.bf16.msra.mxu0 0
      %516 = vmatprep.subr.bf16.mxu0 0
      %517 = vmatpush1.bf16.msra.mxu0 0
      %518 = vmatprep.subr.bf16.mxu0 0
      %519 = vmatpush1.bf16.msra.mxu0 0
      %520 = vmatprep.subr.bf16.mxu0 0
      %521 = vmatpush1.bf16.msra.mxu0 0
      %522 = vmatprep.subr.bf16.mxu0 0
      %523 = vmatpush1.bf16.msra.mxu0 0
      %524 = vmatprep.subr.bf16.mxu0 0
      %525 = vmatpush1.bf16.msra.mxu0 0
      %526 = vmatprep.subr.bf16.mxu0 0
      %527 = vmatpush1.bf16.msra.mxu0 0
      %528 = vmatprep.subr.bf16.mxu0 0
      %529 = vmatpush1.bf16.msra.mxu0 0
      %530 = vmatprep.mubr.bf16.mxu0 0
      %531 = vmatmul.mubr.bf16.gmra.mrb[0].mxu0 %v438
      %v532 = vpop.f32.mrb[0].mxu0
      %v533 = vadd.f32 %v484, %v532
      %v534 = vpop.f32.mrb[0].mxu0
      %v535 = vpop.f32.mrb[0].mxu0
      %v536 = vpop.f32.mrb[0].mxu0
      %537 = vdwg.mxu0
      %539 = vrot.lane.b32.xlu0 %v475, 120
      %v540 = vpop.permute.xlu0 %539
      %542 = vrot.lane.b32.xlu0 %v475, 112
      %v543 = vpop.permute.xlu0 %542
      %545 = vrot.lane.b32.xlu0 %v475, 104
      %v546 = vpop.permute.xlu0 %545
      %v548 = vpack.c.bf16 %v475, %v475
      %v549 = vpack.c.bf16 %v540, %v540
      %v550 = vpack.c.bf16 %v543, %v543
      %v551 = vpack.c.bf16 %v546, %v546
      %553 = vrot.lane.b32.xlu0 %v533, 120
      %v554 = vpop.permute.xlu0 %553
      %556 = vrot.lane.b32.xlu0 %v533, 112
      %v557 = vpop.permute.xlu0 %556
      %559 = vrot.lane.b32.xlu0 %v533, 104
      %v560 = vpop.permute.xlu0 %559
      %v562 = vpack.c.bf16 %v533, %v533
      %v563 = vpack.c.bf16 %v554, %v554
      %v564 = vpack.c.bf16 %v557, %v557
      %v565 = vpack.c.bf16 %v560, %v560
      %vm566 = vcmask 64512
      %v568 = vsel %vm566, %v548, 0
      %v571 = vsel %vm566, %v562, 0
      %573 = vmatprep.subr.bf16.mxu0 0
      %574 = vmatpush1.bf16.xpose.msra.mxu0 %v571
      %575 = vmatprep.subr.bf16.mxu0 0
      %576 = vmatpush1.bf16.xpose.msra.mxu0 0
      %577 = vmatprep.subr.bf16.mxu0 0
      %578 = vmatpush1.bf16.xpose.msra.mxu0 0
      %579 = vmatprep.subr.bf16.mxu0 0
      %580 = vmatpush1.bf16.xpose.msra.mxu0 0
      %581 = vmatprep.subr.bf16.mxu0 0
      %582 = vmatpush1.bf16.xpose.msra.mxu0 0
      %583 = vmatprep.subr.bf16.mxu0 0
      %584 = vmatpush1.bf16.xpose.msra.mxu0 0
      %585 = vmatprep.subr.bf16.mxu0 0
      %586 = vmatpush1.bf16.xpose.msra.mxu0 0
      %587 = vmatprep.subr.bf16.mxu0 0
      %588 = vmatpush1.bf16.xpose.msra.mxu0 0
      %589 = vmatprep.subr.bf16.mxu0 0
      %590 = vmatpush1.bf16.xpose.msra.mxu0 0
      %591 = vmatprep.subr.bf16.mxu0 0
      %592 = vmatpush1.bf16.xpose.msra.mxu0 0
      %593 = vmatprep.subr.bf16.mxu0 0
      %594 = vmatpush1.bf16.xpose.msra.mxu0 0
      %595 = vmatprep.subr.bf16.mxu0 0
      %596 = vmatpush1.bf16.xpose.msra.mxu0 0
      %597 = vmatprep.subr.bf16.mxu0 0
      %598 = vmatpush1.bf16.xpose.msra.mxu0 0
      %599 = vmatprep.subr.bf16.mxu0 0
      %600 = vmatpush1.bf16.xpose.msra.mxu0 0
      %601 = vmatprep.subr.bf16.mxu0 0
      %602 = vmatpush1.bf16.xpose.msra.mxu0 0
      %603 = vmatprep.subr.bf16.mxu0 0
      %604 = vmatpush1.bf16.xpose.msra.mxu0 0
      %605 = vmatprep.mubr.bf16.mxu0 0
      %606 = vmatmul.mubr.bf16.gmra.mrb[0].mxu0 %v568
      %v607 = vpop.f32.mrb[0].mxu0
      %v608 = vadd.f32 0.0, %v607
      %v609 = vpop.f32.mrb[0].mxu0
      %v610 = vpop.f32.mrb[0].mxu0
      %v611 = vpop.f32.mrb[0].mxu0
      %612 = vdwg.mxu0
      %v614 = vsel %vm566, %v549, 0
      %v617 = vsel %vm566, %v563, 0
      %619 = vmatprep.subr.bf16.mxu0 0
      %620 = vmatpush1.bf16.xpose.msra.mxu0 %v617
      %621 = vmatprep.subr.bf16.mxu0 0
      %622 = vmatpush1.bf16.xpose.msra.mxu0 0
      %623 = vmatprep.subr.bf16.mxu0 0
      %624 = vmatpush1.bf16.xpose.msra.mxu0 0
      %625 = vmatprep.subr.bf16.mxu0 0
      %626 = vmatpush1.bf16.xpose.msra.mxu0 0
      %627 = vmatprep.subr.bf16.mxu0 0
      %628 = vmatpush1.bf16.xpose.msra.mxu0 0
      %629 = vmatprep.subr.bf16.mxu0 0
      %630 = vmatpush1.bf16.xpose.msra.mxu0 0
      %631 = vmatprep.subr.bf16.mxu0 0
      %632 = vmatpush1.bf16.xpose.msra.mxu0 0
      %633 = vmatprep.subr.bf16.mxu0 0
      %634 = vmatpush1.bf16.xpose.msra.mxu0 0
      %635 = vmatprep.subr.bf16.mxu0 0
      %636 = vmatpush1.bf16.xpose.msra.mxu0 0
      %637 = vmatprep.subr.bf16.mxu0 0
      %638 = vmatpush1.bf16.xpose.msra.mxu0 0
      %639 = vmatprep.subr.bf16.mxu0 0
      %640 = vmatpush1.bf16.xpose.msra.mxu0 0
      %641 = vmatprep.subr.bf16.mxu0 0
      %642 = vmatpush1.bf16.xpose.msra.mxu0 0
      %643 = vmatprep.subr.bf16.mxu0 0
      %644 = vmatpush1.bf16.xpose.msra.mxu0 0
      %645 = vmatprep.subr.bf16.mxu0 0
      %646 = vmatpush1.bf16.xpose.msra.mxu0 0
      %647 = vmatprep.subr.bf16.mxu0 0
      %648 = vmatpush1.bf16.xpose.msra.mxu0 0
      %649 = vmatprep.subr.bf16.mxu0 0
      %650 = vmatpush1.bf16.xpose.msra.mxu0 0
      %651 = vmatprep.mubr.bf16.mxu0 0
      %652 = vmatmul.mubr.bf16.gmra.mrb[0].mxu0 %v614
      %v653 = vpop.f32.mrb[0].mxu0
      %v654 = vadd.f32 0.0, %v653
      %v655 = vpop.f32.mrb[0].mxu0
      %v656 = vpop.f32.mrb[0].mxu0
      %v657 = vpop.f32.mrb[0].mxu0
      %658 = vdwg.mxu0
      %v660 = vsel %vm566, %v550, 0
      %v663 = vsel %vm566, %v564, 0
      %665 = vmatprep.subr.bf16.mxu0 0
      %666 = vmatpush1.bf16.xpose.msra.mxu0 %v663
      %667 = vmatprep.subr.bf16.mxu0 0
      %668 = vmatpush1.bf16.xpose.msra.mxu0 0
      %669 = vmatprep.subr.bf16.mxu0 0
      %670 = vmatpush1.bf16.xpose.msra.mxu0 0
      %671 = vmatprep.subr.bf16.mxu0 0
      %672 = vmatpush1.bf16.xpose.msra.mxu0 0
      %673 = vmatprep.subr.bf16.mxu0 0
      %674 = vmatpush1.bf16.xpose.msra.mxu0 0
      %675 = vmatprep.subr.bf16.mxu0 0
      %676 = vmatpush1.bf16.xpose.msra.mxu0 0
      %677 = vmatprep.subr.bf16.mxu0 0
      %678 = vmatpush1.bf16.xpose.msra.mxu0 0
      %679 = vmatprep.subr.bf16.mxu0 0
      %680 = vmatpush1.bf16.xpose.msra.mxu0 0
      %681 = vmatprep.subr.bf16.mxu0 0
      %682 = vmatpush1.bf16.xpose.msra.mxu0 0
      %683 = vmatprep.subr.bf16.mxu0 0
      %684 = vmatpush1.bf16.xpose.msra.mxu0 0
      %685 = vmatprep.subr.bf16.mxu0 0
      %686 = vmatpush1.bf16.xpose.msra.mxu0 0
      %687 = vmatprep.subr.bf16.mxu0 0
      %688 = vmatpush1.bf16.xpose.msra.mxu0 0
      %689 = vmatprep.subr.bf16.mxu0 0
      %690 = vmatpush1.bf16.xpose.msra.mxu0 0
      %691 = vmatprep.subr.bf16.mxu0 0
      %692 = vmatpush1.bf16.xpose.msra.mxu0 0
      %693 = vmatprep.subr.bf16.mxu0 0
      %694 = vmatpush1.bf16.xpose.msra.mxu0 0
      %695 = vmatprep.subr.bf16.mxu0 0
      %696 = vmatpush1.bf16.xpose.msra.mxu0 0
      %697 = vmatprep.mubr.bf16.mxu0 0
      %698 = vmatmul.mubr.bf16.gmra.mrb[0].mxu0 %v660
      %v699 = vpop.f32.mrb[0].mxu0
      %v700 = vadd.f32 0.0, %v699
      %v701 = vpop.f32.mrb[0].mxu0
      %v702 = vpop.f32.mrb[0].mxu0
      %v703 = vpop.f32.mrb[0].mxu0
      %704 = vdwg.mxu0
      %v706 = vsel %vm566, %v551, 0
      %v709 = vsel %vm566, %v565, 0
      %711 = vmatprep.subr.bf16.mxu0 0
      %712 = vmatpush1.bf16.xpose.msra.mxu0 %v709
      %713 = vmatprep.subr.bf16.mxu0 0
      %714 = vmatpush1.bf16.xpose.msra.mxu0 0
      %715 = vmatprep.subr.bf16.mxu0 0
      %716 = vmatpush1.bf16.xpose.msra.mxu0 0
      %717 = vmatprep.subr.bf16.mxu0 0
      %718 = vmatpush1.bf16.xpose.msra.mxu0 0
      %719 = vmatprep.subr.bf16.mxu0 0
      %720 = vmatpush1.bf16.xpose.msra.mxu0 0
      %721 = vmatprep.subr.bf16.mxu0 0
      %722 = vmatpush1.bf16.xpose.msra.mxu0 0
      %723 = vmatprep.subr.bf16.mxu0 0
      %724 = vmatpush1.bf16.xpose.msra.mxu0 0
      %725 = vmatprep.subr.bf16.mxu0 0
      %726 = vmatpush1.bf16.xpose.msra.mxu0 0
      %727 = vmatprep.subr.bf16.mxu0 0
      %728 = vmatpush1.bf16.xpose.msra.mxu0 0
      %729 = vmatprep.subr.bf16.mxu0 0
      %730 = vmatpush1.bf16.xpose.msra.mxu0 0
      %731 = vmatprep.subr.bf16.mxu0 0
      %732 = vmatpush1.bf16.xpose.msra.mxu0 0
      %733 = vmatprep.subr.bf16.mxu0 0
      %734 = vmatpush1.bf16.xpose.msra.mxu0 0
      %735 = vmatprep.subr.bf16.mxu0 0
      %736 = vmatpush1.bf16.xpose.msra.mxu0 0
      %737 = vmatprep.subr.bf16.mxu0 0
      %738 = vmatpush1.bf16.xpose.msra.mxu0 0
      %739 = vmatprep.subr.bf16.mxu0 0
      %740 = vmatpush1.bf16.xpose.msra.mxu0 0
      %741 = vmatprep.subr.bf16.mxu0 0
      %742 = vmatpush1.bf16.xpose.msra.mxu0 0
      %743 = vmatprep.mubr.bf16.mxu0 0
      %744 = vmatmul.mubr.bf16.gmra.mrb[0].mxu0 %v706
      %v745 = vpop.f32.mrb[0].mxu0
      %v746 = vadd.f32 0.0, %v745
      %v747 = vpop.f32.mrb[0].mxu0
      %v748 = vpop.f32.mrb[0].mxu0
      %v749 = vpop.f32.mrb[0].mxu0
      %750 = vdwg.mxu0
      %v751 = vmul.f32 %v608, 0.35355338
      %v752 = vmul.f32 %v654, 0.35355338
      %v753 = vmul.f32 %v700, 0.35355338
      %v754 = vmul.f32 %v746, 0.35355338
      %v756 = vlaneseq
      %v757 = vshrl.u32 %v756, 7
      %v758 = vsub.s32 0, %v757
      %v759 = vrot.slane %v403, %v758
      %v761 = vadd.f32 %v751, %v759
      %v762 = vadd.f32 %v752, %v759
      %v763 = vadd.f32 %v753, %v759
      %v764 = vadd.f32 %v754, %v759
      %v765 = vsel %vm566, %v761, -inf
      %766 = vmax.xlane.f32.xlu0 %v765
      %v767 = vpop.xlane.xlu0 %766
      %v768 = vsel %vm566, %v762, -inf
      %769 = vmax.xlane.f32.xlu0 %v768
      %v770 = vpop.xlane.xlu0 %769
      %v771 = vsel %vm566, %v763, -inf
      %772 = vmax.xlane.f32.xlu0 %v771
      %v773 = vpop.xlane.xlu0 %772
      %v774 = vsel %vm566, %v764, -inf
      %775 = vmax.xlane.f32.xlu0 %v774
      %v776 = vpop.xlane.xlu0 %775
      %v777 = vsub.f32 %v761, %v767
      %v778 = vsub.f32 %v762, %v770
      %v779 = vsub.f32 %v763, %v773
      %v780 = vsub.f32 %v764, %v776
      %v781 = vmul.f32 %v777, 1.442695
      %v782 = vpow.pop %v781
      %v783 = vmul.f32 %v778, 1.442695
      %v784 = vpow.pop %v783
      %v785 = vmul.f32 %v779, 1.442695
      %v786 = vpow.pop %v785
      %v787 = vmul.f32 %v780, 1.442695
      %v788 = vpow.pop %v787
      %v789 = vsel %vm566, %v782, 0.0
      %790 = vadd.xlane.f32.xlu0 %v789
      %v791 = vpop.xlane.xlu0 %790
      %v792 = vsel %vm566, %v784, 0.0
      %793 = vadd.xlane.f32.xlu0 %v792
      %v794 = vpop.xlane.xlu0 %793
      %v795 = vsel %vm566, %v786, 0.0
      %796 = vadd.xlane.f32.xlu0 %v795
      %v797 = vpop.xlane.xlu0 %796
      %v798 = vsel %vm566, %v788, 0.0
      %799 = vadd.xlane.f32.xlu0 %v798
      %v800 = vpop.xlane.xlu0 %799
      %v801 = vrcp.pop %v791
      %v802 = vmul.f32 %v782, %v801
      %v803 = vrcp.pop %v794
      %v804 = vmul.f32 %v784, %v803
      %v805 = vrcp.pop %v797
      %v806 = vmul.f32 %v786, %v805
      %v807 = vrcp.pop %v800
      %v808 = vmul.f32 %v788, %v807
      %v809 = vpack.c.bf16 %v802, %v802
      %v810 = vpack.c.bf16 %v804, %v804
      %v811 = vpack.c.bf16 %v806, %v806
      %v812 = vpack.c.bf16 %v808, %v808
      %814 = vrot.lane.b32.xlu0 %v562, 96
      %v815 = vpop.permute.xlu0 %814
      %v817 = vsel %vm566, %v809, 0
      %vm819 = vcmask 1043456
      %v821 = vsel %vm819, %v815, 0
      %823 = vmatprep.subr.bf16.mxu0 0
      %824 = vmatpush1.bf16.msra.mxu0 %v821
      %825 = vmatprep.subr.bf16.mxu0 0
      %826 = vmatpush1.bf16.msra.mxu0 0
      %827 = vmatprep.subr.bf16.mxu0 0
      %828 = vmatpush1.bf16.msra.mxu0 0
      %829 = vmatprep.subr.bf16.mxu0 0
      %830 = vmatpush1.bf16.msra.mxu0 0
      %831 = vmatprep.subr.bf16.mxu0 0
      %832 = vmatpush1.bf16.msra.mxu0 0
      %833 = vmatprep.subr.bf16.mxu0 0
      %834 = vmatpush1.bf16.msra.mxu0 0
      %835 = vmatprep.subr.bf16.mxu0 0
      %836 = vmatpush1.bf16.msra.mxu0 0
      %837 = vmatprep.subr.bf16.mxu0 0
      %838 = vmatpush1.bf16.msra.mxu0 0
      %839 = vmatprep.subr.bf16.mxu0 0
      %840 = vmatpush1.bf16.msra.mxu0 0
      %841 = vmatprep.subr.bf16.mxu0 0
      %842 = vmatpush1.bf16.msra.mxu0 0
      %843 = vmatprep.subr.bf16.mxu0 0
      %844 = vmatpush1.bf16.msra.mxu0 0
      %845 = vmatprep.subr.bf16.mxu0 0
      %846 = vmatpush1.bf16.msra.mxu0 0
      %847 = vmatprep.subr.bf16.mxu0 0
      %848 = vmatpush1.bf16.msra.mxu0 0
      %849 = vmatprep.subr.bf16.mxu0 0
      %850 = vmatpush1.bf16.msra.mxu0 0
      %851 = vmatprep.subr.bf16.mxu0 0
      %852 = vmatpush1.bf16.msra.mxu0 0
      %853 = vmatprep.subr.bf16.mxu0 0
      %854 = vmatpush1.bf16.msra.mxu0 0
      %855 = vmatprep.mubr.bf16.mxu0 0
      %856 = vmatmul.mubr.bf16.gmra.mrb[0].mxu0 %v817
      %v857 = vpop.f32.mrb[0].mxu0
      %v858 = vadd.f32 0.0, %v857
      %v859 = vpop.f32.mrb[0].mxu0
      %v860 = vpop.f32.mrb[0].mxu0
      %v861 = vpop.f32.mrb[0].mxu0
      %862 = vdwg.mxu0
      %864 = vrot.lane.b32.xlu0 %v563, 96
      %v865 = vpop.permute.xlu0 %864
      %v867 = vsel %vm566, %v810, 0
      %v870 = vsel %vm819, %v865, 0
      %872 = vmatprep.subr.bf16.mxu0 0
      %873 = vmatpush1.bf16.msra.mxu0 %v870
      %874 = vmatprep.subr.bf16.mxu0 0
      %875 = vmatpush1.bf16.msra.mxu0 0
      %876 = vmatprep.subr.bf16.mxu0 0
      %877 = vmatpush1.bf16.msra.mxu0 0
      %878 = vmatprep.subr.bf16.mxu0 0
      %879 = vmatpush1.bf16.msra.mxu0 0
      %880 = vmatprep.subr.bf16.mxu0 0
      %881 = vmatpush1.bf16.msra.mxu0 0
      %882 = vmatprep.subr.bf16.mxu0 0
      %883 = vmatpush1.bf16.msra.mxu0 0
      %884 = vmatprep.subr.bf16.mxu0 0
      %885 = vmatpush1.bf16.msra.mxu0 0
      %886 = vmatprep.subr.bf16.mxu0 0
      %887 = vmatpush1.bf16.msra.mxu0 0
      %888 = vmatprep.subr.bf16.mxu0 0
      %889 = vmatpush1.bf16.msra.mxu0 0
      %890 = vmatprep.subr.bf16.mxu0 0
      %891 = vmatpush1.bf16.msra.mxu0 0
      %892 = vmatprep.subr.bf16.mxu0 0
      %893 = vmatpush1.bf16.msra.mxu0 0
      %894 = vmatprep.subr.bf16.mxu0 0
      %895 = vmatpush1.bf16.msra.mxu0 0
      %896 = vmatprep.subr.bf16.mxu0 0
      %897 = vmatpush1.bf16.msra.mxu0 0
      %898 = vmatprep.subr.bf16.mxu0 0
      %899 = vmatpush1.bf16.msra.mxu0 0
      %900 = vmatprep.subr.bf16.mxu0 0
      %901 = vmatpush1.bf16.msra.mxu0 0
      %902 = vmatprep.subr.bf16.mxu0 0
      %903 = vmatpush1.bf16.msra.mxu0 0
      %904 = vmatprep.mubr.bf16.mxu0 0
      %905 = vmatmul.mubr.bf16.gmra.mrb[0].mxu0 %v867
      %v906 = vpop.f32.mrb[0].mxu0
      %v907 = vadd.f32 0.0, %v906
      %v908 = vpop.f32.mrb[0].mxu0
      %v909 = vpop.f32.mrb[0].mxu0
      %v910 = vpop.f32.mrb[0].mxu0
      %911 = vdwg.mxu0
      %913 = vrot.lane.b32.xlu0 %v564, 96
      %v914 = vpop.permute.xlu0 %913
      %v916 = vsel %vm566, %v811, 0
      %v919 = vsel %vm819, %v914, 0
      %921 = vmatprep.subr.bf16.mxu0 0
      %922 = vmatpush1.bf16.msra.mxu0 %v919
      %923 = vmatprep.subr.bf16.mxu0 0
      %924 = vmatpush1.bf16.msra.mxu0 0
      %925 = vmatprep.subr.bf16.mxu0 0
      %926 = vmatpush1.bf16.msra.mxu0 0
      %927 = vmatprep.subr.bf16.mxu0 0
      %928 = vmatpush1.bf16.msra.mxu0 0
      %929 = vmatprep.subr.bf16.mxu0 0
      %930 = vmatpush1.bf16.msra.mxu0 0
      %931 = vmatprep.subr.bf16.mxu0 0
      %932 = vmatpush1.bf16.msra.mxu0 0
      %933 = vmatprep.subr.bf16.mxu0 0
      %934 = vmatpush1.bf16.msra.mxu0 0
      %935 = vmatprep.subr.bf16.mxu0 0
      %936 = vmatpush1.bf16.msra.mxu0 0
      %937 = vmatprep.subr.bf16.mxu0 0
      %938 = vmatpush1.bf16.msra.mxu0 0
      %939 = vmatprep.subr.bf16.mxu0 0
      %940 = vmatpush1.bf16.msra.mxu0 0
      %941 = vmatprep.subr.bf16.mxu0 0
      %942 = vmatpush1.bf16.msra.mxu0 0
      %943 = vmatprep.subr.bf16.mxu0 0
      %944 = vmatpush1.bf16.msra.mxu0 0
      %945 = vmatprep.subr.bf16.mxu0 0
      %946 = vmatpush1.bf16.msra.mxu0 0
      %947 = vmatprep.subr.bf16.mxu0 0
      %948 = vmatpush1.bf16.msra.mxu0 0
      %949 = vmatprep.subr.bf16.mxu0 0
      %950 = vmatpush1.bf16.msra.mxu0 0
      %951 = vmatprep.subr.bf16.mxu0 0
      %952 = vmatpush1.bf16.msra.mxu0 0
      %953 = vmatprep.mubr.bf16.mxu0 0
      %954 = vmatmul.mubr.bf16.gmra.mrb[0].mxu0 %v916
      %v955 = vpop.f32.mrb[0].mxu0
      %v956 = vadd.f32 0.0, %v955
      %v957 = vpop.f32.mrb[0].mxu0
      %v958 = vpop.f32.mrb[0].mxu0
      %v959 = vpop.f32.mrb[0].mxu0
      %960 = vdwg.mxu0
      %962 = vrot.lane.b32.xlu0 %v565, 96
      %v963 = vpop.permute.xlu0 %962
      %v965 = vsel %vm566, %v812, 0
      %v968 = vsel %vm819, %v963, 0
      %970 = vmatprep.subr.bf16.mxu0 0
      %971 = vmatpush1.bf16.msra.mxu0 %v968
      %972 = vmatprep.subr.bf16.mxu0 0
      %973 = vmatpush1.bf16.msra.mxu0 0
      %974 = vmatprep.subr.bf16.mxu0 0
      %975 = vmatpush1.bf16.msra.mxu0 0
      %976 = vmatprep.subr.bf16.mxu0 0
      %977 = vmatpush1.bf16.msra.mxu0 0
      %978 = vmatprep.subr.bf16.mxu0 0
      %979 = vmatpush1.bf16.msra.mxu0 0
      %980 = vmatprep.subr.bf16.mxu0 0
      %981 = vmatpush1.bf16.msra.mxu0 0
      %982 = vmatprep.subr.bf16.mxu0 0
      %983 = vmatpush1.bf16.msra.mxu0 0
      %984 = vmatprep.subr.bf16.mxu0 0
      %985 = vmatpush1.bf16.msra.mxu0 0
      %986 = vmatprep.subr.bf16.mxu0 0
      %987 = vmatpush1.bf16.msra.mxu0 0
      %988 = vmatprep.subr.bf16.mxu0 0
      %989 = vmatpush1.bf16.msra.mxu0 0
      %990 = vmatprep.subr.bf16.mxu0 0
      %991 = vmatpush1.bf16.msra.mxu0 0
      %992 = vmatprep.subr.bf16.mxu0 0
      %993 = vmatpush1.bf16.msra.mxu0 0
      %994 = vmatprep.subr.bf16.mxu0 0
      %995 = vmatpush1.bf16.msra.mxu0 0
      %996 = vmatprep.subr.bf16.mxu0 0
      %997 = vmatpush1.bf16.msra.mxu0 0
      %998 = vmatprep.subr.bf16.mxu0 0
      %999 = vmatpush1.bf16.msra.mxu0 0
      %1000 = vmatprep.subr.bf16.mxu0 0
      %1001 = vmatpush1.bf16.msra.mxu0 0
      %1002 = vmatprep.mubr.bf16.mxu0 0
      %1003 = vmatmul.mubr.bf16.gmra.mrb[0].mxu0 %v965
      %v1004 = vpop.f32.mrb[0].mxu0
      %v1005 = vadd.f32 0.0, %v1004
      %v1006 = vpop.f32.mrb[0].mxu0
      %v1007 = vpop.f32.mrb[0].mxu0
      %v1008 = vpop.f32.mrb[0].mxu0
      %1009 = vdwg.mxu0
      %v1010 = vpack.c.bf16 %v858, %v858
      %v1011 = vpack.c.bf16 %v907, %v907
      %v1012 = vpack.c.bf16 %v956, %v956
      %v1013 = vpack.c.bf16 %v1005, %v1005
      %v1015 = vsel %vm566, %v1010, 0
      %v1018 = vsel %vm819, %v414, 0
      %1020 = vmatprep.subr.bf16.mxu0 0
      %1021 = vmatpush1.bf16.msra.mxu0 %v1018
      %1022 = vmatprep.subr.bf16.mxu0 0
      %1023 = vmatpush1.bf16.msra.mxu0 0
      %1024 = vmatprep.subr.bf16.mxu0 0
      %1025 = vmatpush1.bf16.msra.mxu0 0
      %1026 = vmatprep.subr.bf16.mxu0 0
      %1027 = vmatpush1.bf16.msra.mxu0 0
      %1028 = vmatprep.subr.bf16.mxu0 0
      %1029 = vmatpush1.bf16.msra.mxu0 0
      %1030 = vmatprep.subr.bf16.mxu0 0
      %1031 = vmatpush1.bf16.msra.mxu0 0
      %1032 = vmatprep.subr.bf16.mxu0 0
      %1033 = vmatpush1.bf16.msra.mxu0 0
      %1034 = vmatprep.subr.bf16.mxu0 0
      %1035 = vmatpush1.bf16.msra.mxu0 0
      %1036 = vmatprep.subr.bf16.mxu0 0
      %1037 = vmatpush1.bf16.msra.mxu0 0
      %1038 = vmatprep.subr.bf16.mxu0 0
      %1039 = vmatpush1.bf16.msra.mxu0 0
      %1040 = vmatprep.subr.bf16.mxu0 0
      %1041 = vmatpush1.bf16.msra.mxu0 0
      %1042 = vmatprep.subr.bf16.mxu0 0
      %1043 = vmatpush1.bf16.msra.mxu0 0
      %1044 = vmatprep.subr.bf16.mxu0 0
      %1045 = vmatpush1.bf16.msra.mxu0 0
      %1046 = vmatprep.subr.bf16.mxu0 0
      %1047 = vmatpush1.bf16.msra.mxu0 0
      %1048 = vmatprep.subr.bf16.mxu0 0
      %1049 = vmatpush1.bf16.msra.mxu0 0
      %1050 = vmatprep.subr.bf16.mxu0 0
      %1051 = vmatpush1.bf16.msra.mxu0 0
      %1052 = vmatprep.mubr.bf16.mxu0 0
      %1053 = vmatmul.mubr.bf16.gmra.mrb[0].mxu0 %v1015
      %v1054 = vpop.f32.mrb[0].mxu0
      %v1055 = vadd.f32 0.0, %v1054
      %v1056 = vpop.f32.mrb[0].mxu0
      %v1057 = vpop.f32.mrb[0].mxu0
      %v1058 = vpop.f32.mrb[0].mxu0
      %1059 = vdwg.mxu0
      %v1061 = vsel %vm566, %v1011, 0
      %v1064 = vsel %vm819, %v415, 0
      %1066 = vmatprep.subr.bf16.mxu0 0
      %1067 = vmatpush1.bf16.msra.mxu0 %v1064
      %1068 = vmatprep.subr.bf16.mxu0 0
      %1069 = vmatpush1.bf16.msra.mxu0 0
      %1070 = vmatprep.subr.bf16.mxu0 0
      %1071 = vmatpush1.bf16.msra.mxu0 0
      %1072 = vmatprep.subr.bf16.mxu0 0
      %1073 = vmatpush1.bf16.msra.mxu0 0
      %1074 = vmatprep.subr.bf16.mxu0 0
      %1075 = vmatpush1.bf16.msra.mxu0 0
      %1076 = vmatprep.subr.bf16.mxu0 0
      %1077 = vmatpush1.bf16.msra.mxu0 0
      %1078 = vmatprep.subr.bf16.mxu0 0
      %1079 = vmatpush1.bf16.msra.mxu0 0
      %1080 = vmatprep.subr.bf16.mxu0 0
      %1081 = vmatpush1.bf16.msra.mxu0 0
      %1082 = vmatprep.subr.bf16.mxu0 0
      %1083 = vmatpush1.bf16.msra.mxu0 0
      %1084 = vmatprep.subr.bf16.mxu0 0
      %1085 = vmatpush1.bf16.msra.mxu0 0
      %1086 = vmatprep.subr.bf16.mxu0 0
      %1087 = vmatpush1.bf16.msra.mxu0 0
      %1088 = vmatprep.subr.bf16.mxu0 0
      %1089 = vmatpush1.bf16.msra.mxu0 0
      %1090 = vmatprep.subr.bf16.mxu0 0
      %1091 = vmatpush1.bf16.msra.mxu0 0
      %1092 = vmatprep.subr.bf16.mxu0 0
      %1093 = vmatpush1.bf16.msra.mxu0 0
      %1094 = vmatprep.subr.bf16.mxu0 0
      %1095 = vmatpush1.bf16.msra.mxu0 0
      %1096 = vmatprep.subr.bf16.mxu0 0
      %1097 = vmatpush1.bf16.msra.mxu0 0
      %1098 = vmatprep.mubr.bf16.mxu0 0
      %1099 = vmatmul.mubr.bf16.gmra.mrb[0].mxu0 %v1061
      %v1100 = vpop.f32.mrb[0].mxu0
      %v1101 = vadd.f32 0.0, %v1100
      %v1102 = vpop.f32.mrb[0].mxu0
      %v1103 = vpop.f32.mrb[0].mxu0
      %v1104 = vpop.f32.mrb[0].mxu0
      %1105 = vdwg.mxu0
      %v1107 = vsel %vm566, %v1012, 0
      %v1110 = vsel %vm819, %v416, 0
      %1112 = vmatprep.subr.bf16.mxu0 0
      %1113 = vmatpush1.bf16.msra.mxu0 %v1110
      %1114 = vmatprep.subr.bf16.mxu0 0
      %1115 = vmatpush1.bf16.msra.mxu0 0
      %1116 = vmatprep.subr.bf16.mxu0 0
      %1117 = vmatpush1.bf16.msra.mxu0 0
      %1118 = vmatprep.subr.bf16.mxu0 0
      %1119 = vmatpush1.bf16.msra.mxu0 0
      %1120 = vmatprep.subr.bf16.mxu0 0
      %1121 = vmatpush1.bf16.msra.mxu0 0
      %1122 = vmatprep.subr.bf16.mxu0 0
      %1123 = vmatpush1.bf16.msra.mxu0 0
      %1124 = vmatprep.subr.bf16.mxu0 0
      %1125 = vmatpush1.bf16.msra.mxu0 0
      %1126 = vmatprep.subr.bf16.mxu0 0
      %1127 = vmatpush1.bf16.msra.mxu0 0
      %1128 = vmatprep.subr.bf16.mxu0 0
      %1129 = vmatpush1.bf16.msra.mxu0 0
      %1130 = vmatprep.subr.bf16.mxu0 0
      %1131 = vmatpush1.bf16.msra.mxu0 0
      %1132 = vmatprep.subr.bf16.mxu0 0
      %1133 = vmatpush1.bf16.msra.mxu0 0
      %1134 = vmatprep.subr.bf16.mxu0 0
      %1135 = vmatpush1.bf16.msra.mxu0 0
      %1136 = vmatprep.subr.bf16.mxu0 0
      %1137 = vmatpush1.bf16.msra.mxu0 0
      %1138 = vmatprep.subr.bf16.mxu0 0
      %1139 = vmatpush1.bf16.msra.mxu0 0
      %1140 = vmatprep.subr.bf16.mxu0 0
      %1141 = vmatpush1.bf16.msra.mxu0 0
      %1142 = vmatprep.subr.bf16.mxu0 0
      %1143 = vmatpush1.bf16.msra.mxu0 0
      %1144 = vmatprep.mubr.bf16.mxu0 0
      %1145 = vmatmul.mubr.bf16.gmra.mrb[0].mxu0 %v1107
      %v1146 = vpop.f32.mrb[0].mxu0
      %v1147 = vadd.f32 0.0, %v1146
      %v1148 = vpop.f32.mrb[0].mxu0
      %v1149 = vpop.f32.mrb[0].mxu0
      %v1150 = vpop.f32.mrb[0].mxu0
      %1151 = vdwg.mxu0
      %v1153 = vsel %vm566, %v1013, 0
      %v1156 = vsel %vm819, %v417, 0
      %1158 = vmatprep.subr.bf16.mxu0 0
      %1159 = vmatpush1.bf16.msra.mxu0 %v1156
      %1160 = vmatprep.subr.bf16.mxu0 0
      %1161 = vmatpush1.bf16.msra.mxu0 0
      %1162 = vmatprep.subr.bf16.mxu0 0
      %1163 = vmatpush1.bf16.msra.mxu0 0
      %1164 = vmatprep.subr.bf16.mxu0 0
      %1165 = vmatpush1.bf16.msra.mxu0 0
      %1166 = vmatprep.subr.bf16.mxu0 0
      %1167 = vmatpush1.bf16.msra.mxu0 0
      %1168 = vmatprep.subr.bf16.mxu0 0
      %1169 = vmatpush1.bf16.msra.mxu0 0
      %1170 = vmatprep.subr.bf16.mxu0 0
      %1171 = vmatpush1.bf16.msra.mxu0 0
      %1172 = vmatprep.subr.bf16.mxu0 0
      %1173 = vmatpush1.bf16.msra.mxu0 0
      %1174 = vmatprep.subr.bf16.mxu0 0
      %1175 = vmatpush1.bf16.msra.mxu0 0
      %1176 = vmatprep.subr.bf16.mxu0 0
      %1177 = vmatpush1.bf16.msra.mxu0 0
      %1178 = vmatprep.subr.bf16.mxu0 0
      %1179 = vmatpush1.bf16.msra.mxu0 0
      %1180 = vmatprep.subr.bf16.mxu0 0
      %1181 = vmatpush1.bf16.msra.mxu0 0
      %1182 = vmatprep.subr.bf16.mxu0 0
      %1183 = vmatpush1.bf16.msra.mxu0 0
      %1184 = vmatprep.subr.bf16.mxu0 0
      %1185 = vmatpush1.bf16.msra.mxu0 0
      %1186 = vmatprep.subr.bf16.mxu0 0
      %1187 = vmatpush1.bf16.msra.mxu0 0
      %1188 = vmatprep.subr.bf16.mxu0 0
      %1189 = vmatpush1.bf16.msra.mxu0 0
      %1190 = vmatprep.mubr.bf16.mxu0 0
      %1191 = vmatmul.mubr.bf16.gmra.mrb[0].mxu0 %v1153
      %v1192 = vpop.f32.mrb[0].mxu0
      %v1193 = vadd.f32 0.0, %v1192
      %v1194 = vpop.f32.mrb[0].mxu0
      %v1195 = vpop.f32.mrb[0].mxu0
      %v1196 = vpop.f32.mrb[0].mxu0
      %1197 = vdwg.mxu0
      %v1198 = vadd.f32 %v1055, %v1101
      %v1199 = vadd.f32 %v1198, %v1147
      %v1200 = vadd.f32 %v1199, %v1193
      %v1202 = vlaneseq
      %v1203 = vshrl.u32 %v1202, 7
      %v1204 = vsub.s32 0, %v1203
      %v1205 = vrot.slane %v418, %v1204
      %v1207 = vadd.f32 %v1200, %v1205
      %v1208 = vadd.f32 %v370, %v1207
      %1209 = vst.msk [vmem:[%s368] sm:$0xff] %vm373, %v1208
      %p1210 = scmp.lt.s32.totalorder %s21, 1
      %s1211 = scalar_select %p1210, %s21, 1
      %s1212 = smul.addr %s1211, 8
      %s1213 = scalar_lea.vmem %s10, %s1212
      // Predicated region
      $region61: #{_lambda_.9} parent=59 // pred_check
        %p1214 = pneg %p259
      $region62: #{_lambda_.9} parent=59 // pred_check_branch
        %1216 = sbr.rel (%p1214) target = $region64
      $region63: #{_lambda_.9} parent=59 // pred_region
        _
      $region64: #{_lambda_.9} parent=59 // pred_fallthru
        _
    $region60: #{_lambda_.9} parent=5 // pred_fallthru
      _
    %p1217 = scmp.le.s32.totalorder 2, %s16
    // Predicated region
    $region65: #{_lambda_.9} parent=5 // pred_check
      %p1218 = pneg %p1217
    $region66: #{_lambda_.9} parent=5 // pred_check_branch
      %1220 = sbr.rel (%p1218) target = $region68
    $region67: #{_lambda_.9} parent=5 // pred_region
      %s1221 = ssub.s32 %s16, 2
      // Predicated region
      $region69: #{_lambda_.9} parent=67 // pred_check
        %p1222 = pneg %p265
      $region70: #{_lambda_.9} parent=67 // pred_check_branch
        %1224 = sbr.rel (%p1222) target = $region72
      $region71: #{_lambda_.9} parent=67 // pred_region
        %p1225 = scmp.lt.s32.totalorder %s22, 1
        %s1226 = scalar_select %p1225, %s22, 1
        %s1227 = smul.addr %s1226, 8
        %s1228 = scalar_lea.vmem %s10, %s1227
      $region72: #{_lambda_.9} parent=67 // pred_fallthru
        _
    $region68: #{_lambda_.9} parent=5 // pred_fallthru
      _
  $region6: #{_lambda_.9} parent=0 // loop_footer
    %s20 = sadd.s32 1, %s16
  $region7: #{_lambda_.9} parent=0 // loop_footer_branch
    %15 = sbr.rel target = $region3
  $region8: #{_lambda_.9} parent=0 // loop_exit
    _

// kernel: _lambda_.8
$region0: #{_lambda_.8}
  #allocation0 [shape = 'u32[]', space=smem, size = 0x4, offset = 0x4, fixed_abs, tag = 'smem constant byte address 0x4 - core index']
  #allocation1 [shape = 'u32[144,128]{1,0:T(1,128)}', space=vmem, size = 0x12000, scoped, tag = 'internal scratch']
  %s0 = inlined_call_operand.vmem [shape: f32[2,12,32], index: 0, kind: input, shape index: {}, may-alias: {0,10}]
  %s1 = inlined_call_operand.vmem [shape: f32[2,1,12], index: 1, kind: input, shape index: {}]
  %s2 = inlined_call_operand.vmem [shape: f32[1,32], index: 2, kind: input, shape index: {}]
  %s3 = inlined_call_operand.vmem [shape: f32[1,32], index: 3, kind: input, shape index: {}]
  %s4 = inlined_call_operand.vmem [shape: bf16[32,32], index: 4, kind: input, shape index: {}]
  %s5 = inlined_call_operand.vmem [shape: f32[1,32], index: 5, kind: input, shape index: {}]
  %s6 = inlined_call_operand.vmem [shape: bf16[32,64], index: 6, kind: input, shape index: {}]
  %s7 = inlined_call_operand.vmem [shape: f32[1,64], index: 7, kind: input, shape index: {}]
  %s8 = inlined_call_operand.vmem [shape: bf16[4,8,32], index: 8, kind: input, shape index: {}]
  %s9 = inlined_call_operand.vmem [shape: f32[1,32], index: 9, kind: input, shape index: {}]
  %s10 = inlined_call_operand.vmem [shape: f32[2,12,32], index: 10, kind: output, shape index: {}, may-alias: {0,10}]
  %s11 = sld [smem:[#allocation0]]
  $region73: #{_lambda_.8} parent=0
    _
  %s13 = ssub.s32 1, %s11
  %s14 = scalar_select 0, %s13, %s11
  loop: start=0, step=1, limit=4
  $region2: #{_lambda_.8} parent=0 // loop_pre_header
    _
  $region3: #{_lambda_.8} parent=0 // loop_header
    %s16 = sphi 0, %s20
    %p17 = scmp.ge.s32.totalorder %s16, 4
    %s26 = sphi 0, %s28
    %s29 = sphi 0, %s26
    %s30 = sphi 0, %s29
    %s46 = sphi 0, %s30
    %s52 = sphi 0, %s54
    %s55 = sphi 0, %s52
    %s56 = sphi 0, %s55
    %s72 = sphi 0, %s56
    %s76 = sphi 0, %s76
    %s78 = sphi 0, %s76
    %s79 = sphi 0, %s78
    %s93 = sphi 0, %s79
    %s97 = sphi 0, %s97
    %s99 = sphi 0, %s97
    %s100 = sphi 0, %s99
    %s114 = sphi 0, %s100
    %s118 = sphi 0, %s118
    %s120 = sphi 0, %s118
    %s121 = sphi 0, %s120
    %s135 = sphi 0, %s121
    %s139 = sphi 0, %s139
    %s141 = sphi 0, %s139
    %s142 = sphi 0, %s141
    %s156 = sphi 0, %s142
    %s160 = sphi 0, %s160
    %s162 = sphi 0, %s160
    %s163 = sphi 0, %s162
    %s177 = sphi 0, %s163
    %s181 = sphi 0, %s181
    %s183 = sphi 0, %s181
    %s184 = sphi 0, %s183
    %s198 = sphi 0, %s184
    %s202 = sphi 0, %s202
    %s204 = sphi 0, %s202
    %s205 = sphi 0, %s204
    %s219 = sphi 0, %s205
    %s223 = sphi 0, %s223
    %s225 = sphi 0, %s223
    %s226 = sphi 0, %s225
    %s240 = sphi 0, %s226
    %s246 = sphi 0, %s248
    %s249 = sphi 0, %s246
    %s250 = sphi 0, %s249
    %s266 = sphi 0, %s250
  $region4: #{_lambda_.8} parent=0 // loop_header_branch
    %19 = sbr.rel (%p17) target = $region8
  $region5: #{_lambda_.8} parent=0 // loop_body
    %s21 = ssub.s32 %s16, 1
    %s22 = ssub.s32 %s16, 2
    %s23 = sadd.s32 %s16, 1
    %s24 = ssub.s32 %s16, %s23
    %p25 = scmp.eq.s32.totalorder %s24, 0
    %s27 = sadd.s32 %s26, 1
    %s28 = scalar_select %p25, %s26, %s27
    %p31 = pneg %p25
    %p32 = scmp.eq.s32.totalorder %s16, 1
    %p33 = por %p31, %p32
    %p34 = scmp.ne.s32.totalorder %s26, %s29
    %p35 = scmp.eq.s32.totalorder %s16, 0
    %p36 = por %p34, %p35
    %p37 = scmp.ne.s32.totalorder %s26, %s29
    %p38 = scmp.eq.s32.totalorder %s21, 1
    %p39 = por %p37, %p38
    %p40 = scmp.ne.s32.totalorder %s29, %s30
    %p41 = scmp.eq.s32.totalorder %s21, 0
    %p42 = por %p40, %p41
    %p43 = scmp.ne.s32.totalorder %s29, %s30
    %p44 = scmp.eq.s32.totalorder %s22, 1
    %p45 = por %p43, %p44
    %p47 = scmp.ne.s32.totalorder %s30, %s46
    %p48 = scmp.eq.s32.totalorder %s22, 0
    %p49 = por %p47, %p48
    %s50 = ssub.s32 %s16, %s23
    %p51 = scmp.eq.s32.totalorder %s50, 0
    %s53 = sadd.s32 %s52, 1
    %s54 = scalar_select %p51, %s52, %s53
    %p57 = pneg %p51
    %p58 = scmp.eq.s32.totalorder %s16, 1
    %p59 = por %p57, %p58
    %p60 = scmp.ne.s32.totalorder %s52, %s55
    %p61 = scmp.eq.s32.totalorder %s16, 0
    %p62 = por %p60, %p61
    %p63 = scmp.ne.s32.totalorder %s52, %s55
    %p64 = scmp.eq.s32.totalorder %s21, 1
    %p65 = por %p63, %p64
    %p66 = scmp.ne.s32.totalorder %s55, %s56
    %p67 = scmp.eq.s32.totalorder %s21, 0
    %p68 = por %p66, %p67
    %p69 = scmp.ne.s32.totalorder %s55, %s56
    %p70 = scmp.eq.s32.totalorder %s22, 1
    %p71 = por %p69, %p70
    %p73 = scmp.ne.s32.totalorder %s56, %s72
    %p74 = scmp.eq.s32.totalorder %s22, 0
    %p75 = por %p73, %p74
    %s77 = sadd.s32 %s76, 1
    %p80 = scmp.eq.s32.totalorder %s16, 1
    %p81 = scmp.ne.s32.totalorder %s76, %s78
    %p82 = scmp.eq.s32.totalorder %s16, 0
    %p83 = por %p81, %p82
    %p84 = scmp.ne.s32.totalorder %s76, %s78
    %p85 = scmp.eq.s32.totalorder %s21, 1
    %p86 = por %p84, %p85
    %p87 = scmp.ne.s32.totalorder %s78, %s79
    %p88 = scmp.eq.s32.totalorder %s21, 0
    %p89 = por %p87, %p88
    %p90 = scmp.ne.s32.totalorder %s78, %s79
    %p91 = scmp.eq.s32.totalorder %s22, 1
    %p92 = por %p90, %p91
    %p94 = scmp.ne.s32.totalorder %s79, %s93
    %p95 = scmp.eq.s32.totalorder %s22, 0
    %p96 = por %p94, %p95
    %s98 = sadd.s32 %s97, 1
    %p101 = scmp.eq.s32.totalorder %s16, 1
    %p102 = scmp.ne.s32.totalorder %s97, %s99
    %p103 = scmp.eq.s32.totalorder %s16, 0
    %p104 = por %p102, %p103
    %p105 = scmp.ne.s32.totalorder %s97, %s99
    %p106 = scmp.eq.s32.totalorder %s21, 1
    %p107 = por %p105, %p106
    %p108 = scmp.ne.s32.totalorder %s99, %s100
    %p109 = scmp.eq.s32.totalorder %s21, 0
    %p110 = por %p108, %p109
    %p111 = scmp.ne.s32.totalorder %s99, %s100
    %p112 = scmp.eq.s32.totalorder %s22, 1
    %p113 = por %p111, %p112
    %p115 = scmp.ne.s32.totalorder %s100, %s114
    %p116 = scmp.eq.s32.totalorder %s22, 0
    %p117 = por %p115, %p116
    %s119 = sadd.s32 %s118, 1
    %p122 = scmp.eq.s32.totalorder %s16, 1
    %p123 = scmp.ne.s32.totalorder %s118, %s120
    %p124 = scmp.eq.s32.totalorder %s16, 0
    %p125 = por %p123, %p124
    %p126 = scmp.ne.s32.totalorder %s118, %s120
    %p127 = scmp.eq.s32.totalorder %s21, 1
    %p128 = por %p126, %p127
    %p129 = scmp.ne.s32.totalorder %s120, %s121
    %p130 = scmp.eq.s32.totalorder %s21, 0
    %p131 = por %p129, %p130
    %p132 = scmp.ne.s32.totalorder %s120, %s121
    %p133 = scmp.eq.s32.totalorder %s22, 1
    %p134 = por %p132, %p133
    %p136 = scmp.ne.s32.totalorder %s121, %s135
    %p137 = scmp.eq.s32.totalorder %s22, 0
    %p138 = por %p136, %p137
    %s140 = sadd.s32 %s139, 1
    %p143 = scmp.eq.s32.totalorder %s16, 1
    %p144 = scmp.ne.s32.totalorder %s139, %s141
    %p145 = scmp.eq.s32.totalorder %s16, 0
    %p146 = por %p144, %p145
    %p147 = scmp.ne.s32.totalorder %s139, %s141
    %p148 = scmp.eq.s32.totalorder %s21, 1
    %p149 = por %p147, %p148
    %p150 = scmp.ne.s32.totalorder %s141, %s142
    %p151 = scmp.eq.s32.totalorder %s21, 0
    %p152 = por %p150, %p151
    %p153 = scmp.ne.s32.totalorder %s141, %s142
    %p154 = scmp.eq.s32.totalorder %s22, 1
    %p155 = por %p153, %p154
    %p157 = scmp.ne.s32.totalorder %s142, %s156
    %p158 = scmp.eq.s32.totalorder %s22, 0
    %p159 = por %p157, %p158
    %s161 = sadd.s32 %s160, 1
    %p164 = scmp.eq.s32.totalorder %s16, 1
    %p165 = scmp.ne.s32.totalorder %s160, %s162
    %p166 = scmp.eq.s32.totalorder %s16, 0
    %p167 = por %p165, %p166
    %p168 = scmp.ne.s32.totalorder %s160, %s162
    %p169 = scmp.eq.s32.totalorder %s21, 1
    %p170 = por %p168, %p169
    %p171 = scmp.ne.s32.totalorder %s162, %s163
    %p172 = scmp.eq.s32.totalorder %s21, 0
    %p173 = por %p171, %p172
    %p174 = scmp.ne.s32.totalorder %s162, %s163
    %p175 = scmp.eq.s32.totalorder %s22, 1
    %p176 = por %p174, %p175
    %p178 = scmp.ne.s32.totalorder %s163, %s177
    %p179 = scmp.eq.s32.totalorder %s22, 0
    %p180 = por %p178, %p179
    %s182 = sadd.s32 %s181, 1
    %p185 = scmp.eq.s32.totalorder %s16, 1
    %p186 = scmp.ne.s32.totalorder %s181, %s183
    %p187 = scmp.eq.s32.totalorder %s16, 0
    %p188 = por %p186, %p187
    %p189 = scmp.ne.s32.totalorder %s181, %s183
    %p190 = scmp.eq.s32.totalorder %s21, 1
    %p191 = por %p189, %p190
    %p192 = scmp.ne.s32.totalorder %s183, %s184
    %p193 = scmp.eq.s32.totalorder %s21, 0
    %p194 = por %p192, %p193
    %p195 = scmp.ne.s32.totalorder %s183, %s184
    %p196 = scmp.eq.s32.totalorder %s22, 1
    %p197 = por %p195, %p196
    %p199 = scmp.ne.s32.totalorder %s184, %s198
    %p200 = scmp.eq.s32.totalorder %s22, 0
    %p201 = por %p199, %p200
    %s203 = sadd.s32 %s202, 1
    %p206 = scmp.eq.s32.totalorder %s16, 1
    %p207 = scmp.ne.s32.totalorder %s202, %s204
    %p208 = scmp.eq.s32.totalorder %s16, 0
    %p209 = por %p207, %p208
    %p210 = scmp.ne.s32.totalorder %s202, %s204
    %p211 = scmp.eq.s32.totalorder %s21, 1
    %p212 = por %p210, %p211
    %p213 = scmp.ne.s32.totalorder %s204, %s205
    %p214 = scmp.eq.s32.totalorder %s21, 0
    %p215 = por %p213, %p214
    %p216 = scmp.ne.s32.totalorder %s204, %s205
    %p217 = scmp.eq.s32.totalorder %s22, 1
    %p218 = por %p216, %p217
    %p220 = scmp.ne.s32.totalorder %s205, %s219
    %p221 = scmp.eq.s32.totalorder %s22, 0
    %p222 = por %p220, %p221
    %s224 = sadd.s32 %s223, 1
    %p227 = scmp.eq.s32.totalorder %s16, 1
    %p228 = scmp.ne.s32.totalorder %s223, %s225
    %p229 = scmp.eq.s32.totalorder %s16, 0
    %p230 = por %p228, %p229
    %p231 = scmp.ne.s32.totalorder %s223, %s225
    %p232 = scmp.eq.s32.totalorder %s21, 1
    %p233 = por %p231, %p232
    %p234 = scmp.ne.s32.totalorder %s225, %s226
    %p235 = scmp.eq.s32.totalorder %s21, 0
    %p236 = por %p234, %p235
    %p237 = scmp.ne.s32.totalorder %s225, %s226
    %p238 = scmp.eq.s32.totalorder %s22, 1
    %p239 = por %p237, %p238
    %p241 = scmp.ne.s32.totalorder %s226, %s240
    %p242 = scmp.eq.s32.totalorder %s22, 0
    %p243 = por %p241, %p242
    %s244 = ssub.s32 %s16, %s23
    %p245 = scmp.eq.s32.totalorder %s244, 0
    %s247 = sadd.s32 %s246, 1
    %s248 = scalar_select %p245, %s246, %s247
    %p251 = pneg %p245
    %p252 = scmp.eq.s32.totalorder %s16, 1
    %p253 = por %p251, %p252
    %p254 = scmp.ne.s32.totalorder %s246, %s249
    %p255 = scmp.eq.s32.totalorder %s16, 0
    %p256 = por %p254, %p255
    %p257 = scmp.ne.s32.totalorder %s246, %s249
    %p258 = scmp.eq.s32.totalorder %s21, 1
    %p259 = por %p257, %p258
    %p260 = scmp.ne.s32.totalorder %s249, %s250
    %p261 = scmp.eq.s32.totalorder %s21, 0
    %p262 = por %p260, %p261
    %p263 = scmp.ne.s32.totalorder %s249, %s250
    %p264 = scmp.eq.s32.totalorder %s22, 1
    %p265 = por %p263, %p264
    %p267 = scmp.ne.s32.totalorder %s250, %s266
    %p268 = scmp.eq.s32.totalorder %s22, 0
    %p269 = por %p267, %p268
    %p270 = scmp.le.s32.totalorder 1, %s16
    %p271 = scmp.lt.s32.totalorder %s16, 3
    %p272 = pnand %p270, %p271
    %p273 = pneg %p272
    // Predicated region
    $region9: #{_lambda_.8} parent=5 // pred_check
      _
    $region10: #{_lambda_.8} parent=5 // pred_check_branch
      %275 = sbr.rel (%p272) target = $region12
    $region11: #{_lambda_.8} parent=5 // pred_region
      %s276 = ssub.s32 %s16, 1
      // Predicated region
      $region13: #{_lambda_.8} parent=11 // pred_check
        %p277 = pneg %p89
      $region14: #{_lambda_.8} parent=11 // pred_check_branch
        %279 = sbr.rel (%p277) target = $region16
      $region15: #{_lambda_.8} parent=11 // pred_region
        _
      $region16: #{_lambda_.8} parent=11 // pred_fallthru
        _
      // Predicated region
      $region17: #{_lambda_.8} parent=11 // pred_check
        %p280 = pneg %p110
      $region18: #{_lambda_.8} parent=11 // pred_check_branch
        %282 = sbr.rel (%p280) target = $region20
      $region19: #{_lambda_.8} parent=11 // pred_region
        _
      $region20: #{_lambda_.8} parent=11 // pred_fallthru
        _
      // Predicated region
      $region21: #{_lambda_.8} parent=11 // pred_check
        %p283 = pneg %p131
      $region22: #{_lambda_.8} parent=11 // pred_check_branch
        %285 = sbr.rel (%p283) target = $region24
      $region23: #{_lambda_.8} parent=11 // pred_region
        _
      $region24: #{_lambda_.8} parent=11 // pred_fallthru
        _
      // Predicated region
      $region25: #{_lambda_.8} parent=11 // pred_check
        %p286 = pneg %p152
      $region26: #{_lambda_.8} parent=11 // pred_check_branch
        %288 = sbr.rel (%p286) target = $region28
      $region27: #{_lambda_.8} parent=11 // pred_region
        _
      $region28: #{_lambda_.8} parent=11 // pred_fallthru
        _
      // Predicated region
      $region29: #{_lambda_.8} parent=11 // pred_check
        %p289 = pneg %p173
      $region30: #{_lambda_.8} parent=11 // pred_check_branch
        %291 = sbr.rel (%p289) target = $region32
      $region31: #{_lambda_.8} parent=11 // pred_region
        _
      $region32: #{_lambda_.8} parent=11 // pred_fallthru
        _
      // Predicated region
      $region33: #{_lambda_.8} parent=11 // pred_check
        %p292 = pneg %p194
      $region34: #{_lambda_.8} parent=11 // pred_check_branch
        %294 = sbr.rel (%p292) target = $region36
      $region35: #{_lambda_.8} parent=11 // pred_region
        _
      $region36: #{_lambda_.8} parent=11 // pred_fallthru
        _
      // Predicated region
      $region37: #{_lambda_.8} parent=11 // pred_check
        %p295 = pneg %p215
      $region38: #{_lambda_.8} parent=11 // pred_check_branch
        %297 = sbr.rel (%p295) target = $region40
      $region39: #{_lambda_.8} parent=11 // pred_region
        _
      $region40: #{_lambda_.8} parent=11 // pred_fallthru
        _
      // Predicated region
      $region41: #{_lambda_.8} parent=11 // pred_check
        %p298 = pneg %p236
      $region42: #{_lambda_.8} parent=11 // pred_check_branch
        %300 = sbr.rel (%p298) target = $region44
      $region43: #{_lambda_.8} parent=11 // pred_region
        _
      $region44: #{_lambda_.8} parent=11 // pred_fallthru
        _
    $region12: #{_lambda_.8} parent=5 // pred_fallthru
      _
    %p301 = scmp.lt.s32.totalorder %s16, 2
    // Predicated region
    $region45: #{_lambda_.8} parent=5 // pred_check
      %p302 = pneg %p301
    $region46: #{_lambda_.8} parent=5 // pred_check_branch
      %304 = sbr.rel (%p302) target = $region48
    $region47: #{_lambda_.8} parent=5 // pred_region
      // Predicated region
      $region49: #{_lambda_.8} parent=47 // pred_check
        %p305 = pneg %p36
      $region50: #{_lambda_.8} parent=47 // pred_check_branch
        %307 = sbr.rel (%p305) target = $region52
      $region51: #{_lambda_.8} parent=47 // pred_region
        %p308 = scmp.lt.s32.totalorder %s16, 1
        %s309 = scalar_select %p308, %s16, 1
        %s310 = smul.addr %s309, 2
        %s311 = smul.addr %s310, 8
        %s312 = scalar_lea.vmem %s0, %s311
      $region52: #{_lambda_.8} parent=47 // pred_fallthru
        _
      // Predicated region
      $region53: #{_lambda_.8} parent=47 // pred_check
        %p313 = pneg %p62
      $region54: #{_lambda_.8} parent=47 // pred_check_branch
        %315 = sbr.rel (%p313) target = $region56
      $region55: #{_lambda_.8} parent=47 // pred_region
        %p316 = scmp.lt.s32.totalorder %s16, 1
        %s317 = scalar_select %p316, %s16, 1
        %s318 = scalar_lea.vmem %s1, %s317
      $region56: #{_lambda_.8} parent=47 // pred_fallthru
        _
    $region48: #{_lambda_.8} parent=5 // pred_fallthru
      _
    %p319 = scmp.le.s32.totalorder 1, %s16
    %p320 = scmp.lt.s32.totalorder %s16, 3
    %p321 = pnand %p319, %p320
    %p322 = pneg %p321
    // Predicated region
    $region57: #{_lambda_.8} parent=5 // pred_check
      _
    $region58: #{_lambda_.8} parent=5 // pred_check_branch
      %324 = sbr.rel (%p321) target = $region60
    $region59: #{_lambda_.8} parent=5 // pred_region
      %s325 = ssub.s32 %s16, 1
      %p326 = scmp.lt.s32.totalorder %s21, 1
      %s327 = scalar_select %p326, %s21, 1
      %s328 = smul.addr %s327, 2
      %s329 = smul.addr %s328, 8
      %s330 = scalar_lea.vmem %s0, %s329
      %p331 = pneg %p42
      %p332 = pneg %p39
      %p333 = scmp.lt.s32.totalorder %s21, 1
      %s334 = scalar_select %p333, %s21, 1
      %s335 = scalar_lea.vmem %s1, %s334
      %p336 = pneg %p68
      %p337 = pneg %p65
      %p338 = pneg %p89
      %p339 = pneg %p86
      %p340 = pneg %p110
      %p341 = pneg %p107
      %p342 = pneg %p131
      %p343 = pneg %p128
      %p344 = pneg %p152
      %p345 = pneg %p149
      %p346 = pneg %p173
      %p347 = pneg %p170
      %p348 = pneg %p194
      %p349 = pneg %p191
      %p350 = pneg %p215
      %p351 = pneg %p212
      %p352 = pneg %p236
      %p353 = pneg %p233
      %p354 = pneg %p262
      %p355 = pneg %p259
      %p356 = scmp.lt.s32.totalorder %s21, 1
      %s357 = scalar_select %p356, %s21, 1
      %s358 = smul.addr %s357, 2
      %s359 = smul.addr %s358, 8
      %s360 = scalar_lea.vmem %s10, %s359
      %p361 = scmp.lt.s32.totalorder %s21, 1
      %s362 = scalar_select %p361, %s21, 1
      %s363 = smul.addr %s362, 2
      %s364 = smul.addr %s363, 8
      %s365 = scalar_lea.vmem %s0, %s364
      %p366 = scmp.lt.s32.totalorder %s21, 1
      %s367 = scalar_select %p366, %s21, 1
      %s368 = scalar_lea.vmem %s1, %s367
      %p369 = scmp.lt.s32.totalorder %s21, 1
      %s370 = scalar_select %p369, %s21, 1
      %s371 = smul.addr %s370, 2
      %s372 = smul.addr %s371, 8
      %s373 = scalar_lea.vmem %s10, %s372
      %v375 = vld [vmem:[%s365] sm:$0xff]
      %v376 = vld [vmem:[%s365 + $0x8] sm:$0xf]
      %v377 = vld [vmem:[%s2] sm:$0x1]
      %v378 = vld [vmem:[%s3] sm:$0x1]
      %vm379 = vcmask 261120
      %v380 = vsel %vm379, %v375, 0.0
      %381 = vadd.xlane.f32.xlu0 %v380
      %v382 = vpop.xlane.xlu0 %381
      %vm383 = vcmask 257024
      %v384 = vsel %vm383, %v376, 0.0
      %385 = vadd.xlane.f32.xlu0 %v384
      %v386 = vpop.xlane.xlu0 %385
      %v387 = vrcp.pop 32.0
      %v388 = vmul.f32 %v382, %v387
      %v389 = vmul.f32 %v386, %v387
      %v390 = vsub.f32 %v375, %v388
      %v391 = vsub.f32 %v376, %v389
      %v392 = vmul.f32 %v390, %v390
      %v393 = vmul.f32 %v391, %v391
      %v394 = vsel %vm379, %v392, 0.0
      %395 = vadd.xlane.f32.xlu0 %v394
      %v396 = vpop.xlane.xlu0 %395
      %v397 = vsel %vm383, %v393, 0.0
      %398 = vadd.xlane.f32.xlu0 %v397
      %v399 = vpop.xlane.xlu0 %398
      %v400 = vmul.f32 %v396, %v387
      %v401 = vmul.f32 %v399, %v387
      %v402 = vadd.f32 %v400, 1e-05
      %v403 = vadd.f32 %v401, 1e-05
      %v404 = vrsqrt.pop %v402
      %v405 = vrsqrt.pop %v403
      %v406 = vmul.f32 %v390, %v404
      %v407 = vmul.f32 %v391, %v405
      %v409 = vlaneseq
      %v410 = vshrl.u32 %v409, 7
      %v411 = vsub.s32 0, %v410
      %v412 = vrot.slane %v377, %v411
      %v414 = vmul.f32 %v406, %v412
      %v415 = vmul.f32 %v407, %v412
      %v417 = vlaneseq
      %v418 = vshrl.u32 %v417, 7
      %v419 = vsub.s32 0, %v418
      %v420 = vrot.slane %v378, %v419
      %v422 = vadd.f32 %v414, %v420
      %v423 = vadd.f32 %v415, %v420
      %v424 = vpack.c.bf16 %v423, %v422
      %v425 = vld [vmem:[%s368] sm:$0x1]
      %v426 = vld [vmem:[%s4] sm:$0xf]
      %v427 = vld [vmem:[%s4 + $0x4] sm:$0xf]
      %v428 = vld [vmem:[%s4 + $0x8] sm:$0xf]
      %v429 = vld [vmem:[%s4 + $0xc] sm:$0xf]
      %v430 = vld [vmem:[%s5] sm:$0x1]
      %v431 = vld [vmem:[%s6] sm:$0xf]
      %v432 = vld [vmem:[%s6 + $0x4] sm:$0xf]
      %v433 = vld [vmem:[%s6 + $0x8] sm:$0xf]
      %v434 = vld [vmem:[%s6 + $0xc] sm:$0xf]
      %v435 = vld [vmem:[%s7] sm:$0x1]
      %v436 = vld [vmem:[%s8] sm:$0xf]
      %v437 = vld [vmem:[%s8 + $0x4] sm:$0xf]
      %v438 = vld [vmem:[%s8 + $0x8] sm:$0xf]
      %v439 = vld [vmem:[%s8 + $0xc] sm:$0xf]
      %v440 = vld [vmem:[%s9] sm:$0x1]
      %v442 = vlaneseq
      %v443 = vshrl.u32 %v442, 7
      %v444 = vsub.s32 0, %v443
      %v445 = vrot.slane %v430, %v444
      %v451 = vunpack.c.l.b16 %v426
      %v452 = vunpack.c.l.b16 %v427
      %v453 = vunpack.c.l.b16 %v428
      %v454 = vunpack.c.l.b16 %v429
      %v455 = vpack.c.b16 %v452, %v451
      %v456 = vpack.c.b16 %v454, %v453
      %v460 = vsel %vm379, %v424, 0
      %462 = vmatprep.subr.bf16.mxu0 0
      %463 = vmatpush1.bf16.msra.mxu0 %v455
      %464 = vmatprep.subr.bf16.mxu0 0
      %465 = vmatpush1.bf16.msra.mxu0 %v456
      %466 = vmatprep.subr.bf16.mxu0 0
      %467 = vmatpush1.bf16.msra.mxu0 0
      %468 = vmatprep.subr.bf16.mxu0 0
      %469 = vmatpush1.bf16.msra.mxu0 0
      %470 = vmatprep.subr.bf16.mxu0 0
      %471 = vmatpush1.bf16.msra.mxu0 0
      %472 = vmatprep.subr.bf16.mxu0 0
      %473 = vmatpush1.bf16.msra.mxu0 0
      %474 = vmatprep.subr.bf16.mxu0 0
      %475 = vmatpush1.bf16.msra.mxu0 0
      %476 = vmatprep.subr.bf16.mxu0 0
      %477 = vmatpush1.bf16.msra.mxu0 0
      %478 = vmatprep.subr.bf16.mxu0 0
      %479 = vmatpush1.bf16.msra.mxu0 0
      %480 = vmatprep.subr.bf16.mxu0 0
      %481 = vmatpush1.bf16.msra.mxu0 0
      %482 = vmatprep.subr.bf16.mxu0 0
      %483 = vmatpush1.bf16.msra.mxu0 0
      %484 = vmatprep.subr.bf16.mxu0 0
      %485 = vmatpush1.bf16.msra.mxu0 0
      %486 = vmatprep.subr.bf16.mxu0 0
      %487 = vmatpush1.bf16.msra.mxu0 0
      %488 = vmatprep.subr.bf16.mxu0 0
      %489 = vmatpush1.bf16.msra.mxu0 0
      %490 = vmatprep.subr.bf16.mxu0 0
      %491 = vmatpush1.bf16.msra.mxu0 0
      %492 = vmatprep.subr.bf16.mxu0 0
      %493 = vmatpush1.bf16.msra.mxu0 0
      %494 = vmatprep.mubr.bf16.mxu0 0
      %495 = vmatmul.mubr.bf16.gmra.mrb[0].mxu0 %v460
      %v496 = vpop.f32.mrb[0].mxu0
      %v497 = vadd.f32 %v445, %v496
      %v498 = vpop.f32.mrb[0].mxu0
      %v499 = vpop.f32.mrb[0].mxu0
      %v500 = vadd.f32 %v445, %v499
      %v501 = vpop.f32.mrb[0].mxu0
      %502 = vdwg.mxu0
      %v504 = vlaneseq
      %v505 = vshrl.u32 %v504, 7
      %v506 = vsub.s32 0, %v505
      %v507 = vrot.slane %v435, %v506
      %v513 = vunpack.c.l.b16 %v431
      %v514 = vunpack.c.l.b16 %v432
      %v515 = vunpack.c.l.b16 %v433
      %v516 = vunpack.c.l.b16 %v434
      %v517 = vpack.c.b16 %v514, %v513
      %v518 = vpack.c.b16 %v516, %v515
      %521 = vmatprep.subr.bf16.mxu0 0
      %522 = vmatpush1.bf16.msra.mxu0 %v517
      %523 = vmatprep.subr.bf16.mxu0 0
      %524 = vmatpush1.bf16.msra.mxu0 %v518
      %525 = vmatprep.subr.bf16.mxu0 0
      %526 = vmatpush1.bf16.msra.mxu0 0
      %527 = vmatprep.subr.bf16.mxu0 0
      %528 = vmatpush1.bf16.msra.mxu0 0
      %529 = vmatprep.subr.bf16.mxu0 0
      %530 = vmatpush1.bf16.msra.mxu0 0
      %531 = vmatprep.subr.bf16.mxu0 0
      %532 = vmatpush1.bf16.msra.mxu0 0
      %533 = vmatprep.subr.bf16.mxu0 0
      %534 = vmatpush1.bf16.msra.mxu0 0
      %535 = vmatprep.subr.bf16.mxu0 0
      %536 = vmatpush1.bf16.msra.mxu0 0
      %537 = vmatprep.subr.bf16.mxu0 0
      %538 = vmatpush1.bf16.msra.mxu0 0
      %539 = vmatprep.subr.bf16.mxu0 0
      %540 = vmatpush1.bf16.msra.mxu0 0
      %541 = vmatprep.subr.bf16.mxu0 0
      %542 = vmatpush1.bf16.msra.mxu0 0
      %543 = vmatprep.subr.bf16.mxu0 0
      %544 = vmatpush1.bf16.msra.mxu0 0
      %545 = vmatprep.subr.bf16.mxu0 0
      %546 = vmatpush1.bf16.msra.mxu0 0
      %547 = vmatprep.subr.bf16.mxu0 0
      %548 = vmatpush1.bf16.msra.mxu0 0
      %549 = vmatprep.subr.bf16.mxu0 0
      %550 = vmatpush1.bf16.msra.mxu0 0
      %551 = vmatprep.subr.bf16.mxu0 0
      %552 = vmatpush1.bf16.msra.mxu0 0
      %553 = vmatprep.mubr.bf16.mxu0 0
      %554 = vmatmul.mubr.bf16.gmra.mrb[0].mxu0 %v460
      %v555 = vpop.f32.mrb[0].mxu0
      %v556 = vadd.f32 %v507, %v555
      %v557 = vpop.f32.mrb[0].mxu0
      %v558 = vpop.f32.mrb[0].mxu0
      %v559 = vadd.f32 %v507, %v558
      %v560 = vpop.f32.mrb[0].mxu0
      %561 = vdwg.mxu0
      %564 = vrot.lane.b32.xlu0 %v497, 120
      %v565 = vpop.permute.xlu0 %564
      %566 = vrot.lane.b32.xlu0 %v500, 120
      %v567 = vpop.permute.xlu0 %566
      %570 = vrot.lane.b32.xlu0 %v497, 112
      %v571 = vpop.permute.xlu0 %570
      %572 = vrot.lane.b32.xlu0 %v500, 112
      %v573 = vpop.permute.xlu0 %572
      %576 = vrot.lane.b32.xlu0 %v497, 104
      %v577 = vpop.permute.xlu0 %576
      %578 = vrot.lane.b32.xlu0 %v500, 104
      %v579 = vpop.permute.xlu0 %578
      %v582 = vpack.c.bf16 %v500, %v497
      %v583 = vpack.c.bf16 %v567, %v565
      %v584 = vpack.c.bf16 %v573, %v571
      %v585 = vpack.c.bf16 %v579, %v577
      %588 = vrot.lane.b32.xlu0 %v556, 120
      %v589 = vpop.permute.xlu0 %588
      %590 = vrot.lane.b32.xlu0 %v559, 120
      %v591 = vpop.permute.xlu0 %590
      %594 = vrot.lane.b32.xlu0 %v556, 112
      %v595 = vpop.permute.xlu0 %594
      %596 = vrot.lane.b32.xlu0 %v559, 112
      %v597 = vpop.permute.xlu0 %596
      %600 = vrot.lane.b32.xlu0 %v556, 104
      %v601 = vpop.permute.xlu0 %600
      %602 = vrot.lane.b32.xlu0 %v559, 104
      %v603 = vpop.permute.xlu0 %602
      %v606 = vpack.c.bf16 %v559, %v556
      %v607 = vpack.c.bf16 %v591, %v589
      %v608 = vpack.c.bf16 %v597, %v595
      %v609 = vpack.c.bf16 %v603, %v601
      %vm610 = vcmask 64512
      %v612 = vsel %vm610, %v582, 0
      %v615 = vsel %vm610, %v606, 0
      %617 = vmatprep.subr.bf16.mxu0 0
      %618 = vmatpush1.bf16.xpose.msra.mxu0 %v615
      %619 = vmatprep.subr.bf16.mxu0 0
      %620 = vmatpush1.bf16.xpose.msra.mxu0 0
      %621 = vmatprep.subr.bf16.mxu0 0
      %622 = vmatpush1.bf16.xpose.msra.mxu0 0
      %623 = vmatprep.subr.bf16.mxu0 0
      %624 = vmatpush1.bf16.xpose.msra.mxu0 0
      %625 = vmatprep.subr.bf16.mxu0 0
      %626 = vmatpush1.bf16.xpose.msra.mxu0 0
      %627 = vmatprep.subr.bf16.mxu0 0
      %628 = vmatpush1.bf16.xpose.msra.mxu0 0
      %629 = vmatprep.subr.bf16.mxu0 0
      %630 = vmatpush1.bf16.xpose.msra.mxu0 0
      %631 = vmatprep.subr.bf16.mxu0 0
      %632 = vmatpush1.bf16.xpose.msra.mxu0 0
      %633 = vmatprep.subr.bf16.mxu0 0
      %634 = vmatpush1.bf16.xpose.msra.mxu0 0
      %635 = vmatprep.subr.bf16.mxu0 0
      %636 = vmatpush1.bf16.xpose.msra.mxu0 0
      %637 = vmatprep.subr.bf16.mxu0 0
      %638 = vmatpush1.bf16.xpose.msra.mxu0 0
      %639 = vmatprep.subr.bf16.mxu0 0
      %640 = vmatpush1.bf16.xpose.msra.mxu0 0
      %641 = vmatprep.subr.bf16.mxu0 0
      %642 = vmatpush1.bf16.xpose.msra.mxu0 0
      %643 = vmatprep.subr.bf16.mxu0 0
      %644 = vmatpush1.bf16.xpose.msra.mxu0 0
      %645 = vmatprep.subr.bf16.mxu0 0
      %646 = vmatpush1.bf16.xpose.msra.mxu0 0
      %647 = vmatprep.subr.bf16.mxu0 0
      %648 = vmatpush1.bf16.xpose.msra.mxu0 0
      %649 = vmatprep.mubr.bf16.mxu0 0
      %650 = vmatmul.mubr.bf16.gmra.mrb[0].mxu0 %v612
      %v651 = vpop.f32.mrb[0].mxu0
      %v652 = vadd.f32 0.0, %v651
      %v653 = vpop.f32.mrb[0].mxu0
      %v654 = vpop.f32.mrb[0].mxu0
      %v655 = vadd.f32 0.0, %v654
      %v656 = vpop.f32.mrb[0].mxu0
      %657 = vdwg.mxu0
      %v659 = vsel %vm610, %v583, 0
      %v662 = vsel %vm610, %v607, 0
      %664 = vmatprep.subr.bf16.mxu0 0
      %665 = vmatpush1.bf16.xpose.msra.mxu0 %v662
      %666 = vmatprep.subr.bf16.mxu0 0
      %667 = vmatpush1.bf16.xpose.msra.mxu0 0
      %668 = vmatprep.subr.bf16.mxu0 0
      %669 = vmatpush1.bf16.xpose.msra.mxu0 0
      %670 = vmatprep.subr.bf16.mxu0 0
      %671 = vmatpush1.bf16.xpose.msra.mxu0 0
      %672 = vmatprep.subr.bf16.mxu0 0
      %673 = vmatpush1.bf16.xpose.msra.mxu0 0
      %674 = vmatprep.subr.bf16.mxu0 0
      %675 = vmatpush1.bf16.xpose.msra.mxu0 0
      %676 = vmatprep.subr.bf16.mxu0 0
      %677 = vmatpush1.bf16.xpose.msra.mxu0 0
      %678 = vmatprep.subr.bf16.mxu0 0
      %679 = vmatpush1.bf16.xpose.msra.mxu0 0
      %680 = vmatprep.subr.bf16.mxu0 0
      %681 = vmatpush1.bf16.xpose.msra.mxu0 0
      %682 = vmatprep.subr.bf16.mxu0 0
      %683 = vmatpush1.bf16.xpose.msra.mxu0 0
      %684 = vmatprep.subr.bf16.mxu0 0
      %685 = vmatpush1.bf16.xpose.msra.mxu0 0
      %686 = vmatprep.subr.bf16.mxu0 0
      %687 = vmatpush1.bf16.xpose.msra.mxu0 0
      %688 = vmatprep.subr.bf16.mxu0 0
      %689 = vmatpush1.bf16.xpose.msra.mxu0 0
      %690 = vmatprep.subr.bf16.mxu0 0
      %691 = vmatpush1.bf16.xpose.msra.mxu0 0
      %692 = vmatprep.subr.bf16.mxu0 0
      %693 = vmatpush1.bf16.xpose.msra.mxu0 0
      %694 = vmatprep.subr.bf16.mxu0 0
      %695 = vmatpush1.bf16.xpose.msra.mxu0 0
      %696 = vmatprep.mubr.bf16.mxu0 0
      %697 = vmatmul.mubr.bf16.gmra.mrb[0].mxu0 %v659
      %v698 = vpop.f32.mrb[0].mxu0
      %v699 = vadd.f32 0.0, %v698
      %v700 = vpop.f32.mrb[0].mxu0
      %v701 = vpop.f32.mrb[0].mxu0
      %v702 = vadd.f32 0.0, %v701
      %v703 = vpop.f32.mrb[0].mxu0
      %704 = vdwg.mxu0
      %v706 = vsel %vm610, %v584, 0
      %v709 = vsel %vm610, %v608, 0
      %711 = vmatprep.subr.bf16.mxu0 0
      %712 = vmatpush1.bf16.xpose.msra.mxu0 %v709
      %713 = vmatprep.subr.bf16.mxu0 0
      %714 = vmatpush1.bf16.xpose.msra.mxu0 0
      %715 = vmatprep.subr.bf16.mxu0 0
      %716 = vmatpush1.bf16.xpose.msra.mxu0 0
      %717 = vmatprep.subr.bf16.mxu0 0
      %718 = vmatpush1.bf16.xpose.msra.mxu0 0
      %719 = vmatprep.subr.bf16.mxu0 0
      %720 = vmatpush1.bf16.xpose.msra.mxu0 0
      %721 = vmatprep.subr.bf16.mxu0 0
      %722 = vmatpush1.bf16.xpose.msra.mxu0 0
      %723 = vmatprep.subr.bf16.mxu0 0
      %724 = vmatpush1.bf16.xpose.msra.mxu0 0
      %725 = vmatprep.subr.bf16.mxu0 0
      %726 = vmatpush1.bf16.xpose.msra.mxu0 0
      %727 = vmatprep.subr.bf16.mxu0 0
      %728 = vmatpush1.bf16.xpose.msra.mxu0 0
      %729 = vmatprep.subr.bf16.mxu0 0
      %730 = vmatpush1.bf16.xpose.msra.mxu0 0
      %731 = vmatprep.subr.bf16.mxu0 0
      %732 = vmatpush1.bf16.xpose.msra.mxu0 0
      %733 = vmatprep.subr.bf16.mxu0 0
      %734 = vmatpush1.bf16.xpose.msra.mxu0 0
      %735 = vmatprep.subr.bf16.mxu0 0
      %736 = vmatpush1.bf16.xpose.msra.mxu0 0
      %737 = vmatprep.subr.bf16.mxu0 0
      %738 = vmatpush1.bf16.xpose.msra.mxu0 0
      %739 = vmatprep.subr.bf16.mxu0 0
      %740 = vmatpush1.bf16.xpose.msra.mxu0 0
      %741 = vmatprep.subr.bf16.mxu0 0
      %742 = vmatpush1.bf16.xpose.msra.mxu0 0
      %743 = vmatprep.mubr.bf16.mxu0 0
      %744 = vmatmul.mubr.bf16.gmra.mrb[0].mxu0 %v706
      %v745 = vpop.f32.mrb[0].mxu0
      %v746 = vadd.f32 0.0, %v745
      %v747 = vpop.f32.mrb[0].mxu0
      %v748 = vpop.f32.mrb[0].mxu0
      %v749 = vadd.f32 0.0, %v748
      %v750 = vpop.f32.mrb[0].mxu0
      %751 = vdwg.mxu0
      %v753 = vsel %vm610, %v585, 0
      %v756 = vsel %vm610, %v609, 0
      %758 = vmatprep.subr.bf16.mxu0 0
      %759 = vmatpush1.bf16.xpose.msra.mxu0 %v756
      %760 = vmatprep.subr.bf16.mxu0 0
      %761 = vmatpush1.bf16.xpose.msra.mxu0 0
      %762 = vmatprep.subr.bf16.mxu0 0
      %763 = vmatpush1.bf16.xpose.msra.mxu0 0
      %764 = vmatprep.subr.bf16.mxu0 0
      %765 = vmatpush1.bf16.xpose.msra.mxu0 0
      %766 = vmatprep.subr.bf16.mxu0 0
      %767 = vmatpush1.bf16.xpose.msra.mxu0 0
      %768 = vmatprep.subr.bf16.mxu0 0
      %769 = vmatpush1.bf16.xpose.msra.mxu0 0
      %770 = vmatprep.subr.bf16.mxu0 0
      %771 = vmatpush1.bf16.xpose.msra.mxu0 0
      %772 = vmatprep.subr.bf16.mxu0 0
      %773 = vmatpush1.bf16.xpose.msra.mxu0 0
      %774 = vmatprep.subr.bf16.mxu0 0
      %775 = vmatpush1.bf16.xpose.msra.mxu0 0
      %776 = vmatprep.subr.bf16.mxu0 0
      %777 = vmatpush1.bf16.xpose.msra.mxu0 0
      %778 = vmatprep.subr.bf16.mxu0 0
      %779 = vmatpush1.bf16.xpose.msra.mxu0 0
      %780 = vmatprep.subr.bf16.mxu0 0
      %781 = vmatpush1.bf16.xpose.msra.mxu0 0
      %782 = vmatprep.subr.bf16.mxu0 0
      %783 = vmatpush1.bf16.xpose.msra.mxu0 0
      %784 = vmatprep.subr.bf16.mxu0 0
      %785 = vmatpush1.bf16.xpose.msra.mxu0 0
      %786 = vmatprep.subr.bf16.mxu0 0
      %787 = vmatpush1.bf16.xpose.msra.mxu0 0
      %788 = vmatprep.subr.bf16.mxu0 0
      %789 = vmatpush1.bf16.xpose.msra.mxu0 0
      %790 = vmatprep.mubr.bf16.mxu0 0
      %791 = vmatmul.mubr.bf16.gmra.mrb[0].mxu0 %v753
      %v792 = vpop.f32.mrb[0].mxu0
      %v793 = vadd.f32 0.0, %v792
      %v794 = vpop.f32.mrb[0].mxu0
      %v795 = vpop.f32.mrb[0].mxu0
      %v796 = vadd.f32 0.0, %v795
      %v797 = vpop.f32.mrb[0].mxu0
      %798 = vdwg.mxu0
      %v799 = vmul.f32 %v652, 0.35355338
      %v800 = vmul.f32 %v655, 0.35355338
      %v801 = vmul.f32 %v699, 0.35355338
      %v802 = vmul.f32 %v702, 0.35355338
      %v803 = vmul.f32 %v746, 0.35355338
      %v804 = vmul.f32 %v749, 0.35355338
      %v805 = vmul.f32 %v793, 0.35355338
      %v806 = vmul.f32 %v796, 0.35355338
      %v808 = vlaneseq
      %v809 = vshrl.u32 %v808, 7
      %v810 = vsub.s32 0, %v809
      %v811 = vrot.slane %v425, %v810
      %v813 = vadd.f32 %v799, %v811
      %v814 = vadd.f32 %v800, %v811
      %v815 = vadd.f32 %v801, %v811
      %v816 = vadd.f32 %v802, %v811
      %v817 = vadd.f32 %v803, %v811
      %v818 = vadd.f32 %v804, %v811
      %v819 = vadd.f32 %v805, %v811
      %v820 = vadd.f32 %v806, %v811
      %vm821 = vcmask 97280
      %v822 = vsel %vm821, %v813, -inf
      %823 = vmax.xlane.f32.xlu0 %v822
      %v824 = vpop.xlane.xlu0 %823
      %vm825 = vcmask 93184
      %v826 = vsel %vm825, %v814, -inf
      %827 = vmax.xlane.f32.xlu0 %v826
      %v828 = vpop.xlane.xlu0 %827
      %v829 = vsel %vm821, %v815, -inf
      %830 = vmax.xlane.f32.xlu0 %v829
      %v831 = vpop.xlane.xlu0 %830
      %v832 = vsel %vm825, %v816, -inf
      %833 = vmax.xlane.f32.xlu0 %v832
      %v834 = vpop.xlane.xlu0 %833
      %v835 = vsel %vm821, %v817, -inf
      %836 = vmax.xlane.f32.xlu0 %v835
      %v837 = vpop.xlane.xlu0 %836
      %v838 = vsel %vm825, %v818, -inf
      %839 = vmax.xlane.f32.xlu0 %v838
      %v840 = vpop.xlane.xlu0 %839
      %v841 = vsel %vm821, %v819, -inf
      %842 = vmax.xlane.f32.xlu0 %v841
      %v843 = vpop.xlane.xlu0 %842
      %v844 = vsel %vm825, %v820, -inf
      %845 = vmax.xlane.f32.xlu0 %v844
      %v846 = vpop.xlane.xlu0 %845
      %v847 = vsub.f32 %v813, %v824
      %v848 = vsub.f32 %v814, %v828
      %v849 = vsub.f32 %v815, %v831
      %v850 = vsub.f32 %v816, %v834
      %v851 = vsub.f32 %v817, %v837
      %v852 = vsub.f32 %v818, %v840
      %v853 = vsub.f32 %v819, %v843
      %v854 = vsub.f32 %v820, %v846
      %v855 = vmul.f32 %v847, 1.442695
      %v856 = vpow.pop %v855
      %v857 = vmul.f32 %v848, 1.442695
      %v858 = vpow.pop %v857
      %v859 = vmul.f32 %v849, 1.442695
      %v860 = vpow.pop %v859
      %v861 = vmul.f32 %v850, 1.442695
      %v862 = vpow.pop %v861
      %v863 = vmul.f32 %v851, 1.442695
      %v864 = vpow.pop %v863
      %v865 = vmul.f32 %v852, 1.442695
      %v866 = vpow.pop %v865
      %v867 = vmul.f32 %v853, 1.442695
      %v868 = vpow.pop %v867
      %v869 = vmul.f32 %v854, 1.442695
      %v870 = vpow.pop %v869
      %v871 = vsel %vm821, %v856, 0.0
      %872 = vadd.xlane.f32.xlu0 %v871
      %v873 = vpop.xlane.xlu0 %872
      %v874 = vsel %vm825, %v858, 0.0
      %875 = vadd.xlane.f32.xlu0 %v874
      %v876 = vpop.xlane.xlu0 %875
      %v877 = vsel %vm821, %v860, 0.0
      %878 = vadd.xlane.f32.xlu0 %v877
      %v879 = vpop.xlane.xlu0 %878
      %v880 = vsel %vm825, %v862, 0.0
      %881 = vadd.xlane.f32.xlu0 %v880
      %v882 = vpop.xlane.xlu0 %881
      %v883 = vsel %vm821, %v864, 0.0
      %884 = vadd.xlane.f32.xlu0 %v883
      %v885 = vpop.xlane.xlu0 %884
      %v886 = vsel %vm825, %v866, 0.0
      %887 = vadd.xlane.f32.xlu0 %v886
      %v888 = vpop.xlane.xlu0 %887
      %v889 = vsel %vm821, %v868, 0.0
      %890 = vadd.xlane.f32.xlu0 %v889
      %v891 = vpop.xlane.xlu0 %890
      %v892 = vsel %vm825, %v870, 0.0
      %893 = vadd.xlane.f32.xlu0 %v892
      %v894 = vpop.xlane.xlu0 %893
      %v895 = vrcp.pop %v873
      %v896 = vmul.f32 %v856, %v895
      %v897 = vrcp.pop %v876
      %v898 = vmul.f32 %v858, %v897
      %v899 = vrcp.pop %v879
      %v900 = vmul.f32 %v860, %v899
      %v901 = vrcp.pop %v882
      %v902 = vmul.f32 %v862, %v901
      %v903 = vrcp.pop %v885
      %v904 = vmul.f32 %v864, %v903
      %v905 = vrcp.pop %v888
      %v906 = vmul.f32 %v866, %v905
      %v907 = vrcp.pop %v891
      %v908 = vmul.f32 %v868, %v907
      %v909 = vrcp.pop %v894
      %v910 = vmul.f32 %v870, %v909
      %v911 = vpack.c.bf16 %v898, %v896
      %v912 = vpack.c.bf16 %v902, %v900
      %v913 = vpack.c.bf16 %v906, %v904
      %v914 = vpack.c.bf16 %v910, %v908
      %916 = vrot.lane.b32.xlu0 %v606, 96
      %v917 = vpop.permute.xlu0 %916
      %v919 = vsel %vm821, %v911, 0
      %vm921 = vcmask 1045504
      %v923 = vsel %vm921, %v917, 0
      %925 = vmatprep.subr.bf16.mxu0 0
      %926 = vmatpush1.bf16.msra.mxu0 %v923
      %927 = vmatprep.subr.bf16.mxu0 0
      %928 = vmatpush1.bf16.msra.mxu0 0
      %929 = vmatprep.subr.bf16.mxu0 0
      %930 = vmatpush1.bf16.msra.mxu0 0
      %931 = vmatprep.subr.bf16.mxu0 0
      %932 = vmatpush1.bf16.msra.mxu0 0
      %933 = vmatprep.subr.bf16.mxu0 0
      %934 = vmatpush1.bf16.msra.mxu0 0
      %935 = vmatprep.subr.bf16.mxu0 0
      %936 = vmatpush1.bf16.msra.mxu0 0
      %937 = vmatprep.subr.bf16.mxu0 0
      %938 = vmatpush1.bf16.msra.mxu0 0
      %939 = vmatprep.subr.bf16.mxu0 0
      %940 = vmatpush1.bf16.msra.mxu0 0
      %941 = vmatprep.subr.bf16.mxu0 0
      %942 = vmatpush1.bf16.msra.mxu0 0
      %943 = vmatprep.subr.bf16.mxu0 0
      %944 = vmatpush1.bf16.msra.mxu0 0
      %945 = vmatprep.subr.bf16.mxu0 0
      %946 = vmatpush1.bf16.msra.mxu0 0
      %947 = vmatprep.subr.bf16.mxu0 0
      %948 = vmatpush1.bf16.msra.mxu0 0
      %949 = vmatprep.subr.bf16.mxu0 0
      %950 = vmatpush1.bf16.msra.mxu0 0
      %951 = vmatprep.subr.bf16.mxu0 0
      %952 = vmatpush1.bf16.msra.mxu0 0
      %953 = vmatprep.subr.bf16.mxu0 0
      %954 = vmatpush1.bf16.msra.mxu0 0
      %955 = vmatprep.subr.bf16.mxu0 0
      %956 = vmatpush1.bf16.msra.mxu0 0
      %957 = vmatprep.mubr.bf16.mxu0 0
      %958 = vmatmul.mubr.bf16.gmra.mrb[0].mxu0 %v919
      %v959 = vpop.f32.mrb[0].mxu0
      %v960 = vadd.f32 0.0, %v959
      %v961 = vpop.f32.mrb[0].mxu0
      %v962 = vpop.f32.mrb[0].mxu0
      %v963 = vadd.f32 0.0, %v962
      %v964 = vpop.f32.mrb[0].mxu0
      %965 = vdwg.mxu0
      %967 = vrot.lane.b32.xlu0 %v607, 96
      %v968 = vpop.permute.xlu0 %967
      %v970 = vsel %vm821, %v912, 0
      %v973 = vsel %vm921, %v968, 0
      %975 = vmatprep.subr.bf16.mxu0 0
      %976 = vmatpush1.bf16.msra.mxu0 %v973
      %977 = vmatprep.subr.bf16.mxu0 0
      %978 = vmatpush1.bf16.msra.mxu0 0
      %979 = vmatprep.subr.bf16.mxu0 0
      %980 = vmatpush1.bf16.msra.mxu0 0
      %981 = vmatprep.subr.bf16.mxu0 0
      %982 = vmatpush1.bf16.msra.mxu0 0
      %983 = vmatprep.subr.bf16.mxu0 0
      %984 = vmatpush1.bf16.msra.mxu0 0
      %985 = vmatprep.subr.bf16.mxu0 0
      %986 = vmatpush1.bf16.msra.mxu0 0
      %987 = vmatprep.subr.bf16.mxu0 0
      %988 = vmatpush1.bf16.msra.mxu0 0
      %989 = vmatprep.subr.bf16.mxu0 0
      %990 = vmatpush1.bf16.msra.mxu0 0
      %991 = vmatprep.subr.bf16.mxu0 0
      %992 = vmatpush1.bf16.msra.mxu0 0
      %993 = vmatprep.subr.bf16.mxu0 0
      %994 = vmatpush1.bf16.msra.mxu0 0
      %995 = vmatprep.subr.bf16.mxu0 0
      %996 = vmatpush1.bf16.msra.mxu0 0
      %997 = vmatprep.subr.bf16.mxu0 0
      %998 = vmatpush1.bf16.msra.mxu0 0
      %999 = vmatprep.subr.bf16.mxu0 0
      %1000 = vmatpush1.bf16.msra.mxu0 0
      %1001 = vmatprep.subr.bf16.mxu0 0
      %1002 = vmatpush1.bf16.msra.mxu0 0
      %1003 = vmatprep.subr.bf16.mxu0 0
      %1004 = vmatpush1.bf16.msra.mxu0 0
      %1005 = vmatprep.subr.bf16.mxu0 0
      %1006 = vmatpush1.bf16.msra.mxu0 0
      %1007 = vmatprep.mubr.bf16.mxu0 0
      %1008 = vmatmul.mubr.bf16.gmra.mrb[0].mxu0 %v970
      %v1009 = vpop.f32.mrb[0].mxu0
      %v1010 = vadd.f32 0.0, %v1009
      %v1011 = vpop.f32.mrb[0].mxu0
      %v1012 = vpop.f32.mrb[0].mxu0
      %v1013 = vadd.f32 0.0, %v1012
      %v1014 = vpop.f32.mrb[0].mxu0
      %1015 = vdwg.mxu0
      %1017 = vrot.lane.b32.xlu0 %v608, 96
      %v1018 = vpop.permute.xlu0 %1017
      %v1020 = vsel %vm821, %v913, 0
      %v1023 = vsel %vm921, %v1018, 0
      %1025 = vmatprep.subr.bf16.mxu0 0
      %1026 = vmatpush1.bf16.msra.mxu0 %v1023
      %1027 = vmatprep.subr.bf16.mxu0 0
      %1028 = vmatpush1.bf16.msra.mxu0 0
      %1029 = vmatprep.subr.bf16.mxu0 0
      %1030 = vmatpush1.bf16.msra.mxu0 0
      %1031 = vmatprep.subr.bf16.mxu0 0
      %1032 = vmatpush1.bf16.msra.mxu0 0
      %1033 = vmatprep.subr.bf16.mxu0 0
      %1034 = vmatpush1.bf16.msra.mxu0 0
      %1035 = vmatprep.subr.bf16.mxu0 0
      %1036 = vmatpush1.bf16.msra.mxu0 0
      %1037 = vmatprep.subr.bf16.mxu0 0
      %1038 = vmatpush1.bf16.msra.mxu0 0
      %1039 = vmatprep.subr.bf16.mxu0 0
      %1040 = vmatpush1.bf16.msra.mxu0 0
      %1041 = vmatprep.subr.bf16.mxu0 0
      %1042 = vmatpush1.bf16.msra.mxu0 0
      %1043 = vmatprep.subr.bf16.mxu0 0
      %1044 = vmatpush1.bf16.msra.mxu0 0
      %1045 = vmatprep.subr.bf16.mxu0 0
      %1046 = vmatpush1.bf16.msra.mxu0 0
      %1047 = vmatprep.subr.bf16.mxu0 0
      %1048 = vmatpush1.bf16.msra.mxu0 0
      %1049 = vmatprep.subr.bf16.mxu0 0
      %1050 = vmatpush1.bf16.msra.mxu0 0
      %1051 = vmatprep.subr.bf16.mxu0 0
      %1052 = vmatpush1.bf16.msra.mxu0 0
      %1053 = vmatprep.subr.bf16.mxu0 0
      %1054 = vmatpush1.bf16.msra.mxu0 0
      %1055 = vmatprep.subr.bf16.mxu0 0
      %1056 = vmatpush1.bf16.msra.mxu0 0
      %1057 = vmatprep.mubr.bf16.mxu0 0
      %1058 = vmatmul.mubr.bf16.gmra.mrb[0].mxu0 %v1020
      %v1059 = vpop.f32.mrb[0].mxu0
      %v1060 = vadd.f32 0.0, %v1059
      %v1061 = vpop.f32.mrb[0].mxu0
      %v1062 = vpop.f32.mrb[0].mxu0
      %v1063 = vadd.f32 0.0, %v1062
      %v1064 = vpop.f32.mrb[0].mxu0
      %1065 = vdwg.mxu0
      %1067 = vrot.lane.b32.xlu0 %v609, 96
      %v1068 = vpop.permute.xlu0 %1067
      %v1070 = vsel %vm821, %v914, 0
      %v1073 = vsel %vm921, %v1068, 0
      %1075 = vmatprep.subr.bf16.mxu0 0
      %1076 = vmatpush1.bf16.msra.mxu0 %v1073
      %1077 = vmatprep.subr.bf16.mxu0 0
      %1078 = vmatpush1.bf16.msra.mxu0 0
      %1079 = vmatprep.subr.bf16.mxu0 0
      %1080 = vmatpush1.bf16.msra.mxu0 0
      %1081 = vmatprep.subr.bf16.mxu0 0
      %1082 = vmatpush1.bf16.msra.mxu0 0
      %1083 = vmatprep.subr.bf16.mxu0 0
      %1084 = vmatpush1.bf16.msra.mxu0 0
      %1085 = vmatprep.subr.bf16.mxu0 0
      %1086 = vmatpush1.bf16.msra.mxu0 0
      %1087 = vmatprep.subr.bf16.mxu0 0
      %1088 = vmatpush1.bf16.msra.mxu0 0
      %1089 = vmatprep.subr.bf16.mxu0 0
      %1090 = vmatpush1.bf16.msra.mxu0 0
      %1091 = vmatprep.subr.bf16.mxu0 0
      %1092 = vmatpush1.bf16.msra.mxu0 0
      %1093 = vmatprep.subr.bf16.mxu0 0
      %1094 = vmatpush1.bf16.msra.mxu0 0
      %1095 = vmatprep.subr.bf16.mxu0 0
      %1096 = vmatpush1.bf16.msra.mxu0 0
      %1097 = vmatprep.subr.bf16.mxu0 0
      %1098 = vmatpush1.bf16.msra.mxu0 0
      %1099 = vmatprep.subr.bf16.mxu0 0
      %1100 = vmatpush1.bf16.msra.mxu0 0
      %1101 = vmatprep.subr.bf16.mxu0 0
      %1102 = vmatpush1.bf16.msra.mxu0 0
      %1103 = vmatprep.subr.bf16.mxu0 0
      %1104 = vmatpush1.bf16.msra.mxu0 0
      %1105 = vmatprep.subr.bf16.mxu0 0
      %1106 = vmatpush1.bf16.msra.mxu0 0
      %1107 = vmatprep.mubr.bf16.mxu0 0
      %1108 = vmatmul.mubr.bf16.gmra.mrb[0].mxu0 %v1070
      %v1109 = vpop.f32.mrb[0].mxu0
      %v1110 = vadd.f32 0.0, %v1109
      %v1111 = vpop.f32.mrb[0].mxu0
      %v1112 = vpop.f32.mrb[0].mxu0
      %v1113 = vadd.f32 0.0, %v1112
      %v1114 = vpop.f32.mrb[0].mxu0
      %1115 = vdwg.mxu0
      %v1116 = vpack.c.bf16 %v963, %v960
      %v1117 = vpack.c.bf16 %v1013, %v1010
      %v1118 = vpack.c.bf16 %v1063, %v1060
      %v1119 = vpack.c.bf16 %v1113, %v1110
      %v1121 = vsel %vm610, %v1116, 0
      %vm1123 = vcmask 1043456
      %v1125 = vsel %vm1123, %v436, 0
      %1127 = vmatprep.subr.bf16.mxu0 0
      %1128 = vmatpush1.bf16.msra.mxu0 %v1125
      %1129 = vmatprep.subr.bf16.mxu0 0
      %1130 = vmatpush1.bf16.msra.mxu0 0
      %1131 = vmatprep.subr.bf16.mxu0 0
      %1132 = vmatpush1.bf16.msra.mxu0 0
      %1133 = vmatprep.subr.bf16.mxu0 0
      %1134 = vmatpush1.bf16.msra.mxu0 0
      %1135 = vmatprep.subr.bf16.mxu0 0
      %1136 = vmatpush1.bf16.msra.mxu0 0
      %1137 = vmatprep.subr.bf16.mxu0 0
      %1138 = vmatpush1.bf16.msra.mxu0 0
      %1139 = vmatprep.subr.bf16.mxu0 0
      %1140 = vmatpush1.bf16.msra.mxu0 0
      %1141 = vmatprep.subr.bf16.mxu0 0
      %1142 = vmatpush1.bf16.msra.mxu0 0
      %1143 = vmatprep.subr.bf16.mxu0 0
      %1144 = vmatpush1.bf16.msra.mxu0 0
      %1145 = vmatprep.subr.bf16.mxu0 0
      %1146 = vmatpush1.bf16.msra.mxu0 0
      %1147 = vmatprep.subr.bf16.mxu0 0
      %1148 = vmatpush1.bf16.msra.mxu0 0
      %1149 = vmatprep.subr.bf16.mxu0 0
      %1150 = vmatpush1.bf16.msra.mxu0 0
      %1151 = vmatprep.subr.bf16.mxu0 0
      %1152 = vmatpush1.bf16.msra.mxu0 0
      %1153 = vmatprep.subr.bf16.mxu0 0
      %1154 = vmatpush1.bf16.msra.mxu0 0
      %1155 = vmatprep.subr.bf16.mxu0 0
      %1156 = vmatpush1.bf16.msra.mxu0 0
      %1157 = vmatprep.subr.bf16.mxu0 0
      %1158 = vmatpush1.bf16.msra.mxu0 0
      %1159 = vmatprep.mubr.bf16.mxu0 0
      %1160 = vmatmul.mubr.bf16.gmra.mrb[0].mxu0 %v1121
      %v1161 = vpop.f32.mrb[0].mxu0
      %v1162 = vadd.f32 0.0, %v1161
      %v1163 = vpop.f32.mrb[0].mxu0
      %v1164 = vpop.f32.mrb[0].mxu0
      %v1165 = vadd.f32 0.0, %v1164
      %v1166 = vpop.f32.mrb[0].mxu0
      %1167 = vdwg.mxu0
      %v1169 = vsel %vm610, %v1117, 0
      %v1172 = vsel %vm1123, %v437, 0
      %1174 = vmatprep.subr.bf16.mxu0 0
      %1175 = vmatpush1.bf16.msra.mxu0 %v1172
      %1176 = vmatprep.subr.bf16.mxu0 0
      %1177 = vmatpush1.bf16.msra.mxu0 0
      %1178 = vmatprep.subr.bf16.mxu0 0
      %1179 = vmatpush1.bf16.msra.mxu0 0
      %1180 = vmatprep.subr.bf16.mxu0 0
      %1181 = vmatpush1.bf16.msra.mxu0 0
      %1182 = vmatprep.subr.bf16.mxu0 0
      %1183 = vmatpush1.bf16.msra.mxu0 0
      %1184 = vmatprep.subr.bf16.mxu0 0
      %1185 = vmatpush1.bf16.msra.mxu0 0
      %1186 = vmatprep.subr.bf16.mxu0 0
      %1187 = vmatpush1.bf16.msra.mxu0 0
      %1188 = vmatprep.subr.bf16.mxu0 0
      %1189 = vmatpush1.bf16.msra.mxu0 0
      %1190 = vmatprep.subr.bf16.mxu0 0
      %1191 = vmatpush1.bf16.msra.mxu0 0
      %1192 = vmatprep.subr.bf16.mxu0 0
      %1193 = vmatpush1.bf16.msra.mxu0 0
      %1194 = vmatprep.subr.bf16.mxu0 0
      %1195 = vmatpush1.bf16.msra.mxu0 0
      %1196 = vmatprep.subr.bf16.mxu0 0
      %1197 = vmatpush1.bf16.msra.mxu0 0
      %1198 = vmatprep.subr.bf16.mxu0 0
      %1199 = vmatpush1.bf16.msra.mxu0 0
      %1200 = vmatprep.subr.bf16.mxu0 0
      %1201 = vmatpush1.bf16.msra.mxu0 0
      %1202 = vmatprep.subr.bf16.mxu0 0
      %1203 = vmatpush1.bf16.msra.mxu0 0
      %1204 = vmatprep.subr.bf16.mxu0 0
      %1205 = vmatpush1.bf16.msra.mxu0 0
      %1206 = vmatprep.mubr.bf16.mxu0 0
      %1207 = vmatmul.mubr.bf16.gmra.mrb[0].mxu0 %v1169
      %v1208 = vpop.f32.mrb[0].mxu0
      %v1209 = vadd.f32 0.0, %v1208
      %v1210 = vpop.f32.mrb[0].mxu0
      %v1211 = vpop.f32.mrb[0].mxu0
      %v1212 = vadd.f32 0.0, %v1211
      %v1213 = vpop.f32.mrb[0].mxu0
      %1214 = vdwg.mxu0
      %v1216 = vsel %vm610, %v1118, 0
      %v1219 = vsel %vm1123, %v438, 0
      %1221 = vmatprep.subr.bf16.mxu0 0
      %1222 = vmatpush1.bf16.msra.mxu0 %v1219
      %1223 = vmatprep.subr.bf16.mxu0 0
      %1224 = vmatpush1.bf16.msra.mxu0 0
      %1225 = vmatprep.subr.bf16.mxu0 0
      %1226 = vmatpush1.bf16.msra.mxu0 0
      %1227 = vmatprep.subr.bf16.mxu0 0
      %1228 = vmatpush1.bf16.msra.mxu0 0
      %1229 = vmatprep.subr.bf16.mxu0 0
      %1230 = vmatpush1.bf16.msra.mxu0 0
      %1231 = vmatprep.subr.bf16.mxu0 0
      %1232 = vmatpush1.bf16.msra.mxu0 0
      %1233 = vmatprep.subr.bf16.mxu0 0
      %1234 = vmatpush1.bf16.msra.mxu0 0
      %1235 = vmatprep.subr.bf16.mxu0 0
      %1236 = vmatpush1.bf16.msra.mxu0 0
      %1237 = vmatprep.subr.bf16.mxu0 0
      %1238 = vmatpush1.bf16.msra.mxu0 0
      %1239 = vmatprep.subr.bf16.mxu0 0
      %1240 = vmatpush1.bf16.msra.mxu0 0
      %1241 = vmatprep.subr.bf16.mxu0 0
      %1242 = vmatpush1.bf16.msra.mxu0 0
      %1243 = vmatprep.subr.bf16.mxu0 0
      %1244 = vmatpush1.bf16.msra.mxu0 0
      %1245 = vmatprep.subr.bf16.mxu0 0
      %1246 = vmatpush1.bf16.msra.mxu0 0
      %1247 = vmatprep.subr.bf16.mxu0 0
      %1248 = vmatpush1.bf16.msra.mxu0 0
      %1249 = vmatprep.subr.bf16.mxu0 0
      %1250 = vmatpush1.bf16.msra.mxu0 0
      %1251 = vmatprep.subr.bf16.mxu0 0
      %1252 = vmatpush1.bf16.msra.mxu0 0
      %1253 = vmatprep.mubr.bf16.mxu0 0
      %1254 = vmatmul.mubr.bf16.gmra.mrb[0].mxu0 %v1216
      %v1255 = vpop.f32.mrb[0].mxu0
      %v1256 = vadd.f32 0.0, %v1255
      %v1257 = vpop.f32.mrb[0].mxu0
      %v1258 = vpop.f32.mrb[0].mxu0
      %v1259 = vadd.f32 0.0, %v1258
      %v1260 = vpop.f32.mrb[0].mxu0
      %1261 = vdwg.mxu0
      %v1263 = vsel %vm610, %v1119, 0
      %v1266 = vsel %vm1123, %v439, 0
      %1268 = vmatprep.subr.bf16.mxu0 0
      %1269 = vmatpush1.bf16.msra.mxu0 %v1266
      %1270 = vmatprep.subr.bf16.mxu0 0
      %1271 = vmatpush1.bf16.msra.mxu0 0
      %1272 = vmatprep.subr.bf16.mxu0 0
      %1273 = vmatpush1.bf16.msra.mxu0 0
      %1274 = vmatprep.subr.bf16.mxu0 0
      %1275 = vmatpush1.bf16.msra.mxu0 0
      %1276 = vmatprep.subr.bf16.mxu0 0
      %1277 = vmatpush1.bf16.msra.mxu0 0
      %1278 = vmatprep.subr.bf16.mxu0 0
      %1279 = vmatpush1.bf16.msra.mxu0 0
      %1280 = vmatprep.subr.bf16.mxu0 0
      %1281 = vmatpush1.bf16.msra.mxu0 0
      %1282 = vmatprep.subr.bf16.mxu0 0
      %1283 = vmatpush1.bf16.msra.mxu0 0
      %1284 = vmatprep.subr.bf16.mxu0 0
      %1285 = vmatpush1.bf16.msra.mxu0 0
      %1286 = vmatprep.subr.bf16.mxu0 0
      %1287 = vmatpush1.bf16.msra.mxu0 0
      %1288 = vmatprep.subr.bf16.mxu0 0
      %1289 = vmatpush1.bf16.msra.mxu0 0
      %1290 = vmatprep.subr.bf16.mxu0 0
      %1291 = vmatpush1.bf16.msra.mxu0 0
      %1292 = vmatprep.subr.bf16.mxu0 0
      %1293 = vmatpush1.bf16.msra.mxu0 0
      %1294 = vmatprep.subr.bf16.mxu0 0
      %1295 = vmatpush1.bf16.msra.mxu0 0
      %1296 = vmatprep.subr.bf16.mxu0 0
      %1297 = vmatpush1.bf16.msra.mxu0 0
      %1298 = vmatprep.subr.bf16.mxu0 0
      %1299 = vmatpush1.bf16.msra.mxu0 0
      %1300 = vmatprep.mubr.bf16.mxu0 0
      %1301 = vmatmul.mubr.bf16.gmra.mrb[0].mxu0 %v1263
      %v1302 = vpop.f32.mrb[0].mxu0
      %v1303 = vadd.f32 0.0, %v1302
      %v1304 = vpop.f32.mrb[0].mxu0
      %v1305 = vpop.f32.mrb[0].mxu0
      %v1306 = vadd.f32 0.0, %v1305
      %v1307 = vpop.f32.mrb[0].mxu0
      %1308 = vdwg.mxu0
      %v1309 = vadd.f32 %v1162, %v1209
      %v1310 = vadd.f32 %v1165, %v1212
      %v1311 = vadd.f32 %v1309, %v1256
      %v1312 = vadd.f32 %v1310, %v1259
      %v1313 = vadd.f32 %v1311, %v1303
      %v1314 = vadd.f32 %v1312, %v1306
      %v1316 = vlaneseq
      %v1317 = vshrl.u32 %v1316, 7
      %v1318 = vsub.s32 0, %v1317
      %v1319 = vrot.slane %v440, %v1318
      %v1321 = vadd.f32 %v1313, %v1319
      %v1322 = vadd.f32 %v1314, %v1319
      %v1323 = vadd.f32 %v375, %v1321
      %v1324 = vadd.f32 %v376, %v1322
      %1325 = vst.msk [vmem:[%s373] sm:$0xff] %vm379, %v1323
      %1326 = vst.msk [vmem:[%s373 + $0x8] sm:$0xf] %vm383, %v1324
      %p1327 = scmp.lt.s32.totalorder %s21, 1
      %s1328 = scalar_select %p1327, %s21, 1
      %s1329 = smul.addr %s1328, 2
      %s1330 = smul.addr %s1329, 8
      %s1331 = scalar_lea.vmem %s10, %s1330
      // Predicated region
      $region61: #{_lambda_.8} parent=59 // pred_check
        %p1332 = pneg %p259
      $region62: #{_lambda_.8} parent=59 // pred_check_branch
        %1334 = sbr.rel (%p1332) target = $region64
      $region63: #{_lambda_.8} parent=59 // pred_region
        _
      $region64: #{_lambda_.8} parent=59 // pred_fallthru
        _
    $region60: #{_lambda_.8} parent=5 // pred_fallthru
      _
    %p1335 = scmp.le.s32.totalorder 2, %s16
    // Predicated region
    $region65: #{_lambda_.8} parent=5 // pred_check
      %p1336 = pneg %p1335
    $region66: #{_lambda_.8} parent=5 // pred_check_branch
      %1338 = sbr.rel (%p1336) target = $region68
    $region67: #{_lambda_.8} parent=5 // pred_region
      %s1339 = ssub.s32 %s16, 2
      // Predicated region
      $region69: #{_lambda_.8} parent=67 // pred_check
        %p1340 = pneg %p265
      $region70: #{_lambda_.8} parent=67 // pred_check_branch
        %1342 = sbr.rel (%p1340) target = $region72
      $region71: #{_lambda_.8} parent=67 // pred_region
        %p1343 = scmp.lt.s32.totalorder %s22, 1
        %s1344 = scalar_select %p1343, %s22, 1
        %s1345 = smul.addr %s1344, 2
        %s1346 = smul.addr %s1345, 8
        %s1347 = scalar_lea.vmem %s10, %s1346
      $region72: #{_lambda_.8} parent=67 // pred_fallthru
        _
    $region68: #{_lambda_.8} parent=5 // pred_fallthru
      _
  $region6: #{_lambda_.8} parent=0 // loop_footer
    %s20 = sadd.s32 1, %s16
  $region7: #{_lambda_.8} parent=0 // loop_footer_branch
    %15 = sbr.rel target = $region3
  $region8: #{_lambda_.8} parent=0 // loop_exit
    _

// kernel: _lambda_.10
$region0: #{_lambda_.10}
  #allocation0 [shape = 'u32[]', space=smem, size = 0x4, offset = 0x4, fixed_abs, tag = 'smem constant byte address 0x4 - core index']
  #allocation1 [shape = 'u32[144,128]{1,0:T(1,128)}', space=vmem, size = 0x12000, scoped, tag = 'internal scratch']
  %s0 = inlined_call_operand.vmem [shape: f32[2,12,32], index: 0, kind: input, shape index: {}]
  %s1 = inlined_call_operand.vmem [shape: f32[2,8,32], index: 1, kind: input, shape index: {}]
  %s2 = inlined_call_operand.vmem [shape: f32[2,1,8], index: 2, kind: input, shape index: {}]
  %s3 = inlined_call_operand.vmem [shape: f32[1,32], index: 3, kind: input, shape index: {}]
  %s4 = inlined_call_operand.vmem [shape: f32[1,32], index: 4, kind: input, shape index: {}]
  %s5 = inlined_call_operand.vmem [shape: bf16[32,32], index: 5, kind: input, shape index: {}]
  %s6 = inlined_call_operand.vmem [shape: f32[1,32], index: 6, kind: input, shape index: {}]
  %s7 = inlined_call_operand.vmem [shape: bf16[32,64], index: 7, kind: input, shape index: {}]
  %s8 = inlined_call_operand.vmem [shape: f32[1,64], index: 8, kind: input, shape index: {}]
  %s9 = inlined_call_operand.vmem [shape: bf16[4,8,32], index: 9, kind: input, shape index: {}]
  %s10 = inlined_call_operand.vmem [shape: f32[1,32], index: 10, kind: input, shape index: {}]
  %s11 = inlined_call_operand.vmem [shape: f32[1,32], index: 11, kind: input, shape index: {}]
  %s12 = inlined_call_operand.vmem [shape: f32[1,32], index: 12, kind: input, shape index: {}]
  %s13 = inlined_call_operand.vmem [shape: bf16[32,64], index: 13, kind: input, shape index: {}]
  %s14 = inlined_call_operand.vmem [shape: f32[1,64], index: 14, kind: input, shape index: {}]
  %s15 = inlined_call_operand.vmem [shape: bf16[64,32], index: 15, kind: input, shape index: {}]
  %s16 = inlined_call_operand.vmem [shape: f32[1,32], index: 16, kind: input, shape index: {}]
  %s17 = inlined_call_operand.vmem [shape: f32[2,12,32], index: 17, kind: output, shape index: {}]
  %s18 = sld [smem:[#allocation0]]
  $region101: #{_lambda_.10} parent=0
    _
  %s20 = ssub.s32 1, %s18
  %s21 = scalar_select 0, %s20, %s18
  loop: start=0, step=1, limit=4
  $region2: #{_lambda_.10} parent=0 // loop_pre_header
    _
  $region3: #{_lambda_.10} parent=0 // loop_header
    %s23 = sphi 0, %s27
    %p24 = scmp.ge.s32.totalorder %s23, 4
    %s33 = sphi 0, %s35
    %s36 = sphi 0, %s33
    %s37 = sphi 0, %s36
    %s53 = sphi 0, %s37
    %s59 = sphi 0, %s61
    %s62 = sphi 0, %s59
    %s63 = sphi 0, %s62
    %s79 = sphi 0, %s63
    %s85 = sphi 0, %s87
    %s88 = sphi 0, %s85
    %s89 = sphi 0, %s88
    %s105 = sphi 0, %s89
    %s109 = sphi 0, %s109
    %s111 = sphi 0, %s109
    %s112 = sphi 0, %s111
    %s126 = sphi 0, %s112
    %s130 = sphi 0, %s130
    %s132 = sphi 0, %s130
    %s133 = sphi 0, %s132
    %s147 = sphi 0, %s133
    %s151 = sphi 0, %s151
    %s153 = sphi 0, %s151
    %s154 = sphi 0, %s153
    %s168 = sphi 0, %s154
    %s172 = sphi 0, %s172
    %s174 = sphi 0, %s172
    %s175 = sphi 0, %s174
    %s189 = sphi 0, %s175
    %s193 = sphi 0, %s193
    %s195 = sphi 0, %s193
    %s196 = sphi 0, %s195
    %s210 = sphi 0, %s196
    %s214 = sphi 0, %s214
    %s216 = sphi 0, %s214
    %s217 = sphi 0, %s216
    %s231 = sphi 0, %s217
    %s235 = sphi 0, %s235
    %s237 = sphi 0, %s235
    %s238 = sphi 0, %s237
    %s252 = sphi 0, %s238
    %s256 = sphi 0, %s256
    %s258 = sphi 0, %s256
    %s259 = sphi 0, %s258
    %s273 = sphi 0, %s259
    %s277 = sphi 0, %s277
    %s279 = sphi 0, %s277
    %s280 = sphi 0, %s279
    %s294 = sphi 0, %s280
    %s298 = sphi 0, %s298
    %s300 = sphi 0, %s298
    %s301 = sphi 0, %s300
    %s315 = sphi 0, %s301
    %s319 = sphi 0, %s319
    %s321 = sphi 0, %s319
    %s322 = sphi 0, %s321
    %s336 = sphi 0, %s322
    %s340 = sphi 0, %s340
    %s342 = sphi 0, %s340
    %s343 = sphi 0, %s342
    %s357 = sphi 0, %s343
    %s361 = sphi 0, %s361
    %s363 = sphi 0, %s361
    %s364 = sphi 0, %s363
    %s378 = sphi 0, %s364
    %s382 = sphi 0, %s382
    %s384 = sphi 0, %s382
    %s385 = sphi 0, %s384
    %s399 = sphi 0, %s385
    %s405 = sphi 0, %s407
    %s408 = sphi 0, %s405
    %s409 = sphi 0, %s408
    %s425 = sphi 0, %s409
  $region4: #{_lambda_.10} parent=0 // loop_header_branch
    %26 = sbr.rel (%p24) target = $region8
  $region5: #{_lambda_.10} parent=0 // loop_body
    %s28 = ssub.s32 %s23, 1
    %s29 = ssub.s32 %s23, 2
    %s30 = sadd.s32 %s23, 1
    %s31 = ssub.s32 %s23, %s30
    %p32 = scmp.eq.s32.totalorder %s31, 0
    %s34 = sadd.s32 %s33, 1
    %s35 = scalar_select %p32, %s33, %s34
    %p38 = pneg %p32
    %p39 = scmp.eq.s32.totalorder %s23, 1
    %p40 = por %p38, %p39
    %p41 = scmp.ne.s32.totalorder %s33, %s36
    %p42 = scmp.eq.s32.totalorder %s23, 0
    %p43 = por %p41, %p42
    %p44 = scmp.ne.s32.totalorder %s33, %s36
    %p45 = scmp.eq.s32.totalorder %s28, 1
    %p46 = por %p44, %p45
    %p47 = scmp.ne.s32.totalorder %s36, %s37
    %p48 = scmp.eq.s32.totalorder %s28, 0
    %p49 = por %p47, %p48
    %p50 = scmp.ne.s32.totalorder %s36, %s37
    %p51 = scmp.eq.s32.totalorder %s29, 1
    %p52 = por %p50, %p51
    %p54 = scmp.ne.s32.totalorder %s37, %s53
    %p55 = scmp.eq.s32.totalorder %s29, 0
    %p56 = por %p54, %p55
    %s57 = ssub.s32 %s23, %s30
    %p58 = scmp.eq.s32.totalorder %s57, 0
    %s60 = sadd.s32 %s59, 1
    %s61 = scalar_select %p58, %s59, %s60
    %p64 = pneg %p58
    %p65 = scmp.eq.s32.totalorder %s23, 1
    %p66 = por %p64, %p65
    %p67 = scmp.ne.s32.totalorder %s59, %s62
    %p68 = scmp.eq.s32.totalorder %s23, 0
    %p69 = por %p67, %p68
    %p70 = scmp.ne.s32.totalorder %s59, %s62
    %p71 = scmp.eq.s32.totalorder %s28, 1
    %p72 = por %p70, %p71
    %p73 = scmp.ne.s32.totalorder %s62, %s63
    %p74 = scmp.eq.s32.totalorder %s28, 0
    %p75 = por %p73, %p74
    %p76 = scmp.ne.s32.totalorder %s62, %s63
    %p77 = scmp.eq.s32.totalorder %s29, 1
    %p78 = por %p76, %p77
    %p80 = scmp.ne.s32.totalorder %s63, %s79
    %p81 = scmp.eq.s32.totalorder %s29, 0
    %p82 = por %p80, %p81
    %s83 = ssub.s32 %s23, %s30
    %p84 = scmp.eq.s32.totalorder %s83, 0
    %s86 = sadd.s32 %s85, 1
    %s87 = scalar_select %p84, %s85, %s86
    %p90 = pneg %p84
    %p91 = scmp.eq.s32.totalorder %s23, 1
    %p92 = por %p90, %p91
    %p93 = scmp.ne.s32.totalorder %s85, %s88
    %p94 = scmp.eq.s32.totalorder %s23, 0
    %p95 = por %p93, %p94
    %p96 = scmp.ne.s32.totalorder %s85, %s88
    %p97 = scmp.eq.s32.totalorder %s28, 1
    %p98 = por %p96, %p97
    %p99 = scmp.ne.s32.totalorder %s88, %s89
    %p100 = scmp.eq.s32.totalorder %s28, 0
    %p101 = por %p99, %p100
    %p102 = scmp.ne.s32.totalorder %s88, %s89
    %p103 = scmp.eq.s32.totalorder %s29, 1
    %p104 = por %p102, %p103
    %p106 = scmp.ne.s32.totalorder %s89, %s105
    %p107 = scmp.eq.s32.totalorder %s29, 0
    %p108 = por %p106, %p107
    %s110 = sadd.s32 %s109, 1
    %p113 = scmp.eq.s32.totalorder %s23, 1
    %p114 = scmp.ne.s32.totalorder %s109, %s111
    %p115 = scmp.eq.s32.totalorder %s23, 0
    %p116 = por %p114, %p115
    %p117 = scmp.ne.s32.totalorder %s109, %s111
    %p118 = scmp.eq.s32.totalorder %s28, 1
    %p119 = por %p117, %p118
    %p120 = scmp.ne.s32.totalorder %s111, %s112
    %p121 = scmp.eq.s32.totalorder %s28, 0
    %p122 = por %p120, %p121
    %p123 = scmp.ne.s32.totalorder %s111, %s112
    %p124 = scmp.eq.s32.totalorder %s29, 1
    %p125 = por %p123, %p124
    %p127 = scmp.ne.s32.totalorder %s112, %s126
    %p128 = scmp.eq.s32.totalorder %s29, 0
    %p129 = por %p127, %p128
    %s131 = sadd.s32 %s130, 1
    %p134 = scmp.eq.s32.totalorder %s23, 1
    %p135 = scmp.ne.s32.totalorder %s130, %s132
    %p136 = scmp.eq.s32.totalorder %s23, 0
    %p137 = por %p135, %p136
    %p138 = scmp.ne.s32.totalorder %s130, %s132
    %p139 = scmp.eq.s32.totalorder %s28, 1
    %p140 = por %p138, %p139
    %p141 = scmp.ne.s32.totalorder %s132, %s133
    %p142 = scmp.eq.s32.totalorder %s28, 0
    %p143 = por %p141, %p142
    %p144 = scmp.ne.s32.totalorder %s132, %s133
    %p145 = scmp.eq.s32.totalorder %s29, 1
    %p146 = por %p144, %p145
    %p148 = scmp.ne.s32.totalorder %s133, %s147
    %p149 = scmp.eq.s32.totalorder %s29, 0
    %p150 = por %p148, %p149
    %s152 = sadd.s32 %s151, 1
    %p155 = scmp.eq.s32.totalorder %s23, 1
    %p156 = scmp.ne.s32.totalorder %s151, %s153
    %p157 = scmp.eq.s32.totalorder %s23, 0
    %p158 = por %p156, %p157
    %p159 = scmp.ne.s32.totalorder %s151, %s153
    %p160 = scmp.eq.s32.totalorder %s28, 1
    %p161 = por %p159, %p160
    %p162 = scmp.ne.s32.totalorder %s153, %s154
    %p163 = scmp.eq.s32.totalorder %s28, 0
    %p164 = por %p162, %p163
    %p165 = scmp.ne.s32.totalorder %s153, %s154
    %p166 = scmp.eq.s32.totalorder %s29, 1
    %p167 = por %p165, %p166
    %p169 = scmp.ne.s32.totalorder %s154, %s168
    %p170 = scmp.eq.s32.totalorder %s29, 0
    %p171 = por %p169, %p170
    %s173 = sadd.s32 %s172, 1
    %p176 = scmp.eq.s32.totalorder %s23, 1
    %p177 = scmp.ne.s32.totalorder %s172, %s174
    %p178 = scmp.eq.s32.totalorder %s23, 0
    %p179 = por %p177, %p178
    %p180 = scmp.ne.s32.totalorder %s172, %s174
    %p181 = scmp.eq.s32.totalorder %s28, 1
    %p182 = por %p180, %p181
    %p183 = scmp.ne.s32.totalorder %s174, %s175
    %p184 = scmp.eq.s32.totalorder %s28, 0
    %p185 = por %p183, %p184
    %p186 = scmp.ne.s32.totalorder %s174, %s175
    %p187 = scmp.eq.s32.totalorder %s29, 1
    %p188 = por %p186, %p187
    %p190 = scmp.ne.s32.totalorder %s175, %s189
    %p191 = scmp.eq.s32.totalorder %s29, 0
    %p192 = por %p190, %p191
    %s194 = sadd.s32 %s193, 1
    %p197 = scmp.eq.s32.totalorder %s23, 1
    %p198 = scmp.ne.s32.totalorder %s193, %s195
    %p199 = scmp.eq.s32.totalorder %s23, 0
    %p200 = por %p198, %p199
    %p201 = scmp.ne.s32.totalorder %s193, %s195
    %p202 = scmp.eq.s32.totalorder %s28, 1
    %p203 = por %p201, %p202
    %p204 = scmp.ne.s32.totalorder %s195, %s196
    %p205 = scmp.eq.s32.totalorder %s28, 0
    %p206 = por %p204, %p205
    %p207 = scmp.ne.s32.totalorder %s195, %s196
    %p208 = scmp.eq.s32.totalorder %s29, 1
    %p209 = por %p207, %p208
    %p211 = scmp.ne.s32.totalorder %s196, %s210
    %p212 = scmp.eq.s32.totalorder %s29, 0
    %p213 = por %p211, %p212
    %s215 = sadd.s32 %s214, 1
    %p218 = scmp.eq.s32.totalorder %s23, 1
    %p219 = scmp.ne.s32.totalorder %s214, %s216
    %p220 = scmp.eq.s32.totalorder %s23, 0
    %p221 = por %p219, %p220
    %p222 = scmp.ne.s32.totalorder %s214, %s216
    %p223 = scmp.eq.s32.totalorder %s28, 1
    %p224 = por %p222, %p223
    %p225 = scmp.ne.s32.totalorder %s216, %s217
    %p226 = scmp.eq.s32.totalorder %s28, 0
    %p227 = por %p225, %p226
    %p228 = scmp.ne.s32.totalorder %s216, %s217
    %p229 = scmp.eq.s32.totalorder %s29, 1
    %p230 = por %p228, %p229
    %p232 = scmp.ne.s32.totalorder %s217, %s231
    %p233 = scmp.eq.s32.totalorder %s29, 0
    %p234 = por %p232, %p233
    %s236 = sadd.s32 %s235, 1
    %p239 = scmp.eq.s32.totalorder %s23, 1
    %p240 = scmp.ne.s32.totalorder %s235, %s237
    %p241 = scmp.eq.s32.totalorder %s23, 0
    %p242 = por %p240, %p241
    %p243 = scmp.ne.s32.totalorder %s235, %s237
    %p244 = scmp.eq.s32.totalorder %s28, 1
    %p245 = por %p243, %p244
    %p246 = scmp.ne.s32.totalorder %s237, %s238
    %p247 = scmp.eq.s32.totalorder %s28, 0
    %p248 = por %p246, %p247
    %p249 = scmp.ne.s32.totalorder %s237, %s238
    %p250 = scmp.eq.s32.totalorder %s29, 1
    %p251 = por %p249, %p250
    %p253 = scmp.ne.s32.totalorder %s238, %s252
    %p254 = scmp.eq.s32.totalorder %s29, 0
    %p255 = por %p253, %p254
    %s257 = sadd.s32 %s256, 1
    %p260 = scmp.eq.s32.totalorder %s23, 1
    %p261 = scmp.ne.s32.totalorder %s256, %s258
    %p262 = scmp.eq.s32.totalorder %s23, 0
    %p263 = por %p261, %p262
    %p264 = scmp.ne.s32.totalorder %s256, %s258
    %p265 = scmp.eq.s32.totalorder %s28, 1
    %p266 = por %p264, %p265
    %p267 = scmp.ne.s32.totalorder %s258, %s259
    %p268 = scmp.eq.s32.totalorder %s28, 0
    %p269 = por %p267, %p268
    %p270 = scmp.ne.s32.totalorder %s258, %s259
    %p271 = scmp.eq.s32.totalorder %s29, 1
    %p272 = por %p270, %p271
    %p274 = scmp.ne.s32.totalorder %s259, %s273
    %p275 = scmp.eq.s32.totalorder %s29, 0
    %p276 = por %p274, %p275
    %s278 = sadd.s32 %s277, 1
    %p281 = scmp.eq.s32.totalorder %s23, 1
    %p282 = scmp.ne.s32.totalorder %s277, %s279
    %p283 = scmp.eq.s32.totalorder %s23, 0
    %p284 = por %p282, %p283
    %p285 = scmp.ne.s32.totalorder %s277, %s279
    %p286 = scmp.eq.s32.totalorder %s28, 1
    %p287 = por %p285, %p286
    %p288 = scmp.ne.s32.totalorder %s279, %s280
    %p289 = scmp.eq.s32.totalorder %s28, 0
    %p290 = por %p288, %p289
    %p291 = scmp.ne.s32.totalorder %s279, %s280
    %p292 = scmp.eq.s32.totalorder %s29, 1
    %p293 = por %p291, %p292
    %p295 = scmp.ne.s32.totalorder %s280, %s294
    %p296 = scmp.eq.s32.totalorder %s29, 0
    %p297 = por %p295, %p296
    %s299 = sadd.s32 %s298, 1
    %p302 = scmp.eq.s32.totalorder %s23, 1
    %p303 = scmp.ne.s32.totalorder %s298, %s300
    %p304 = scmp.eq.s32.totalorder %s23, 0
    %p305 = por %p303, %p304
    %p306 = scmp.ne.s32.totalorder %s298, %s300
    %p307 = scmp.eq.s32.totalorder %s28, 1
    %p308 = por %p306, %p307
    %p309 = scmp.ne.s32.totalorder %s300, %s301
    %p310 = scmp.eq.s32.totalorder %s28, 0
    %p311 = por %p309, %p310
    %p312 = scmp.ne.s32.totalorder %s300, %s301
    %p313 = scmp.eq.s32.totalorder %s29, 1
    %p314 = por %p312, %p313
    %p316 = scmp.ne.s32.totalorder %s301, %s315
    %p317 = scmp.eq.s32.totalorder %s29, 0
    %p318 = por %p316, %p317
    %s320 = sadd.s32 %s319, 1
    %p323 = scmp.eq.s32.totalorder %s23, 1
    %p324 = scmp.ne.s32.totalorder %s319, %s321
    %p325 = scmp.eq.s32.totalorder %s23, 0
    %p326 = por %p324, %p325
    %p327 = scmp.ne.s32.totalorder %s319, %s321
    %p328 = scmp.eq.s32.totalorder %s28, 1
    %p329 = por %p327, %p328
    %p330 = scmp.ne.s32.totalorder %s321, %s322
    %p331 = scmp.eq.s32.totalorder %s28, 0
    %p332 = por %p330, %p331
    %p333 = scmp.ne.s32.totalorder %s321, %s322
    %p334 = scmp.eq.s32.totalorder %s29, 1
    %p335 = por %p333, %p334
    %p337 = scmp.ne.s32.totalorder %s322, %s336
    %p338 = scmp.eq.s32.totalorder %s29, 0
    %p339 = por %p337, %p338
    %s341 = sadd.s32 %s340, 1
    %p344 = scmp.eq.s32.totalorder %s23, 1
    %p345 = scmp.ne.s32.totalorder %s340, %s342
    %p346 = scmp.eq.s32.totalorder %s23, 0
    %p347 = por %p345, %p346
    %p348 = scmp.ne.s32.totalorder %s340, %s342
    %p349 = scmp.eq.s32.totalorder %s28, 1
    %p350 = por %p348, %p349
    %p351 = scmp.ne.s32.totalorder %s342, %s343
    %p352 = scmp.eq.s32.totalorder %s28, 0
    %p353 = por %p351, %p352
    %p354 = scmp.ne.s32.totalorder %s342, %s343
    %p355 = scmp.eq.s32.totalorder %s29, 1
    %p356 = por %p354, %p355
    %p358 = scmp.ne.s32.totalorder %s343, %s357
    %p359 = scmp.eq.s32.totalorder %s29, 0
    %p360 = por %p358, %p359
    %s362 = sadd.s32 %s361, 1
    %p365 = scmp.eq.s32.totalorder %s23, 1
    %p366 = scmp.ne.s32.totalorder %s361, %s363
    %p367 = scmp.eq.s32.totalorder %s23, 0
    %p368 = por %p366, %p367
    %p369 = scmp.ne.s32.totalorder %s361, %s363
    %p370 = scmp.eq.s32.totalorder %s28, 1
    %p371 = por %p369, %p370
    %p372 = scmp.ne.s32.totalorder %s363, %s364
    %p373 = scmp.eq.s32.totalorder %s28, 0
    %p374 = por %p372, %p373
    %p375 = scmp.ne.s32.totalorder %s363, %s364
    %p376 = scmp.eq.s32.totalorder %s29, 1
    %p377 = por %p375, %p376
    %p379 = scmp.ne.s32.totalorder %s364, %s378
    %p380 = scmp.eq.s32.totalorder %s29, 0
    %p381 = por %p379, %p380
    %s383 = sadd.s32 %s382, 1
    %p386 = scmp.eq.s32.totalorder %s23, 1
    %p387 = scmp.ne.s32.totalorder %s382, %s384
    %p388 = scmp.eq.s32.totalorder %s23, 0
    %p389 = por %p387, %p388
    %p390 = scmp.ne.s32.totalorder %s382, %s384
    %p391 = scmp.eq.s32.totalorder %s28, 1
    %p392 = por %p390, %p391
    %p393 = scmp.ne.s32.totalorder %s384, %s385
    %p394 = scmp.eq.s32.totalorder %s28, 0
    %p395 = por %p393, %p394
    %p396 = scmp.ne.s32.totalorder %s384, %s385
    %p397 = scmp.eq.s32.totalorder %s29, 1
    %p398 = por %p396, %p397
    %p400 = scmp.ne.s32.totalorder %s385, %s399
    %p401 = scmp.eq.s32.totalorder %s29, 0
    %p402 = por %p400, %p401
    %s403 = ssub.s32 %s23, %s30
    %p404 = scmp.eq.s32.totalorder %s403, 0
    %s406 = sadd.s32 %s405, 1
    %s407 = scalar_select %p404, %s405, %s406
    %p410 = pneg %p404
    %p411 = scmp.eq.s32.totalorder %s23, 1
    %p412 = por %p410, %p411
    %p413 = scmp.ne.s32.totalorder %s405, %s408
    %p414 = scmp.eq.s32.totalorder %s23, 0
    %p415 = por %p413, %p414
    %p416 = scmp.ne.s32.totalorder %s405, %s408
    %p417 = scmp.eq.s32.totalorder %s28, 1
    %p418 = por %p416, %p417
    %p419 = scmp.ne.s32.totalorder %s408, %s409
    %p420 = scmp.eq.s32.totalorder %s28, 0
    %p421 = por %p419, %p420
    %p422 = scmp.ne.s32.totalorder %s408, %s409
    %p423 = scmp.eq.s32.totalorder %s29, 1
    %p424 = por %p422, %p423
    %p426 = scmp.ne.s32.totalorder %s409, %s425
    %p427 = scmp.eq.s32.totalorder %s29, 0
    %p428 = por %p426, %p427
    %p429 = scmp.le.s32.totalorder 1, %s23
    %p430 = scmp.lt.s32.totalorder %s23, 3
    %p431 = pnand %p429, %p430
    %p432 = pneg %p431
    // Predicated region
    $region9: #{_lambda_.10} parent=5 // pred_check
      _
    $region10: #{_lambda_.10} parent=5 // pred_check_branch
      %434 = sbr.rel (%p431) target = $region12
    $region11: #{_lambda_.10} parent=5 // pred_region
      %s435 = ssub.s32 %s23, 1
      // Predicated region
      $region13: #{_lambda_.10} parent=11 // pred_check
        %p436 = pneg %p122
      $region14: #{_lambda_.10} parent=11 // pred_check_branch
        %438 = sbr.rel (%p436) target = $region16
      $region15: #{_lambda_.10} parent=11 // pred_region
        _
      $region16: #{_lambda_.10} parent=11 // pred_fallthru
        _
      // Predicated region
      $region17: #{_lambda_.10} parent=11 // pred_check
        %p439 = pneg %p143
      $region18: #{_lambda_.10} parent=11 // pred_check_branch
        %441 = sbr.rel (%p439) target = $region20
      $region19: #{_lambda_.10} parent=11 // pred_region
        _
      $region20: #{_lambda_.10} parent=11 // pred_fallthru
        _
      // Predicated region
      $region21: #{_lambda_.10} parent=11 // pred_check
        %p442 = pneg %p164
      $region22: #{_lambda_.10} parent=11 // pred_check_branch
        %444 = sbr.rel (%p442) target = $region24
      $region23: #{_lambda_.10} parent=11 // pred_region
        _
      $region24: #{_lambda_.10} parent=11 // pred_fallthru
        _
      // Predicated region
      $region25: #{_lambda_.10} parent=11 // pred_check
        %p445 = pneg %p185
      $region26: #{_lambda_.10} parent=11 // pred_check_branch
        %447 = sbr.rel (%p445) target = $region28
      $region27: #{_lambda_.10} parent=11 // pred_region
        _
      $region28: #{_lambda_.10} parent=11 // pred_fallthru
        _
      // Predicated region
      $region29: #{_lambda_.10} parent=11 // pred_check
        %p448 = pneg %p206
      $region30: #{_lambda_.10} parent=11 // pred_check_branch
        %450 = sbr.rel (%p448) target = $region32
      $region31: #{_lambda_.10} parent=11 // pred_region
        _
      $region32: #{_lambda_.10} parent=11 // pred_fallthru
        _
      // Predicated region
      $region33: #{_lambda_.10} parent=11 // pred_check
        %p451 = pneg %p227
      $region34: #{_lambda_.10} parent=11 // pred_check_branch
        %453 = sbr.rel (%p451) target = $region36
      $region35: #{_lambda_.10} parent=11 // pred_region
        _
      $region36: #{_lambda_.10} parent=11 // pred_fallthru
        _
      // Predicated region
      $region37: #{_lambda_.10} parent=11 // pred_check
        %p454 = pneg %p248
      $region38: #{_lambda_.10} parent=11 // pred_check_branch
        %456 = sbr.rel (%p454) target = $region40
      $region39: #{_lambda_.10} parent=11 // pred_region
        _
      $region40: #{_lambda_.10} parent=11 // pred_fallthru
        _
      // Predicated region
      $region41: #{_lambda_.10} parent=11 // pred_check
        %p457 = pneg %p269
      $region42: #{_lambda_.10} parent=11 // pred_check_branch
        %459 = sbr.rel (%p457) target = $region44
      $region43: #{_lambda_.10} parent=11 // pred_region
        _
      $region44: #{_lambda_.10} parent=11 // pred_fallthru
        _
      // Predicated region
      $region45: #{_lambda_.10} parent=11 // pred_check
        %p460 = pneg %p290
      $region46: #{_lambda_.10} parent=11 // pred_check_branch
        %462 = sbr.rel (%p460) target = $region48
      $region47: #{_lambda_.10} parent=11 // pred_region
        _
      $region48: #{_lambda_.10} parent=11 // pred_fallthru
        _
      // Predicated region
      $region49: #{_lambda_.10} parent=11 // pred_check
        %p463 = pneg %p311
      $region50: #{_lambda_.10} parent=11 // pred_check_branch
        %465 = sbr.rel (%p463) target = $region52
      $region51: #{_lambda_.10} parent=11 // pred_region
        _
      $region52: #{_lambda_.10} parent=11 // pred_fallthru
        _
      // Predicated region
      $region53: #{_lambda_.10} parent=11 // pred_check
        %p466 = pneg %p332
      $region54: #{_lambda_.10} parent=11 // pred_check_branch
        %468 = sbr.rel (%p466) target = $region56
      $region55: #{_lambda_.10} parent=11 // pred_region
        _
      $region56: #{_lambda_.10} parent=11 // pred_fallthru
        _
      // Predicated region
      $region57: #{_lambda_.10} parent=11 // pred_check
        %p469 = pneg %p353
      $region58: #{_lambda_.10} parent=11 // pred_check_branch
        %471 = sbr.rel (%p469) target = $region60
      $region59: #{_lambda_.10} parent=11 // pred_region
        _
      $region60: #{_lambda_.10} parent=11 // pred_fallthru
        _
      // Predicated region
      $region61: #{_lambda_.10} parent=11 // pred_check
        %p472 = pneg %p374
      $region62: #{_lambda_.10} parent=11 // pred_check_branch
        %474 = sbr.rel (%p472) target = $region64
      $region63: #{_lambda_.10} parent=11 // pred_region
        _
      $region64: #{_lambda_.10} parent=11 // pred_fallthru
        _
      // Predicated region
      $region65: #{_lambda_.10} parent=11 // pred_check
        %p475 = pneg %p395
      $region66: #{_lambda_.10} parent=11 // pred_check_branch
        %477 = sbr.rel (%p475) target = $region68
      $region67: #{_lambda_.10} parent=11 // pred_region
        _
      $region68: #{_lambda_.10} parent=11 // pred_fallthru
        _
    $region12: #{_lambda_.10} parent=5 // pred_fallthru
      _
    %p478 = scmp.lt.s32.totalorder %s23, 2
    // Predicated region
    $region69: #{_lambda_.10} parent=5 // pred_check
      %p479 = pneg %p478
    $region70: #{_lambda_.10} parent=5 // pred_check_branch
      %481 = sbr.rel (%p479) target = $region72
    $region71: #{_lambda_.10} parent=5 // pred_region
      // Predicated region
      $region73: #{_lambda_.10} parent=71 // pred_check
        %p482 = pneg %p43
      $region74: #{_lambda_.10} parent=71 // pred_check_branch
        %484 = sbr.rel (%p482) target = $region76
      $region75: #{_lambda_.10} parent=71 // pred_region
        %p485 = scmp.lt.s32.totalorder %s23, 1
        %s486 = scalar_select %p485, %s23, 1
        %s487 = smul.addr %s486, 2
        %s488 = smul.addr %s487, 8
        %s489 = scalar_lea.vmem %s0, %s488
      $region76: #{_lambda_.10} parent=71 // pred_fallthru
        _
      // Predicated region
      $region77: #{_lambda_.10} parent=71 // pred_check
        %p490 = pneg %p69
      $region78: #{_lambda_.10} parent=71 // pred_check_branch
        %492 = sbr.rel (%p490) target = $region80
      $region79: #{_lambda_.10} parent=71 // pred_region
        %p493 = scmp.lt.s32.totalorder %s23, 1
        %s494 = scalar_select %p493, %s23, 1
        %s495 = smul.addr %s494, 8
        %s496 = scalar_lea.vmem %s1, %s495
      $region80: #{_lambda_.10} parent=71 // pred_fallthru
        _
      // Predicated region
      $region81: #{_lambda_.10} parent=71 // pred_check
        %p497 = pneg %p95
      $region82: #{_lambda_.10} parent=71 // pred_check_branch
        %499 = sbr.rel (%p497) target = $region84
      $region83: #{_lambda_.10} parent=71 // pred_region
        %p500 = scmp.lt.s32.totalorder %s23, 1
        %s501 = scalar_select %p500, %s23, 1
        %s502 = scalar_lea.vmem %s2, %s501
      $region84: #{_lambda_.10} parent=71 // pred_fallthru
        _
    $region72: #{_lambda_.10} parent=5 // pred_fallthru
      _
    %p503 = scmp.le.s32.totalorder 1, %s23
    %p504 = scmp.lt.s32.totalorder %s23, 3
    %p505 = pnand %p503, %p504
    %p506 = pneg %p505
    // Predicated region
    $region85: #{_lambda_.10} parent=5 // pred_check
      _
    $region86: #{_lambda_.10} parent=5 // pred_check_branch
      %508 = sbr.rel (%p505) target = $region88
    $region87: #{_lambda_.10} parent=5 // pred_region
      %s509 = ssub.s32 %s23, 1
      %p510 = scmp.lt.s32.totalorder %s28, 1
      %s511 = scalar_select %p510, %s28, 1
      %s512 = smul.addr %s511, 2
      %s513 = smul.addr %s512, 8
      %s514 = scalar_lea.vmem %s0, %s513
      %p515 = pneg %p49
      %p516 = pneg %p46
      %p517 = scmp.lt.s32.totalorder %s28, 1
      %s518 = scalar_select %p517, %s28, 1
      %s519 = smul.addr %s518, 8
      %s520 = scalar_lea.vmem %s1, %s519
      %p521 = pneg %p75
      %p522 = pneg %p72
      %p523 = scmp.lt.s32.totalorder %s28, 1
      %s524 = scalar_select %p523, %s28, 1
      %s525 = scalar_lea.vmem %s2, %s524
      %p526 = pneg %p101
      %p527 = pneg %p98
      %p528 = pneg %p122
      %p529 = pneg %p119
      %p530 = pneg %p143
      %p531 = pneg %p140
      %p532 = pneg %p164
      %p533 = pneg %p161
      %p534 = pneg %p185
      %p535 = pneg %p182
      %p536 = pneg %p206
      %p537 = pneg %p203
      %p538 = pneg %p227
      %p539 = pneg %p224
      %p540 = pneg %p248
      %p541 = pneg %p245
      %p542 = pneg %p269
      %p543 = pneg %p266
      %p544 = pneg %p290
      %p545 = pneg %p287
      %p546 = pneg %p311
      %p547 = pneg %p308
      %p548 = pneg %p332
      %p549 = pneg %p329
      %p550 = pneg %p353
      %p551 = pneg %p350
      %p552 = pneg %p374
      %p553 = pneg %p371
      %p554 = pneg %p395
      %p555 = pneg %p392
      %p556 = pneg %p421
      %p557 = pneg %p418
      %p558 = scmp.lt.s32.totalorder %s28, 1
      %s559 = scalar_select %p558, %s28, 1
      %s560 = smul.addr %s559, 2
      %s561 = smul.addr %s560, 8
      %s562 = scalar_lea.vmem %s17, %s561
      %p563 = scmp.lt.s32.totalorder %s28, 1
      %s564 = scalar_select %p563, %s28, 1
      %s565 = smul.addr %s564, 2
      %s566 = smul.addr %s565, 8
      %s567 = scalar_lea.vmem %s0, %s566
      %p568 = scmp.lt.s32.totalorder %s28, 1
      %s569 = scalar_select %p568, %s28, 1
      %s570 = smul.addr %s569, 8
      %s571 = scalar_lea.vmem %s1, %s570
      %p572 = scmp.lt.s32.totalorder %s28, 1
      %s573 = scalar_select %p572, %s28, 1
      %s574 = scalar_lea.vmem %s2, %s573
      %p575 = scmp.lt.s32.totalorder %s28, 1
      %s576 = scalar_select %p575, %s28, 1
      %s577 = smul.addr %s576, 2
      %s578 = smul.addr %s577, 8
      %s579 = scalar_lea.vmem %s17, %s578
      %v581 = vld [vmem:[%s567] sm:$0xff]
      %v582 = vld [vmem:[%s567 + $0x8] sm:$0xf]
      %v583 = vld [vmem:[%s3] sm:$0x1]
      %v584 = vld [vmem:[%s4] sm:$0x1]
      %vm585 = vcmask 261120
      %v586 = vsel %vm585, %v581, 0.0
      %587 = vadd.xlane.f32.xlu0 %v586
      %v588 = vpop.xlane.xlu0 %587
      %vm589 = vcmask 257024
      %v590 = vsel %vm589, %v582, 0.0
      %591 = vadd.xlane.f32.xlu0 %v590
      %v592 = vpop.xlane.xlu0 %591
      %v593 = vrcp.pop 32.0
      %v594 = vmul.f32 %v588, %v593
      %v595 = vmul.f32 %v592, %v593
      %v596 = vsub.f32 %v581, %v594
      %v597 = vsub.f32 %v582, %v595
      %v598 = vmul.f32 %v596, %v596
      %v599 = vmul.f32 %v597, %v597
      %v600 = vsel %vm585, %v598, 0.0
      %601 = vadd.xlane.f32.xlu0 %v600
      %v602 = vpop.xlane.xlu0 %601
      %v603 = vsel %vm589, %v599, 0.0
      %604 = vadd.xlane.f32.xlu0 %v603
      %v605 = vpop.xlane.xlu0 %604
      %v606 = vmul.f32 %v602, %v593
      %v607 = vmul.f32 %v605, %v593
      %v608 = vadd.f32 %v606, 1e-05
      %v609 = vadd.f32 %v607, 1e-05
      %v610 = vrsqrt.pop %v608
      %v611 = vrsqrt.pop %v609
      %v612 = vmul.f32 %v596, %v610
      %v613 = vmul.f32 %v597, %v611
      %v615 = vlaneseq
      %v616 = vshrl.u32 %v615, 7
      %v617 = vsub.s32 0, %v616
      %v618 = vrot.slane %v583, %v617
      %v620 = vmul.f32 %v612, %v618
      %v621 = vmul.f32 %v613, %v618
      %v623 = vlaneseq
      %v624 = vshrl.u32 %v623, 7
      %v625 = vsub.s32 0, %v624
      %v626 = vrot.slane %v584, %v625
      %v628 = vadd.f32 %v620, %v626
      %v629 = vadd.f32 %v621, %v626
      %v630 = vpack.c.bf16 %v629, %v628
      %v631 = vld [vmem:[%s571] sm:$0xff]
      %v632 = vpack.c.bf16 %v631, %v631
      %v633 = vld [vmem:[%s574] sm:$0x1]
      %v634 = vld [vmem:[%s5] sm:$0xf]
      %v635 = vld [vmem:[%s5 + $0x4] sm:$0xf]
      %v636 = vld [vmem:[%s5 + $0x8] sm:$0xf]
      %v637 = vld [vmem:[%s5 + $0xc] sm:$0xf]
      %v638 = vld [vmem:[%s6] sm:$0x1]
      %v639 = vld [vmem:[%s7] sm:$0xf]
      %v640 = vld [vmem:[%s7 + $0x4] sm:$0xf]
      %v641 = vld [vmem:[%s7 + $0x8] sm:$0xf]
      %v642 = vld [vmem:[%s7 + $0xc] sm:$0xf]
      %v643 = vld [vmem:[%s8] sm:$0x1]
      %v644 = vld [vmem:[%s9] sm:$0xf]
      %v645 = vld [vmem:[%s9 + $0x4] sm:$0xf]
      %v646 = vld [vmem:[%s9 + $0x8] sm:$0xf]
      %v647 = vld [vmem:[%s9 + $0xc] sm:$0xf]
      %v648 = vld [vmem:[%s10] sm:$0x1]
      %v650 = vlaneseq
      %v651 = vshrl.u32 %v650, 7
      %v652 = vsub.s32 0, %v651
      %v653 = vrot.slane %v638, %v652
      %v659 = vunpack.c.l.b16 %v634
      %v660 = vunpack.c.l.b16 %v635
      %v661 = vunpack.c.l.b16 %v636
      %v662 = vunpack.c.l.b16 %v637
      %v663 = vpack.c.b16 %v660, %v659
      %v664 = vpack.c.b16 %v662, %v661
      %v668 = vsel %vm585, %v630, 0
      %670 = vmatprep.subr.bf16.mxu0 0
      %671 = vmatpush1.bf16.msra.mxu0 %v663
      %672 = vmatprep.subr.bf16.mxu0 0
      %673 = vmatpush1.bf16.msra.mxu0 %v664
      %674 = vmatprep.subr.bf16.mxu0 0
      %675 = vmatpush1.bf16.msra.mxu0 0
      %676 = vmatprep.subr.bf16.mxu0 0
      %677 = vmatpush1.bf16.msra.mxu0 0
      %678 = vmatprep.subr.bf16.mxu0 0
      %679 = vmatpush1.bf16.msra.mxu0 0
      %680 = vmatprep.subr.bf16.mxu0 0
      %681 = vmatpush1.bf16.msra.mxu0 0
      %682 = vmatprep.subr.bf16.mxu0 0
      %683 = vmatpush1.bf16.msra.mxu0 0
      %684 = vmatprep.subr.bf16.mxu0 0
      %685 = vmatpush1.bf16.msra.mxu0 0
      %686 = vmatprep.subr.bf16.mxu0 0
      %687 = vmatpush1.bf16.msra.mxu0 0
      %688 = vmatprep.subr.bf16.mxu0 0
      %689 = vmatpush1.bf16.msra.mxu0 0
      %690 = vmatprep.subr.bf16.mxu0 0
      %691 = vmatpush1.bf16.msra.mxu0 0
      %692 = vmatprep.subr.bf16.mxu0 0
      %693 = vmatpush1.bf16.msra.mxu0 0
      %694 = vmatprep.subr.bf16.mxu0 0
      %695 = vmatpush1.bf16.msra.mxu0 0
      %696 = vmatprep.subr.bf16.mxu0 0
      %697 = vmatpush1.bf16.msra.mxu0 0
      %698 = vmatprep.subr.bf16.mxu0 0
      %699 = vmatpush1.bf16.msra.mxu0 0
      %700 = vmatprep.subr.bf16.mxu0 0
      %701 = vmatpush1.bf16.msra.mxu0 0
      %702 = vmatprep.mubr.bf16.mxu0 0
      %703 = vmatmul.mubr.bf16.gmra.mrb[0].mxu0 %v668
      %v704 = vpop.f32.mrb[0].mxu0
      %v705 = vadd.f32 %v653, %v704
      %v706 = vpop.f32.mrb[0].mxu0
      %v707 = vpop.f32.mrb[0].mxu0
      %v708 = vadd.f32 %v653, %v707
      %v709 = vpop.f32.mrb[0].mxu0
      %710 = vdwg.mxu0
      %v712 = vlaneseq
      %v713 = vshrl.u32 %v712, 7
      %v714 = vsub.s32 0, %v713
      %v715 = vrot.slane %v643, %v714
      %v721 = vunpack.c.l.b16 %v639
      %v722 = vunpack.c.l.b16 %v640
      %v723 = vunpack.c.l.b16 %v641
      %v724 = vunpack.c.l.b16 %v642
      %v725 = vpack.c.b16 %v722, %v721
      %v726 = vpack.c.b16 %v724, %v723
      %v730 = vsel %vm585, %v632, 0
      %732 = vmatprep.subr.bf16.mxu0 0
      %733 = vmatpush1.bf16.msra.mxu0 %v725
      %734 = vmatprep.subr.bf16.mxu0 0
      %735 = vmatpush1.bf16.msra.mxu0 %v726
      %736 = vmatprep.subr.bf16.mxu0 0
      %737 = vmatpush1.bf16.msra.mxu0 0
      %738 = vmatprep.subr.bf16.mxu0 0
      %739 = vmatpush1.bf16.msra.mxu0 0
      %740 = vmatprep.subr.bf16.mxu0 0
      %741 = vmatpush1.bf16.msra.mxu0 0
      %742 = vmatprep.subr.bf16.mxu0 0
      %743 = vmatpush1.bf16.msra.mxu0 0
      %744 = vmatprep.subr.bf16.mxu0 0
      %745 = vmatpush1.bf16.msra.mxu0 0
      %746 = vmatprep.subr.bf16.mxu0 0
      %747 = vmatpush1.bf16.msra.mxu0 0
      %748 = vmatprep.subr.bf16.mxu0 0
      %749 = vmatpush1.bf16.msra.mxu0 0
      %750 = vmatprep.subr.bf16.mxu0 0
      %751 = vmatpush1.bf16.msra.mxu0 0
      %752 = vmatprep.subr.bf16.mxu0 0
      %753 = vmatpush1.bf16.msra.mxu0 0
      %754 = vmatprep.subr.bf16.mxu0 0
      %755 = vmatpush1.bf16.msra.mxu0 0
      %756 = vmatprep.subr.bf16.mxu0 0
      %757 = vmatpush1.bf16.msra.mxu0 0
      %758 = vmatprep.subr.bf16.mxu0 0
      %759 = vmatpush1.bf16.msra.mxu0 0
      %760 = vmatprep.subr.bf16.mxu0 0
      %761 = vmatpush1.bf16.msra.mxu0 0
      %762 = vmatprep.subr.bf16.mxu0 0
      %763 = vmatpush1.bf16.msra.mxu0 0
      %764 = vmatprep.mubr.bf16.mxu0 0
      %765 = vmatmul.mubr.bf16.gmra.mrb[0].mxu0 %v730
      %v766 = vpop.f32.mrb[0].mxu0
      %v767 = vadd.f32 %v715, %v766
      %v768 = vpop.f32.mrb[0].mxu0
      %v769 = vpop.f32.mrb[0].mxu0
      %v770 = vpop.f32.mrb[0].mxu0
      %771 = vdwg.mxu0
      %774 = vrot.lane.b32.xlu0 %v705, 120
      %v775 = vpop.permute.xlu0 %774
      %776 = vrot.lane.b32.xlu0 %v708, 120
      %v777 = vpop.permute.xlu0 %776
      %780 = vrot.lane.b32.xlu0 %v705, 112
      %v781 = vpop.permute.xlu0 %780
      %782 = vrot.lane.b32.xlu0 %v708, 112
      %v783 = vpop.permute.xlu0 %782
      %786 = vrot.lane.b32.xlu0 %v705, 104
      %v787 = vpop.permute.xlu0 %786
      %788 = vrot.lane.b32.xlu0 %v708, 104
      %v789 = vpop.permute.xlu0 %788
      %v792 = vpack.c.bf16 %v708, %v705
      %v793 = vpack.c.bf16 %v777, %v775
      %v794 = vpack.c.bf16 %v783, %v781
      %v795 = vpack.c.bf16 %v789, %v787
      %797 = vrot.lane.b32.xlu0 %v767, 120
      %v798 = vpop.permute.xlu0 %797
      %800 = vrot.lane.b32.xlu0 %v767, 112
      %v801 = vpop.permute.xlu0 %800
      %803 = vrot.lane.b32.xlu0 %v767, 104
      %v804 = vpop.permute.xlu0 %803
      %v806 = vpack.c.bf16 %v767, %v767
      %v807 = vpack.c.bf16 %v798, %v798
      %v808 = vpack.c.bf16 %v801, %v801
      %v809 = vpack.c.bf16 %v804, %v804
      %vm810 = vcmask 64512
      %v812 = vsel %vm810, %v792, 0
      %v815 = vsel %vm810, %v806, 0
      %817 = vmatprep.subr.bf16.mxu0 0
      %818 = vmatpush1.bf16.xpose.msra.mxu0 %v815
      %819 = vmatprep.subr.bf16.mxu0 0
      %820 = vmatpush1.bf16.xpose.msra.mxu0 0
      %821 = vmatprep.subr.bf16.mxu0 0
      %822 = vmatpush1.bf16.xpose.msra.mxu0 0
      %823 = vmatprep.subr.bf16.mxu0 0
      %824 = vmatpush1.bf16.xpose.msra.mxu0 0
      %825 = vmatprep.subr.bf16.mxu0 0
      %826 = vmatpush1.bf16.xpose.msra.mxu0 0
      %827 = vmatprep.subr.bf16.mxu0 0
      %828 = vmatpush1.bf16.xpose.msra.mxu0 0
      %829 = vmatprep.subr.bf16.mxu0 0
      %830 = vmatpush1.bf16.xpose.msra.mxu0 0
      %831 = vmatprep.subr.bf16.mxu0 0
      %832 = vmatpush1.bf16.xpose.msra.mxu0 0
      %833 = vmatprep.subr.bf16.mxu0 0
      %834 = vmatpush1.bf16.xpose.msra.mxu0 0
      %835 = vmatprep.subr.bf16.mxu0 0
      %836 = vmatpush1.bf16.xpose.msra.mxu0 0
      %837 = vmatprep.subr.bf16.mxu0 0
      %838 = vmatpush1.bf16.xpose.msra.mxu0 0
      %839 = vmatprep.subr.bf16.mxu0 0
      %840 = vmatpush1.bf16.xpose.msra.mxu0 0
      %841 = vmatprep.subr.bf16.mxu0 0
      %842 = vmatpush1.bf16.xpose.msra.mxu0 0
      %843 = vmatprep.subr.bf16.mxu0 0
      %844 = vmatpush1.bf16.xpose.msra.mxu0 0
      %845 = vmatprep.subr.bf16.mxu0 0
      %846 = vmatpush1.bf16.xpose.msra.mxu0 0
      %847 = vmatprep.subr.bf16.mxu0 0
      %848 = vmatpush1.bf16.xpose.msra.mxu0 0
      %849 = vmatprep.mubr.bf16.mxu0 0
      %850 = vmatmul.mubr.bf16.gmra.mrb[0].mxu0 %v812
      %v851 = vpop.f32.mrb[0].mxu0
      %v852 = vadd.f32 0.0, %v851
      %v853 = vpop.f32.mrb[0].mxu0
      %v854 = vpop.f32.mrb[0].mxu0
      %v855 = vadd.f32 0.0, %v854
      %v856 = vpop.f32.mrb[0].mxu0
      %857 = vdwg.mxu0
      %v859 = vsel %vm810, %v793, 0
      %v862 = vsel %vm810, %v807, 0
      %864 = vmatprep.subr.bf16.mxu0 0
      %865 = vmatpush1.bf16.xpose.msra.mxu0 %v862
      %866 = vmatprep.subr.bf16.mxu0 0
      %867 = vmatpush1.bf16.xpose.msra.mxu0 0
      %868 = vmatprep.subr.bf16.mxu0 0
      %869 = vmatpush1.bf16.xpose.msra.mxu0 0
      %870 = vmatprep.subr.bf16.mxu0 0
      %871 = vmatpush1.bf16.xpose.msra.mxu0 0
      %872 = vmatprep.subr.bf16.mxu0 0
      %873 = vmatpush1.bf16.xpose.msra.mxu0 0
      %874 = vmatprep.subr.bf16.mxu0 0
      %875 = vmatpush1.bf16.xpose.msra.mxu0 0
      %876 = vmatprep.subr.bf16.mxu0 0
      %877 = vmatpush1.bf16.xpose.msra.mxu0 0
      %878 = vmatprep.subr.bf16.mxu0 0
      %879 = vmatpush1.bf16.xpose.msra.mxu0 0
      %880 = vmatprep.subr.bf16.mxu0 0
      %881 = vmatpush1.bf16.xpose.msra.mxu0 0
      %882 = vmatprep.subr.bf16.mxu0 0
      %883 = vmatpush1.bf16.xpose.msra.mxu0 0
      %884 = vmatprep.subr.bf16.mxu0 0
      %885 = vmatpush1.bf16.xpose.msra.mxu0 0
      %886 = vmatprep.subr.bf16.mxu0 0
      %887 = vmatpush1.bf16.xpose.msra.mxu0 0
      %888 = vmatprep.subr.bf16.mxu0 0
      %889 = vmatpush1.bf16.xpose.msra.mxu0 0
      %890 = vmatprep.subr.bf16.mxu0 0
      %891 = vmatpush1.bf16.xpose.msra.mxu0 0
      %892 = vmatprep.subr.bf16.mxu0 0
      %893 = vmatpush1.bf16.xpose.msra.mxu0 0
      %894 = vmatprep.subr.bf16.mxu0 0
      %895 = vmatpush1.bf16.xpose.msra.mxu0 0
      %896 = vmatprep.mubr.bf16.mxu0 0
      %897 = vmatmul.mubr.bf16.gmra.mrb[0].mxu0 %v859
      %v898 = vpop.f32.mrb[0].mxu0
      %v899 = vadd.f32 0.0, %v898
      %v900 = vpop.f32.mrb[0].mxu0
      %v901 = vpop.f32.mrb[0].mxu0
      %v902 = vadd.f32 0.0, %v901
      %v903 = vpop.f32.mrb[0].mxu0
      %904 = vdwg.mxu0
      %v906 = vsel %vm810, %v794, 0
      %v909 = vsel %vm810, %v808, 0
      %911 = vmatprep.subr.bf16.mxu0 0
      %912 = vmatpush1.bf16.xpose.msra.mxu0 %v909
      %913 = vmatprep.subr.bf16.mxu0 0
      %914 = vmatpush1.bf16.xpose.msra.mxu0 0
      %915 = vmatprep.subr.bf16.mxu0 0
      %916 = vmatpush1.bf16.xpose.msra.mxu0 0
      %917 = vmatprep.subr.bf16.mxu0 0
      %918 = vmatpush1.bf16.xpose.msra.mxu0 0
      %919 = vmatprep.subr.bf16.mxu0 0
      %920 = vmatpush1.bf16.xpose.msra.mxu0 0
      %921 = vmatprep.subr.bf16.mxu0 0
      %922 = vmatpush1.bf16.xpose.msra.mxu0 0
      %923 = vmatprep.subr.bf16.mxu0 0
      %924 = vmatpush1.bf16.xpose.msra.mxu0 0
      %925 = vmatprep.subr.bf16.mxu0 0
      %926 = vmatpush1.bf16.xpose.msra.mxu0 0
      %927 = vmatprep.subr.bf16.mxu0 0
      %928 = vmatpush1.bf16.xpose.msra.mxu0 0
      %929 = vmatprep.subr.bf16.mxu0 0
      %930 = vmatpush1.bf16.xpose.msra.mxu0 0
      %931 = vmatprep.subr.bf16.mxu0 0
      %932 = vmatpush1.bf16.xpose.msra.mxu0 0
      %933 = vmatprep.subr.bf16.mxu0 0
      %934 = vmatpush1.bf16.xpose.msra.mxu0 0
      %935 = vmatprep.subr.bf16.mxu0 0
      %936 = vmatpush1.bf16.xpose.msra.mxu0 0
      %937 = vmatprep.subr.bf16.mxu0 0
      %938 = vmatpush1.bf16.xpose.msra.mxu0 0
      %939 = vmatprep.subr.bf16.mxu0 0
      %940 = vmatpush1.bf16.xpose.msra.mxu0 0
      %941 = vmatprep.subr.bf16.mxu0 0
      %942 = vmatpush1.bf16.xpose.msra.mxu0 0
      %943 = vmatprep.mubr.bf16.mxu0 0
      %944 = vmatmul.mubr.bf16.gmra.mrb[0].mxu0 %v906
      %v945 = vpop.f32.mrb[0].mxu0
      %v946 = vadd.f32 0.0, %v945
      %v947 = vpop.f32.mrb[0].mxu0
      %v948 = vpop.f32.mrb[0].mxu0
      %v949 = vadd.f32 0.0, %v948
      %v950 = vpop.f32.mrb[0].mxu0
      %951 = vdwg.mxu0
      %v953 = vsel %vm810, %v795, 0
      %v956 = vsel %vm810, %v809, 0
      %958 = vmatprep.subr.bf16.mxu0 0
      %959 = vmatpush1.bf16.xpose.msra.mxu0 %v956
      %960 = vmatprep.subr.bf16.mxu0 0
      %961 = vmatpush1.bf16.xpose.msra.mxu0 0
      %962 = vmatprep.subr.bf16.mxu0 0
      %963 = vmatpush1.bf16.xpose.msra.mxu0 0
      %964 = vmatprep.subr.bf16.mxu0 0
      %965 = vmatpush1.bf16.xpose.msra.mxu0 0
      %966 = vmatprep.subr.bf16.mxu0 0
      %967 = vmatpush1.bf16.xpose.msra.mxu0 0
      %968 = vmatprep.subr.bf16.mxu0 0
      %969 = vmatpush1.bf16.xpose.msra.mxu0 0
      %970 = vmatprep.subr.bf16.mxu0 0
      %971 = vmatpush1.bf16.xpose.msra.mxu0 0
      %972 = vmatprep.subr.bf16.mxu0 0
      %973 = vmatpush1.bf16.xpose.msra.mxu0 0
      %974 = vmatprep.subr.bf16.mxu0 0
      %975 = vmatpush1.bf16.xpose.msra.mxu0 0
      %976 = vmatprep.subr.bf16.mxu0 0
      %977 = vmatpush1.bf16.xpose.msra.mxu0 0
      %978 = vmatprep.subr.bf16.mxu0 0
      %979 = vmatpush1.bf16.xpose.msra.mxu0 0
      %980 = vmatprep.subr.bf16.mxu0 0
      %981 = vmatpush1.bf16.xpose.msra.mxu0 0
      %982 = vmatprep.subr.bf16.mxu0 0
      %983 = vmatpush1.bf16.xpose.msra.mxu0 0
      %984 = vmatprep.subr.bf16.mxu0 0
      %985 = vmatpush1.bf16.xpose.msra.mxu0 0
      %986 = vmatprep.subr.bf16.mxu0 0
      %987 = vmatpush1.bf16.xpose.msra.mxu0 0
      %988 = vmatprep.subr.bf16.mxu0 0
      %989 = vmatpush1.bf16.xpose.msra.mxu0 0
      %990 = vmatprep.mubr.bf16.mxu0 0
      %991 = vmatmul.mubr.bf16.gmra.mrb[0].mxu0 %v953
      %v992 = vpop.f32.mrb[0].mxu0
      %v993 = vadd.f32 0.0, %v992
      %v994 = vpop.f32.mrb[0].mxu0
      %v995 = vpop.f32.mrb[0].mxu0
      %v996 = vadd.f32 0.0, %v995
      %v997 = vpop.f32.mrb[0].mxu0
      %998 = vdwg.mxu0
      %v999 = vmul.f32 %v852, 0.35355338
      %v1000 = vmul.f32 %v855, 0.35355338
      %v1001 = vmul.f32 %v899, 0.35355338
      %v1002 = vmul.f32 %v902, 0.35355338
      %v1003 = vmul.f32 %v946, 0.35355338
      %v1004 = vmul.f32 %v949, 0.35355338
      %v1005 = vmul.f32 %v993, 0.35355338
      %v1006 = vmul.f32 %v996, 0.35355338
      %v1008 = vlaneseq
      %v1009 = vshrl.u32 %v1008, 7
      %v1010 = vsub.s32 0, %v1009
      %v1011 = vrot.slane %v633, %v1010
      %v1013 = vadd.f32 %v999, %v1011
      %v1014 = vadd.f32 %v1000, %v1011
      %v1015 = vadd.f32 %v1001, %v1011
      %v1016 = vadd.f32 %v1002, %v1011
      %v1017 = vadd.f32 %v1003, %v1011
      %v1018 = vadd.f32 %v1004, %v1011
      %v1019 = vadd.f32 %v1005, %v1011
      %v1020 = vadd.f32 %v1006, %v1011
      %v1021 = vsel %vm810, %v1013, -inf
      %1022 = vmax.xlane.f32.xlu0 %v1021
      %v1023 = vpop.xlane.xlu0 %1022
      %vm1024 = vcmask 60416
      %v1025 = vsel %vm1024, %v1014, -inf
      %1026 = vmax.xlane.f32.xlu0 %v1025
      %v1027 = vpop.xlane.xlu0 %1026
      %v1028 = vsel %vm810, %v1015, -inf
      %1029 = vmax.xlane.f32.xlu0 %v1028
      %v1030 = vpop.xlane.xlu0 %1029
      %v1031 = vsel %vm1024, %v1016, -inf
      %1032 = vmax.xlane.f32.xlu0 %v1031
      %v1033 = vpop.xlane.xlu0 %1032
      %v1034 = vsel %vm810, %v1017, -inf
      %1035 = vmax.xlane.f32.xlu0 %v1034
      %v1036 = vpop.xlane.xlu0 %1035
      %v1037 = vsel %vm1024, %v1018, -inf
      %1038 = vmax.xlane.f32.xlu0 %v1037
      %v1039 = vpop.xlane.xlu0 %1038
      %v1040 = vsel %vm810, %v1019, -inf
      %1041 = vmax.xlane.f32.xlu0 %v1040
      %v1042 = vpop.xlane.xlu0 %1041
      %v1043 = vsel %vm1024, %v1020, -inf
      %1044 = vmax.xlane.f32.xlu0 %v1043
      %v1045 = vpop.xlane.xlu0 %1044
      %v1046 = vsub.f32 %v1013, %v1023
      %v1047 = vsub.f32 %v1014, %v1027
      %v1048 = vsub.f32 %v1015, %v1030
      %v1049 = vsub.f32 %v1016, %v1033
      %v1050 = vsub.f32 %v1017, %v1036
      %v1051 = vsub.f32 %v1018, %v1039
      %v1052 = vsub.f32 %v1019, %v1042
      %v1053 = vsub.f32 %v1020, %v1045
      %v1054 = vmul.f32 %v1046, 1.442695
      %v1055 = vpow.pop %v1054
      %v1056 = vmul.f32 %v1047, 1.442695
      %v1057 = vpow.pop %v1056
      %v1058 = vmul.f32 %v1048, 1.442695
      %v1059 = vpow.pop %v1058
      %v1060 = vmul.f32 %v1049, 1.442695
      %v1061 = vpow.pop %v1060
      %v1062 = vmul.f32 %v1050, 1.442695
      %v1063 = vpow.pop %v1062
      %v1064 = vmul.f32 %v1051, 1.442695
      %v1065 = vpow.pop %v1064
      %v1066 = vmul.f32 %v1052, 1.442695
      %v1067 = vpow.pop %v1066
      %v1068 = vmul.f32 %v1053, 1.442695
      %v1069 = vpow.pop %v1068
      %v1070 = vsel %vm810, %v1055, 0.0
      %1071 = vadd.xlane.f32.xlu0 %v1070
      %v1072 = vpop.xlane.xlu0 %1071
      %v1073 = vsel %vm1024, %v1057, 0.0
      %1074 = vadd.xlane.f32.xlu0 %v1073
      %v1075 = vpop.xlane.xlu0 %1074
      %v1076 = vsel %vm810, %v1059, 0.0
      %1077 = vadd.xlane.f32.xlu0 %v1076
      %v1078 = vpop.xlane.xlu0 %1077
      %v1079 = vsel %vm1024, %v1061, 0.0
      %1080 = vadd.xlane.f32.xlu0 %v1079
      %v1081 = vpop.xlane.xlu0 %1080
      %v1082 = vsel %vm810, %v1063, 0.0
      %1083 = vadd.xlane.f32.xlu0 %v1082
      %v1084 = vpop.xlane.xlu0 %1083
      %v1085 = vsel %vm1024, %v1065, 0.0
      %1086 = vadd.xlane.f32.xlu0 %v1085
      %v1087 = vpop.xlane.xlu0 %1086
      %v1088 = vsel %vm810, %v1067, 0.0
      %1089 = vadd.xlane.f32.xlu0 %v1088
      %v1090 = vpop.xlane.xlu0 %1089
      %v1091 = vsel %vm1024, %v1069, 0.0
      %1092 = vadd.xlane.f32.xlu0 %v1091
      %v1093 = vpop.xlane.xlu0 %1092
      %v1094 = vrcp.pop %v1072
      %v1095 = vmul.f32 %v1055, %v1094
      %v1096 = vrcp.pop %v1075
      %v1097 = vmul.f32 %v1057, %v1096
      %v1098 = vrcp.pop %v1078
      %v1099 = vmul.f32 %v1059, %v1098
      %v1100 = vrcp.pop %v1081
      %v1101 = vmul.f32 %v1061, %v1100
      %v1102 = vrcp.pop %v1084
      %v1103 = vmul.f32 %v1063, %v1102
      %v1104 = vrcp.pop %v1087
      %v1105 = vmul.f32 %v1065, %v1104
      %v1106 = vrcp.pop %v1090
      %v1107 = vmul.f32 %v1067, %v1106
      %v1108 = vrcp.pop %v1093
      %v1109 = vmul.f32 %v1069, %v1108
      %v1110 = vpack.c.bf16 %v1097, %v1095
      %v1111 = vpack.c.bf16 %v1101, %v1099
      %v1112 = vpack.c.bf16 %v1105, %v1103
      %v1113 = vpack.c.bf16 %v1109, %v1107
      %1115 = vrot.lane.b32.xlu0 %v806, 96
      %v1116 = vpop.permute.xlu0 %1115
      %v1118 = vsel %vm810, %v1110, 0
      %vm1120 = vcmask 1043456
      %v1122 = vsel %vm1120, %v1116, 0
      %1124 = vmatprep.subr.bf16.mxu0 0
      %1125 = vmatpush1.bf16.msra.mxu0 %v1122
      %1126 = vmatprep.subr.bf16.mxu0 0
      %1127 = vmatpush1.bf16.msra.mxu0 0
      %1128 = vmatprep.subr.bf16.mxu0 0
      %1129 = vmatpush1.bf16.msra.mxu0 0
      %1130 = vmatprep.subr.bf16.mxu0 0
      %1131 = vmatpush1.bf16.msra.mxu0 0
      %1132 = vmatprep.subr.bf16.mxu0 0
      %1133 = vmatpush1.bf16.msra.mxu0 0
      %1134 = vmatprep.subr.bf16.mxu0 0
      %1135 = vmatpush1.bf16.msra.mxu0 0
      %1136 = vmatprep.subr.bf16.mxu0 0
      %1137 = vmatpush1.bf16.msra.mxu0 0
      %1138 = vmatprep.subr.bf16.mxu0 0
      %1139 = vmatpush1.bf16.msra.mxu0 0
      %1140 = vmatprep.subr.bf16.mxu0 0
      %1141 = vmatpush1.bf16.msra.mxu0 0
      %1142 = vmatprep.subr.bf16.mxu0 0
      %1143 = vmatpush1.bf16.msra.mxu0 0
      %1144 = vmatprep.subr.bf16.mxu0 0
      %1145 = vmatpush1.bf16.msra.mxu0 0
      %1146 = vmatprep.subr.bf16.mxu0 0
      %1147 = vmatpush1.bf16.msra.mxu0 0
      %1148 = vmatprep.subr.bf16.mxu0 0
      %1149 = vmatpush1.bf16.msra.mxu0 0
      %1150 = vmatprep.subr.bf16.mxu0 0
      %1151 = vmatpush1.bf16.msra.mxu0 0
      %1152 = vmatprep.subr.bf16.mxu0 0
      %1153 = vmatpush1.bf16.msra.mxu0 0
      %1154 = vmatprep.subr.bf16.mxu0 0
      %1155 = vmatpush1.bf16.msra.mxu0 0
      %1156 = vmatprep.mubr.bf16.mxu0 0
      %1157 = vmatmul.mubr.bf16.gmra.mrb[0].mxu0 %v1118
      %v1158 = vpop.f32.mrb[0].mxu0
      %v1159 = vadd.f32 0.0, %v1158
      %v1160 = vpop.f32.mrb[0].mxu0
      %v1161 = vpop.f32.mrb[0].mxu0
      %v1162 = vadd.f32 0.0, %v1161
      %v1163 = vpop.f32.mrb[0].mxu0
      %1164 = vdwg.mxu0
      %1166 = vrot.lane.b32.xlu0 %v807, 96
      %v1167 = vpop.permute.xlu0 %1166
      %v1169 = vsel %vm810, %v1111, 0
      %v1172 = vsel %vm1120, %v1167, 0
      %1174 = vmatprep.subr.bf16.mxu0 0
      %1175 = vmatpush1.bf16.msra.mxu0 %v1172
      %1176 = vmatprep.subr.bf16.mxu0 0
      %1177 = vmatpush1.bf16.msra.mxu0 0
      %1178 = vmatprep.subr.bf16.mxu0 0
      %1179 = vmatpush1.bf16.msra.mxu0 0
      %1180 = vmatprep.subr.bf16.mxu0 0
      %1181 = vmatpush1.bf16.msra.mxu0 0
      %1182 = vmatprep.subr.bf16.mxu0 0
      %1183 = vmatpush1.bf16.msra.mxu0 0
      %1184 = vmatprep.subr.bf16.mxu0 0
      %1185 = vmatpush1.bf16.msra.mxu0 0
      %1186 = vmatprep.subr.bf16.mxu0 0
      %1187 = vmatpush1.bf16.msra.mxu0 0
      %1188 = vmatprep.subr.bf16.mxu0 0
      %1189 = vmatpush1.bf16.msra.mxu0 0
      %1190 = vmatprep.subr.bf16.mxu0 0
      %1191 = vmatpush1.bf16.msra.mxu0 0
      %1192 = vmatprep.subr.bf16.mxu0 0
      %1193 = vmatpush1.bf16.msra.mxu0 0
      %1194 = vmatprep.subr.bf16.mxu0 0
      %1195 = vmatpush1.bf16.msra.mxu0 0
      %1196 = vmatprep.subr.bf16.mxu0 0
      %1197 = vmatpush1.bf16.msra.mxu0 0
      %1198 = vmatprep.subr.bf16.mxu0 0
      %1199 = vmatpush1.bf16.msra.mxu0 0
      %1200 = vmatprep.subr.bf16.mxu0 0
      %1201 = vmatpush1.bf16.msra.mxu0 0
      %1202 = vmatprep.subr.bf16.mxu0 0
      %1203 = vmatpush1.bf16.msra.mxu0 0
      %1204 = vmatprep.subr.bf16.mxu0 0
      %1205 = vmatpush1.bf16.msra.mxu0 0
      %1206 = vmatprep.mubr.bf16.mxu0 0
      %1207 = vmatmul.mubr.bf16.gmra.mrb[0].mxu0 %v1169
      %v1208 = vpop.f32.mrb[0].mxu0
      %v1209 = vadd.f32 0.0, %v1208
      %v1210 = vpop.f32.mrb[0].mxu0
      %v1211 = vpop.f32.mrb[0].mxu0
      %v1212 = vadd.f32 0.0, %v1211
      %v1213 = vpop.f32.mrb[0].mxu0
      %1214 = vdwg.mxu0
      %1216 = vrot.lane.b32.xlu0 %v808, 96
      %v1217 = vpop.permute.xlu0 %1216
      %v1219 = vsel %vm810, %v1112, 0
      %v1222 = vsel %vm1120, %v1217, 0
      %1224 = vmatprep.subr.bf16.mxu0 0
      %1225 = vmatpush1.bf16.msra.mxu0 %v1222
      %1226 = vmatprep.subr.bf16.mxu0 0
      %1227 = vmatpush1.bf16.msra.mxu0 0
      %1228 = vmatprep.subr.bf16.mxu0 0
      %1229 = vmatpush1.bf16.msra.mxu0 0
      %1230 = vmatprep.subr.bf16.mxu0 0
      %1231 = vmatpush1.bf16.msra.mxu0 0
      %1232 = vmatprep.subr.bf16.mxu0 0
      %1233 = vmatpush1.bf16.msra.mxu0 0
      %1234 = vmatprep.subr.bf16.mxu0 0
      %1235 = vmatpush1.bf16.msra.mxu0 0
      %1236 = vmatprep.subr.bf16.mxu0 0
      %1237 = vmatpush1.bf16.msra.mxu0 0
      %1238 = vmatprep.subr.bf16.mxu0 0
      %1239 = vmatpush1.bf16.msra.mxu0 0
      %1240 = vmatprep.subr.bf16.mxu0 0
      %1241 = vmatpush1.bf16.msra.mxu0 0
      %1242 = vmatprep.subr.bf16.mxu0 0
      %1243 = vmatpush1.bf16.msra.mxu0 0
      %1244 = vmatprep.subr.bf16.mxu0 0
      %1245 = vmatpush1.bf16.msra.mxu0 0
      %1246 = vmatprep.subr.bf16.mxu0 0
      %1247 = vmatpush1.bf16.msra.mxu0 0
      %1248 = vmatprep.subr.bf16.mxu0 0
      %1249 = vmatpush1.bf16.msra.mxu0 0
      %1250 = vmatprep.subr.bf16.mxu0 0
      %1251 = vmatpush1.bf16.msra.mxu0 0
      %1252 = vmatprep.subr.bf16.mxu0 0
      %1253 = vmatpush1.bf16.msra.mxu0 0
      %1254 = vmatprep.subr.bf16.mxu0 0
      %1255 = vmatpush1.bf16.msra.mxu0 0
      %1256 = vmatprep.mubr.bf16.mxu0 0
      %1257 = vmatmul.mubr.bf16.gmra.mrb[0].mxu0 %v1219
      %v1258 = vpop.f32.mrb[0].mxu0
      %v1259 = vadd.f32 0.0, %v1258
      %v1260 = vpop.f32.mrb[0].mxu0
      %v1261 = vpop.f32.mrb[0].mxu0
      %v1262 = vadd.f32 0.0, %v1261
      %v1263 = vpop.f32.mrb[0].mxu0
      %1264 = vdwg.mxu0
      %1266 = vrot.lane.b32.xlu0 %v809, 96
      %v1267 = vpop.permute.xlu0 %1266
      %v1269 = vsel %vm810, %v1113, 0
      %v1272 = vsel %vm1120, %v1267, 0
      %1274 = vmatprep.subr.bf16.mxu0 0
      %1275 = vmatpush1.bf16.msra.mxu0 %v1272
      %1276 = vmatprep.subr.bf16.mxu0 0
      %1277 = vmatpush1.bf16.msra.mxu0 0
      %1278 = vmatprep.subr.bf16.mxu0 0
      %1279 = vmatpush1.bf16.msra.mxu0 0
      %1280 = vmatprep.subr.bf16.mxu0 0
      %1281 = vmatpush1.bf16.msra.mxu0 0
      %1282 = vmatprep.subr.bf16.mxu0 0
      %1283 = vmatpush1.bf16.msra.mxu0 0
      %1284 = vmatprep.subr.bf16.mxu0 0
      %1285 = vmatpush1.bf16.msra.mxu0 0
      %1286 = vmatprep.subr.bf16.mxu0 0
      %1287 = vmatpush1.bf16.msra.mxu0 0
      %1288 = vmatprep.subr.bf16.mxu0 0
      %1289 = vmatpush1.bf16.msra.mxu0 0
      %1290 = vmatprep.subr.bf16.mxu0 0
      %1291 = vmatpush1.bf16.msra.mxu0 0
      %1292 = vmatprep.subr.bf16.mxu0 0
      %1293 = vmatpush1.bf16.msra.mxu0 0
      %1294 = vmatprep.subr.bf16.mxu0 0
      %1295 = vmatpush1.bf16.msra.mxu0 0
      %1296 = vmatprep.subr.bf16.mxu0 0
      %1297 = vmatpush1.bf16.msra.mxu0 0
      %1298 = vmatprep.subr.bf16.mxu0 0
      %1299 = vmatpush1.bf16.msra.mxu0 0
      %1300 = vmatprep.subr.bf16.mxu0 0
      %1301 = vmatpush1.bf16.msra.mxu0 0
      %1302 = vmatprep.subr.bf16.mxu0 0
      %1303 = vmatpush1.bf16.msra.mxu0 0
      %1304 = vmatprep.subr.bf16.mxu0 0
      %1305 = vmatpush1.bf16.msra.mxu0 0
      %1306 = vmatprep.mubr.bf16.mxu0 0
      %1307 = vmatmul.mubr.bf16.gmra.mrb[0].mxu0 %v1269
      %v1308 = vpop.f32.mrb[0].mxu0
      %v1309 = vadd.f32 0.0, %v1308
      %v1310 = vpop.f32.mrb[0].mxu0
      %v1311 = vpop.f32.mrb[0].mxu0
      %v1312 = vadd.f32 0.0, %v1311
      %v1313 = vpop.f32.mrb[0].mxu0
      %1314 = vdwg.mxu0
      %v1315 = vpack.c.bf16 %v1162, %v1159
      %v1316 = vpack.c.bf16 %v1212, %v1209
      %v1317 = vpack.c.bf16 %v1262, %v1259
      %v1318 = vpack.c.bf16 %v1312, %v1309
      %v1320 = vsel %vm810, %v1315, 0
      %v1323 = vsel %vm1120, %v644, 0
      %1325 = vmatprep.subr.bf16.mxu0 0
      %1326 = vmatpush1.bf16.msra.mxu0 %v1323
      %1327 = vmatprep.subr.bf16.mxu0 0
      %1328 = vmatpush1.bf16.msra.mxu0 0
      %1329 = vmatprep.subr.bf16.mxu0 0
      %1330 = vmatpush1.bf16.msra.mxu0 0
      %1331 = vmatprep.subr.bf16.mxu0 0
      %1332 = vmatpush1.bf16.msra.mxu0 0
      %1333 = vmatprep.subr.bf16.mxu0 0
      %1334 = vmatpush1.bf16.msra.mxu0 0
      %1335 = vmatprep.subr.bf16.mxu0 0
      %1336 = vmatpush1.bf16.msra.mxu0 0
      %1337 = vmatprep.subr.bf16.mxu0 0
      %1338 = vmatpush1.bf16.msra.mxu0 0
      %1339 = vmatprep.subr.bf16.mxu0 0
      %1340 = vmatpush1.bf16.msra.mxu0 0
      %1341 = vmatprep.subr.bf16.mxu0 0
      %1342 = vmatpush1.bf16.msra.mxu0 0
      %1343 = vmatprep.subr.bf16.mxu0 0
      %1344 = vmatpush1.bf16.msra.mxu0 0
      %1345 = vmatprep.subr.bf16.mxu0 0
      %1346 = vmatpush1.bf16.msra.mxu0 0
      %1347 = vmatprep.subr.bf16.mxu0 0
      %1348 = vmatpush1.bf16.msra.mxu0 0
      %1349 = vmatprep.subr.bf16.mxu0 0
      %1350 = vmatpush1.bf16.msra.mxu0 0
      %1351 = vmatprep.subr.bf16.mxu0 0
      %1352 = vmatpush1.bf16.msra.mxu0 0
      %1353 = vmatprep.subr.bf16.mxu0 0
      %1354 = vmatpush1.bf16.msra.mxu0 0
      %1355 = vmatprep.subr.bf16.mxu0 0
      %1356 = vmatpush1.bf16.msra.mxu0 0
      %1357 = vmatprep.mubr.bf16.mxu0 0
      %1358 = vmatmul.mubr.bf16.gmra.mrb[0].mxu0 %v1320
      %v1359 = vpop.f32.mrb[0].mxu0
      %v1360 = vadd.f32 0.0, %v1359
      %v1361 = vpop.f32.mrb[0].mxu0
      %v1362 = vpop.f32.mrb[0].mxu0
      %v1363 = vadd.f32 0.0, %v1362
      %v1364 = vpop.f32.mrb[0].mxu0
      %1365 = vdwg.mxu0
      %v1367 = vsel %vm810, %v1316, 0
      %v1370 = vsel %vm1120, %v645, 0
      %1372 = vmatprep.subr.bf16.mxu0 0
      %1373 = vmatpush1.bf16.msra.mxu0 %v1370
      %1374 = vmatprep.subr.bf16.mxu0 0
      %1375 = vmatpush1.bf16.msra.mxu0 0
      %1376 = vmatprep.subr.bf16.mxu0 0
      %1377 = vmatpush1.bf16.msra.mxu0 0
      %1378 = vmatprep.subr.bf16.mxu0 0
      %1379 = vmatpush1.bf16.msra.mxu0 0
      %1380 = vmatprep.subr.bf16.mxu0 0
      %1381 = vmatpush1.bf16.msra.mxu0 0
      %1382 = vmatprep.subr.bf16.mxu0 0
      %1383 = vmatpush1.bf16.msra.mxu0 0
      %1384 = vmatprep.subr.bf16.mxu0 0
      %1385 = vmatpush1.bf16.msra.mxu0 0
      %1386 = vmatprep.subr.bf16.mxu0 0
      %1387 = vmatpush1.bf16.msra.mxu0 0
      %1388 = vmatprep.subr.bf16.mxu0 0
      %1389 = vmatpush1.bf16.msra.mxu0 0
      %1390 = vmatprep.subr.bf16.mxu0 0
      %1391 = vmatpush1.bf16.msra.mxu0 0
      %1392 = vmatprep.subr.bf16.mxu0 0
      %1393 = vmatpush1.bf16.msra.mxu0 0
      %1394 = vmatprep.subr.bf16.mxu0 0
      %1395 = vmatpush1.bf16.msra.mxu0 0
      %1396 = vmatprep.subr.bf16.mxu0 0
      %1397 = vmatpush1.bf16.msra.mxu0 0
      %1398 = vmatprep.subr.bf16.mxu0 0
      %1399 = vmatpush1.bf16.msra.mxu0 0
      %1400 = vmatprep.subr.bf16.mxu0 0
      %1401 = vmatpush1.bf16.msra.mxu0 0
      %1402 = vmatprep.subr.bf16.mxu0 0
      %1403 = vmatpush1.bf16.msra.mxu0 0
      %1404 = vmatprep.mubr.bf16.mxu0 0
      %1405 = vmatmul.mubr.bf16.gmra.mrb[0].mxu0 %v1367
      %v1406 = vpop.f32.mrb[0].mxu0
      %v1407 = vadd.f32 0.0, %v1406
      %v1408 = vpop.f32.mrb[0].mxu0
      %v1409 = vpop.f32.mrb[0].mxu0
      %v1410 = vadd.f32 0.0, %v1409
      %v1411 = vpop.f32.mrb[0].mxu0
      %1412 = vdwg.mxu0
      %v1414 = vsel %vm810, %v1317, 0
      %v1417 = vsel %vm1120, %v646, 0
      %1419 = vmatprep.subr.bf16.mxu0 0
      %1420 = vmatpush1.bf16.msra.mxu0 %v1417
      %1421 = vmatprep.subr.bf16.mxu0 0
      %1422 = vmatpush1.bf16.msra.mxu0 0
      %1423 = vmatprep.subr.bf16.mxu0 0
      %1424 = vmatpush1.bf16.msra.mxu0 0
      %1425 = vmatprep.subr.bf16.mxu0 0
      %1426 = vmatpush1.bf16.msra.mxu0 0
      %1427 = vmatprep.subr.bf16.mxu0 0
      %1428 = vmatpush1.bf16.msra.mxu0 0
      %1429 = vmatprep.subr.bf16.mxu0 0
      %1430 = vmatpush1.bf16.msra.mxu0 0
      %1431 = vmatprep.subr.bf16.mxu0 0
      %1432 = vmatpush1.bf16.msra.mxu0 0
      %1433 = vmatprep.subr.bf16.mxu0 0
      %1434 = vmatpush1.bf16.msra.mxu0 0
      %1435 = vmatprep.subr.bf16.mxu0 0
      %1436 = vmatpush1.bf16.msra.mxu0 0
      %1437 = vmatprep.subr.bf16.mxu0 0
      %1438 = vmatpush1.bf16.msra.mxu0 0
      %1439 = vmatprep.subr.bf16.mxu0 0
      %1440 = vmatpush1.bf16.msra.mxu0 0
      %1441 = vmatprep.subr.bf16.mxu0 0
      %1442 = vmatpush1.bf16.msra.mxu0 0
      %1443 = vmatprep.subr.bf16.mxu0 0
      %1444 = vmatpush1.bf16.msra.mxu0 0
      %1445 = vmatprep.subr.bf16.mxu0 0
      %1446 = vmatpush1.bf16.msra.mxu0 0
      %1447 = vmatprep.subr.bf16.mxu0 0
      %1448 = vmatpush1.bf16.msra.mxu0 0
      %1449 = vmatprep.subr.bf16.mxu0 0
      %1450 = vmatpush1.bf16.msra.mxu0 0
      %1451 = vmatprep.mubr.bf16.mxu0 0
      %1452 = vmatmul.mubr.bf16.gmra.mrb[0].mxu0 %v1414
      %v1453 = vpop.f32.mrb[0].mxu0
      %v1454 = vadd.f32 0.0, %v1453
      %v1455 = vpop.f32.mrb[0].mxu0
      %v1456 = vpop.f32.mrb[0].mxu0
      %v1457 = vadd.f32 0.0, %v1456
      %v1458 = vpop.f32.mrb[0].mxu0
      %1459 = vdwg.mxu0
      %v1461 = vsel %vm810, %v1318, 0
      %v1464 = vsel %vm1120, %v647, 0
      %1466 = vmatprep.subr.bf16.mxu0 0
      %1467 = vmatpush1.bf16.msra.mxu0 %v1464
      %1468 = vmatprep.subr.bf16.mxu0 0
      %1469 = vmatpush1.bf16.msra.mxu0 0
      %1470 = vmatprep.subr.bf16.mxu0 0
      %1471 = vmatpush1.bf16.msra.mxu0 0
      %1472 = vmatprep.subr.bf16.mxu0 0
      %1473 = vmatpush1.bf16.msra.mxu0 0
      %1474 = vmatprep.subr.bf16.mxu0 0
      %1475 = vmatpush1.bf16.msra.mxu0 0
      %1476 = vmatprep.subr.bf16.mxu0 0
      %1477 = vmatpush1.bf16.msra.mxu0 0
      %1478 = vmatprep.subr.bf16.mxu0 0
      %1479 = vmatpush1.bf16.msra.mxu0 0
      %1480 = vmatprep.subr.bf16.mxu0 0
      %1481 = vmatpush1.bf16.msra.mxu0 0
      %1482 = vmatprep.subr.bf16.mxu0 0
      %1483 = vmatpush1.bf16.msra.mxu0 0
      %1484 = vmatprep.subr.bf16.mxu0 0
      %1485 = vmatpush1.bf16.msra.mxu0 0
      %1486 = vmatprep.subr.bf16.mxu0 0
      %1487 = vmatpush1.bf16.msra.mxu0 0
      %1488 = vmatprep.subr.bf16.mxu0 0
      %1489 = vmatpush1.bf16.msra.mxu0 0
      %1490 = vmatprep.subr.bf16.mxu0 0
      %1491 = vmatpush1.bf16.msra.mxu0 0
      %1492 = vmatprep.subr.bf16.mxu0 0
      %1493 = vmatpush1.bf16.msra.mxu0 0
      %1494 = vmatprep.subr.bf16.mxu0 0
      %1495 = vmatpush1.bf16.msra.mxu0 0
      %1496 = vmatprep.subr.bf16.mxu0 0
      %1497 = vmatpush1.bf16.msra.mxu0 0
      %1498 = vmatprep.mubr.bf16.mxu0 0
      %1499 = vmatmul.mubr.bf16.gmra.mrb[0].mxu0 %v1461
      %v1500 = vpop.f32.mrb[0].mxu0
      %v1501 = vadd.f32 0.0, %v1500
      %v1502 = vpop.f32.mrb[0].mxu0
      %v1503 = vpop.f32.mrb[0].mxu0
      %v1504 = vadd.f32 0.0, %v1503
      %v1505 = vpop.f32.mrb[0].mxu0
      %1506 = vdwg.mxu0
      %v1507 = vadd.f32 %v1360, %v1407
      %v1508 = vadd.f32 %v1363, %v1410
      %v1509 = vadd.f32 %v1507, %v1454
      %v1510 = vadd.f32 %v1508, %v1457
      %v1511 = vadd.f32 %v1509, %v1501
      %v1512 = vadd.f32 %v1510, %v1504
      %v1514 = vlaneseq
      %v1515 = vshrl.u32 %v1514, 7
      %v1516 = vsub.s32 0, %v1515
      %v1517 = vrot.slane %v648, %v1516
      %v1519 = vadd.f32 %v1511, %v1517
      %v1520 = vadd.f32 %v1512, %v1517
      %v1521 = vadd.f32 %v581, %v1519
      %v1522 = vadd.f32 %v582, %v1520
      %v1523 = vld [vmem:[%s11] sm:$0x1]
      %v1524 = vld [vmem:[%s12] sm:$0x1]
      %v1525 = vsel %vm585, %v1521, 0.0
      %1526 = vadd.xlane.f32.xlu0 %v1525
      %v1527 = vpop.xlane.xlu0 %1526
      %v1528 = vsel %vm589, %v1522, 0.0
      %1529 = vadd.xlane.f32.xlu0 %v1528
      %v1530 = vpop.xlane.xlu0 %1529
      %v1531 = vmul.f32 %v1527, %v593
      %v1532 = vmul.f32 %v1530, %v593
      %v1533 = vsub.f32 %v1521, %v1531
      %v1534 = vsub.f32 %v1522, %v1532
      %v1535 = vmul.f32 %v1533, %v1533
      %v1536 = vmul.f32 %v1534, %v1534
      %v1537 = vsel %vm585, %v1535, 0.0
      %1538 = vadd.xlane.f32.xlu0 %v1537
      %v1539 = vpop.xlane.xlu0 %1538
      %v1540 = vsel %vm589, %v1536, 0.0
      %1541 = vadd.xlane.f32.xlu0 %v1540
      %v1542 = vpop.xlane.xlu0 %1541
      %v1543 = vmul.f32 %v1539, %v593
      %v1544 = vmul.f32 %v1542, %v593
      %v1545 = vadd.f32 %v1543, 1e-05
      %v1546 = vadd.f32 %v1544, 1e-05
      %v1547 = vrsqrt.pop %v1545
      %v1548 = vrsqrt.pop %v1546
      %v1549 = vmul.f32 %v1533, %v1547
      %v1550 = vmul.f32 %v1534, %v1548
      %v1552 = vlaneseq
      %v1553 = vshrl.u32 %v1552, 7
      %v1554 = vsub.s32 0, %v1553
      %v1555 = vrot.slane %v1523, %v1554
      %v1557 = vmul.f32 %v1549, %v1555
      %v1558 = vmul.f32 %v1550, %v1555
      %v1560 = vlaneseq
      %v1561 = vshrl.u32 %v1560, 7
      %v1562 = vsub.s32 0, %v1561
      %v1563 = vrot.slane %v1524, %v1562
      %v1565 = vadd.f32 %v1557, %v1563
      %v1566 = vadd.f32 %v1558, %v1563
      %v1567 = vpack.c.bf16 %v1566, %v1565
      %v1568 = vld [vmem:[%s13] sm:$0xf]
      %v1569 = vld [vmem:[%s13 + $0x4] sm:$0xf]
      %v1570 = vld [vmem:[%s13 + $0x8] sm:$0xf]
      %v1571 = vld [vmem:[%s13 + $0xc] sm:$0xf]
      %v1572 = vld [vmem:[%s14] sm:$0x1]
      %v1574 = vlaneseq
      %v1575 = vshrl.u32 %v1574, 7
      %v1576 = vsub.s32 0, %v1575
      %v1577 = vrot.slane %v1572, %v1576
      %v1583 = vunpack.c.l.b16 %v1568
      %v1584 = vunpack.c.l.b16 %v1569
      %v1585 = vunpack.c.l.b16 %v1570
      %v1586 = vunpack.c.l.b16 %v1571
      %v1587 = vpack.c.b16 %v1584, %v1583
      %v1588 = vpack.c.b16 %v1586, %v1585
      %v1592 = vsel %vm585, %v1567, 0
      %1594 = vmatprep.subr.bf16.mxu0 0
      %1595 = vmatpush1.bf16.msra.mxu0 %v1587
      %1596 = vmatprep.subr.bf16.mxu0 0
      %1597 = vmatpush1.bf16.msra.mxu0 %v1588
      %1598 = vmatprep.subr.bf16.mxu0 0
      %1599 = vmatpush1.bf16.msra.mxu0 0
      %1600 = vmatprep.subr.bf16.mxu0 0
      %1601 = vmatpush1.bf16.msra.mxu0 0
      %1602 = vmatprep.subr.bf16.mxu0 0
      %1603 = vmatpush1.bf16.msra.mxu0 0
      %1604 = vmatprep.subr.bf16.mxu0 0
      %1605 = vmatpush1.bf16.msra.mxu0 0
      %1606 = vmatprep.subr.bf16.mxu0 0
      %1607 = vmatpush1.bf16.msra.mxu0 0
      %1608 = vmatprep.subr.bf16.mxu0 0
      %1609 = vmatpush1.bf16.msra.mxu0 0
      %1610 = vmatprep.subr.bf16.mxu0 0
      %1611 = vmatpush1.bf16.msra.mxu0 0
      %1612 = vmatprep.subr.bf16.mxu0 0
      %1613 = vmatpush1.bf16.msra.mxu0 0
      %1614 = vmatprep.subr.bf16.mxu0 0
      %1615 = vmatpush1.bf16.msra.mxu0 0
      %1616 = vmatprep.subr.bf16.mxu0 0
      %1617 = vmatpush1.bf16.msra.mxu0 0
      %1618 = vmatprep.subr.bf16.mxu0 0
      %1619 = vmatpush1.bf16.msra.mxu0 0
      %1620 = vmatprep.subr.bf16.mxu0 0
      %1621 = vmatpush1.bf16.msra.mxu0 0
      %1622 = vmatprep.subr.bf16.mxu0 0
      %1623 = vmatpush1.bf16.msra.mxu0 0
      %1624 = vmatprep.subr.bf16.mxu0 0
      %1625 = vmatpush1.bf16.msra.mxu0 0
      %1626 = vmatprep.mubr.bf16.mxu0 0
      %1627 = vmatmul.mubr.bf16.gmra.mrb[0].mxu0 %v1592
      %v1628 = vpop.f32.mrb[0].mxu0
      %v1629 = vadd.f32 %v1577, %v1628
      %v1630 = vpop.f32.mrb[0].mxu0
      %v1631 = vpop.f32.mrb[0].mxu0
      %v1632 = vadd.f32 %v1577, %v1631
      %v1633 = vpop.f32.mrb[0].mxu0
      %1634 = vdwg.mxu0
      %v1635 = vmax.f32 %v1629, 0.0
      %v1636 = vmax.f32 %v1632, 0.0
      %v1637 = vpack.c.bf16 %v1636, %v1635
      %v1638 = vld [vmem:[%s15] sm:$0xf]
      %v1639 = vld [vmem:[%s15 + $0x4] sm:$0xf]
      %v1640 = vld [vmem:[%s15 + $0x8] sm:$0xf]
      %v1641 = vld [vmem:[%s15 + $0xc] sm:$0xf]
      %v1642 = vld [vmem:[%s15 + $0x10] sm:$0xf]
      %v1643 = vld [vmem:[%s15 + $0x14] sm:$0xf]
      %v1644 = vld [vmem:[%s15 + $0x18] sm:$0xf]
      %v1645 = vld [vmem:[%s15 + $0x1c] sm:$0xf]
      %v1646 = vld [vmem:[%s16] sm:$0x1]
      %v1648 = vlaneseq
      %v1649 = vshrl.u32 %v1648, 7
      %v1650 = vsub.s32 0, %v1649
      %v1651 = vrot.slane %v1646, %v1650
      %v1661 = vunpack.c.l.b16 %v1638
      %v1662 = vunpack.c.l.b16 %v1639
      %v1663 = vunpack.c.l.b16 %v1640
      %v1664 = vunpack.c.l.b16 %v1641
      %v1665 = vunpack.c.l.b16 %v1642
      %v1666 = vunpack.c.l.b16 %v1643
      %v1667 = vunpack.c.l.b16 %v1644
      %v1668 = vunpack.c.l.b16 %v1645
      %v1669 = vpack.c.b16 %v1662, %v1661
      %v1670 = vpack.c.b16 %v1664, %v1663
      %v1671 = vpack.c.b16 %v1666, %v1665
      %v1672 = vpack.c.b16 %v1668, %v1667
      %vm1677 = vcmask 523264
      %v1679 = vsel %vm1677, %v1637, 0
      %1681 = vmatprep.subr.bf16.mxu0 0
      %1682 = vmatpush1.bf16.msra.mxu0 %v1669
      %1683 = vmatprep.subr.bf16.mxu0 0
      %1684 = vmatpush1.bf16.msra.mxu0 %v1670
      %1685 = vmatprep.subr.bf16.mxu0 0
      %1686 = vmatpush1.bf16.msra.mxu0 %v1671
      %1687 = vmatprep.subr.bf16.mxu0 0
      %1688 = vmatpush1.bf16.msra.mxu0 %v1672
      %1689 = vmatprep.subr.bf16.mxu0 0
      %1690 = vmatpush1.bf16.msra.mxu0 0
      %1691 = vmatprep.subr.bf16.mxu0 0
      %1692 = vmatpush1.bf16.msra.mxu0 0
      %1693 = vmatprep.subr.bf16.mxu0 0
      %1694 = vmatpush1.bf16.msra.mxu0 0
      %1695 = vmatprep.subr.bf16.mxu0 0
      %1696 = vmatpush1.bf16.msra.mxu0 0
      %1697 = vmatprep.subr.bf16.mxu0 0
      %1698 = vmatpush1.bf16.msra.mxu0 0
      %1699 = vmatprep.subr.bf16.mxu0 0
      %1700 = vmatpush1.bf16.msra.mxu0 0
      %1701 = vmatprep.subr.bf16.mxu0 0
      %1702 = vmatpush1.bf16.msra.mxu0 0
      %1703 = vmatprep.subr.bf16.mxu0 0
      %1704 = vmatpush1.bf16.msra.mxu0 0
      %1705 = vmatprep.subr.bf16.mxu0 0
      %1706 = vmatpush1.bf16.msra.mxu0 0
      %1707 = vmatprep.subr.bf16.mxu0 0
      %1708 = vmatpush1.bf16.msra.mxu0 0
      %1709 = vmatprep.subr.bf16.mxu0 0
      %1710 = vmatpush1.bf16.msra.mxu0 0
      %1711 = vmatprep.subr.bf16.mxu0 0
      %1712 = vmatpush1.bf16.msra.mxu0 0
      %1713 = vmatprep.mubr.bf16.mxu0 0
      %1714 = vmatmul.mubr.bf16.gmra.mrb[0].mxu0 %v1679
      %v1715 = vpop.f32.mrb[0].mxu0
      %v1716 = vadd.f32 %v1651, %v1715
      %v1717 = vpop.f32.mrb[0].mxu0
      %v1718 = vpop.f32.mrb[0].mxu0
      %v1719 = vadd.f32 %v1651, %v1718
      %v1720 = vpop.f32.mrb[0].mxu0
      %1721 = vdwg.mxu0
      %v1722 = vadd.f32 %v1521, %v1716
      %v1723 = vadd.f32 %v1522, %v1719
      %1724 = vst.msk [vmem:[%s579] sm:$0xff] %vm585, %v1722
      %1725 = vst.msk [vmem:[%s579 + $0x8] sm:$0xf] %vm589, %v1723
      %p1726 = scmp.lt.s32.totalorder %s28, 1
      %s1727 = scalar_select %p1726, %s28, 1
      %s1728 = smul.addr %s1727, 2
      %s1729 = smul.addr %s1728, 8
      %s1730 = scalar_lea.vmem %s17, %s1729
      // Predicated region
      $region89: #{_lambda_.10} parent=87 // pred_check
        %p1731 = pneg %p418
      $region90: #{_lambda_.10} parent=87 // pred_check_branch
        %1733 = sbr.rel (%p1731) target = $region92
      $region91: #{_lambda_.10} parent=87 // pred_region
        _
      $region92: #{_lambda_.10} parent=87 // pred_fallthru
        _
    $region88: #{_lambda_.10} parent=5 // pred_fallthru
      _
    %p1734 = scmp.le.s32.totalorder 2, %s23
    // Predicated region
    $region93: #{_lambda_.10} parent=5 // pred_check
      %p1735 = pneg %p1734
    $region94: #{_lambda_.10} parent=5 // pred_check_branch
      %1737 = sbr.rel (%p1735) target = $region96
    $region95: #{_lambda_.10} parent=5 // pred_region
      %s1738 = ssub.s32 %s23, 2
      // Predicated region
      $region97: #{_lambda_.10} parent=95 // pred_check
        %p1739 = pneg %p424
      $region98: #{_lambda_.10} parent=95 // pred_check_branch
        %1741 = sbr.rel (%p1739) target = $region100
      $region99: #{_lambda_.10} parent=95 // pred_region
        %p1742 = scmp.lt.s32.totalorder %s29, 1
        %s1743 = scalar_select %p1742, %s29, 1
        %s1744 = smul.addr %s1743, 2
        %s1745 = smul.addr %s1744, 8
        %s1746 = scalar_lea.vmem %s17, %s1745
      $region100: #{_lambda_.10} parent=95 // pred_fallthru
        _
    $region96: #{_lambda_.10} parent=5 // pred_fallthru
      _
  $region6: #{_lambda_.10} parent=0 // loop_footer
    %s27 = sadd.s32 1, %s23
  $region7: #{_lambda_.10} parent=0 // loop_footer_branch
    %22 = sbr.rel target = $region3
  $region8: #{_lambda_.10} parent=0 // loop_exit
    _

// kernel: _lambda_.11
$region0: #{_lambda_.11}
  #allocation0 [shape = 'u32[]', space=smem, size = 0x4, offset = 0x4, fixed_abs, tag = 'smem constant byte address 0x4 - core index']
  #allocation1 [shape = 'u32[144,128]{1,0:T(1,128)}', space=vmem, size = 0x12000, scoped, tag = 'internal scratch']
  %s0 = inlined_call_operand.vmem [shape: f32[2,8,32], index: 0, kind: input, shape index: {}]
  %s1 = inlined_call_operand.vmem [shape: f32[2,12,32], index: 1, kind: input, shape index: {}]
  %s2 = inlined_call_operand.vmem [shape: f32[2,1,12], index: 2, kind: input, shape index: {}]
  %s3 = inlined_call_operand.vmem [shape: f32[1,32], index: 3, kind: input, shape index: {}]
  %s4 = inlined_call_operand.vmem [shape: f32[1,32], index: 4, kind: input, shape index: {}]
  %s5 = inlined_call_operand.vmem [shape: bf16[32,32], index: 5, kind: input, shape index: {}]
  %s6 = inlined_call_operand.vmem [shape: f32[1,32], index: 6, kind: input, shape index: {}]
  %s7 = inlined_call_operand.vmem [shape: bf16[32,64], index: 7, kind: input, shape index: {}]
  %s8 = inlined_call_operand.vmem [shape: f32[1,64], index: 8, kind: input, shape index: {}]
  %s9 = inlined_call_operand.vmem [shape: bf16[4,8,32], index: 9, kind: input, shape index: {}]
  %s10 = inlined_call_operand.vmem [shape: f32[1,32], index: 10, kind: input, shape index: {}]
  %s11 = inlined_call_operand.vmem [shape: f32[1,32], index: 11, kind: input, shape index: {}]
  %s12 = inlined_call_operand.vmem [shape: f32[1,32], index: 12, kind: input, shape index: {}]
  %s13 = inlined_call_operand.vmem [shape: bf16[32,64], index: 13, kind: input, shape index: {}]
  %s14 = inlined_call_operand.vmem [shape: f32[1,64], index: 14, kind: input, shape index: {}]
  %s15 = inlined_call_operand.vmem [shape: bf16[64,32], index: 15, kind: input, shape index: {}]
  %s16 = inlined_call_operand.vmem [shape: f32[1,32], index: 16, kind: input, shape index: {}]
  %s17 = inlined_call_operand.vmem [shape: f32[2,8,32], index: 17, kind: output, shape index: {}]
  %s18 = sld [smem:[#allocation0]]
  $region101: #{_lambda_.11} parent=0
    _
  %s20 = ssub.s32 1, %s18
  %s21 = scalar_select 0, %s20, %s18
  loop: start=0, step=1, limit=4
  $region2: #{_lambda_.11} parent=0 // loop_pre_header
    _
  $region3: #{_lambda_.11} parent=0 // loop_header
    %s23 = sphi 0, %s27
    %p24 = scmp.ge.s32.totalorder %s23, 4
    %s33 = sphi 0, %s35
    %s36 = sphi 0, %s33
    %s37 = sphi 0, %s36
    %s53 = sphi 0, %s37
    %s59 = sphi 0, %s61
    %s62 = sphi 0, %s59
    %s63 = sphi 0, %s62
    %s79 = sphi 0, %s63
    %s85 = sphi 0, %s87
    %s88 = sphi 0, %s85
    %s89 = sphi 0, %s88
    %s105 = sphi 0, %s89
    %s109 = sphi 0, %s109
    %s111 = sphi 0, %s109
    %s112 = sphi 0, %s111
    %s126 = sphi 0, %s112
    %s130 = sphi 0, %s130
    %s132 = sphi 0, %s130
    %s133 = sphi 0, %s132
    %s147 = sphi 0, %s133
    %s151 = sphi 0, %s151
    %s153 = sphi 0, %s151
    %s154 = sphi 0, %s153
    %s168 = sphi 0, %s154
    %s172 = sphi 0, %s172
    %s174 = sphi 0, %s172
    %s175 = sphi 0, %s174
    %s189 = sphi 0, %s175
    %s193 = sphi 0, %s193
    %s195 = sphi 0, %s193
    %s196 = sphi 0, %s195
    %s210 = sphi 0, %s196
    %s214 = sphi 0, %s214
    %s216 = sphi 0, %s214
    %s217 = sphi 0, %s216
    %s231 = sphi 0, %s217
    %s235 = sphi 0, %s235
    %s237 = sphi 0, %s235
    %s238 = sphi 0, %s237
    %s252 = sphi 0, %s238
    %s256 = sphi 0, %s256
    %s258 = sphi 0, %s256
    %s259 = sphi 0, %s258
    %s273 = sphi 0, %s259
    %s277 = sphi 0, %s277
    %s279 = sphi 0, %s277
    %s280 = sphi 0, %s279
    %s294 = sphi 0, %s280
    %s298 = sphi 0, %s298
    %s300 = sphi 0, %s298
    %s301 = sphi 0, %s300
    %s315 = sphi 0, %s301
    %s319 = sphi 0, %s319
    %s321 = sphi 0, %s319
    %s322 = sphi 0, %s321
    %s336 = sphi 0, %s322
    %s340 = sphi 0, %s340
    %s342 = sphi 0, %s340
    %s343 = sphi 0, %s342
    %s357 = sphi 0, %s343
    %s361 = sphi 0, %s361
    %s363 = sphi 0, %s361
    %s364 = sphi 0, %s363
    %s378 = sphi 0, %s364
    %s382 = sphi 0, %s382
    %s384 = sphi 0, %s382
    %s385 = sphi 0, %s384
    %s399 = sphi 0, %s385
    %s405 = sphi 0, %s407
    %s408 = sphi 0, %s405
    %s409 = sphi 0, %s408
    %s425 = sphi 0, %s409
  $region4: #{_lambda_.11} parent=0 // loop_header_branch
    %26 = sbr.rel (%p24) target = $region8
  $region5: #{_lambda_.11} parent=0 // loop_body
    %s28 = ssub.s32 %s23, 1
    %s29 = ssub.s32 %s23, 2
    %s30 = sadd.s32 %s23, 1
    %s31 = ssub.s32 %s23, %s30
    %p32 = scmp.eq.s32.totalorder %s31, 0
    %s34 = sadd.s32 %s33, 1
    %s35 = scalar_select %p32, %s33, %s34
    %p38 = pneg %p32
    %p39 = scmp.eq.s32.totalorder %s23, 1
    %p40 = por %p38, %p39
    %p41 = scmp.ne.s32.totalorder %s33, %s36
    %p42 = scmp.eq.s32.totalorder %s23, 0
    %p43 = por %p41, %p42
    %p44 = scmp.ne.s32.totalorder %s33, %s36
    %p45 = scmp.eq.s32.totalorder %s28, 1
    %p46 = por %p44, %p45
    %p47 = scmp.ne.s32.totalorder %s36, %s37
    %p48 = scmp.eq.s32.totalorder %s28, 0
    %p49 = por %p47, %p48
    %p50 = scmp.ne.s32.totalorder %s36, %s37
    %p51 = scmp.eq.s32.totalorder %s29, 1
    %p52 = por %p50, %p51
    %p54 = scmp.ne.s32.totalorder %s37, %s53
    %p55 = scmp.eq.s32.totalorder %s29, 0
    %p56 = por %p54, %p55
    %s57 = ssub.s32 %s23, %s30
    %p58 = scmp.eq.s32.totalorder %s57, 0
    %s60 = sadd.s32 %s59, 1
    %s61 = scalar_select %p58, %s59, %s60
    %p64 = pneg %p58
    %p65 = scmp.eq.s32.totalorder %s23, 1
    %p66 = por %p64, %p65
    %p67 = scmp.ne.s32.totalorder %s59, %s62
    %p68 = scmp.eq.s32.totalorder %s23, 0
    %p69 = por %p67, %p68
    %p70 = scmp.ne.s32.totalorder %s59, %s62
    %p71 = scmp.eq.s32.totalorder %s28, 1
    %p72 = por %p70, %p71
    %p73 = scmp.ne.s32.totalorder %s62, %s63
    %p74 = scmp.eq.s32.totalorder %s28, 0
    %p75 = por %p73, %p74
    %p76 = scmp.ne.s32.totalorder %s62, %s63
    %p77 = scmp.eq.s32.totalorder %s29, 1
    %p78 = por %p76, %p77
    %p80 = scmp.ne.s32.totalorder %s63, %s79
    %p81 = scmp.eq.s32.totalorder %s29, 0
    %p82 = por %p80, %p81
    %s83 = ssub.s32 %s23, %s30
    %p84 = scmp.eq.s32.totalorder %s83, 0
    %s86 = sadd.s32 %s85, 1
    %s87 = scalar_select %p84, %s85, %s86
    %p90 = pneg %p84
    %p91 = scmp.eq.s32.totalorder %s23, 1
    %p92 = por %p90, %p91
    %p93 = scmp.ne.s32.totalorder %s85, %s88
    %p94 = scmp.eq.s32.totalorder %s23, 0
    %p95 = por %p93, %p94
    %p96 = scmp.ne.s32.totalorder %s85, %s88
    %p97 = scmp.eq.s32.totalorder %s28, 1
    %p98 = por %p96, %p97
    %p99 = scmp.ne.s32.totalorder %s88, %s89
    %p100 = scmp.eq.s32.totalorder %s28, 0
    %p101 = por %p99, %p100
    %p102 = scmp.ne.s32.totalorder %s88, %s89
    %p103 = scmp.eq.s32.totalorder %s29, 1
    %p104 = por %p102, %p103
    %p106 = scmp.ne.s32.totalorder %s89, %s105
    %p107 = scmp.eq.s32.totalorder %s29, 0
    %p108 = por %p106, %p107
    %s110 = sadd.s32 %s109, 1
    %p113 = scmp.eq.s32.totalorder %s23, 1
    %p114 = scmp.ne.s32.totalorder %s109, %s111
    %p115 = scmp.eq.s32.totalorder %s23, 0
    %p116 = por %p114, %p115
    %p117 = scmp.ne.s32.totalorder %s109, %s111
    %p118 = scmp.eq.s32.totalorder %s28, 1
    %p119 = por %p117, %p118
    %p120 = scmp.ne.s32.totalorder %s111, %s112
    %p121 = scmp.eq.s32.totalorder %s28, 0
    %p122 = por %p120, %p121
    %p123 = scmp.ne.s32.totalorder %s111, %s112
    %p124 = scmp.eq.s32.totalorder %s29, 1
    %p125 = por %p123, %p124
    %p127 = scmp.ne.s32.totalorder %s112, %s126
    %p128 = scmp.eq.s32.totalorder %s29, 0
    %p129 = por %p127, %p128
    %s131 = sadd.s32 %s130, 1
    %p134 = scmp.eq.s32.totalorder %s23, 1
    %p135 = scmp.ne.s32.totalorder %s130, %s132
    %p136 = scmp.eq.s32.totalorder %s23, 0
    %p137 = por %p135, %p136
    %p138 = scmp.ne.s32.totalorder %s130, %s132
    %p139 = scmp.eq.s32.totalorder %s28, 1
    %p140 = por %p138, %p139
    %p141 = scmp.ne.s32.totalorder %s132, %s133
    %p142 = scmp.eq.s32.totalorder %s28, 0
    %p143 = por %p141, %p142
    %p144 = scmp.ne.s32.totalorder %s132, %s133
    %p145 = scmp.eq.s32.totalorder %s29, 1
    %p146 = por %p144, %p145
    %p148 = scmp.ne.s32.totalorder %s133, %s147
    %p149 = scmp.eq.s32.totalorder %s29, 0
    %p150 = por %p148, %p149
    %s152 = sadd.s32 %s151, 1
    %p155 = scmp.eq.s32.totalorder %s23, 1
    %p156 = scmp.ne.s32.totalorder %s151, %s153
    %p157 = scmp.eq.s32.totalorder %s23, 0
    %p158 = por %p156, %p157
    %p159 = scmp.ne.s32.totalorder %s151, %s153
    %p160 = scmp.eq.s32.totalorder %s28, 1
    %p161 = por %p159, %p160
    %p162 = scmp.ne.s32.totalorder %s153, %s154
    %p163 = scmp.eq.s32.totalorder %s28, 0
    %p164 = por %p162, %p163
    %p165 = scmp.ne.s32.totalorder %s153, %s154
    %p166 = scmp.eq.s32.totalorder %s29, 1
    %p167 = por %p165, %p166
    %p169 = scmp.ne.s32.totalorder %s154, %s168
    %p170 = scmp.eq.s32.totalorder %s29, 0
    %p171 = por %p169, %p170
    %s173 = sadd.s32 %s172, 1
    %p176 = scmp.eq.s32.totalorder %s23, 1
    %p177 = scmp.ne.s32.totalorder %s172, %s174
    %p178 = scmp.eq.s32.totalorder %s23, 0
    %p179 = por %p177, %p178
    %p180 = scmp.ne.s32.totalorder %s172, %s174
    %p181 = scmp.eq.s32.totalorder %s28, 1
    %p182 = por %p180, %p181
    %p183 = scmp.ne.s32.totalorder %s174, %s175
    %p184 = scmp.eq.s32.totalorder %s28, 0
    %p185 = por %p183, %p184
    %p186 = scmp.ne.s32.totalorder %s174, %s175
    %p187 = scmp.eq.s32.totalorder %s29, 1
    %p188 = por %p186, %p187
    %p190 = scmp.ne.s32.totalorder %s175, %s189
    %p191 = scmp.eq.s32.totalorder %s29, 0
    %p192 = por %p190, %p191
    %s194 = sadd.s32 %s193, 1
    %p197 = scmp.eq.s32.totalorder %s23, 1
    %p198 = scmp.ne.s32.totalorder %s193, %s195
    %p199 = scmp.eq.s32.totalorder %s23, 0
    %p200 = por %p198, %p199
    %p201 = scmp.ne.s32.totalorder %s193, %s195
    %p202 = scmp.eq.s32.totalorder %s28, 1
    %p203 = por %p201, %p202
    %p204 = scmp.ne.s32.totalorder %s195, %s196
    %p205 = scmp.eq.s32.totalorder %s28, 0
    %p206 = por %p204, %p205
    %p207 = scmp.ne.s32.totalorder %s195, %s196
    %p208 = scmp.eq.s32.totalorder %s29, 1
    %p209 = por %p207, %p208
    %p211 = scmp.ne.s32.totalorder %s196, %s210
    %p212 = scmp.eq.s32.totalorder %s29, 0
    %p213 = por %p211, %p212
    %s215 = sadd.s32 %s214, 1
    %p218 = scmp.eq.s32.totalorder %s23, 1
    %p219 = scmp.ne.s32.totalorder %s214, %s216
    %p220 = scmp.eq.s32.totalorder %s23, 0
    %p221 = por %p219, %p220
    %p222 = scmp.ne.s32.totalorder %s214, %s216
    %p223 = scmp.eq.s32.totalorder %s28, 1
    %p224 = por %p222, %p223
    %p225 = scmp.ne.s32.totalorder %s216, %s217
    %p226 = scmp.eq.s32.totalorder %s28, 0
    %p227 = por %p225, %p226
    %p228 = scmp.ne.s32.totalorder %s216, %s217
    %p229 = scmp.eq.s32.totalorder %s29, 1
    %p230 = por %p228, %p229
    %p232 = scmp.ne.s32.totalorder %s217, %s231
    %p233 = scmp.eq.s32.totalorder %s29, 0
    %p234 = por %p232, %p233
    %s236 = sadd.s32 %s235, 1
    %p239 = scmp.eq.s32.totalorder %s23, 1
    %p240 = scmp.ne.s32.totalorder %s235, %s237
    %p241 = scmp.eq.s32.totalorder %s23, 0
    %p242 = por %p240, %p241
    %p243 = scmp.ne.s32.totalorder %s235, %s237
    %p244 = scmp.eq.s32.totalorder %s28, 1
    %p245 = por %p243, %p244
    %p246 = scmp.ne.s32.totalorder %s237, %s238
    %p247 = scmp.eq.s32.totalorder %s28, 0
    %p248 = por %p246, %p247
    %p249 = scmp.ne.s32.totalorder %s237, %s238
    %p250 = scmp.eq.s32.totalorder %s29, 1
    %p251 = por %p249, %p250
    %p253 = scmp.ne.s32.totalorder %s238, %s252
    %p254 = scmp.eq.s32.totalorder %s29, 0
    %p255 = por %p253, %p254
    %s257 = sadd.s32 %s256, 1
    %p260 = scmp.eq.s32.totalorder %s23, 1
    %p261 = scmp.ne.s32.totalorder %s256, %s258
    %p262 = scmp.eq.s32.totalorder %s23, 0
    %p263 = por %p261, %p262
    %p264 = scmp.ne.s32.totalorder %s256, %s258
    %p265 = scmp.eq.s32.totalorder %s28, 1
    %p266 = por %p264, %p265
    %p267 = scmp.ne.s32.totalorder %s258, %s259
    %p268 = scmp.eq.s32.totalorder %s28, 0
    %p269 = por %p267, %p268
    %p270 = scmp.ne.s32.totalorder %s258, %s259
    %p271 = scmp.eq.s32.totalorder %s29, 1
    %p272 = por %p270, %p271
    %p274 = scmp.ne.s32.totalorder %s259, %s273
    %p275 = scmp.eq.s32.totalorder %s29, 0
    %p276 = por %p274, %p275
    %s278 = sadd.s32 %s277, 1
    %p281 = scmp.eq.s32.totalorder %s23, 1
    %p282 = scmp.ne.s32.totalorder %s277, %s279
    %p283 = scmp.eq.s32.totalorder %s23, 0
    %p284 = por %p282, %p283
    %p285 = scmp.ne.s32.totalorder %s277, %s279
    %p286 = scmp.eq.s32.totalorder %s28, 1
    %p287 = por %p285, %p286
    %p288 = scmp.ne.s32.totalorder %s279, %s280
    %p289 = scmp.eq.s32.totalorder %s28, 0
    %p290 = por %p288, %p289
    %p291 = scmp.ne.s32.totalorder %s279, %s280
    %p292 = scmp.eq.s32.totalorder %s29, 1
    %p293 = por %p291, %p292
    %p295 = scmp.ne.s32.totalorder %s280, %s294
    %p296 = scmp.eq.s32.totalorder %s29, 0
    %p297 = por %p295, %p296
    %s299 = sadd.s32 %s298, 1
    %p302 = scmp.eq.s32.totalorder %s23, 1
    %p303 = scmp.ne.s32.totalorder %s298, %s300
    %p304 = scmp.eq.s32.totalorder %s23, 0
    %p305 = por %p303, %p304
    %p306 = scmp.ne.s32.totalorder %s298, %s300
    %p307 = scmp.eq.s32.totalorder %s28, 1
    %p308 = por %p306, %p307
    %p309 = scmp.ne.s32.totalorder %s300, %s301
    %p310 = scmp.eq.s32.totalorder %s28, 0
    %p311 = por %p309, %p310
    %p312 = scmp.ne.s32.totalorder %s300, %s301
    %p313 = scmp.eq.s32.totalorder %s29, 1
    %p314 = por %p312, %p313
    %p316 = scmp.ne.s32.totalorder %s301, %s315
    %p317 = scmp.eq.s32.totalorder %s29, 0
    %p318 = por %p316, %p317
    %s320 = sadd.s32 %s319, 1
    %p323 = scmp.eq.s32.totalorder %s23, 1
    %p324 = scmp.ne.s32.totalorder %s319, %s321
    %p325 = scmp.eq.s32.totalorder %s23, 0
    %p326 = por %p324, %p325
    %p327 = scmp.ne.s32.totalorder %s319, %s321
    %p328 = scmp.eq.s32.totalorder %s28, 1
    %p329 = por %p327, %p328
    %p330 = scmp.ne.s32.totalorder %s321, %s322
    %p331 = scmp.eq.s32.totalorder %s28, 0
    %p332 = por %p330, %p331
    %p333 = scmp.ne.s32.totalorder %s321, %s322
    %p334 = scmp.eq.s32.totalorder %s29, 1
    %p335 = por %p333, %p334
    %p337 = scmp.ne.s32.totalorder %s322, %s336
    %p338 = scmp.eq.s32.totalorder %s29, 0
    %p339 = por %p337, %p338
    %s341 = sadd.s32 %s340, 1
    %p344 = scmp.eq.s32.totalorder %s23, 1
    %p345 = scmp.ne.s32.totalorder %s340, %s342
    %p346 = scmp.eq.s32.totalorder %s23, 0
    %p347 = por %p345, %p346
    %p348 = scmp.ne.s32.totalorder %s340, %s342
    %p349 = scmp.eq.s32.totalorder %s28, 1
    %p350 = por %p348, %p349
    %p351 = scmp.ne.s32.totalorder %s342, %s343
    %p352 = scmp.eq.s32.totalorder %s28, 0
    %p353 = por %p351, %p352
    %p354 = scmp.ne.s32.totalorder %s342, %s343
    %p355 = scmp.eq.s32.totalorder %s29, 1
    %p356 = por %p354, %p355
    %p358 = scmp.ne.s32.totalorder %s343, %s357
    %p359 = scmp.eq.s32.totalorder %s29, 0
    %p360 = por %p358, %p359
    %s362 = sadd.s32 %s361, 1
    %p365 = scmp.eq.s32.totalorder %s23, 1
    %p366 = scmp.ne.s32.totalorder %s361, %s363
    %p367 = scmp.eq.s32.totalorder %s23, 0
    %p368 = por %p366, %p367
    %p369 = scmp.ne.s32.totalorder %s361, %s363
    %p370 = scmp.eq.s32.totalorder %s28, 1
    %p371 = por %p369, %p370
    %p372 = scmp.ne.s32.totalorder %s363, %s364
    %p373 = scmp.eq.s32.totalorder %s28, 0
    %p374 = por %p372, %p373
    %p375 = scmp.ne.s32.totalorder %s363, %s364
    %p376 = scmp.eq.s32.totalorder %s29, 1
    %p377 = por %p375, %p376
    %p379 = scmp.ne.s32.totalorder %s364, %s378
    %p380 = scmp.eq.s32.totalorder %s29, 0
    %p381 = por %p379, %p380
    %s383 = sadd.s32 %s382, 1
    %p386 = scmp.eq.s32.totalorder %s23, 1
    %p387 = scmp.ne.s32.totalorder %s382, %s384
    %p388 = scmp.eq.s32.totalorder %s23, 0
    %p389 = por %p387, %p388
    %p390 = scmp.ne.s32.totalorder %s382, %s384
    %p391 = scmp.eq.s32.totalorder %s28, 1
    %p392 = por %p390, %p391
    %p393 = scmp.ne.s32.totalorder %s384, %s385
    %p394 = scmp.eq.s32.totalorder %s28, 0
    %p395 = por %p393, %p394
    %p396 = scmp.ne.s32.totalorder %s384, %s385
    %p397 = scmp.eq.s32.totalorder %s29, 1
    %p398 = por %p396, %p397
    %p400 = scmp.ne.s32.totalorder %s385, %s399
    %p401 = scmp.eq.s32.totalorder %s29, 0
    %p402 = por %p400, %p401
    %s403 = ssub.s32 %s23, %s30
    %p404 = scmp.eq.s32.totalorder %s403, 0
    %s406 = sadd.s32 %s405, 1
    %s407 = scalar_select %p404, %s405, %s406
    %p410 = pneg %p404
    %p411 = scmp.eq.s32.totalorder %s23, 1
    %p412 = por %p410, %p411
    %p413 = scmp.ne.s32.totalorder %s405, %s408
    %p414 = scmp.eq.s32.totalorder %s23, 0
    %p415 = por %p413, %p414
    %p416 = scmp.ne.s32.totalorder %s405, %s408
    %p417 = scmp.eq.s32.totalorder %s28, 1
    %p418 = por %p416, %p417
    %p419 = scmp.ne.s32.totalorder %s408, %s409
    %p420 = scmp.eq.s32.totalorder %s28, 0
    %p421 = por %p419, %p420
    %p422 = scmp.ne.s32.totalorder %s408, %s409
    %p423 = scmp.eq.s32.totalorder %s29, 1
    %p424 = por %p422, %p423
    %p426 = scmp.ne.s32.totalorder %s409, %s425
    %p427 = scmp.eq.s32.totalorder %s29, 0
    %p428 = por %p426, %p427
    %p429 = scmp.le.s32.totalorder 1, %s23
    %p430 = scmp.lt.s32.totalorder %s23, 3
    %p431 = pnand %p429, %p430
    %p432 = pneg %p431
    // Predicated region
    $region9: #{_lambda_.11} parent=5 // pred_check
      _
    $region10: #{_lambda_.11} parent=5 // pred_check_branch
      %434 = sbr.rel (%p431) target = $region12
    $region11: #{_lambda_.11} parent=5 // pred_region
      %s435 = ssub.s32 %s23, 1
      // Predicated region
      $region13: #{_lambda_.11} parent=11 // pred_check
        %p436 = pneg %p122
      $region14: #{_lambda_.11} parent=11 // pred_check_branch
        %438 = sbr.rel (%p436) target = $region16
      $region15: #{_lambda_.11} parent=11 // pred_region
        _
      $region16: #{_lambda_.11} parent=11 // pred_fallthru
        _
      // Predicated region
      $region17: #{_lambda_.11} parent=11 // pred_check
        %p439 = pneg %p143
      $region18: #{_lambda_.11} parent=11 // pred_check_branch
        %441 = sbr.rel (%p439) target = $region20
      $region19: #{_lambda_.11} parent=11 // pred_region
        _
      $region20: #{_lambda_.11} parent=11 // pred_fallthru
        _
      // Predicated region
      $region21: #{_lambda_.11} parent=11 // pred_check
        %p442 = pneg %p164
      $region22: #{_lambda_.11} parent=11 // pred_check_branch
        %444 = sbr.rel (%p442) target = $region24
      $region23: #{_lambda_.11} parent=11 // pred_region
        _
      $region24: #{_lambda_.11} parent=11 // pred_fallthru
        _
      // Predicated region
      $region25: #{_lambda_.11} parent=11 // pred_check
        %p445 = pneg %p185
      $region26: #{_lambda_.11} parent=11 // pred_check_branch
        %447 = sbr.rel (%p445) target = $region28
      $region27: #{_lambda_.11} parent=11 // pred_region
        _
      $region28: #{_lambda_.11} parent=11 // pred_fallthru
        _
      // Predicated region
      $region29: #{_lambda_.11} parent=11 // pred_check
        %p448 = pneg %p206
      $region30: #{_lambda_.11} parent=11 // pred_check_branch
        %450 = sbr.rel (%p448) target = $region32
      $region31: #{_lambda_.11} parent=11 // pred_region
        _
      $region32: #{_lambda_.11} parent=11 // pred_fallthru
        _
      // Predicated region
      $region33: #{_lambda_.11} parent=11 // pred_check
        %p451 = pneg %p227
      $region34: #{_lambda_.11} parent=11 // pred_check_branch
        %453 = sbr.rel (%p451) target = $region36
      $region35: #{_lambda_.11} parent=11 // pred_region
        _
      $region36: #{_lambda_.11} parent=11 // pred_fallthru
        _
      // Predicated region
      $region37: #{_lambda_.11} parent=11 // pred_check
        %p454 = pneg %p248
      $region38: #{_lambda_.11} parent=11 // pred_check_branch
        %456 = sbr.rel (%p454) target = $region40
      $region39: #{_lambda_.11} parent=11 // pred_region
        _
      $region40: #{_lambda_.11} parent=11 // pred_fallthru
        _
      // Predicated region
      $region41: #{_lambda_.11} parent=11 // pred_check
        %p457 = pneg %p269
      $region42: #{_lambda_.11} parent=11 // pred_check_branch
        %459 = sbr.rel (%p457) target = $region44
      $region43: #{_lambda_.11} parent=11 // pred_region
        _
      $region44: #{_lambda_.11} parent=11 // pred_fallthru
        _
      // Predicated region
      $region45: #{_lambda_.11} parent=11 // pred_check
        %p460 = pneg %p290
      $region46: #{_lambda_.11} parent=11 // pred_check_branch
        %462 = sbr.rel (%p460) target = $region48
      $region47: #{_lambda_.11} parent=11 // pred_region
        _
      $region48: #{_lambda_.11} parent=11 // pred_fallthru
        _
      // Predicated region
      $region49: #{_lambda_.11} parent=11 // pred_check
        %p463 = pneg %p311
      $region50: #{_lambda_.11} parent=11 // pred_check_branch
        %465 = sbr.rel (%p463) target = $region52
      $region51: #{_lambda_.11} parent=11 // pred_region
        _
      $region52: #{_lambda_.11} parent=11 // pred_fallthru
        _
      // Predicated region
      $region53: #{_lambda_.11} parent=11 // pred_check
        %p466 = pneg %p332
      $region54: #{_lambda_.11} parent=11 // pred_check_branch
        %468 = sbr.rel (%p466) target = $region56
      $region55: #{_lambda_.11} parent=11 // pred_region
        _
      $region56: #{_lambda_.11} parent=11 // pred_fallthru
        _
      // Predicated region
      $region57: #{_lambda_.11} parent=11 // pred_check
        %p469 = pneg %p353
      $region58: #{_lambda_.11} parent=11 // pred_check_branch
        %471 = sbr.rel (%p469) target = $region60
      $region59: #{_lambda_.11} parent=11 // pred_region
        _
      $region60: #{_lambda_.11} parent=11 // pred_fallthru
        _
      // Predicated region
      $region61: #{_lambda_.11} parent=11 // pred_check
        %p472 = pneg %p374
      $region62: #{_lambda_.11} parent=11 // pred_check_branch
        %474 = sbr.rel (%p472) target = $region64
      $region63: #{_lambda_.11} parent=11 // pred_region
        _
      $region64: #{_lambda_.11} parent=11 // pred_fallthru
        _
      // Predicated region
      $region65: #{_lambda_.11} parent=11 // pred_check
        %p475 = pneg %p395
      $region66: #{_lambda_.11} parent=11 // pred_check_branch
        %477 = sbr.rel (%p475) target = $region68
      $region67: #{_lambda_.11} parent=11 // pred_region
        _
      $region68: #{_lambda_.11} parent=11 // pred_fallthru
        _
    $region12: #{_lambda_.11} parent=5 // pred_fallthru
      _
    %p478 = scmp.lt.s32.totalorder %s23, 2
    // Predicated region
    $region69: #{_lambda_.11} parent=5 // pred_check
      %p479 = pneg %p478
    $region70: #{_lambda_.11} parent=5 // pred_check_branch
      %481 = sbr.rel (%p479) target = $region72
    $region71: #{_lambda_.11} parent=5 // pred_region
      // Predicated region
      $region73: #{_lambda_.11} parent=71 // pred_check
        %p482 = pneg %p43
      $region74: #{_lambda_.11} parent=71 // pred_check_branch
        %484 = sbr.rel (%p482) target = $region76
      $region75: #{_lambda_.11} parent=71 // pred_region
        %p485 = scmp.lt.s32.totalorder %s23, 1
        %s486 = scalar_select %p485, %s23, 1
        %s487 = smul.addr %s486, 8
        %s488 = scalar_lea.vmem %s0, %s487
      $region76: #{_lambda_.11} parent=71 // pred_fallthru
        _
      // Predicated region
      $region77: #{_lambda_.11} parent=71 // pred_check
        %p489 = pneg %p69
      $region78: #{_lambda_.11} parent=71 // pred_check_branch
        %491 = sbr.rel (%p489) target = $region80
      $region79: #{_lambda_.11} parent=71 // pred_region
        %p492 = scmp.lt.s32.totalorder %s23, 1
        %s493 = scalar_select %p492, %s23, 1
        %s494 = smul.addr %s493, 2
        %s495 = smul.addr %s494, 8
        %s496 = scalar_lea.vmem %s1, %s495
      $region80: #{_lambda_.11} parent=71 // pred_fallthru
        _
      // Predicated region
      $region81: #{_lambda_.11} parent=71 // pred_check
        %p497 = pneg %p95
      $region82: #{_lambda_.11} parent=71 // pred_check_branch
        %499 = sbr.rel (%p497) target = $region84
      $region83: #{_lambda_.11} parent=71 // pred_region
        %p500 = scmp.lt.s32.totalorder %s23, 1
        %s501 = scalar_select %p500, %s23, 1
        %s502 = scalar_lea.vmem %s2, %s501
      $region84: #{_lambda_.11} parent=71 // pred_fallthru
        _
    $region72: #{_lambda_.11} parent=5 // pred_fallthru
      _
    %p503 = scmp.le.s32.totalorder 1, %s23
    %p504 = scmp.lt.s32.totalorder %s23, 3
    %p505 = pnand %p503, %p504
    %p506 = pneg %p505
    // Predicated region
    $region85: #{_lambda_.11} parent=5 // pred_check
      _
    $region86: #{_lambda_.11} parent=5 // pred_check_branch
      %508 = sbr.rel (%p505) target = $region88
    $region87: #{_lambda_.11} parent=5 // pred_region
      %s509 = ssub.s32 %s23, 1
      %p510 = scmp.lt.s32.totalorder %s28, 1
      %s511 = scalar_select %p510, %s28, 1
      %s512 = smul.addr %s511, 8
      %s513 = scalar_lea.vmem %s0, %s512
      %p514 = pneg %p49
      %p515 = pneg %p46
      %p516 = scmp.lt.s32.totalorder %s28, 1
      %s517 = scalar_select %p516, %s28, 1
      %s518 = smul.addr %s517, 2
      %s519 = smul.addr %s518, 8
      %s520 = scalar_lea.vmem %s1, %s519
      %p521 = pneg %p75
      %p522 = pneg %p72
      %p523 = scmp.lt.s32.totalorder %s28, 1
      %s524 = scalar_select %p523, %s28, 1
      %s525 = scalar_lea.vmem %s2, %s524
      %p526 = pneg %p101
      %p527 = pneg %p98
      %p528 = pneg %p122
      %p529 = pneg %p119
      %p530 = pneg %p143
      %p531 = pneg %p140
      %p532 = pneg %p164
      %p533 = pneg %p161
      %p534 = pneg %p185
      %p535 = pneg %p182
      %p536 = pneg %p206
      %p537 = pneg %p203
      %p538 = pneg %p227
      %p539 = pneg %p224
      %p540 = pneg %p248
      %p541 = pneg %p245
      %p542 = pneg %p269
      %p543 = pneg %p266
      %p544 = pneg %p290
      %p545 = pneg %p287
      %p546 = pneg %p311
      %p547 = pneg %p308
      %p548 = pneg %p332
      %p549 = pneg %p329
      %p550 = pneg %p353
      %p551 = pneg %p350
      %p552 = pneg %p374
      %p553 = pneg %p371
      %p554 = pneg %p395
      %p555 = pneg %p392
      %p556 = pneg %p421
      %p557 = pneg %p418
      %p558 = scmp.lt.s32.totalorder %s28, 1
      %s559 = scalar_select %p558, %s28, 1
      %s560 = smul.addr %s559, 8
      %s561 = scalar_lea.vmem %s17, %s560
      %p562 = scmp.lt.s32.totalorder %s28, 1
      %s563 = scalar_select %p562, %s28, 1
      %s564 = smul.addr %s563, 8
      %s565 = scalar_lea.vmem %s0, %s564
      %p566 = scmp.lt.s32.totalorder %s28, 1
      %s567 = scalar_select %p566, %s28, 1
      %s568 = smul.addr %s567, 2
      %s569 = smul.addr %s568, 8
      %s570 = scalar_lea.vmem %s1, %s569
      %p571 = scmp.lt.s32.totalorder %s28, 1
      %s572 = scalar_select %p571, %s28, 1
      %s573 = scalar_lea.vmem %s2, %s572
      %p574 = scmp.lt.s32.totalorder %s28, 1
      %s575 = scalar_select %p574, %s28, 1
      %s576 = smul.addr %s575, 8
      %s577 = scalar_lea.vmem %s17, %s576
      %v579 = vld [vmem:[%s565] sm:$0xff]
      %v580 = vld [vmem:[%s3] sm:$0x1]
      %v581 = vld [vmem:[%s4] sm:$0x1]
      %vm582 = vcmask 261120
      %v583 = vsel %vm582, %v579, 0.0
      %584 = vadd.xlane.f32.xlu0 %v583
      %v585 = vpop.xlane.xlu0 %584
      %v586 = vrcp.pop 32.0
      %v587 = vmul.f32 %v585, %v586
      %v588 = vsub.f32 %v579, %v587
      %v589 = vmul.f32 %v588, %v588
      %v590 = vsel %vm582, %v589, 0.0
      %591 = vadd.xlane.f32.xlu0 %v590
      %v592 = vpop.xlane.xlu0 %591
      %v593 = vmul.f32 %v592, %v586
      %v594 = vadd.f32 %v593, 1e-05
      %v595 = vrsqrt.pop %v594
      %v596 = vmul.f32 %v588, %v595
      %v598 = vlaneseq
      %v599 = vshrl.u32 %v598, 7
      %v600 = vsub.s32 0, %v599
      %v601 = vrot.slane %v580, %v600
      %v603 = vmul.f32 %v596, %v601
      %v605 = vlaneseq
      %v606 = vshrl.u32 %v605, 7
      %v607 = vsub.s32 0, %v606
      %v608 = vrot.slane %v581, %v607
      %v610 = vadd.f32 %v603, %v608
      %v611 = vpack.c.bf16 %v610, %v610
      %v612 = vld [vmem:[%s570] sm:$0xff]
      %v613 = vld [vmem:[%s570 + $0x8] sm:$0xf]
      %v614 = vpack.c.bf16 %v613, %v612
      %v615 = vld [vmem:[%s573] sm:$0x1]
      %v616 = vld [vmem:[%s5] sm:$0xf]
      %v617 = vld [vmem:[%s5 + $0x4] sm:$0xf]
      %v618 = vld [vmem:[%s5 + $0x8] sm:$0xf]
      %v619 = vld [vmem:[%s5 + $0xc] sm:$0xf]
      %v620 = vld [vmem:[%s6] sm:$0x1]
      %v621 = vld [vmem:[%s7] sm:$0xf]
      %v622 = vld [vmem:[%s7 + $0x4] sm:$0xf]
      %v623 = vld [vmem:[%s7 + $0x8] sm:$0xf]
      %v624 = vld [vmem:[%s7 + $0xc] sm:$0xf]
      %v625 = vld [vmem:[%s8] sm:$0x1]
      %v626 = vld [vmem:[%s9] sm:$0xf]
      %v627 = vld [vmem:[%s9 + $0x4] sm:$0xf]
      %v628 = vld [vmem:[%s9 + $0x8] sm:$0xf]
      %v629 = vld [vmem:[%s9 + $0xc] sm:$0xf]
      %v630 = vld [vmem:[%s10] sm:$0x1]
      %v632 = vlaneseq
      %v633 = vshrl.u32 %v632, 7
      %v634 = vsub.s32 0, %v633
      %v635 = vrot.slane %v620, %v634
      %v641 = vunpack.c.l.b16 %v616
      %v642 = vunpack.c.l.b16 %v617
      %v643 = vunpack.c.l.b16 %v618
      %v644 = vunpack.c.l.b16 %v619
      %v645 = vpack.c.b16 %v642, %v641
      %v646 = vpack.c.b16 %v644, %v643
      %v650 = vsel %vm582, %v611, 0
      %652 = vmatprep.subr.bf16.mxu0 0
      %653 = vmatpush1.bf16.msra.mxu0 %v645
      %654 = vmatprep.subr.bf16.mxu0 0
      %655 = vmatpush1.bf16.msra.mxu0 %v646
      %656 = vmatprep.subr.bf16.mxu0 0
      %657 = vmatpush1.bf16.msra.mxu0 0
      %658 = vmatprep.subr.bf16.mxu0 0
      %659 = vmatpush1.bf16.msra.mxu0 0
      %660 = vmatprep.subr.bf16.mxu0 0
      %661 = vmatpush1.bf16.msra.mxu0 0
      %662 = vmatprep.subr.bf16.mxu0 0
      %663 = vmatpush1.bf16.msra.mxu0 0
      %664 = vmatprep.subr.bf16.mxu0 0
      %665 = vmatpush1.bf16.msra.mxu0 0
      %666 = vmatprep.subr.bf16.mxu0 0
      %667 = vmatpush1.bf16.msra.mxu0 0
      %668 = vmatprep.subr.bf16.mxu0 0
      %669 = vmatpush1.bf16.msra.mxu0 0
      %670 = vmatprep.subr.bf16.mxu0 0
      %671 = vmatpush1.bf16.msra.mxu0 0
      %672 = vmatprep.subr.bf16.mxu0 0
      %673 = vmatpush1.bf16.msra.mxu0 0
      %674 = vmatprep.subr.bf16.mxu0 0
      %675 = vmatpush1.bf16.msra.mxu0 0
      %676 = vmatprep.subr.bf16.mxu0 0
      %677 = vmatpush1.bf16.msra.mxu0 0
      %678 = vmatprep.subr.bf16.mxu0 0
      %679 = vmatpush1.bf16.msra.mxu0 0
      %680 = vmatprep.subr.bf16.mxu0 0
      %681 = vmatpush1.bf16.msra.mxu0 0
      %682 = vmatprep.subr.bf16.mxu0 0
      %683 = vmatpush1.bf16.msra.mxu0 0
      %684 = vmatprep.mubr.bf16.mxu0 0
      %685 = vmatmul.mubr.bf16.gmra.mrb[0].mxu0 %v650
      %v686 = vpop.f32.mrb[0].mxu0
      %v687 = vadd.f32 %v635, %v686
      %v688 = vpop.f32.mrb[0].mxu0
      %v689 = vpop.f32.mrb[0].mxu0
      %v690 = vpop.f32.mrb[0].mxu0
      %691 = vdwg.mxu0
      %v693 = vlaneseq
      %v694 = vshrl.u32 %v693, 7
      %v695 = vsub.s32 0, %v694
      %v696 = vrot.slane %v625, %v695
      %v702 = vunpack.c.l.b16 %v621
      %v703 = vunpack.c.l.b16 %v622
      %v704 = vunpack.c.l.b16 %v623
      %v705 = vunpack.c.l.b16 %v624
      %v706 = vpack.c.b16 %v703, %v702
      %v707 = vpack.c.b16 %v705, %v704
      %v711 = vsel %vm582, %v614, 0
      %713 = vmatprep.subr.bf16.mxu0 0
      %714 = vmatpush1.bf16.msra.mxu0 %v706
      %715 = vmatprep.subr.bf16.mxu0 0
      %716 = vmatpush1.bf16.msra.mxu0 %v707
      %717 = vmatprep.subr.bf16.mxu0 0
      %718 = vmatpush1.bf16.msra.mxu0 0
      %719 = vmatprep.subr.bf16.mxu0 0
      %720 = vmatpush1.bf16.msra.mxu0 0
      %721 = vmatprep.subr.bf16.mxu0 0
      %722 = vmatpush1.bf16.msra.mxu0 0
      %723 = vmatprep.subr.bf16.mxu0 0
      %724 = vmatpush1.bf16.msra.mxu0 0
      %725 = vmatprep.subr.bf16.mxu0 0
      %726 = vmatpush1.bf16.msra.mxu0 0
      %727 = vmatprep.subr.bf16.mxu0 0
      %728 = vmatpush1.bf16.msra.mxu0 0
      %729 = vmatprep.subr.bf16.mxu0 0
      %730 = vmatpush1.bf16.msra.mxu0 0
      %731 = vmatprep.subr.bf16.mxu0 0
      %732 = vmatpush1.bf16.msra.mxu0 0
      %733 = vmatprep.subr.bf16.mxu0 0
      %734 = vmatpush1.bf16.msra.mxu0 0
      %735 = vmatprep.subr.bf16.mxu0 0
      %736 = vmatpush1.bf16.msra.mxu0 0
      %737 = vmatprep.subr.bf16.mxu0 0
      %738 = vmatpush1.bf16.msra.mxu0 0
      %739 = vmatprep.subr.bf16.mxu0 0
      %740 = vmatpush1.bf16.msra.mxu0 0
      %741 = vmatprep.subr.bf16.mxu0 0
      %742 = vmatpush1.bf16.msra.mxu0 0
      %743 = vmatprep.subr.bf16.mxu0 0
      %744 = vmatpush1.bf16.msra.mxu0 0
      %745 = vmatprep.mubr.bf16.mxu0 0
      %746 = vmatmul.mubr.bf16.gmra.mrb[0].mxu0 %v711
      %v747 = vpop.f32.mrb[0].mxu0
      %v748 = vadd.f32 %v696, %v747
      %v749 = vpop.f32.mrb[0].mxu0
      %v750 = vpop.f32.mrb[0].mxu0
      %v751 = vadd.f32 %v696, %v750
      %v752 = vpop.f32.mrb[0].mxu0
      %753 = vdwg.mxu0
      %755 = vrot.lane.b32.xlu0 %v687, 120
      %v756 = vpop.permute.xlu0 %755
      %758 = vrot.lane.b32.xlu0 %v687, 112
      %v759 = vpop.permute.xlu0 %758
      %761 = vrot.lane.b32.xlu0 %v687, 104
      %v762 = vpop.permute.xlu0 %761
      %v764 = vpack.c.bf16 %v687, %v687
      %v765 = vpack.c.bf16 %v756, %v756
      %v766 = vpack.c.bf16 %v759, %v759
      %v767 = vpack.c.bf16 %v762, %v762
      %770 = vrot.lane.b32.xlu0 %v748, 120
      %v771 = vpop.permute.xlu0 %770
      %772 = vrot.lane.b32.xlu0 %v751, 120
      %v773 = vpop.permute.xlu0 %772
      %776 = vrot.lane.b32.xlu0 %v748, 112
      %v777 = vpop.permute.xlu0 %776
      %778 = vrot.lane.b32.xlu0 %v751, 112
      %v779 = vpop.permute.xlu0 %778
      %782 = vrot.lane.b32.xlu0 %v748, 104
      %v783 = vpop.permute.xlu0 %782
      %784 = vrot.lane.b32.xlu0 %v751, 104
      %v785 = vpop.permute.xlu0 %784
      %v788 = vpack.c.bf16 %v751, %v748
      %v789 = vpack.c.bf16 %v773, %v771
      %v790 = vpack.c.bf16 %v779, %v777
      %v791 = vpack.c.bf16 %v785, %v783
      %vm792 = vcmask 64512
      %v794 = vsel %vm792, %v764, 0
      %v797 = vsel %vm792, %v788, 0
      %799 = vmatprep.subr.bf16.mxu0 0
      %800 = vmatpush1.bf16.xpose.msra.mxu0 %v797
      %801 = vmatprep.subr.bf16.mxu0 0
      %802 = vmatpush1.bf16.xpose.msra.mxu0 0
      %803 = vmatprep.subr.bf16.mxu0 0
      %804 = vmatpush1.bf16.xpose.msra.mxu0 0
      %805 = vmatprep.subr.bf16.mxu0 0
      %806 = vmatpush1.bf16.xpose.msra.mxu0 0
      %807 = vmatprep.subr.bf16.mxu0 0
      %808 = vmatpush1.bf16.xpose.msra.mxu0 0
      %809 = vmatprep.subr.bf16.mxu0 0
      %810 = vmatpush1.bf16.xpose.msra.mxu0 0
      %811 = vmatprep.subr.bf16.mxu0 0
      %812 = vmatpush1.bf16.xpose.msra.mxu0 0
      %813 = vmatprep.subr.bf16.mxu0 0
      %814 = vmatpush1.bf16.xpose.msra.mxu0 0
      %815 = vmatprep.subr.bf16.mxu0 0
      %816 = vmatpush1.bf16.xpose.msra.mxu0 0
      %817 = vmatprep.subr.bf16.mxu0 0
      %818 = vmatpush1.bf16.xpose.msra.mxu0 0
      %819 = vmatprep.subr.bf16.mxu0 0
      %820 = vmatpush1.bf16.xpose.msra.mxu0 0
      %821 = vmatprep.subr.bf16.mxu0 0
      %822 = vmatpush1.bf16.xpose.msra.mxu0 0
      %823 = vmatprep.subr.bf16.mxu0 0
      %824 = vmatpush1.bf16.xpose.msra.mxu0 0
      %825 = vmatprep.subr.bf16.mxu0 0
      %826 = vmatpush1.bf16.xpose.msra.mxu0 0
      %827 = vmatprep.subr.bf16.mxu0 0
      %828 = vmatpush1.bf16.xpose.msra.mxu0 0
      %829 = vmatprep.subr.bf16.mxu0 0
      %830 = vmatpush1.bf16.xpose.msra.mxu0 0
      %831 = vmatprep.mubr.bf16.mxu0 0
      %832 = vmatmul.mubr.bf16.gmra.mrb[0].mxu0 %v794
      %v833 = vpop.f32.mrb[0].mxu0
      %v834 = vadd.f32 0.0, %v833
      %v835 = vpop.f32.mrb[0].mxu0
      %v836 = vpop.f32.mrb[0].mxu0
      %v837 = vpop.f32.mrb[0].mxu0
      %838 = vdwg.mxu0
      %v840 = vsel %vm792, %v765, 0
      %v843 = vsel %vm792, %v789, 0
      %845 = vmatprep.subr.bf16.mxu0 0
      %846 = vmatpush1.bf16.xpose.msra.mxu0 %v843
      %847 = vmatprep.subr.bf16.mxu0 0
      %848 = vmatpush1.bf16.xpose.msra.mxu0 0
      %849 = vmatprep.subr.bf16.mxu0 0
      %850 = vmatpush1.bf16.xpose.msra.mxu0 0
      %851 = vmatprep.subr.bf16.mxu0 0
      %852 = vmatpush1.bf16.xpose.msra.mxu0 0
      %853 = vmatprep.subr.bf16.mxu0 0
      %854 = vmatpush1.bf16.xpose.msra.mxu0 0
      %855 = vmatprep.subr.bf16.mxu0 0
      %856 = vmatpush1.bf16.xpose.msra.mxu0 0
      %857 = vmatprep.subr.bf16.mxu0 0
      %858 = vmatpush1.bf16.xpose.msra.mxu0 0
      %859 = vmatprep.subr.bf16.mxu0 0
      %860 = vmatpush1.bf16.xpose.msra.mxu0 0
      %861 = vmatprep.subr.bf16.mxu0 0
      %862 = vmatpush1.bf16.xpose.msra.mxu0 0
      %863 = vmatprep.subr.bf16.mxu0 0
      %864 = vmatpush1.bf16.xpose.msra.mxu0 0
      %865 = vmatprep.subr.bf16.mxu0 0
      %866 = vmatpush1.bf16.xpose.msra.mxu0 0
      %867 = vmatprep.subr.bf16.mxu0 0
      %868 = vmatpush1.bf16.xpose.msra.mxu0 0
      %869 = vmatprep.subr.bf16.mxu0 0
      %870 = vmatpush1.bf16.xpose.msra.mxu0 0
      %871 = vmatprep.subr.bf16.mxu0 0
      %872 = vmatpush1.bf16.xpose.msra.mxu0 0
      %873 = vmatprep.subr.bf16.mxu0 0
      %874 = vmatpush1.bf16.xpose.msra.mxu0 0
      %875 = vmatprep.subr.bf16.mxu0 0
      %876 = vmatpush1.bf16.xpose.msra.mxu0 0
      %877 = vmatprep.mubr.bf16.mxu0 0
      %878 = vmatmul.mubr.bf16.gmra.mrb[0].mxu0 %v840
      %v879 = vpop.f32.mrb[0].mxu0
      %v880 = vadd.f32 0.0, %v879
      %v881 = vpop.f32.mrb[0].mxu0
      %v882 = vpop.f32.mrb[0].mxu0
      %v883 = vpop.f32.mrb[0].mxu0
      %884 = vdwg.mxu0
      %v886 = vsel %vm792, %v766, 0
      %v889 = vsel %vm792, %v790, 0
      %891 = vmatprep.subr.bf16.mxu0 0
      %892 = vmatpush1.bf16.xpose.msra.mxu0 %v889
      %893 = vmatprep.subr.bf16.mxu0 0
      %894 = vmatpush1.bf16.xpose.msra.mxu0 0
      %895 = vmatprep.subr.bf16.mxu0 0
      %896 = vmatpush1.bf16.xpose.msra.mxu0 0
      %897 = vmatprep.subr.bf16.mxu0 0
      %898 = vmatpush1.bf16.xpose.msra.mxu0 0
      %899 = vmatprep.subr.bf16.mxu0 0
      %900 = vmatpush1.bf16.xpose.msra.mxu0 0
      %901 = vmatprep.subr.bf16.mxu0 0
      %902 = vmatpush1.bf16.xpose.msra.mxu0 0
      %903 = vmatprep.subr.bf16.mxu0 0
      %904 = vmatpush1.bf16.xpose.msra.mxu0 0
      %905 = vmatprep.subr.bf16.mxu0 0
      %906 = vmatpush1.bf16.xpose.msra.mxu0 0
      %907 = vmatprep.subr.bf16.mxu0 0
      %908 = vmatpush1.bf16.xpose.msra.mxu0 0
      %909 = vmatprep.subr.bf16.mxu0 0
      %910 = vmatpush1.bf16.xpose.msra.mxu0 0
      %911 = vmatprep.subr.bf16.mxu0 0
      %912 = vmatpush1.bf16.xpose.msra.mxu0 0
      %913 = vmatprep.subr.bf16.mxu0 0
      %914 = vmatpush1.bf16.xpose.msra.mxu0 0
      %915 = vmatprep.subr.bf16.mxu0 0
      %916 = vmatpush1.bf16.xpose.msra.mxu0 0
      %917 = vmatprep.subr.bf16.mxu0 0
      %918 = vmatpush1.bf16.xpose.msra.mxu0 0
      %919 = vmatprep.subr.bf16.mxu0 0
      %920 = vmatpush1.bf16.xpose.msra.mxu0 0
      %921 = vmatprep.subr.bf16.mxu0 0
      %922 = vmatpush1.bf16.xpose.msra.mxu0 0
      %923 = vmatprep.mubr.bf16.mxu0 0
      %924 = vmatmul.mubr.bf16.gmra.mrb[0].mxu0 %v886
      %v925 = vpop.f32.mrb[0].mxu0
      %v926 = vadd.f32 0.0, %v925
      %v927 = vpop.f32.mrb[0].mxu0
      %v928 = vpop.f32.mrb[0].mxu0
      %v929 = vpop.f32.mrb[0].mxu0
      %930 = vdwg.mxu0
      %v932 = vsel %vm792, %v767, 0
      %v935 = vsel %vm792, %v791, 0
      %937 = vmatprep.subr.bf16.mxu0 0
      %938 = vmatpush1.bf16.xpose.msra.mxu0 %v935
      %939 = vmatprep.subr.bf16.mxu0 0
      %940 = vmatpush1.bf16.xpose.msra.mxu0 0
      %941 = vmatprep.subr.bf16.mxu0 0
      %942 = vmatpush1.bf16.xpose.msra.mxu0 0
      %943 = vmatprep.subr.bf16.mxu0 0
      %944 = vmatpush1.bf16.xpose.msra.mxu0 0
      %945 = vmatprep.subr.bf16.mxu0 0
      %946 = vmatpush1.bf16.xpose.msra.mxu0 0
      %947 = vmatprep.subr.bf16.mxu0 0
      %948 = vmatpush1.bf16.xpose.msra.mxu0 0
      %949 = vmatprep.subr.bf16.mxu0 0
      %950 = vmatpush1.bf16.xpose.msra.mxu0 0
      %951 = vmatprep.subr.bf16.mxu0 0
      %952 = vmatpush1.bf16.xpose.msra.mxu0 0
      %953 = vmatprep.subr.bf16.mxu0 0
      %954 = vmatpush1.bf16.xpose.msra.mxu0 0
      %955 = vmatprep.subr.bf16.mxu0 0
      %956 = vmatpush1.bf16.xpose.msra.mxu0 0
      %957 = vmatprep.subr.bf16.mxu0 0
      %958 = vmatpush1.bf16.xpose.msra.mxu0 0
      %959 = vmatprep.subr.bf16.mxu0 0
      %960 = vmatpush1.bf16.xpose.msra.mxu0 0
      %961 = vmatprep.subr.bf16.mxu0 0
      %962 = vmatpush1.bf16.xpose.msra.mxu0 0
      %963 = vmatprep.subr.bf16.mxu0 0
      %964 = vmatpush1.bf16.xpose.msra.mxu0 0
      %965 = vmatprep.subr.bf16.mxu0 0
      %966 = vmatpush1.bf16.xpose.msra.mxu0 0
      %967 = vmatprep.subr.bf16.mxu0 0
      %968 = vmatpush1.bf16.xpose.msra.mxu0 0
      %969 = vmatprep.mubr.bf16.mxu0 0
      %970 = vmatmul.mubr.bf16.gmra.mrb[0].mxu0 %v932
      %v971 = vpop.f32.mrb[0].mxu0
      %v972 = vadd.f32 0.0, %v971
      %v973 = vpop.f32.mrb[0].mxu0
      %v974 = vpop.f32.mrb[0].mxu0
      %v975 = vpop.f32.mrb[0].mxu0
      %976 = vdwg.mxu0
      %v977 = vmul.f32 %v834, 0.35355338
      %v978 = vmul.f32 %v880, 0.35355338
      %v979 = vmul.f32 %v926, 0.35355338
      %v980 = vmul.f32 %v972, 0.35355338
      %v982 = vlaneseq
      %v983 = vshrl.u32 %v982, 7
      %v984 = vsub.s32 0, %v983
      %v985 = vrot.slane %v615, %v984
      %v987 = vadd.f32 %v977, %v985
      %v988 = vadd.f32 %v978, %v985
      %v989 = vadd.f32 %v979, %v985
      %v990 = vadd.f32 %v980, %v985
      %vm991 = vcmask 97280
      %v992 = vsel %vm991, %v987, -inf
      %993 = vmax.xlane.f32.xlu0 %v992
      %v994 = vpop.xlane.xlu0 %993
      %v995 = vsel %vm991, %v988, -inf
      %996 = vmax.xlane.f32.xlu0 %v995
      %v997 = vpop.xlane.xlu0 %996
      %v998 = vsel %vm991, %v989, -inf
      %999 = vmax.xlane.f32.xlu0 %v998
      %v1000 = vpop.xlane.xlu0 %999
      %v1001 = vsel %vm991, %v990, -inf
      %1002 = vmax.xlane.f32.xlu0 %v1001
      %v1003 = vpop.xlane.xlu0 %1002
      %v1004 = vsub.f32 %v987, %v994
      %v1005 = vsub.f32 %v988, %v997
      %v1006 = vsub.f32 %v989, %v1000
      %v1007 = vsub.f32 %v990, %v1003
      %v1008 = vmul.f32 %v1004, 1.442695
      %v1009 = vpow.pop %v1008
      %v1010 = vmul.f32 %v1005, 1.442695
      %v1011 = vpow.pop %v1010
      %v1012 = vmul.f32 %v1006, 1.442695
      %v1013 = vpow.pop %v1012
      %v1014 = vmul.f32 %v1007, 1.442695
      %v1015 = vpow.pop %v1014
      %v1016 = vsel %vm991, %v1009, 0.0
      %1017 = vadd.xlane.f32.xlu0 %v1016
      %v1018 = vpop.xlane.xlu0 %1017
      %v1019 = vsel %vm991, %v1011, 0.0
      %1020 = vadd.xlane.f32.xlu0 %v1019
      %v1021 = vpop.xlane.xlu0 %1020
      %v1022 = vsel %vm991, %v1013, 0.0
      %1023 = vadd.xlane.f32.xlu0 %v1022
      %v1024 = vpop.xlane.xlu0 %1023
      %v1025 = vsel %vm991, %v1015, 0.0
      %1026 = vadd.xlane.f32.xlu0 %v1025
      %v1027 = vpop.xlane.xlu0 %1026
      %v1028 = vrcp.pop %v1018
      %v1029 = vmul.f32 %v1009, %v1028
      %v1030 = vrcp.pop %v1021
      %v1031 = vmul.f32 %v1011, %v1030
      %v1032 = vrcp.pop %v1024
      %v1033 = vmul.f32 %v1013, %v1032
      %v1034 = vrcp.pop %v1027
      %v1035 = vmul.f32 %v1015, %v1034
      %v1036 = vpack.c.bf16 %v1029, %v1029
      %v1037 = vpack.c.bf16 %v1031, %v1031
      %v1038 = vpack.c.bf16 %v1033, %v1033
      %v1039 = vpack.c.bf16 %v1035, %v1035
      %1041 = vrot.lane.b32.xlu0 %v788, 96
      %v1042 = vpop.permute.xlu0 %1041
      %v1044 = vsel %vm991, %v1036, 0
      %vm1046 = vcmask 1045504
      %v1048 = vsel %vm1046, %v1042, 0
      %1050 = vmatprep.subr.bf16.mxu0 0
      %1051 = vmatpush1.bf16.msra.mxu0 %v1048
      %1052 = vmatprep.subr.bf16.mxu0 0
      %1053 = vmatpush1.bf16.msra.mxu0 0
      %1054 = vmatprep.subr.bf16.mxu0 0
      %1055 = vmatpush1.bf16.msra.mxu0 0
      %1056 = vmatprep.subr.bf16.mxu0 0
      %1057 = vmatpush1.bf16.msra.mxu0 0
      %1058 = vmatprep.subr.bf16.mxu0 0
      %1059 = vmatpush1.bf16.msra.mxu0 0
      %1060 = vmatprep.subr.bf16.mxu0 0
      %1061 = vmatpush1.bf16.msra.mxu0 0
      %1062 = vmatprep.subr.bf16.mxu0 0
      %1063 = vmatpush1.bf16.msra.mxu0 0
      %1064 = vmatprep.subr.bf16.mxu0 0
      %1065 = vmatpush1.bf16.msra.mxu0 0
      %1066 = vmatprep.subr.bf16.mxu0 0
      %1067 = vmatpush1.bf16.msra.mxu0 0
      %1068 = vmatprep.subr.bf16.mxu0 0
      %1069 = vmatpush1.bf16.msra.mxu0 0
      %1070 = vmatprep.subr.bf16.mxu0 0
      %1071 = vmatpush1.bf16.msra.mxu0 0
      %1072 = vmatprep.subr.bf16.mxu0 0
      %1073 = vmatpush1.bf16.msra.mxu0 0
      %1074 = vmatprep.subr.bf16.mxu0 0
      %1075 = vmatpush1.bf16.msra.mxu0 0
      %1076 = vmatprep.subr.bf16.mxu0 0
      %1077 = vmatpush1.bf16.msra.mxu0 0
      %1078 = vmatprep.subr.bf16.mxu0 0
      %1079 = vmatpush1.bf16.msra.mxu0 0
      %1080 = vmatprep.subr.bf16.mxu0 0
      %1081 = vmatpush1.bf16.msra.mxu0 0
      %1082 = vmatprep.mubr.bf16.mxu0 0
      %1083 = vmatmul.mubr.bf16.gmra.mrb[0].mxu0 %v1044
      %v1084 = vpop.f32.mrb[0].mxu0
      %v1085 = vadd.f32 0.0, %v1084
      %v1086 = vpop.f32.mrb[0].mxu0
      %v1087 = vpop.f32.mrb[0].mxu0
      %v1088 = vpop.f32.mrb[0].mxu0
      %1089 = vdwg.mxu0
      %1091 = vrot.lane.b32.xlu0 %v789, 96
      %v1092 = vpop.permute.xlu0 %1091
      %v1094 = vsel %vm991, %v1037, 0
      %v1097 = vsel %vm1046, %v1092, 0
      %1099 = vmatprep.subr.bf16.mxu0 0
      %1100 = vmatpush1.bf16.msra.mxu0 %v1097
      %1101 = vmatprep.subr.bf16.mxu0 0
      %1102 = vmatpush1.bf16.msra.mxu0 0
      %1103 = vmatprep.subr.bf16.mxu0 0
      %1104 = vmatpush1.bf16.msra.mxu0 0
      %1105 = vmatprep.subr.bf16.mxu0 0
      %1106 = vmatpush1.bf16.msra.mxu0 0
      %1107 = vmatprep.subr.bf16.mxu0 0
      %1108 = vmatpush1.bf16.msra.mxu0 0
      %1109 = vmatprep.subr.bf16.mxu0 0
      %1110 = vmatpush1.bf16.msra.mxu0 0
      %1111 = vmatprep.subr.bf16.mxu0 0
      %1112 = vmatpush1.bf16.msra.mxu0 0
      %1113 = vmatprep.subr.bf16.mxu0 0
      %1114 = vmatpush1.bf16.msra.mxu0 0
      %1115 = vmatprep.subr.bf16.mxu0 0
      %1116 = vmatpush1.bf16.msra.mxu0 0
      %1117 = vmatprep.subr.bf16.mxu0 0
      %1118 = vmatpush1.bf16.msra.mxu0 0
      %1119 = vmatprep.subr.bf16.mxu0 0
      %1120 = vmatpush1.bf16.msra.mxu0 0
      %1121 = vmatprep.subr.bf16.mxu0 0
      %1122 = vmatpush1.bf16.msra.mxu0 0
      %1123 = vmatprep.subr.bf16.mxu0 0
      %1124 = vmatpush1.bf16.msra.mxu0 0
      %1125 = vmatprep.subr.bf16.mxu0 0
      %1126 = vmatpush1.bf16.msra.mxu0 0
      %1127 = vmatprep.subr.bf16.mxu0 0
      %1128 = vmatpush1.bf16.msra.mxu0 0
      %1129 = vmatprep.subr.bf16.mxu0 0
      %1130 = vmatpush1.bf16.msra.mxu0 0
      %1131 = vmatprep.mubr.bf16.mxu0 0
      %1132 = vmatmul.mubr.bf16.gmra.mrb[0].mxu0 %v1094
      %v1133 = vpop.f32.mrb[0].mxu0
      %v1134 = vadd.f32 0.0, %v1133
      %v1135 = vpop.f32.mrb[0].mxu0
      %v1136 = vpop.f32.mrb[0].mxu0
      %v1137 = vpop.f32.mrb[0].mxu0
      %1138 = vdwg.mxu0
      %1140 = vrot.lane.b32.xlu0 %v790, 96
      %v1141 = vpop.permute.xlu0 %1140
      %v1143 = vsel %vm991, %v1038, 0
      %v1146 = vsel %vm1046, %v1141, 0
      %1148 = vmatprep.subr.bf16.mxu0 0
      %1149 = vmatpush1.bf16.msra.mxu0 %v1146
      %1150 = vmatprep.subr.bf16.mxu0 0
      %1151 = vmatpush1.bf16.msra.mxu0 0
      %1152 = vmatprep.subr.bf16.mxu0 0
      %1153 = vmatpush1.bf16.msra.mxu0 0
      %1154 = vmatprep.subr.bf16.mxu0 0
      %1155 = vmatpush1.bf16.msra.mxu0 0
      %1156 = vmatprep.subr.bf16.mxu0 0
      %1157 = vmatpush1.bf16.msra.mxu0 0
      %1158 = vmatprep.subr.bf16.mxu0 0
      %1159 = vmatpush1.bf16.msra.mxu0 0
      %1160 = vmatprep.subr.bf16.mxu0 0
      %1161 = vmatpush1.bf16.msra.mxu0 0
      %1162 = vmatprep.subr.bf16.mxu0 0
      %1163 = vmatpush1.bf16.msra.mxu0 0
      %1164 = vmatprep.subr.bf16.mxu0 0
      %1165 = vmatpush1.bf16.msra.mxu0 0
      %1166 = vmatprep.subr.bf16.mxu0 0
      %1167 = vmatpush1.bf16.msra.mxu0 0
      %1168 = vmatprep.subr.bf16.mxu0 0
      %1169 = vmatpush1.bf16.msra.mxu0 0
      %1170 = vmatprep.subr.bf16.mxu0 0
      %1171 = vmatpush1.bf16.msra.mxu0 0
      %1172 = vmatprep.subr.bf16.mxu0 0
      %1173 = vmatpush1.bf16.msra.mxu0 0
      %1174 = vmatprep.subr.bf16.mxu0 0
      %1175 = vmatpush1.bf16.msra.mxu0 0
      %1176 = vmatprep.subr.bf16.mxu0 0
      %1177 = vmatpush1.bf16.msra.mxu0 0
      %1178 = vmatprep.subr.bf16.mxu0 0
      %1179 = vmatpush1.bf16.msra.mxu0 0
      %1180 = vmatprep.mubr.bf16.mxu0 0
      %1181 = vmatmul.mubr.bf16.gmra.mrb[0].mxu0 %v1143
      %v1182 = vpop.f32.mrb[0].mxu0
      %v1183 = vadd.f32 0.0, %v1182
      %v1184 = vpop.f32.mrb[0].mxu0
      %v1185 = vpop.f32.mrb[0].mxu0
      %v1186 = vpop.f32.mrb[0].mxu0
      %1187 = vdwg.mxu0
      %1189 = vrot.lane.b32.xlu0 %v791, 96
      %v1190 = vpop.permute.xlu0 %1189
      %v1192 = vsel %vm991, %v1039, 0
      %v1195 = vsel %vm1046, %v1190, 0
      %1197 = vmatprep.subr.bf16.mxu0 0
      %1198 = vmatpush1.bf16.msra.mxu0 %v1195
      %1199 = vmatprep.subr.bf16.mxu0 0
      %1200 = vmatpush1.bf16.msra.mxu0 0
      %1201 = vmatprep.subr.bf16.mxu0 0
      %1202 = vmatpush1.bf16.msra.mxu0 0
      %1203 = vmatprep.subr.bf16.mxu0 0
      %1204 = vmatpush1.bf16.msra.mxu0 0
      %1205 = vmatprep.subr.bf16.mxu0 0
      %1206 = vmatpush1.bf16.msra.mxu0 0
      %1207 = vmatprep.subr.bf16.mxu0 0
      %1208 = vmatpush1.bf16.msra.mxu0 0
      %1209 = vmatprep.subr.bf16.mxu0 0
      %1210 = vmatpush1.bf16.msra.mxu0 0
      %1211 = vmatprep.subr.bf16.mxu0 0
      %1212 = vmatpush1.bf16.msra.mxu0 0
      %1213 = vmatprep.subr.bf16.mxu0 0
      %1214 = vmatpush1.bf16.msra.mxu0 0
      %1215 = vmatprep.subr.bf16.mxu0 0
      %1216 = vmatpush1.bf16.msra.mxu0 0
      %1217 = vmatprep.subr.bf16.mxu0 0
      %1218 = vmatpush1.bf16.msra.mxu0 0
      %1219 = vmatprep.subr.bf16.mxu0 0
      %1220 = vmatpush1.bf16.msra.mxu0 0
      %1221 = vmatprep.subr.bf16.mxu0 0
      %1222 = vmatpush1.bf16.msra.mxu0 0
      %1223 = vmatprep.subr.bf16.mxu0 0
      %1224 = vmatpush1.bf16.msra.mxu0 0
      %1225 = vmatprep.subr.bf16.mxu0 0
      %1226 = vmatpush1.bf16.msra.mxu0 0
      %1227 = vmatprep.subr.bf16.mxu0 0
      %1228 = vmatpush1.bf16.msra.mxu0 0
      %1229 = vmatprep.mubr.bf16.mxu0 0
      %1230 = vmatmul.mubr.bf16.gmra.mrb[0].mxu0 %v1192
      %v1231 = vpop.f32.mrb[0].mxu0
      %v1232 = vadd.f32 0.0, %v1231
      %v1233 = vpop.f32.mrb[0].mxu0
      %v1234 = vpop.f32.mrb[0].mxu0
      %v1235 = vpop.f32.mrb[0].mxu0
      %1236 = vdwg.mxu0
      %v1237 = vpack.c.bf16 %v1085, %v1085
      %v1238 = vpack.c.bf16 %v1134, %v1134
      %v1239 = vpack.c.bf16 %v1183, %v1183
      %v1240 = vpack.c.bf16 %v1232, %v1232
      %v1242 = vsel %vm792, %v1237, 0
      %vm1244 = vcmask 1043456
      %v1246 = vsel %vm1244, %v626, 0
      %1248 = vmatprep.subr.bf16.mxu0 0
      %1249 = vmatpush1.bf16.msra.mxu0 %v1246
      %1250 = vmatprep.subr.bf16.mxu0 0
      %1251 = vmatpush1.bf16.msra.mxu0 0
      %1252 = vmatprep.subr.bf16.mxu0 0
      %1253 = vmatpush1.bf16.msra.mxu0 0
      %1254 = vmatprep.subr.bf16.mxu0 0
      %1255 = vmatpush1.bf16.msra.mxu0 0
      %1256 = vmatprep.subr.bf16.mxu0 0
      %1257 = vmatpush1.bf16.msra.mxu0 0
      %1258 = vmatprep.subr.bf16.mxu0 0
      %1259 = vmatpush1.bf16.msra.mxu0 0
      %1260 = vmatprep.subr.bf16.mxu0 0
      %1261 = vmatpush1.bf16.msra.mxu0 0
      %1262 = vmatprep.subr.bf16.mxu0 0
      %1263 = vmatpush1.bf16.msra.mxu0 0
      %1264 = vmatprep.subr.bf16.mxu0 0
      %1265 = vmatpush1.bf16.msra.mxu0 0
      %1266 = vmatprep.subr.bf16.mxu0 0
      %1267 = vmatpush1.bf16.msra.mxu0 0
      %1268 = vmatprep.subr.bf16.mxu0 0
      %1269 = vmatpush1.bf16.msra.mxu0 0
      %1270 = vmatprep.subr.bf16.mxu0 0
      %1271 = vmatpush1.bf16.msra.mxu0 0
      %1272 = vmatprep.subr.bf16.mxu0 0
      %1273 = vmatpush1.bf16.msra.mxu0 0
      %1274 = vmatprep.subr.bf16.mxu0 0
      %1275 = vmatpush1.bf16.msra.mxu0 0
      %1276 = vmatprep.subr.bf16.mxu0 0
      %1277 = vmatpush1.bf16.msra.mxu0 0
      %1278 = vmatprep.subr.bf16.mxu0 0
      %1279 = vmatpush1.bf16.msra.mxu0 0
      %1280 = vmatprep.mubr.bf16.mxu0 0
      %1281 = vmatmul.mubr.bf16.gmra.mrb[0].mxu0 %v1242
      %v1282 = vpop.f32.mrb[0].mxu0
      %v1283 = vadd.f32 0.0, %v1282
      %v1284 = vpop.f32.mrb[0].mxu0
      %v1285 = vpop.f32.mrb[0].mxu0
      %v1286 = vpop.f32.mrb[0].mxu0
      %1287 = vdwg.mxu0
      %v1289 = vsel %vm792, %v1238, 0
      %v1292 = vsel %vm1244, %v627, 0
      %1294 = vmatprep.subr.bf16.mxu0 0
      %1295 = vmatpush1.bf16.msra.mxu0 %v1292
      %1296 = vmatprep.subr.bf16.mxu0 0
      %1297 = vmatpush1.bf16.msra.mxu0 0
      %1298 = vmatprep.subr.bf16.mxu0 0
      %1299 = vmatpush1.bf16.msra.mxu0 0
      %1300 = vmatprep.subr.bf16.mxu0 0
      %1301 = vmatpush1.bf16.msra.mxu0 0
      %1302 = vmatprep.subr.bf16.mxu0 0
      %1303 = vmatpush1.bf16.msra.mxu0 0
      %1304 = vmatprep.subr.bf16.mxu0 0
      %1305 = vmatpush1.bf16.msra.mxu0 0
      %1306 = vmatprep.subr.bf16.mxu0 0
      %1307 = vmatpush1.bf16.msra.mxu0 0
      %1308 = vmatprep.subr.bf16.mxu0 0
      %1309 = vmatpush1.bf16.msra.mxu0 0
      %1310 = vmatprep.subr.bf16.mxu0 0
      %1311 = vmatpush1.bf16.msra.mxu0 0
      %1312 = vmatprep.subr.bf16.mxu0 0
      %1313 = vmatpush1.bf16.msra.mxu0 0
      %1314 = vmatprep.subr.bf16.mxu0 0
      %1315 = vmatpush1.bf16.msra.mxu0 0
      %1316 = vmatprep.subr.bf16.mxu0 0
      %1317 = vmatpush1.bf16.msra.mxu0 0
      %1318 = vmatprep.subr.bf16.mxu0 0
      %1319 = vmatpush1.bf16.msra.mxu0 0
      %1320 = vmatprep.subr.bf16.mxu0 0
      %1321 = vmatpush1.bf16.msra.mxu0 0
      %1322 = vmatprep.subr.bf16.mxu0 0
      %1323 = vmatpush1.bf16.msra.mxu0 0
      %1324 = vmatprep.subr.bf16.mxu0 0
      %1325 = vmatpush1.bf16.msra.mxu0 0
      %1326 = vmatprep.mubr.bf16.mxu0 0
      %1327 = vmatmul.mubr.bf16.gmra.mrb[0].mxu0 %v1289
      %v1328 = vpop.f32.mrb[0].mxu0
      %v1329 = vadd.f32 0.0, %v1328
      %v1330 = vpop.f32.mrb[0].mxu0
      %v1331 = vpop.f32.mrb[0].mxu0
      %v1332 = vpop.f32.mrb[0].mxu0
      %1333 = vdwg.mxu0
      %v1335 = vsel %vm792, %v1239, 0
      %v1338 = vsel %vm1244, %v628, 0
      %1340 = vmatprep.subr.bf16.mxu0 0
      %1341 = vmatpush1.bf16.msra.mxu0 %v1338
      %1342 = vmatprep.subr.bf16.mxu0 0
      %1343 = vmatpush1.bf16.msra.mxu0 0
      %1344 = vmatprep.subr.bf16.mxu0 0
      %1345 = vmatpush1.bf16.msra.mxu0 0
      %1346 = vmatprep.subr.bf16.mxu0 0
      %1347 = vmatpush1.bf16.msra.mxu0 0
      %1348 = vmatprep.subr.bf16.mxu0 0
      %1349 = vmatpush1.bf16.msra.mxu0 0
      %1350 = vmatprep.subr.bf16.mxu0 0
      %1351 = vmatpush1.bf16.msra.mxu0 0
      %1352 = vmatprep.subr.bf16.mxu0 0
      %1353 = vmatpush1.bf16.msra.mxu0 0
      %1354 = vmatprep.subr.bf16.mxu0 0
      %1355 = vmatpush1.bf16.msra.mxu0 0
      %1356 = vmatprep.subr.bf16.mxu0 0
      %1357 = vmatpush1.bf16.msra.mxu0 0
      %1358 = vmatprep.subr.bf16.mxu0 0
      %1359 = vmatpush1.bf16.msra.mxu0 0
      %1360 = vmatprep.subr.bf16.mxu0 0
      %1361 = vmatpush1.bf16.msra.mxu0 0
      %1362 = vmatprep.subr.bf16.mxu0 0
      %1363 = vmatpush1.bf16.msra.mxu0 0
      %1364 = vmatprep.subr.bf16.mxu0 0
      %1365 = vmatpush1.bf16.msra.mxu0 0
      %1366 = vmatprep.subr.bf16.mxu0 0
      %1367 = vmatpush1.bf16.msra.mxu0 0
      %1368 = vmatprep.subr.bf16.mxu0 0
      %1369 = vmatpush1.bf16.msra.mxu0 0
      %1370 = vmatprep.subr.bf16.mxu0 0
      %1371 = vmatpush1.bf16.msra.mxu0 0
      %1372 = vmatprep.mubr.bf16.mxu0 0
      %1373 = vmatmul.mubr.bf16.gmra.mrb[0].mxu0 %v1335
      %v1374 = vpop.f32.mrb[0].mxu0
      %v1375 = vadd.f32 0.0, %v1374
      %v1376 = vpop.f32.mrb[0].mxu0
      %v1377 = vpop.f32.mrb[0].mxu0
      %v1378 = vpop.f32.mrb[0].mxu0
      %1379 = vdwg.mxu0
      %v1381 = vsel %vm792, %v1240, 0
      %v1384 = vsel %vm1244, %v629, 0
      %1386 = vmatprep.subr.bf16.mxu0 0
      %1387 = vmatpush1.bf16.msra.mxu0 %v1384
      %1388 = vmatprep.subr.bf16.mxu0 0
      %1389 = vmatpush1.bf16.msra.mxu0 0
      %1390 = vmatprep.subr.bf16.mxu0 0
      %1391 = vmatpush1.bf16.msra.mxu0 0
      %1392 = vmatprep.subr.bf16.mxu0 0
      %1393 = vmatpush1.bf16.msra.mxu0 0
      %1394 = vmatprep.subr.bf16.mxu0 0
      %1395 = vmatpush1.bf16.msra.mxu0 0
      %1396 = vmatprep.subr.bf16.mxu0 0
      %1397 = vmatpush1.bf16.msra.mxu0 0
      %1398 = vmatprep.subr.bf16.mxu0 0
      %1399 = vmatpush1.bf16.msra.mxu0 0
      %1400 = vmatprep.subr.bf16.mxu0 0
      %1401 = vmatpush1.bf16.msra.mxu0 0
      %1402 = vmatprep.subr.bf16.mxu0 0
      %1403 = vmatpush1.bf16.msra.mxu0 0
      %1404 = vmatprep.subr.bf16.mxu0 0
      %1405 = vmatpush1.bf16.msra.mxu0 0
      %1406 = vmatprep.subr.bf16.mxu0 0
      %1407 = vmatpush1.bf16.msra.mxu0 0
      %1408 = vmatprep.subr.bf16.mxu0 0
      %1409 = vmatpush1.bf16.msra.mxu0 0
      %1410 = vmatprep.subr.bf16.mxu0 0
      %1411 = vmatpush1.bf16.msra.mxu0 0
      %1412 = vmatprep.subr.bf16.mxu0 0
      %1413 = vmatpush1.bf16.msra.mxu0 0
      %1414 = vmatprep.subr.bf16.mxu0 0
      %1415 = vmatpush1.bf16.msra.mxu0 0
      %1416 = vmatprep.subr.bf16.mxu0 0
      %1417 = vmatpush1.bf16.msra.mxu0 0
      %1418 = vmatprep.mubr.bf16.mxu0 0
      %1419 = vmatmul.mubr.bf16.gmra.mrb[0].mxu0 %v1381
      %v1420 = vpop.f32.mrb[0].mxu0
      %v1421 = vadd.f32 0.0, %v1420
      %v1422 = vpop.f32.mrb[0].mxu0
      %v1423 = vpop.f32.mrb[0].mxu0
      %v1424 = vpop.f32.mrb[0].mxu0
      %1425 = vdwg.mxu0
      %v1426 = vadd.f32 %v1283, %v1329
      %v1427 = vadd.f32 %v1426, %v1375
      %v1428 = vadd.f32 %v1427, %v1421
      %v1430 = vlaneseq
      %v1431 = vshrl.u32 %v1430, 7
      %v1432 = vsub.s32 0, %v1431
      %v1433 = vrot.slane %v630, %v1432
      %v1435 = vadd.f32 %v1428, %v1433
      %v1436 = vadd.f32 %v579, %v1435
      %v1437 = vld [vmem:[%s11] sm:$0x1]
      %v1438 = vld [vmem:[%s12] sm:$0x1]
      %v1439 = vsel %vm582, %v1436, 0.0
      %1440 = vadd.xlane.f32.xlu0 %v1439
      %v1441 = vpop.xlane.xlu0 %1440
      %v1442 = vmul.f32 %v1441, %v586
      %v1443 = vsub.f32 %v1436, %v1442
      %v1444 = vmul.f32 %v1443, %v1443
      %v1445 = vsel %vm582, %v1444, 0.0
      %1446 = vadd.xlane.f32.xlu0 %v1445
      %v1447 = vpop.xlane.xlu0 %1446
      %v1448 = vmul.f32 %v1447, %v586
      %v1449 = vadd.f32 %v1448, 1e-05
      %v1450 = vrsqrt.pop %v1449
      %v1451 = vmul.f32 %v1443, %v1450
      %v1453 = vlaneseq
      %v1454 = vshrl.u32 %v1453, 7
      %v1455 = vsub.s32 0, %v1454
      %v1456 = vrot.slane %v1437, %v1455
      %v1458 = vmul.f32 %v1451, %v1456
      %v1460 = vlaneseq
      %v1461 = vshrl.u32 %v1460, 7
      %v1462 = vsub.s32 0, %v1461
      %v1463 = vrot.slane %v1438, %v1462
      %v1465 = vadd.f32 %v1458, %v1463
      %v1466 = vpack.c.bf16 %v1465, %v1465
      %v1467 = vld [vmem:[%s13] sm:$0xf]
      %v1468 = vld [vmem:[%s13 + $0x4] sm:$0xf]
      %v1469 = vld [vmem:[%s13 + $0x8] sm:$0xf]
      %v1470 = vld [vmem:[%s13 + $0xc] sm:$0xf]
      %v1471 = vld [vmem:[%s14] sm:$0x1]
      %v1473 = vlaneseq
      %v1474 = vshrl.u32 %v1473, 7
      %v1475 = vsub.s32 0, %v1474
      %v1476 = vrot.slane %v1471, %v1475
      %v1482 = vunpack.c.l.b16 %v1467
      %v1483 = vunpack.c.l.b16 %v1468
      %v1484 = vunpack.c.l.b16 %v1469
      %v1485 = vunpack.c.l.b16 %v1470
      %v1486 = vpack.c.b16 %v1483, %v1482
      %v1487 = vpack.c.b16 %v1485, %v1484
      %v1491 = vsel %vm582, %v1466, 0
      %1493 = vmatprep.subr.bf16.mxu0 0
      %1494 = vmatpush1.bf16.msra.mxu0 %v1486
      %1495 = vmatprep.subr.bf16.mxu0 0
      %1496 = vmatpush1.bf16.msra.mxu0 %v1487
      %1497 = vmatprep.subr.bf16.mxu0 0
      %1498 = vmatpush1.bf16.msra.mxu0 0
      %1499 = vmatprep.subr.bf16.mxu0 0
      %1500 = vmatpush1.bf16.msra.mxu0 0
      %1501 = vmatprep.subr.bf16.mxu0 0
      %1502 = vmatpush1.bf16.msra.mxu0 0
      %1503 = vmatprep.subr.bf16.mxu0 0
      %1504 = vmatpush1.bf16.msra.mxu0 0
      %1505 = vmatprep.subr.bf16.mxu0 0
      %1506 = vmatpush1.bf16.msra.mxu0 0
      %1507 = vmatprep.subr.bf16.mxu0 0
      %1508 = vmatpush1.bf16.msra.mxu0 0
      %1509 = vmatprep.subr.bf16.mxu0 0
      %1510 = vmatpush1.bf16.msra.mxu0 0
      %1511 = vmatprep.subr.bf16.mxu0 0
      %1512 = vmatpush1.bf16.msra.mxu0 0
      %1513 = vmatprep.subr.bf16.mxu0 0
      %1514 = vmatpush1.bf16.msra.mxu0 0
      %1515 = vmatprep.subr.bf16.mxu0 0
      %1516 = vmatpush1.bf16.msra.mxu0 0
      %1517 = vmatprep.subr.bf16.mxu0 0
      %1518 = vmatpush1.bf16.msra.mxu0 0
      %1519 = vmatprep.subr.bf16.mxu0 0
      %1520 = vmatpush1.bf16.msra.mxu0 0
      %1521 = vmatprep.subr.bf16.mxu0 0
      %1522 = vmatpush1.bf16.msra.mxu0 0
      %1523 = vmatprep.subr.bf16.mxu0 0
      %1524 = vmatpush1.bf16.msra.mxu0 0
      %1525 = vmatprep.mubr.bf16.mxu0 0
      %1526 = vmatmul.mubr.bf16.gmra.mrb[0].mxu0 %v1491
      %v1527 = vpop.f32.mrb[0].mxu0
      %v1528 = vadd.f32 %v1476, %v1527
      %v1529 = vpop.f32.mrb[0].mxu0
      %v1530 = vpop.f32.mrb[0].mxu0
      %v1531 = vpop.f32.mrb[0].mxu0
      %1532 = vdwg.mxu0
      %v1533 = vmax.f32 %v1528, 0.0
      %v1534 = vpack.c.bf16 %v1533, %v1533
      %v1535 = vld [vmem:[%s15] sm:$0xf]
      %v1536 = vld [vmem:[%s15 + $0x4] sm:$0xf]
      %v1537 = vld [vmem:[%s15 + $0x8] sm:$0xf]
      %v1538 = vld [vmem:[%s15 + $0xc] sm:$0xf]
      %v1539 = vld [vmem:[%s15 + $0x10] sm:$0xf]
      %v1540 = vld [vmem:[%s15 + $0x14] sm:$0xf]
      %v1541 = vld [vmem:[%s15 + $0x18] sm:$0xf]
      %v1542 = vld [vmem:[%s15 + $0x1c] sm:$0xf]
      %v1543 = vld [vmem:[%s16] sm:$0x1]
      %v1545 = vlaneseq
      %v1546 = vshrl.u32 %v1545, 7
      %v1547 = vsub.s32 0, %v1546
      %v1548 = vrot.slane %v1543, %v1547
      %v1558 = vunpack.c.l.b16 %v1535
      %v1559 = vunpack.c.l.b16 %v1536
      %v1560 = vunpack.c.l.b16 %v1537
      %v1561 = vunpack.c.l.b16 %v1538
      %v1562 = vunpack.c.l.b16 %v1539
      %v1563 = vunpack.c.l.b16 %v1540
      %v1564 = vunpack.c.l.b16 %v1541
      %v1565 = vunpack.c.l.b16 %v1542
      %v1566 = vpack.c.b16 %v1559, %v1558
      %v1567 = vpack.c.b16 %v1561, %v1560
      %v1568 = vpack.c.b16 %v1563, %v1562
      %v1569 = vpack.c.b16 %v1565, %v1564
      %vm1574 = vcmask 523264
      %v1576 = vsel %vm1574, %v1534, 0
      %1578 = vmatprep.subr.bf16.mxu0 0
      %1579 = vmatpush1.bf16.msra.mxu0 %v1566
      %1580 = vmatprep.subr.bf16.mxu0 0
      %1581 = vmatpush1.bf16.msra.mxu0 %v1567
      %1582 = vmatprep.subr.bf16.mxu0 0
      %1583 = vmatpush1.bf16.msra.mxu0 %v1568
      %1584 = vmatprep.subr.bf16.mxu0 0
      %1585 = vmatpush1.bf16.msra.mxu0 %v1569
      %1586 = vmatprep.subr.bf16.mxu0 0
      %1587 = vmatpush1.bf16.msra.mxu0 0
      %1588 = vmatprep.subr.bf16.mxu0 0
      %1589 = vmatpush1.bf16.msra.mxu0 0
      %1590 = vmatprep.subr.bf16.mxu0 0
      %1591 = vmatpush1.bf16.msra.mxu0 0
      %1592 = vmatprep.subr.bf16.mxu0 0
      %1593 = vmatpush1.bf16.msra.mxu0 0
      %1594 = vmatprep.subr.bf16.mxu0 0
      %1595 = vmatpush1.bf16.msra.mxu0 0
      %1596 = vmatprep.subr.bf16.mxu0 0
      %1597 = vmatpush1.bf16.msra.mxu0 0
      %1598 = vmatprep.subr.bf16.mxu0 0
      %1599 = vmatpush1.bf16.msra.mxu0 0
      %1600 = vmatprep.subr.bf16.mxu0 0
      %1601 = vmatpush1.bf16.msra.mxu0 0
      %1602 = vmatprep.subr.bf16.mxu0 0
      %1603 = vmatpush1.bf16.msra.mxu0 0
      %1604 = vmatprep.subr.bf16.mxu0 0
      %1605 = vmatpush1.bf16.msra.mxu0 0
      %1606 = vmatprep.subr.bf16.mxu0 0
      %1607 = vmatpush1.bf16.msra.mxu0 0
      %1608 = vmatprep.subr.bf16.mxu0 0
      %1609 = vmatpush1.bf16.msra.mxu0 0
      %1610 = vmatprep.mubr.bf16.mxu0 0
      %1611 = vmatmul.mubr.bf16.gmra.mrb[0].mxu0 %v1576
      %v1612 = vpop.f32.mrb[0].mxu0
      %v1613 = vadd.f32 %v1548, %v1612
      %v1614 = vpop.f32.mrb[0].mxu0
      %v1615 = vpop.f32.mrb[0].mxu0
      %v1616 = vpop.f32.mrb[0].mxu0
      %1617 = vdwg.mxu0
      %v1618 = vadd.f32 %v1436, %v1613
      %1619 = vst.msk [vmem:[%s577] sm:$0xff] %vm582, %v1618
      %p1620 = scmp.lt.s32.totalorder %s28, 1
      %s1621 = scalar_select %p1620, %s28, 1
      %s1622 = smul.addr %s1621, 8
      %s1623 = scalar_lea.vmem %s17, %s1622
      // Predicated region
      $region89: #{_lambda_.11} parent=87 // pred_check
        %p1624 = pneg %p418
      $region90: #{_lambda_.11} parent=87 // pred_check_branch
        %1626 = sbr.rel (%p1624) target = $region92
      $region91: #{_lambda_.11} parent=87 // pred_region
        _
      $region92: #{_lambda_.11} parent=87 // pred_fallthru
        _
    $region88: #{_lambda_.11} parent=5 // pred_fallthru
      _
    %p1627 = scmp.le.s32.totalorder 2, %s23
    // Predicated region
    $region93: #{_lambda_.11} parent=5 // pred_check
      %p1628 = pneg %p1627
    $region94: #{_lambda_.11} parent=5 // pred_check_branch
      %1630 = sbr.rel (%p1628) target = $region96
    $region95: #{_lambda_.11} parent=5 // pred_region
      %s1631 = ssub.s32 %s23, 2
      // Predicated region
      $region97: #{_lambda_.11} parent=95 // pred_check
        %p1632 = pneg %p424
      $region98: #{_lambda_.11} parent=95 // pred_check_branch
        %1634 = sbr.rel (%p1632) target = $region100
      $region99: #{_lambda_.11} parent=95 // pred_region
        %p1635 = scmp.lt.s32.totalorder %s29, 1
        %s1636 = scalar_select %p1635, %s29, 1
        %s1637 = smul.addr %s1636, 8
        %s1638 = scalar_lea.vmem %s17, %s1637
      $region100: #{_lambda_.11} parent=95 // pred_fallthru
        _
    $region96: #{_lambda_.11} parent=5 // pred_fallthru
      _
  $region6: #{_lambda_.11} parent=0 // loop_footer
    %s27 = sadd.s32 1, %s23
  $region7: #{_lambda_.11} parent=0 // loop_footer_branch
    %22 = sbr.rel target = $region3
  $region8: #{_lambda_.11} parent=0 // loop_exit
    _

// kernel: _lambda_.15
$region0: #{_lambda_.15}
  #allocation0 [shape = 'u32[]', space=smem, size = 0x4, offset = 0x4, fixed_abs, tag = 'smem constant byte address 0x4 - core index']
  #allocation1 [shape = 'u32[144,128]{1,0:T(1,128)}', space=vmem, size = 0x12000, scoped, tag = 'internal scratch']
  %s0 = inlined_call_operand.vmem [shape: f32[2,8,32], index: 0, kind: input, shape index: {}]
  %s1 = inlined_call_operand.vmem [shape: f32[2,12,32], index: 1, kind: input, shape index: {}]
  %s2 = inlined_call_operand.vmem [shape: f32[2,1,12], index: 2, kind: input, shape index: {}]
  %s3 = inlined_call_operand.vmem [shape: f32[1,32], index: 3, kind: input, shape index: {}]
  %s4 = inlined_call_operand.vmem [shape: f32[1,32], index: 4, kind: input, shape index: {}]
  %s5 = inlined_call_operand.vmem [shape: bf16[32,32], index: 5, kind: input, shape index: {}]
  %s6 = inlined_call_operand.vmem [shape: f32[1,32], index: 6, kind: input, shape index: {}]
  %s7 = inlined_call_operand.vmem [shape: bf16[32,64], index: 7, kind: input, shape index: {}]
  %s8 = inlined_call_operand.vmem [shape: f32[1,64], index: 8, kind: input, shape index: {}]
  %s9 = inlined_call_operand.vmem [shape: bf16[4,8,32], index: 9, kind: input, shape index: {}]
  %s10 = inlined_call_operand.vmem [shape: f32[1,32], index: 10, kind: input, shape index: {}]
  %s11 = inlined_call_operand.vmem [shape: f32[1,32], index: 11, kind: input, shape index: {}]
  %s12 = inlined_call_operand.vmem [shape: f32[1,32], index: 12, kind: input, shape index: {}]
  %s13 = inlined_call_operand.vmem [shape: bf16[32,64], index: 13, kind: input, shape index: {}]
  %s14 = inlined_call_operand.vmem [shape: f32[1,64], index: 14, kind: input, shape index: {}]
  %s15 = inlined_call_operand.vmem [shape: bf16[64,32], index: 15, kind: input, shape index: {}]
  %s16 = inlined_call_operand.vmem [shape: f32[1,32], index: 16, kind: input, shape index: {}]
  %s17 = inlined_call_operand.hbm [shape: f32[2,8,32], index: 17, kind: output, shape index: {}]
  %s18 = sld [smem:[#allocation0]]
  $region101: #{_lambda_.15} parent=0
    _
  %s20 = ssub.s32 1, %s18
  %s21 = scalar_select 0, %s20, %s18
  $region1: #{_lambda_.15} parent=0
    #allocation2 [shape = 'u8[8192]{0}', space=vmem, size = 0x2000, scoped, tag = 'output window, operand 0']
    #allocation3 [shape = 's32[2]{0}', space=sflag, size = 0x8, scoped, tag = 'scoped memory for _lambda_.15']
    %22 = vsyncpa [#allocation3], 0
    %s23 = scalar_lea.sflag [#allocation3], 1
    %24 = vsyncpa %s23, 0
    loop: start=0, step=1, limit=4
    $region2: #{_lambda_.15} parent=1 // loop_pre_header
      _
    $region3: #{_lambda_.15} parent=1 // loop_header
      %s26 = sphi 0, %s30
      %p27 = scmp.ge.s32.totalorder %s26, 4
      %s36 = sphi 0, %s38
      %s39 = sphi 0, %s36
      %s40 = sphi 0, %s39
      %s56 = sphi 0, %s40
      %s62 = sphi 0, %s64
      %s65 = sphi 0, %s62
      %s66 = sphi 0, %s65
      %s82 = sphi 0, %s66
      %s88 = sphi 0, %s90
      %s91 = sphi 0, %s88
      %s92 = sphi 0, %s91
      %s108 = sphi 0, %s92
      %s112 = sphi 0, %s112
      %s114 = sphi 0, %s112
      %s115 = sphi 0, %s114
      %s129 = sphi 0, %s115
      %s133 = sphi 0, %s133
      %s135 = sphi 0, %s133
      %s136 = sphi 0, %s135
      %s150 = sphi 0, %s136
      %s154 = sphi 0, %s154
      %s156 = sphi 0, %s154
      %s157 = sphi 0, %s156
      %s171 = sphi 0, %s157
      %s175 = sphi 0, %s175
      %s177 = sphi 0, %s175
      %s178 = sphi 0, %s177
      %s192 = sphi 0, %s178
      %s196 = sphi 0, %s196
      %s198 = sphi 0, %s196
      %s199 = sphi 0, %s198
      %s213 = sphi 0, %s199
      %s217 = sphi 0, %s217
      %s219 = sphi 0, %s217
      %s220 = sphi 0, %s219
      %s234 = sphi 0, %s220
      %s238 = sphi 0, %s238
      %s240 = sphi 0, %s238
      %s241 = sphi 0, %s240
      %s255 = sphi 0, %s241
      %s259 = sphi 0, %s259
      %s261 = sphi 0, %s259
      %s262 = sphi 0, %s261
      %s276 = sphi 0, %s262
      %s280 = sphi 0, %s280
      %s282 = sphi 0, %s280
      %s283 = sphi 0, %s282
      %s297 = sphi 0, %s283
      %s301 = sphi 0, %s301
      %s303 = sphi 0, %s301
      %s304 = sphi 0, %s303
      %s318 = sphi 0, %s304
      %s322 = sphi 0, %s322
      %s324 = sphi 0, %s322
      %s325 = sphi 0, %s324
      %s339 = sphi 0, %s325
      %s343 = sphi 0, %s343
      %s345 = sphi 0, %s343
      %s346 = sphi 0, %s345
      %s360 = sphi 0, %s346
      %s364 = sphi 0, %s364
      %s366 = sphi 0, %s364
      %s367 = sphi 0, %s366
      %s381 = sphi 0, %s367
      %s385 = sphi 0, %s385
      %s387 = sphi 0, %s385
      %s388 = sphi 0, %s387
      %s402 = sphi 0, %s388
      %s408 = sphi 0, %s410
      %s411 = sphi 0, %s408
      %s412 = sphi 0, %s411
      %s428 = sphi 0, %s412
    $region4: #{_lambda_.15} parent=1 // loop_header_branch
      %29 = sbr.rel (%p27) target = $region8
    $region5: #{_lambda_.15} parent=1 // loop_body
      %s31 = ssub.s32 %s26, 1
      %s32 = ssub.s32 %s26, 2
      %s33 = sadd.s32 %s26, 1
      %s34 = ssub.s32 %s26, %s33
      %p35 = scmp.eq.s32.totalorder %s34, 0
      %s37 = sadd.s32 %s36, 1
      %s38 = scalar_select %p35, %s36, %s37
      %p41 = pneg %p35
      %p42 = scmp.eq.s32.totalorder %s26, 1
      %p43 = por %p41, %p42
      %p44 = scmp.ne.s32.totalorder %s36, %s39
      %p45 = scmp.eq.s32.totalorder %s26, 0
      %p46 = por %p44, %p45
      %p47 = scmp.ne.s32.totalorder %s36, %s39
      %p48 = scmp.eq.s32.totalorder %s31, 1
      %p49 = por %p47, %p48
      %p50 = scmp.ne.s32.totalorder %s39, %s40
      %p51 = scmp.eq.s32.totalorder %s31, 0
      %p52 = por %p50, %p51
      %p53 = scmp.ne.s32.totalorder %s39, %s40
      %p54 = scmp.eq.s32.totalorder %s32, 1
      %p55 = por %p53, %p54
      %p57 = scmp.ne.s32.totalorder %s40, %s56
      %p58 = scmp.eq.s32.totalorder %s32, 0
      %p59 = por %p57, %p58
      %s60 = ssub.s32 %s26, %s33
      %p61 = scmp.eq.s32.totalorder %s60, 0
      %s63 = sadd.s32 %s62, 1
      %s64 = scalar_select %p61, %s62, %s63
      %p67 = pneg %p61
      %p68 = scmp.eq.s32.totalorder %s26, 1
      %p69 = por %p67, %p68
      %p70 = scmp.ne.s32.totalorder %s62, %s65
      %p71 = scmp.eq.s32.totalorder %s26, 0
      %p72 = por %p70, %p71
      %p73 = scmp.ne.s32.totalorder %s62, %s65
      %p74 = scmp.eq.s32.totalorder %s31, 1
      %p75 = por %p73, %p74
      %p76 = scmp.ne.s32.totalorder %s65, %s66
      %p77 = scmp.eq.s32.totalorder %s31, 0
      %p78 = por %p76, %p77
      %p79 = scmp.ne.s32.totalorder %s65, %s66
      %p80 = scmp.eq.s32.totalorder %s32, 1
      %p81 = por %p79, %p80
      %p83 = scmp.ne.s32.totalorder %s66, %s82
      %p84 = scmp.eq.s32.totalorder %s32, 0
      %p85 = por %p83, %p84
      %s86 = ssub.s32 %s26, %s33
      %p87 = scmp.eq.s32.totalorder %s86, 0
      %s89 = sadd.s32 %s88, 1
      %s90 = scalar_select %p87, %s88, %s89
      %p93 = pneg %p87
      %p94 = scmp.eq.s32.totalorder %s26, 1
      %p95 = por %p93, %p94
      %p96 = scmp.ne.s32.totalorder %s88, %s91
      %p97 = scmp.eq.s32.totalorder %s26, 0
      %p98 = por %p96, %p97
      %p99 = scmp.ne.s32.totalorder %s88, %s91
      %p100 = scmp.eq.s32.totalorder %s31, 1
      %p101 = por %p99, %p100
      %p102 = scmp.ne.s32.totalorder %s91, %s92
      %p103 = scmp.eq.s32.totalorder %s31, 0
      %p104 = por %p102, %p103
      %p105 = scmp.ne.s32.totalorder %s91, %s92
      %p106 = scmp.eq.s32.totalorder %s32, 1
      %p107 = por %p105, %p106
      %p109 = scmp.ne.s32.totalorder %s92, %s108
      %p110 = scmp.eq.s32.totalorder %s32, 0
      %p111 = por %p109, %p110
      %s113 = sadd.s32 %s112, 1
      %p116 = scmp.eq.s32.totalorder %s26, 1
      %p117 = scmp.ne.s32.totalorder %s112, %s114
      %p118 = scmp.eq.s32.totalorder %s26, 0
      %p119 = por %p117, %p118
      %p120 = scmp.ne.s32.totalorder %s112, %s114
      %p121 = scmp.eq.s32.totalorder %s31, 1
      %p122 = por %p120, %p121
      %p123 = scmp.ne.s32.totalorder %s114, %s115
      %p124 = scmp.eq.s32.totalorder %s31, 0
      %p125 = por %p123, %p124
      %p126 = scmp.ne.s32.totalorder %s114, %s115
      %p127 = scmp.eq.s32.totalorder %s32, 1
      %p128 = por %p126, %p127
      %p130 = scmp.ne.s32.totalorder %s115, %s129
      %p131 = scmp.eq.s32.totalorder %s32, 0
      %p132 = por %p130, %p131
      %s134 = sadd.s32 %s133, 1
      %p137 = scmp.eq.s32.totalorder %s26, 1
      %p138 = scmp.ne.s32.totalorder %s133, %s135
      %p139 = scmp.eq.s32.totalorder %s26, 0
      %p140 = por %p138, %p139
      %p141 = scmp.ne.s32.totalorder %s133, %s135
      %p142 = scmp.eq.s32.totalorder %s31, 1
      %p143 = por %p141, %p142
      %p144 = scmp.ne.s32.totalorder %s135, %s136
      %p145 = scmp.eq.s32.totalorder %s31, 0
      %p146 = por %p144, %p145
      %p147 = scmp.ne.s32.totalorder %s135, %s136
      %p148 = scmp.eq.s32.totalorder %s32, 1
      %p149 = por %p147, %p148
      %p151 = scmp.ne.s32.totalorder %s136, %s150
      %p152 = scmp.eq.s32.totalorder %s32, 0
      %p153 = por %p151, %p152
      %s155 = sadd.s32 %s154, 1
      %p158 = scmp.eq.s32.totalorder %s26, 1
      %p159 = scmp.ne.s32.totalorder %s154, %s156
      %p160 = scmp.eq.s32.totalorder %s26, 0
      %p161 = por %p159, %p160
      %p162 = scmp.ne.s32.totalorder %s154, %s156
      %p163 = scmp.eq.s32.totalorder %s31, 1
      %p164 = por %p162, %p163
      %p165 = scmp.ne.s32.totalorder %s156, %s157
      %p166 = scmp.eq.s32.totalorder %s31, 0
      %p167 = por %p165, %p166
      %p168 = scmp.ne.s32.totalorder %s156, %s157
      %p169 = scmp.eq.s32.totalorder %s32, 1
      %p170 = por %p168, %p169
      %p172 = scmp.ne.s32.totalorder %s157, %s171
      %p173 = scmp.eq.s32.totalorder %s32, 0
      %p174 = por %p172, %p173
      %s176 = sadd.s32 %s175, 1
      %p179 = scmp.eq.s32.totalorder %s26, 1
      %p180 = scmp.ne.s32.totalorder %s175, %s177
      %p181 = scmp.eq.s32.totalorder %s26, 0
      %p182 = por %p180, %p181
      %p183 = scmp.ne.s32.totalorder %s175, %s177
      %p184 = scmp.eq.s32.totalorder %s31, 1
      %p185 = por %p183, %p184
      %p186 = scmp.ne.s32.totalorder %s177, %s178
      %p187 = scmp.eq.s32.totalorder %s31, 0
      %p188 = por %p186, %p187
      %p189 = scmp.ne.s32.totalorder %s177, %s178
      %p190 = scmp.eq.s32.totalorder %s32, 1
      %p191 = por %p189, %p190
      %p193 = scmp.ne.s32.totalorder %s178, %s192
      %p194 = scmp.eq.s32.totalorder %s32, 0
      %p195 = por %p193, %p194
      %s197 = sadd.s32 %s196, 1
      %p200 = scmp.eq.s32.totalorder %s26, 1
      %p201 = scmp.ne.s32.totalorder %s196, %s198
      %p202 = scmp.eq.s32.totalorder %s26, 0
      %p203 = por %p201, %p202
      %p204 = scmp.ne.s32.totalorder %s196, %s198
      %p205 = scmp.eq.s32.totalorder %s31, 1
      %p206 = por %p204, %p205
      %p207 = scmp.ne.s32.totalorder %s198, %s199
      %p208 = scmp.eq.s32.totalorder %s31, 0
      %p209 = por %p207, %p208
      %p210 = scmp.ne.s32.totalorder %s198, %s199
      %p211 = scmp.eq.s32.totalorder %s32, 1
      %p212 = por %p210, %p211
      %p214 = scmp.ne.s32.totalorder %s199, %s213
      %p215 = scmp.eq.s32.totalorder %s32, 0
      %p216 = por %p214, %p215
      %s218 = sadd.s32 %s217, 1
      %p221 = scmp.eq.s32.totalorder %s26, 1
      %p222 = scmp.ne.s32.totalorder %s217, %s219
      %p223 = scmp.eq.s32.totalorder %s26, 0
      %p224 = por %p222, %p223
      %p225 = scmp.ne.s32.totalorder %s217, %s219
      %p226 = scmp.eq.s32.totalorder %s31, 1
      %p227 = por %p225, %p226
      %p228 = scmp.ne.s32.totalorder %s219, %s220
      %p229 = scmp.eq.s32.totalorder %s31, 0
      %p230 = por %p228, %p229
      %p231 = scmp.ne.s32.totalorder %s219, %s220
      %p232 = scmp.eq.s32.totalorder %s32, 1
      %p233 = por %p231, %p232
      %p235 = scmp.ne.s32.totalorder %s220, %s234
      %p236 = scmp.eq.s32.totalorder %s32, 0
      %p237 = por %p235, %p236
      %s239 = sadd.s32 %s238, 1
      %p242 = scmp.eq.s32.totalorder %s26, 1
      %p243 = scmp.ne.s32.totalorder %s238, %s240
      %p244 = scmp.eq.s32.totalorder %s26, 0
      %p245 = por %p243, %p244
      %p246 = scmp.ne.s32.totalorder %s238, %s240
      %p247 = scmp.eq.s32.totalorder %s31, 1
      %p248 = por %p246, %p247
      %p249 = scmp.ne.s32.totalorder %s240, %s241
      %p250 = scmp.eq.s32.totalorder %s31, 0
      %p251 = por %p249, %p250
      %p252 = scmp.ne.s32.totalorder %s240, %s241
      %p253 = scmp.eq.s32.totalorder %s32, 1
      %p254 = por %p252, %p253
      %p256 = scmp.ne.s32.totalorder %s241, %s255
      %p257 = scmp.eq.s32.totalorder %s32, 0
      %p258 = por %p256, %p257
      %s260 = sadd.s32 %s259, 1
      %p263 = scmp.eq.s32.totalorder %s26, 1
      %p264 = scmp.ne.s32.totalorder %s259, %s261
      %p265 = scmp.eq.s32.totalorder %s26, 0
      %p266 = por %p264, %p265
      %p267 = scmp.ne.s32.totalorder %s259, %s261
      %p268 = scmp.eq.s32.totalorder %s31, 1
      %p269 = por %p267, %p268
      %p270 = scmp.ne.s32.totalorder %s261, %s262
      %p271 = scmp.eq.s32.totalorder %s31, 0
      %p272 = por %p270, %p271
      %p273 = scmp.ne.s32.totalorder %s261, %s262
      %p274 = scmp.eq.s32.totalorder %s32, 1
      %p275 = por %p273, %p274
      %p277 = scmp.ne.s32.totalorder %s262, %s276
      %p278 = scmp.eq.s32.totalorder %s32, 0
      %p279 = por %p277, %p278
      %s281 = sadd.s32 %s280, 1
      %p284 = scmp.eq.s32.totalorder %s26, 1
      %p285 = scmp.ne.s32.totalorder %s280, %s282
      %p286 = scmp.eq.s32.totalorder %s26, 0
      %p287 = por %p285, %p286
      %p288 = scmp.ne.s32.totalorder %s280, %s282
      %p289 = scmp.eq.s32.totalorder %s31, 1
      %p290 = por %p288, %p289
      %p291 = scmp.ne.s32.totalorder %s282, %s283
      %p292 = scmp.eq.s32.totalorder %s31, 0
      %p293 = por %p291, %p292
      %p294 = scmp.ne.s32.totalorder %s282, %s283
      %p295 = scmp.eq.s32.totalorder %s32, 1
      %p296 = por %p294, %p295
      %p298 = scmp.ne.s32.totalorder %s283, %s297
      %p299 = scmp.eq.s32.totalorder %s32, 0
      %p300 = por %p298, %p299
      %s302 = sadd.s32 %s301, 1
      %p305 = scmp.eq.s32.totalorder %s26, 1
      %p306 = scmp.ne.s32.totalorder %s301, %s303
      %p307 = scmp.eq.s32.totalorder %s26, 0
      %p308 = por %p306, %p307
      %p309 = scmp.ne.s32.totalorder %s301, %s303
      %p310 = scmp.eq.s32.totalorder %s31, 1
      %p311 = por %p309, %p310
      %p312 = scmp.ne.s32.totalorder %s303, %s304
      %p313 = scmp.eq.s32.totalorder %s31, 0
      %p314 = por %p312, %p313
      %p315 = scmp.ne.s32.totalorder %s303, %s304
      %p316 = scmp.eq.s32.totalorder %s32, 1
      %p317 = por %p315, %p316
      %p319 = scmp.ne.s32.totalorder %s304, %s318
      %p320 = scmp.eq.s32.totalorder %s32, 0
      %p321 = por %p319, %p320
      %s323 = sadd.s32 %s322, 1
      %p326 = scmp.eq.s32.totalorder %s26, 1
      %p327 = scmp.ne.s32.totalorder %s322, %s324
      %p328 = scmp.eq.s32.totalorder %s26, 0
      %p329 = por %p327, %p328
      %p330 = scmp.ne.s32.totalorder %s322, %s324
      %p331 = scmp.eq.s32.totalorder %s31, 1
      %p332 = por %p330, %p331
      %p333 = scmp.ne.s32.totalorder %s324, %s325
      %p334 = scmp.eq.s32.totalorder %s31, 0
      %p335 = por %p333, %p334
      %p336 = scmp.ne.s32.totalorder %s324, %s325
      %p337 = scmp.eq.s32.totalorder %s32, 1
      %p338 = por %p336, %p337
      %p340 = scmp.ne.s32.totalorder %s325, %s339
      %p341 = scmp.eq.s32.totalorder %s32, 0
      %p342 = por %p340, %p341
      %s344 = sadd.s32 %s343, 1
      %p347 = scmp.eq.s32.totalorder %s26, 1
      %p348 = scmp.ne.s32.totalorder %s343, %s345
      %p349 = scmp.eq.s32.totalorder %s26, 0
      %p350 = por %p348, %p349
      %p351 = scmp.ne.s32.totalorder %s343, %s345
      %p352 = scmp.eq.s32.totalorder %s31, 1
      %p353 = por %p351, %p352
      %p354 = scmp.ne.s32.totalorder %s345, %s346
      %p355 = scmp.eq.s32.totalorder %s31, 0
      %p356 = por %p354, %p355
      %p357 = scmp.ne.s32.totalorder %s345, %s346
      %p358 = scmp.eq.s32.totalorder %s32, 1
      %p359 = por %p357, %p358
      %p361 = scmp.ne.s32.totalorder %s346, %s360
      %p362 = scmp.eq.s32.totalorder %s32, 0
      %p363 = por %p361, %p362
      %s365 = sadd.s32 %s364, 1
      %p368 = scmp.eq.s32.totalorder %s26, 1
      %p369 = scmp.ne.s32.totalorder %s364, %s366
      %p370 = scmp.eq.s32.totalorder %s26, 0
      %p371 = por %p369, %p370
      %p372 = scmp.ne.s32.totalorder %s364, %s366
      %p373 = scmp.eq.s32.totalorder %s31, 1
      %p374 = por %p372, %p373
      %p375 = scmp.ne.s32.totalorder %s366, %s367
      %p376 = scmp.eq.s32.totalorder %s31, 0
      %p377 = por %p375, %p376
      %p378 = scmp.ne.s32.totalorder %s366, %s367
      %p379 = scmp.eq.s32.totalorder %s32, 1
      %p380 = por %p378, %p379
      %p382 = scmp.ne.s32.totalorder %s367, %s381
      %p383 = scmp.eq.s32.totalorder %s32, 0
      %p384 = por %p382, %p383
      %s386 = sadd.s32 %s385, 1
      %p389 = scmp.eq.s32.totalorder %s26, 1
      %p390 = scmp.ne.s32.totalorder %s385, %s387
      %p391 = scmp.eq.s32.totalorder %s26, 0
      %p392 = por %p390, %p391
      %p393 = scmp.ne.s32.totalorder %s385, %s387
      %p394 = scmp.eq.s32.totalorder %s31, 1
      %p395 = por %p393, %p394
      %p396 = scmp.ne.s32.totalorder %s387, %s388
      %p397 = scmp.eq.s32.totalorder %s31, 0
      %p398 = por %p396, %p397
      %p399 = scmp.ne.s32.totalorder %s387, %s388
      %p400 = scmp.eq.s32.totalorder %s32, 1
      %p401 = por %p399, %p400
      %p403 = scmp.ne.s32.totalorder %s388, %s402
      %p404 = scmp.eq.s32.totalorder %s32, 0
      %p405 = por %p403, %p404
      %s406 = ssub.s32 %s26, %s33
      %p407 = scmp.eq.s32.totalorder %s406, 0
      %s409 = sadd.s32 %s408, 1
      %s410 = scalar_select %p407, %s408, %s409
      %p413 = pneg %p407
      %p414 = scmp.eq.s32.totalorder %s26, 1
      %p415 = por %p413, %p414
      %p416 = scmp.ne.s32.totalorder %s408, %s411
      %p417 = scmp.eq.s32.totalorder %s26, 0
      %p418 = por %p416, %p417
      %p419 = scmp.ne.s32.totalorder %s408, %s411
      %p420 = scmp.eq.s32.totalorder %s31, 1
      %p421 = por %p419, %p420
      %p422 = scmp.ne.s32.totalorder %s411, %s412
      %p423 = scmp.eq.s32.totalorder %s31, 0
      %p424 = por %p422, %p423
      %p425 = scmp.ne.s32.totalorder %s411, %s412
      %p426 = scmp.eq.s32.totalorder %s32, 1
      %p427 = por %p425, %p426
      %p429 = scmp.ne.s32.totalorder %s412, %s428
      %p430 = scmp.eq.s32.totalorder %s32, 0
      %p431 = por %p429, %p430
      %p432 = scmp.le.s32.totalorder 1, %s26
      %p433 = scmp.lt.s32.totalorder %s26, 3
      %p434 = pnand %p432, %p433
      %p435 = pneg %p434
      // Predicated region
      $region9: #{_lambda_.15} parent=5 // pred_check
        _
      $region10: #{_lambda_.15} parent=5 // pred_check_branch
        %437 = sbr.rel (%p434) target = $region12
      $region11: #{_lambda_.15} parent=5 // pred_region
        %s438 = ssub.s32 %s26, 1
        // Predicated region
        $region13: #{_lambda_.15} parent=11 // pred_check
          %p439 = pneg %p125
        $region14: #{_lambda_.15} parent=11 // pred_check_branch
          %441 = sbr.rel (%p439) target = $region16
        $region15: #{_lambda_.15} parent=11 // pred_region
          _
        $region16: #{_lambda_.15} parent=11 // pred_fallthru
          _
        // Predicated region
        $region17: #{_lambda_.15} parent=11 // pred_check
          %p442 = pneg %p146
        $region18: #{_lambda_.15} parent=11 // pred_check_branch
          %444 = sbr.rel (%p442) target = $region20
        $region19: #{_lambda_.15} parent=11 // pred_region
          _
        $region20: #{_lambda_.15} parent=11 // pred_fallthru
          _
        // Predicated region
        $region21: #{_lambda_.15} parent=11 // pred_check
          %p445 = pneg %p167
        $region22: #{_lambda_.15} parent=11 // pred_check_branch
          %447 = sbr.rel (%p445) target = $region24
        $region23: #{_lambda_.15} parent=11 // pred_region
          _
        $region24: #{_lambda_.15} parent=11 // pred_fallthru
          _
        // Predicated region
        $region25: #{_lambda_.15} parent=11 // pred_check
          %p448 = pneg %p188
        $region26: #{_lambda_.15} parent=11 // pred_check_branch
          %450 = sbr.rel (%p448) target = $region28
        $region27: #{_lambda_.15} parent=11 // pred_region
          _
        $region28: #{_lambda_.15} parent=11 // pred_fallthru
          _
        // Predicated region
        $region29: #{_lambda_.15} parent=11 // pred_check
          %p451 = pneg %p209
        $region30: #{_lambda_.15} parent=11 // pred_check_branch
          %453 = sbr.rel (%p451) target = $region32
        $region31: #{_lambda_.15} parent=11 // pred_region
          _
        $region32: #{_lambda_.15} parent=11 // pred_fallthru
          _
        // Predicated region
        $region33: #{_lambda_.15} parent=11 // pred_check
          %p454 = pneg %p230
        $region34: #{_lambda_.15} parent=11 // pred_check_branch
          %456 = sbr.rel (%p454) target = $region36
        $region35: #{_lambda_.15} parent=11 // pred_region
          _
        $region36: #{_lambda_.15} parent=11 // pred_fallthru
          _
        // Predicated region
        $region37: #{_lambda_.15} parent=11 // pred_check
          %p457 = pneg %p251
        $region38: #{_lambda_.15} parent=11 // pred_check_branch
          %459 = sbr.rel (%p457) target = $region40
        $region39: #{_lambda_.15} parent=11 // pred_region
          _
        $region40: #{_lambda_.15} parent=11 // pred_fallthru
          _
        // Predicated region
        $region41: #{_lambda_.15} parent=11 // pred_check
          %p460 = pneg %p272
        $region42: #{_lambda_.15} parent=11 // pred_check_branch
          %462 = sbr.rel (%p460) target = $region44
        $region43: #{_lambda_.15} parent=11 // pred_region
          _
        $region44: #{_lambda_.15} parent=11 // pred_fallthru
          _
        // Predicated region
        $region45: #{_lambda_.15} parent=11 // pred_check
          %p463 = pneg %p293
        $region46: #{_lambda_.15} parent=11 // pred_check_branch
          %465 = sbr.rel (%p463) target = $region48
        $region47: #{_lambda_.15} parent=11 // pred_region
          _
        $region48: #{_lambda_.15} parent=11 // pred_fallthru
          _
        // Predicated region
        $region49: #{_lambda_.15} parent=11 // pred_check
          %p466 = pneg %p314
        $region50: #{_lambda_.15} parent=11 // pred_check_branch
          %468 = sbr.rel (%p466) target = $region52
        $region51: #{_lambda_.15} parent=11 // pred_region
          _
        $region52: #{_lambda_.15} parent=11 // pred_fallthru
          _
        // Predicated region
        $region53: #{_lambda_.15} parent=11 // pred_check
          %p469 = pneg %p335
        $region54: #{_lambda_.15} parent=11 // pred_check_branch
          %471 = sbr.rel (%p469) target = $region56
        $region55: #{_lambda_.15} parent=11 // pred_region
          _
        $region56: #{_lambda_.15} parent=11 // pred_fallthru
          _
        // Predicated region
        $region57: #{_lambda_.15} parent=11 // pred_check
          %p472 = pneg %p356
        $region58: #{_lambda_.15} parent=11 // pred_check_branch
          %474 = sbr.rel (%p472) target = $region60
        $region59: #{_lambda_.15} parent=11 // pred_region
          _
        $region60: #{_lambda_.15} parent=11 // pred_fallthru
          _
        // Predicated region
        $region61: #{_lambda_.15} parent=11 // pred_check
          %p475 = pneg %p377
        $region62: #{_lambda_.15} parent=11 // pred_check_branch
          %477 = sbr.rel (%p475) target = $region64
        $region63: #{_lambda_.15} parent=11 // pred_region
          _
        $region64: #{_lambda_.15} parent=11 // pred_fallthru
          _
        // Predicated region
        $region65: #{_lambda_.15} parent=11 // pred_check
          %p478 = pneg %p398
        $region66: #{_lambda_.15} parent=11 // pred_check_branch
          %480 = sbr.rel (%p478) target = $region68
        $region67: #{_lambda_.15} parent=11 // pred_region
          _
        $region68: #{_lambda_.15} parent=11 // pred_fallthru
          _
      $region12: #{_lambda_.15} parent=5 // pred_fallthru
        _
      %p481 = scmp.lt.s32.totalorder %s26, 2
      // Predicated region
      $region69: #{_lambda_.15} parent=5 // pred_check
        %p482 = pneg %p481
      $region70: #{_lambda_.15} parent=5 // pred_check_branch
        %484 = sbr.rel (%p482) target = $region72
      $region71: #{_lambda_.15} parent=5 // pred_region
        // Predicated region
        $region73: #{_lambda_.15} parent=71 // pred_check
          %p485 = pneg %p46
        $region74: #{_lambda_.15} parent=71 // pred_check_branch
          %487 = sbr.rel (%p485) target = $region76
        $region75: #{_lambda_.15} parent=71 // pred_region
          %p488 = scmp.lt.s32.totalorder %s26, 1
          %s489 = scalar_select %p488, %s26, 1
          %s490 = smul.addr %s489, 8
          %s491 = scalar_lea.vmem %s0, %s490
        $region76: #{_lambda_.15} parent=71 // pred_fallthru
          _
        // Predicated region
        $region77: #{_lambda_.15} parent=71 // pred_check
          %p492 = pneg %p72
        $region78: #{_lambda_.15} parent=71 // pred_check_branch
          %494 = sbr.rel (%p492) target = $region80
        $region79: #{_lambda_.15} parent=71 // pred_region
          %p495 = scmp.lt.s32.totalorder %s26, 1
          %s496 = scalar_select %p495, %s26, 1
          %s497 = smul.addr %s496, 2
          %s498 = smul.addr %s497, 8
          %s499 = scalar_lea.vmem %s1, %s498
        $region80: #{_lambda_.15} parent=71 // pred_fallthru
          _
        // Predicated region
        $region81: #{_lambda_.15} parent=71 // pred_check
          %p500 = pneg %p98
        $region82: #{_lambda_.15} parent=71 // pred_check_branch
          %502 = sbr.rel (%p500) target = $region84
        $region83: #{_lambda_.15} parent=71 // pred_region
          %p503 = scmp.lt.s32.totalorder %s26, 1
          %s504 = scalar_select %p503, %s26, 1
          %s505 = scalar_lea.vmem %s2, %s504
        $region84: #{_lambda_.15} parent=71 // pred_fallthru
          _
      $region72: #{_lambda_.15} parent=5 // pred_fallthru
        _
      %p506 = scmp.le.s32.totalorder 1, %s26
      %p507 = scmp.lt.s32.totalorder %s26, 3
      %p508 = pnand %p506, %p507
      %p509 = pneg %p508
      // Predicated region
      $region85: #{_lambda_.15} parent=5 // pred_check
        _
      $region86: #{_lambda_.15} parent=5 // pred_check_branch
        %511 = sbr.rel (%p508) target = $region88
      $region87: #{_lambda_.15} parent=5 // pred_region
        %s512 = ssub.s32 %s26, 1
        %p513 = scmp.lt.s32.totalorder %s31, 1
        %s514 = scalar_select %p513, %s31, 1
        %s515 = smul.addr %s514, 8
        %s516 = scalar_lea.vmem %s0, %s515
        %p517 = pneg %p52
        %p518 = pneg %p49
        %p519 = scmp.lt.s32.totalorder %s31, 1
        %s520 = scalar_select %p519, %s31, 1
        %s521 = smul.addr %s520, 2
        %s522 = smul.addr %s521, 8
        %s523 = scalar_lea.vmem %s1, %s522
        %p524 = pneg %p78
        %p525 = pneg %p75
        %p526 = scmp.lt.s32.totalorder %s31, 1
        %s527 = scalar_select %p526, %s31, 1
        %s528 = scalar_lea.vmem %s2, %s527
        %p529 = pneg %p104
        %p530 = pneg %p101
        %p531 = pneg %p125
        %p532 = pneg %p122
        %p533 = pneg %p146
        %p534 = pneg %p143
        %p535 = pneg %p167
        %p536 = pneg %p164
        %p537 = pneg %p188
        %p538 = pneg %p185
        %p539 = pneg %p209
        %p540 = pneg %p206
        %p541 = pneg %p230
        %p542 = pneg %p227
        %p543 = pneg %p251
        %p544 = pneg %p248
        %p545 = pneg %p272
        %p546 = pneg %p269
        %p547 = pneg %p293
        %p548 = pneg %p290
        %p549 = pneg %p314
        %p550 = pneg %p311
        %p551 = pneg %p335
        %p552 = pneg %p332
        %p553 = pneg %p356
        %p554 = pneg %p353
        %p555 = pneg %p377
        %p556 = pneg %p374
        %p557 = pneg %p398
        %p558 = pneg %p395
        %p559 = pneg %p424
        %p560 = pneg %p421
        %s561 = sand.u32 %s411, 1
        %s562 = scalar_lea.sflag [#allocation3], %s561
        %s563 = sand.u32 %s411, 1
        %s564 = smul.addr %s563, 8
        %s565 = scalar_lea.vmem [#allocation2], %s564
        %p566 = scmp.lt.s32.totalorder %s31, 1
        %s567 = scalar_select %p566, %s31, 1
        %s568 = smul.addr %s567, 8
        %s569 = scalar_lea.vmem %s0, %s568
        %p570 = scmp.lt.s32.totalorder %s31, 1
        %s571 = scalar_select %p570, %s31, 1
        %s572 = smul.addr %s571, 2
        %s573 = smul.addr %s572, 8
        %s574 = scalar_lea.vmem %s1, %s573
        %p575 = scmp.lt.s32.totalorder %s31, 1
        %s576 = scalar_select %p575, %s31, 1
        %s577 = scalar_lea.vmem %s2, %s576
        %v579 = vld [vmem:[%s569] sm:$0xff]
        %v580 = vld [vmem:[%s3] sm:$0x1]
        %v581 = vld [vmem:[%s4] sm:$0x1]
        %vm582 = vcmask 261120
        %v583 = vsel %vm582, %v579, 0.0
        %584 = vadd.xlane.f32.xlu0 %v583
        %v585 = vpop.xlane.xlu0 %584
        %v586 = vrcp.pop 32.0
        %v587 = vmul.f32 %v585, %v586
        %v588 = vsub.f32 %v579, %v587
        %v589 = vmul.f32 %v588, %v588
        %v590 = vsel %vm582, %v589, 0.0
        %591 = vadd.xlane.f32.xlu0 %v590
        %v592 = vpop.xlane.xlu0 %591
        %v593 = vmul.f32 %v592, %v586
        %v594 = vadd.f32 %v593, 1e-05
        %v595 = vrsqrt.pop %v594
        %v596 = vmul.f32 %v588, %v595
        %v598 = vlaneseq
        %v599 = vshrl.u32 %v598, 7
        %v600 = vsub.s32 0, %v599
        %v601 = vrot.slane %v580, %v600
        %v603 = vmul.f32 %v596, %v601
        %v605 = vlaneseq
        %v606 = vshrl.u32 %v605, 7
        %v607 = vsub.s32 0, %v606
        %v608 = vrot.slane %v581, %v607
        %v610 = vadd.f32 %v603, %v608
        %v611 = vpack.c.bf16 %v610, %v610
        %v612 = vld [vmem:[%s574] sm:$0xff]
        %v613 = vld [vmem:[%s574 + $0x8] sm:$0xf]
        %v614 = vpack.c.bf16 %v613, %v612
        %v615 = vld [vmem:[%s577] sm:$0x1]
        %v616 = vld [vmem:[%s5] sm:$0xf]
        %v617 = vld [vmem:[%s5 + $0x4] sm:$0xf]
        %v618 = vld [vmem:[%s5 + $0x8] sm:$0xf]
        %v619 = vld [vmem:[%s5 + $0xc] sm:$0xf]
        %v620 = vld [vmem:[%s6] sm:$0x1]
        %v621 = vld [vmem:[%s7] sm:$0xf]
        %v622 = vld [vmem:[%s7 + $0x4] sm:$0xf]
        %v623 = vld [vmem:[%s7 + $0x8] sm:$0xf]
        %v624 = vld [vmem:[%s7 + $0xc] sm:$0xf]
        %v625 = vld [vmem:[%s8] sm:$0x1]
        %v626 = vld [vmem:[%s9] sm:$0xf]
        %v627 = vld [vmem:[%s9 + $0x4] sm:$0xf]
        %v628 = vld [vmem:[%s9 + $0x8] sm:$0xf]
        %v629 = vld [vmem:[%s9 + $0xc] sm:$0xf]
        %v630 = vld [vmem:[%s10] sm:$0x1]
        %v632 = vlaneseq
        %v633 = vshrl.u32 %v632, 7
        %v634 = vsub.s32 0, %v633
        %v635 = vrot.slane %v620, %v634
        %v641 = vunpack.c.l.b16 %v616
        %v642 = vunpack.c.l.b16 %v617
        %v643 = vunpack.c.l.b16 %v618
        %v644 = vunpack.c.l.b16 %v619
        %v645 = vpack.c.b16 %v642, %v641
        %v646 = vpack.c.b16 %v644, %v643
        %v650 = vsel %vm582, %v611, 0
        %652 = vmatprep.subr.bf16.mxu0 0
        %653 = vmatpush1.bf16.msra.mxu0 %v645
        %654 = vmatprep.subr.bf16.mxu0 0
        %655 = vmatpush1.bf16.msra.mxu0 %v646
        %656 = vmatprep.subr.bf16.mxu0 0
        %657 = vmatpush1.bf16.msra.mxu0 0
        %658 = vmatprep.subr.bf16.mxu0 0
        %659 = vmatpush1.bf16.msra.mxu0 0
        %660 = vmatprep.subr.bf16.mxu0 0
        %661 = vmatpush1.bf16.msra.mxu0 0
        %662 = vmatprep.subr.bf16.mxu0 0
        %663 = vmatpush1.bf16.msra.mxu0 0
        %664 = vmatprep.subr.bf16.mxu0 0
        %665 = vmatpush1.bf16.msra.mxu0 0
        %666 = vmatprep.subr.bf16.mxu0 0
        %667 = vmatpush1.bf16.msra.mxu0 0
        %668 = vmatprep.subr.bf16.mxu0 0
        %669 = vmatpush1.bf16.msra.mxu0 0
        %670 = vmatprep.subr.bf16.mxu0 0
        %671 = vmatpush1.bf16.msra.mxu0 0
        %672 = vmatprep.subr.bf16.mxu0 0
        %673 = vmatpush1.bf16.msra.mxu0 0
        %674 = vmatprep.subr.bf16.mxu0 0
        %675 = vmatpush1.bf16.msra.mxu0 0
        %676 = vmatprep.subr.bf16.mxu0 0
        %677 = vmatpush1.bf16.msra.mxu0 0
        %678 = vmatprep.subr.bf16.mxu0 0
        %679 = vmatpush1.bf16.msra.mxu0 0
        %680 = vmatprep.subr.bf16.mxu0 0
        %681 = vmatpush1.bf16.msra.mxu0 0
        %682 = vmatprep.subr.bf16.mxu0 0
        %683 = vmatpush1.bf16.msra.mxu0 0
        %684 = vmatprep.mubr.bf16.mxu0 0
        %685 = vmatmul.mubr.bf16.gmra.mrb[0].mxu0 %v650
        %v686 = vpop.f32.mrb[0].mxu0
        %v687 = vadd.f32 %v635, %v686
        %v688 = vpop.f32.mrb[0].mxu0
        %v689 = vpop.f32.mrb[0].mxu0
        %v690 = vpop.f32.mrb[0].mxu0
        %691 = vdwg.mxu0
        %v693 = vlaneseq
        %v694 = vshrl.u32 %v693, 7
        %v695 = vsub.s32 0, %v694
        %v696 = vrot.slane %v625, %v695
        %v702 = vunpack.c.l.b16 %v621
        %v703 = vunpack.c.l.b16 %v622
        %v704 = vunpack.c.l.b16 %v623
        %v705 = vunpack.c.l.b16 %v624
        %v706 = vpack.c.b16 %v703, %v702
        %v707 = vpack.c.b16 %v705, %v704
        %v711 = vsel %vm582, %v614, 0
        %713 = vmatprep.subr.bf16.mxu0 0
        %714 = vmatpush1.bf16.msra.mxu0 %v706
        %715 = vmatprep.subr.bf16.mxu0 0
        %716 = vmatpush1.bf16.msra.mxu0 %v707
        %717 = vmatprep.subr.bf16.mxu0 0
        %718 = vmatpush1.bf16.msra.mxu0 0
        %719 = vmatprep.subr.bf16.mxu0 0
        %720 = vmatpush1.bf16.msra.mxu0 0
        %721 = vmatprep.subr.bf16.mxu0 0
        %722 = vmatpush1.bf16.msra.mxu0 0
        %723 = vmatprep.subr.bf16.mxu0 0
        %724 = vmatpush1.bf16.msra.mxu0 0
        %725 = vmatprep.subr.bf16.mxu0 0
        %726 = vmatpush1.bf16.msra.mxu0 0
        %727 = vmatprep.subr.bf16.mxu0 0
        %728 = vmatpush1.bf16.msra.mxu0 0
        %729 = vmatprep.subr.bf16.mxu0 0
        %730 = vmatpush1.bf16.msra.mxu0 0
        %731 = vmatprep.subr.bf16.mxu0 0
        %732 = vmatpush1.bf16.msra.mxu0 0
        %733 = vmatprep.subr.bf16.mxu0 0
        %734 = vmatpush1.bf16.msra.mxu0 0
        %735 = vmatprep.subr.bf16.mxu0 0
        %736 = vmatpush1.bf16.msra.mxu0 0
        %737 = vmatprep.subr.bf16.mxu0 0
        %738 = vmatpush1.bf16.msra.mxu0 0
        %739 = vmatprep.subr.bf16.mxu0 0
        %740 = vmatpush1.bf16.msra.mxu0 0
        %741 = vmatprep.subr.bf16.mxu0 0
        %742 = vmatpush1.bf16.msra.mxu0 0
        %743 = vmatprep.subr.bf16.mxu0 0
        %744 = vmatpush1.bf16.msra.mxu0 0
        %745 = vmatprep.mubr.bf16.mxu0 0
        %746 = vmatmul.mubr.bf16.gmra.mrb[0].mxu0 %v711
        %v747 = vpop.f32.mrb[0].mxu0
        %v748 = vadd.f32 %v696, %v747
        %v749 = vpop.f32.mrb[0].mxu0
        %v750 = vpop.f32.mrb[0].mxu0
        %v751 = vadd.f32 %v696, %v750
        %v752 = vpop.f32.mrb[0].mxu0
        %753 = vdwg.mxu0
        %755 = vrot.lane.b32.xlu0 %v687, 120
        %v756 = vpop.permute.xlu0 %755
        %758 = vrot.lane.b32.xlu0 %v687, 112
        %v759 = vpop.permute.xlu0 %758
        %761 = vrot.lane.b32.xlu0 %v687, 104
        %v762 = vpop.permute.xlu0 %761
        %v764 = vpack.c.bf16 %v687, %v687
        %v765 = vpack.c.bf16 %v756, %v756
        %v766 = vpack.c.bf16 %v759, %v759
        %v767 = vpack.c.bf16 %v762, %v762
        %770 = vrot.lane.b32.xlu0 %v748, 120
        %v771 = vpop.permute.xlu0 %770
        %772 = vrot.lane.b32.xlu0 %v751, 120
        %v773 = vpop.permute.xlu0 %772
        %776 = vrot.lane.b32.xlu0 %v748, 112
        %v777 = vpop.permute.xlu0 %776
        %778 = vrot.lane.b32.xlu0 %v751, 112
        %v779 = vpop.permute.xlu0 %778
        %782 = vrot.lane.b32.xlu0 %v748, 104
        %v783 = vpop.permute.xlu0 %782
        %784 = vrot.lane.b32.xlu0 %v751, 104
        %v785 = vpop.permute.xlu0 %784
        %v788 = vpack.c.bf16 %v751, %v748
        %v789 = vpack.c.bf16 %v773, %v771
        %v790 = vpack.c.bf16 %v779, %v777
        %v791 = vpack.c.bf16 %v785, %v783
        %vm792 = vcmask 64512
        %v794 = vsel %vm792, %v764, 0
        %v797 = vsel %vm792, %v788, 0
        %799 = vmatprep.subr.bf16.mxu0 0
        %800 = vmatpush1.bf16.xpose.msra.mxu0 %v797
        %801 = vmatprep.subr.bf16.mxu0 0
        %802 = vmatpush1.bf16.xpose.msra.mxu0 0
        %803 = vmatprep.subr.bf16.mxu0 0
        %804 = vmatpush1.bf16.xpose.msra.mxu0 0
        %805 = vmatprep.subr.bf16.mxu0 0
        %806 = vmatpush1.bf16.xpose.msra.mxu0 0
        %807 = vmatprep.subr.bf16.mxu0 0
        %808 = vmatpush1.bf16.xpose.msra.mxu0 0
        %809 = vmatprep.subr.bf16.mxu0 0
        %810 = vmatpush1.bf16.xpose.msra.mxu0 0
        %811 = vmatprep.subr.bf16.mxu0 0
        %812 = vmatpush1.bf16.xpose.msra.mxu0 0
        %813 = vmatprep.subr.bf16.mxu0 0
        %814 = vmatpush1.bf16.xpose.msra.mxu0 0
        %815 = vmatprep.subr.bf16.mxu0 0
        %816 = vmatpush1.bf16.xpose.msra.mxu0 0
        %817 = vmatprep.subr.bf16.mxu0 0
        %818 = vmatpush1.bf16.xpose.msra.mxu0 0
        %819 = vmatprep.subr.bf16.mxu0 0
        %820 = vmatpush1.bf16.xpose.msra.mxu0 0
        %821 = vmatprep.subr.bf16.mxu0 0
        %822 = vmatpush1.bf16.xpose.msra.mxu0 0
        %823 = vmatprep.subr.bf16.mxu0 0
        %824 = vmatpush1.bf16.xpose.msra.mxu0 0
        %825 = vmatprep.subr.bf16.mxu0 0
        %826 = vmatpush1.bf16.xpose.msra.mxu0 0
        %827 = vmatprep.subr.bf16.mxu0 0
        %828 = vmatpush1.bf16.xpose.msra.mxu0 0
        %829 = vmatprep.subr.bf16.mxu0 0
        %830 = vmatpush1.bf16.xpose.msra.mxu0 0
        %831 = vmatprep.mubr.bf16.mxu0 0
        %832 = vmatmul.mubr.bf16.gmra.mrb[0].mxu0 %v794
        %v833 = vpop.f32.mrb[0].mxu0
        %v834 = vadd.f32 0.0, %v833
        %v835 = vpop.f32.mrb[0].mxu0
        %v836 = vpop.f32.mrb[0].mxu0
        %v837 = vpop.f32.mrb[0].mxu0
        %838 = vdwg.mxu0
        %v840 = vsel %vm792, %v765, 0
        %v843 = vsel %vm792, %v789, 0
        %845 = vmatprep.subr.bf16.mxu0 0
        %846 = vmatpush1.bf16.xpose.msra.mxu0 %v843
        %847 = vmatprep.subr.bf16.mxu0 0
        %848 = vmatpush1.bf16.xpose.msra.mxu0 0
        %849 = vmatprep.subr.bf16.mxu0 0
        %850 = vmatpush1.bf16.xpose.msra.mxu0 0
        %851 = vmatprep.subr.bf16.mxu0 0
        %852 = vmatpush1.bf16.xpose.msra.mxu0 0
        %853 = vmatprep.subr.bf16.mxu0 0
        %854 = vmatpush1.bf16.xpose.msra.mxu0 0
        %855 = vmatprep.subr.bf16.mxu0 0
        %856 = vmatpush1.bf16.xpose.msra.mxu0 0
        %857 = vmatprep.subr.bf16.mxu0 0
        %858 = vmatpush1.bf16.xpose.msra.mxu0 0
        %859 = vmatprep.subr.bf16.mxu0 0
        %860 = vmatpush1.bf16.xpose.msra.mxu0 0
        %861 = vmatprep.subr.bf16.mxu0 0
        %862 = vmatpush1.bf16.xpose.msra.mxu0 0
        %863 = vmatprep.subr.bf16.mxu0 0
        %864 = vmatpush1.bf16.xpose.msra.mxu0 0
        %865 = vmatprep.subr.bf16.mxu0 0
        %866 = vmatpush1.bf16.xpose.msra.mxu0 0
        %867 = vmatprep.subr.bf16.mxu0 0
        %868 = vmatpush1.bf16.xpose.msra.mxu0 0
        %869 = vmatprep.subr.bf16.mxu0 0
        %870 = vmatpush1.bf16.xpose.msra.mxu0 0
        %871 = vmatprep.subr.bf16.mxu0 0
        %872 = vmatpush1.bf16.xpose.msra.mxu0 0
        %873 = vmatprep.subr.bf16.mxu0 0
        %874 = vmatpush1.bf16.xpose.msra.mxu0 0
        %875 = vmatprep.subr.bf16.mxu0 0
        %876 = vmatpush1.bf16.xpose.msra.mxu0 0
        %877 = vmatprep.mubr.bf16.mxu0 0
        %878 = vmatmul.mubr.bf16.gmra.mrb[0].mxu0 %v840
        %v879 = vpop.f32.mrb[0].mxu0
        %v880 = vadd.f32 0.0, %v879
        %v881 = vpop.f32.mrb[0].mxu0
        %v882 = vpop.f32.mrb[0].mxu0
        %v883 = vpop.f32.mrb[0].mxu0
        %884 = vdwg.mxu0
        %v886 = vsel %vm792, %v766, 0
        %v889 = vsel %vm792, %v790, 0
        %891 = vmatprep.subr.bf16.mxu0 0
        %892 = vmatpush1.bf16.xpose.msra.mxu0 %v889
        %893 = vmatprep.subr.bf16.mxu0 0
        %894 = vmatpush1.bf16.xpose.msra.mxu0 0
        %895 = vmatprep.subr.bf16.mxu0 0
        %896 = vmatpush1.bf16.xpose.msra.mxu0 0
        %897 = vmatprep.subr.bf16.mxu0 0
        %898 = vmatpush1.bf16.xpose.msra.mxu0 0
        %899 = vmatprep.subr.bf16.mxu0 0
        %900 = vmatpush1.bf16.xpose.msra.mxu0 0
        %901 = vmatprep.subr.bf16.mxu0 0
        %902 = vmatpush1.bf16.xpose.msra.mxu0 0
        %903 = vmatprep.subr.bf16.mxu0 0
        %904 = vmatpush1.bf16.xpose.msra.mxu0 0
        %905 = vmatprep.subr.bf16.mxu0 0
        %906 = vmatpush1.bf16.xpose.msra.mxu0 0
        %907 = vmatprep.subr.bf16.mxu0 0
        %908 = vmatpush1.bf16.xpose.msra.mxu0 0
        %909 = vmatprep.subr.bf16.mxu0 0
        %910 = vmatpush1.bf16.xpose.msra.mxu0 0
        %911 = vmatprep.subr.bf16.mxu0 0
        %912 = vmatpush1.bf16.xpose.msra.mxu0 0
        %913 = vmatprep.subr.bf16.mxu0 0
        %914 = vmatpush1.bf16.xpose.msra.mxu0 0
        %915 = vmatprep.subr.bf16.mxu0 0
        %916 = vmatpush1.bf16.xpose.msra.mxu0 0
        %917 = vmatprep.subr.bf16.mxu0 0
        %918 = vmatpush1.bf16.xpose.msra.mxu0 0
        %919 = vmatprep.subr.bf16.mxu0 0
        %920 = vmatpush1.bf16.xpose.msra.mxu0 0
        %921 = vmatprep.subr.bf16.mxu0 0
        %922 = vmatpush1.bf16.xpose.msra.mxu0 0
        %923 = vmatprep.mubr.bf16.mxu0 0
        %924 = vmatmul.mubr.bf16.gmra.mrb[0].mxu0 %v886
        %v925 = vpop.f32.mrb[0].mxu0
        %v926 = vadd.f32 0.0, %v925
        %v927 = vpop.f32.mrb[0].mxu0
        %v928 = vpop.f32.mrb[0].mxu0
        %v929 = vpop.f32.mrb[0].mxu0
        %930 = vdwg.mxu0
        %v932 = vsel %vm792, %v767, 0
        %v935 = vsel %vm792, %v791, 0
        %937 = vmatprep.subr.bf16.mxu0 0
        %938 = vmatpush1.bf16.xpose.msra.mxu0 %v935
        %939 = vmatprep.subr.bf16.mxu0 0
        %940 = vmatpush1.bf16.xpose.msra.mxu0 0
        %941 = vmatprep.subr.bf16.mxu0 0
        %942 = vmatpush1.bf16.xpose.msra.mxu0 0
        %943 = vmatprep.subr.bf16.mxu0 0
        %944 = vmatpush1.bf16.xpose.msra.mxu0 0
        %945 = vmatprep.subr.bf16.mxu0 0
        %946 = vmatpush1.bf16.xpose.msra.mxu0 0
        %947 = vmatprep.subr.bf16.mxu0 0
        %948 = vmatpush1.bf16.xpose.msra.mxu0 0
        %949 = vmatprep.subr.bf16.mxu0 0
        %950 = vmatpush1.bf16.xpose.msra.mxu0 0
        %951 = vmatprep.subr.bf16.mxu0 0
        %952 = vmatpush1.bf16.xpose.msra.mxu0 0
        %953 = vmatprep.subr.bf16.mxu0 0
        %954 = vmatpush1.bf16.xpose.msra.mxu0 0
        %955 = vmatprep.subr.bf16.mxu0 0
        %956 = vmatpush1.bf16.xpose.msra.mxu0 0
        %957 = vmatprep.subr.bf16.mxu0 0
        %958 = vmatpush1.bf16.xpose.msra.mxu0 0
        %959 = vmatprep.subr.bf16.mxu0 0
        %960 = vmatpush1.bf16.xpose.msra.mxu0 0
        %961 = vmatprep.subr.bf16.mxu0 0
        %962 = vmatpush1.bf16.xpose.msra.mxu0 0
        %963 = vmatprep.subr.bf16.mxu0 0
        %964 = vmatpush1.bf16.xpose.msra.mxu0 0
        %965 = vmatprep.subr.bf16.mxu0 0
        %966 = vmatpush1.bf16.xpose.msra.mxu0 0
        %967 = vmatprep.subr.bf16.mxu0 0
        %968 = vmatpush1.bf16.xpose.msra.mxu0 0
        %969 = vmatprep.mubr.bf16.mxu0 0
        %970 = vmatmul.mubr.bf16.gmra.mrb[0].mxu0 %v932
        %v971 = vpop.f32.mrb[0].mxu0
        %v972 = vadd.f32 0.0, %v971
        %v973 = vpop.f32.mrb[0].mxu0
        %v974 = vpop.f32.mrb[0].mxu0
        %v975 = vpop.f32.mrb[0].mxu0
        %976 = vdwg.mxu0
        %v977 = vmul.f32 %v834, 0.35355338
        %v978 = vmul.f32 %v880, 0.35355338
        %v979 = vmul.f32 %v926, 0.35355338
        %v980 = vmul.f32 %v972, 0.35355338
        %v982 = vlaneseq
        %v983 = vshrl.u32 %v982, 7
        %v984 = vsub.s32 0, %v983
        %v985 = vrot.slane %v615, %v984
        %v987 = vadd.f32 %v977, %v985
        %v988 = vadd.f32 %v978, %v985
        %v989 = vadd.f32 %v979, %v985
        %v990 = vadd.f32 %v980, %v985
        %vm991 = vcmask 97280
        %v992 = vsel %vm991, %v987, -inf
        %993 = vmax.xlane.f32.xlu0 %v992
        %v994 = vpop.xlane.xlu0 %993
        %v995 = vsel %vm991, %v988, -inf
        %996 = vmax.xlane.f32.xlu0 %v995
        %v997 = vpop.xlane.xlu0 %996
        %v998 = vsel %vm991, %v989, -inf
        %999 = vmax.xlane.f32.xlu0 %v998
        %v1000 = vpop.xlane.xlu0 %999
        %v1001 = vsel %vm991, %v990, -inf
        %1002 = vmax.xlane.f32.xlu0 %v1001
        %v1003 = vpop.xlane.xlu0 %1002
        %v1004 = vsub.f32 %v987, %v994
        %v1005 = vsub.f32 %v988, %v997
        %v1006 = vsub.f32 %v989, %v1000
        %v1007 = vsub.f32 %v990, %v1003
        %v1008 = vmul.f32 %v1004, 1.442695
        %v1009 = vpow.pop %v1008
        %v1010 = vmul.f32 %v1005, 1.442695
        %v1011 = vpow.pop %v1010
        %v1012 = vmul.f32 %v1006, 1.442695
        %v1013 = vpow.pop %v1012
        %v1014 = vmul.f32 %v1007, 1.442695
        %v1015 = vpow.pop %v1014
        %v1016 = vsel %vm991, %v1009, 0.0
        %1017 = vadd.xlane.f32.xlu0 %v1016
        %v1018 = vpop.xlane.xlu0 %1017
        %v1019 = vsel %vm991, %v1011, 0.0
        %1020 = vadd.xlane.f32.xlu0 %v1019
        %v1021 = vpop.xlane.xlu0 %1020
        %v1022 = vsel %vm991, %v1013, 0.0
        %1023 = vadd.xlane.f32.xlu0 %v1022
        %v1024 = vpop.xlane.xlu0 %1023
        %v1025 = vsel %vm991, %v1015, 0.0
        %1026 = vadd.xlane.f32.xlu0 %v1025
        %v1027 = vpop.xlane.xlu0 %1026
        %v1028 = vrcp.pop %v1018
        %v1029 = vmul.f32 %v1009, %v1028
        %v1030 = vrcp.pop %v1021
        %v1031 = vmul.f32 %v1011, %v1030
        %v1032 = vrcp.pop %v1024
        %v1033 = vmul.f32 %v1013, %v1032
        %v1034 = vrcp.pop %v1027
        %v1035 = vmul.f32 %v1015, %v1034
        %v1036 = vpack.c.bf16 %v1029, %v1029
        %v1037 = vpack.c.bf16 %v1031, %v1031
        %v1038 = vpack.c.bf16 %v1033, %v1033
        %v1039 = vpack.c.bf16 %v1035, %v1035
        %1041 = vrot.lane.b32.xlu0 %v788, 96
        %v1042 = vpop.permute.xlu0 %1041
        %v1044 = vsel %vm991, %v1036, 0
        %vm1046 = vcmask 1045504
        %v1048 = vsel %vm1046, %v1042, 0
        %1050 = vmatprep.subr.bf16.mxu0 0
        %1051 = vmatpush1.bf16.msra.mxu0 %v1048
        %1052 = vmatprep.subr.bf16.mxu0 0
        %1053 = vmatpush1.bf16.msra.mxu0 0
        %1054 = vmatprep.subr.bf16.mxu0 0
        %1055 = vmatpush1.bf16.msra.mxu0 0
        %1056 = vmatprep.subr.bf16.mxu0 0
        %1057 = vmatpush1.bf16.msra.mxu0 0
        %1058 = vmatprep.subr.bf16.mxu0 0
        %1059 = vmatpush1.bf16.msra.mxu0 0
        %1060 = vmatprep.subr.bf16.mxu0 0
        %1061 = vmatpush1.bf16.msra.mxu0 0
        %1062 = vmatprep.subr.bf16.mxu0 0
        %1063 = vmatpush1.bf16.msra.mxu0 0
        %1064 = vmatprep.subr.bf16.mxu0 0
        %1065 = vmatpush1.bf16.msra.mxu0 0
        %1066 = vmatprep.subr.bf16.mxu0 0
        %1067 = vmatpush1.bf16.msra.mxu0 0
        %1068 = vmatprep.subr.bf16.mxu0 0
        %1069 = vmatpush1.bf16.msra.mxu0 0
        %1070 = vmatprep.subr.bf16.mxu0 0
        %1071 = vmatpush1.bf16.msra.mxu0 0
        %1072 = vmatprep.subr.bf16.mxu0 0
        %1073 = vmatpush1.bf16.msra.mxu0 0
        %1074 = vmatprep.subr.bf16.mxu0 0
        %1075 = vmatpush1.bf16.msra.mxu0 0
        %1076 = vmatprep.subr.bf16.mxu0 0
        %1077 = vmatpush1.bf16.msra.mxu0 0
        %1078 = vmatprep.subr.bf16.mxu0 0
        %1079 = vmatpush1.bf16.msra.mxu0 0
        %1080 = vmatprep.subr.bf16.mxu0 0
        %1081 = vmatpush1.bf16.msra.mxu0 0
        %1082 = vmatprep.mubr.bf16.mxu0 0
        %1083 = vmatmul.mubr.bf16.gmra.mrb[0].mxu0 %v1044
        %v1084 = vpop.f32.mrb[0].mxu0
        %v1085 = vadd.f32 0.0, %v1084
        %v1086 = vpop.f32.mrb[0].mxu0
        %v1087 = vpop.f32.mrb[0].mxu0
        %v1088 = vpop.f32.mrb[0].mxu0
        %1089 = vdwg.mxu0
        %1091 = vrot.lane.b32.xlu0 %v789, 96
        %v1092 = vpop.permute.xlu0 %1091
        %v1094 = vsel %vm991, %v1037, 0
        %v1097 = vsel %vm1046, %v1092, 0
        %1099 = vmatprep.subr.bf16.mxu0 0
        %1100 = vmatpush1.bf16.msra.mxu0 %v1097
        %1101 = vmatprep.subr.bf16.mxu0 0
        %1102 = vmatpush1.bf16.msra.mxu0 0
        %1103 = vmatprep.subr.bf16.mxu0 0
        %1104 = vmatpush1.bf16.msra.mxu0 0
        %1105 = vmatprep.subr.bf16.mxu0 0
        %1106 = vmatpush1.bf16.msra.mxu0 0
        %1107 = vmatprep.subr.bf16.mxu0 0
        %1108 = vmatpush1.bf16.msra.mxu0 0
        %1109 = vmatprep.subr.bf16.mxu0 0
        %1110 = vmatpush1.bf16.msra.mxu0 0
        %1111 = vmatprep.subr.bf16.mxu0 0
        %1112 = vmatpush1.bf16.msra.mxu0 0
        %1113 = vmatprep.subr.bf16.mxu0 0
        %1114 = vmatpush1.bf16.msra.mxu0 0
        %1115 = vmatprep.subr.bf16.mxu0 0
        %1116 = vmatpush1.bf16.msra.mxu0 0
        %1117 = vmatprep.subr.bf16.mxu0 0
        %1118 = vmatpush1.bf16.msra.mxu0 0
        %1119 = vmatprep.subr.bf16.mxu0 0
        %1120 = vmatpush1.bf16.msra.mxu0 0
        %1121 = vmatprep.subr.bf16.mxu0 0
        %1122 = vmatpush1.bf16.msra.mxu0 0
        %1123 = vmatprep.subr.bf16.mxu0 0
        %1124 = vmatpush1.bf16.msra.mxu0 0
        %1125 = vmatprep.subr.bf16.mxu0 0
        %1126 = vmatpush1.bf16.msra.mxu0 0
        %1127 = vmatprep.subr.bf16.mxu0 0
        %1128 = vmatpush1.bf16.msra.mxu0 0
        %1129 = vmatprep.subr.bf16.mxu0 0
        %1130 = vmatpush1.bf16.msra.mxu0 0
        %1131 = vmatprep.mubr.bf16.mxu0 0
        %1132 = vmatmul.mubr.bf16.gmra.mrb[0].mxu0 %v1094
        %v1133 = vpop.f32.mrb[0].mxu0
        %v1134 = vadd.f32 0.0, %v1133
        %v1135 = vpop.f32.mrb[0].mxu0
        %v1136 = vpop.f32.mrb[0].mxu0
        %v1137 = vpop.f32.mrb[0].mxu0
        %1138 = vdwg.mxu0
        %1140 = vrot.lane.b32.xlu0 %v790, 96
        %v1141 = vpop.permute.xlu0 %1140
        %v1143 = vsel %vm991, %v1038, 0
        %v1146 = vsel %vm1046, %v1141, 0
        %1148 = vmatprep.subr.bf16.mxu0 0
        %1149 = vmatpush1.bf16.msra.mxu0 %v1146
        %1150 = vmatprep.subr.bf16.mxu0 0
        %1151 = vmatpush1.bf16.msra.mxu0 0
        %1152 = vmatprep.subr.bf16.mxu0 0
        %1153 = vmatpush1.bf16.msra.mxu0 0
        %1154 = vmatprep.subr.bf16.mxu0 0
        %1155 = vmatpush1.bf16.msra.mxu0 0
        %1156 = vmatprep.subr.bf16.mxu0 0
        %1157 = vmatpush1.bf16.msra.mxu0 0
        %1158 = vmatprep.subr.bf16.mxu0 0
        %1159 = vmatpush1.bf16.msra.mxu0 0
        %1160 = vmatprep.subr.bf16.mxu0 0
        %1161 = vmatpush1.bf16.msra.mxu0 0
        %1162 = vmatprep.subr.bf16.mxu0 0
        %1163 = vmatpush1.bf16.msra.mxu0 0
        %1164 = vmatprep.subr.bf16.mxu0 0
        %1165 = vmatpush1.bf16.msra.mxu0 0
        %1166 = vmatprep.subr.bf16.mxu0 0
        %1167 = vmatpush1.bf16.msra.mxu0 0
        %1168 = vmatprep.subr.bf16.mxu0 0
        %1169 = vmatpush1.bf16.msra.mxu0 0
        %1170 = vmatprep.subr.bf16.mxu0 0
        %1171 = vmatpush1.bf16.msra.mxu0 0
        %1172 = vmatprep.subr.bf16.mxu0 0
        %1173 = vmatpush1.bf16.msra.mxu0 0
        %1174 = vmatprep.subr.bf16.mxu0 0
        %1175 = vmatpush1.bf16.msra.mxu0 0
        %1176 = vmatprep.subr.bf16.mxu0 0
        %1177 = vmatpush1.bf16.msra.mxu0 0
        %1178 = vmatprep.subr.bf16.mxu0 0
        %1179 = vmatpush1.bf16.msra.mxu0 0
        %1180 = vmatprep.mubr.bf16.mxu0 0
        %1181 = vmatmul.mubr.bf16.gmra.mrb[0].mxu0 %v1143
        %v1182 = vpop.f32.mrb[0].mxu0
        %v1183 = vadd.f32 0.0, %v1182
        %v1184 = vpop.f32.mrb[0].mxu0
        %v1185 = vpop.f32.mrb[0].mxu0
        %v1186 = vpop.f32.mrb[0].mxu0
        %1187 = vdwg.mxu0
        %1189 = vrot.lane.b32.xlu0 %v791, 96
        %v1190 = vpop.permute.xlu0 %1189
        %v1192 = vsel %vm991, %v1039, 0
        %v1195 = vsel %vm1046, %v1190, 0
        %1197 = vmatprep.subr.bf16.mxu0 0
        %1198 = vmatpush1.bf16.msra.mxu0 %v1195
        %1199 = vmatprep.subr.bf16.mxu0 0
        %1200 = vmatpush1.bf16.msra.mxu0 0
        %1201 = vmatprep.subr.bf16.mxu0 0
        %1202 = vmatpush1.bf16.msra.mxu0 0
        %1203 = vmatprep.subr.bf16.mxu0 0
        %1204 = vmatpush1.bf16.msra.mxu0 0
        %1205 = vmatprep.subr.bf16.mxu0 0
        %1206 = vmatpush1.bf16.msra.mxu0 0
        %1207 = vmatprep.subr.bf16.mxu0 0
        %1208 = vmatpush1.bf16.msra.mxu0 0
        %1209 = vmatprep.subr.bf16.mxu0 0
        %1210 = vmatpush1.bf16.msra.mxu0 0
        %1211 = vmatprep.subr.bf16.mxu0 0
        %1212 = vmatpush1.bf16.msra.mxu0 0
        %1213 = vmatprep.subr.bf16.mxu0 0
        %1214 = vmatpush1.bf16.msra.mxu0 0
        %1215 = vmatprep.subr.bf16.mxu0 0
        %1216 = vmatpush1.bf16.msra.mxu0 0
        %1217 = vmatprep.subr.bf16.mxu0 0
        %1218 = vmatpush1.bf16.msra.mxu0 0
        %1219 = vmatprep.subr.bf16.mxu0 0
        %1220 = vmatpush1.bf16.msra.mxu0 0
        %1221 = vmatprep.subr.bf16.mxu0 0
        %1222 = vmatpush1.bf16.msra.mxu0 0
        %1223 = vmatprep.subr.bf16.mxu0 0
        %1224 = vmatpush1.bf16.msra.mxu0 0
        %1225 = vmatprep.subr.bf16.mxu0 0
        %1226 = vmatpush1.bf16.msra.mxu0 0
        %1227 = vmatprep.subr.bf16.mxu0 0
        %1228 = vmatpush1.bf16.msra.mxu0 0
        %1229 = vmatprep.mubr.bf16.mxu0 0
        %1230 = vmatmul.mubr.bf16.gmra.mrb[0].mxu0 %v1192
        %v1231 = vpop.f32.mrb[0].mxu0
        %v1232 = vadd.f32 0.0, %v1231
        %v1233 = vpop.f32.mrb[0].mxu0
        %v1234 = vpop.f32.mrb[0].mxu0
        %v1235 = vpop.f32.mrb[0].mxu0
        %1236 = vdwg.mxu0
        %v1237 = vpack.c.bf16 %v1085, %v1085
        %v1238 = vpack.c.bf16 %v1134, %v1134
        %v1239 = vpack.c.bf16 %v1183, %v1183
        %v1240 = vpack.c.bf16 %v1232, %v1232
        %v1242 = vsel %vm792, %v1237, 0
        %vm1244 = vcmask 1043456
        %v1246 = vsel %vm1244, %v626, 0
        %1248 = vmatprep.subr.bf16.mxu0 0
        %1249 = vmatpush1.bf16.msra.mxu0 %v1246
        %1250 = vmatprep.subr.bf16.mxu0 0
        %1251 = vmatpush1.bf16.msra.mxu0 0
        %1252 = vmatprep.subr.bf16.mxu0 0
        %1253 = vmatpush1.bf16.msra.mxu0 0
        %1254 = vmatprep.subr.bf16.mxu0 0
        %1255 = vmatpush1.bf16.msra.mxu0 0
        %1256 = vmatprep.subr.bf16.mxu0 0
        %1257 = vmatpush1.bf16.msra.mxu0 0
        %1258 = vmatprep.subr.bf16.mxu0 0
        %1259 = vmatpush1.bf16.msra.mxu0 0
        %1260 = vmatprep.subr.bf16.mxu0 0
        %1261 = vmatpush1.bf16.msra.mxu0 0
        %1262 = vmatprep.subr.bf16.mxu0 0
        %1263 = vmatpush1.bf16.msra.mxu0 0
        %1264 = vmatprep.subr.bf16.mxu0 0
        %1265 = vmatpush1.bf16.msra.mxu0 0
        %1266 = vmatprep.subr.bf16.mxu0 0
        %1267 = vmatpush1.bf16.msra.mxu0 0
        %1268 = vmatprep.subr.bf16.mxu0 0
        %1269 = vmatpush1.bf16.msra.mxu0 0
        %1270 = vmatprep.subr.bf16.mxu0 0
        %1271 = vmatpush1.bf16.msra.mxu0 0
        %1272 = vmatprep.subr.bf16.mxu0 0
        %1273 = vmatpush1.bf16.msra.mxu0 0
        %1274 = vmatprep.subr.bf16.mxu0 0
        %1275 = vmatpush1.bf16.msra.mxu0 0
        %1276 = vmatprep.subr.bf16.mxu0 0
        %1277 = vmatpush1.bf16.msra.mxu0 0
        %1278 = vmatprep.subr.bf16.mxu0 0
        %1279 = vmatpush1.bf16.msra.mxu0 0
        %1280 = vmatprep.mubr.bf16.mxu0 0
        %1281 = vmatmul.mubr.bf16.gmra.mrb[0].mxu0 %v1242
        %v1282 = vpop.f32.mrb[0].mxu0
        %v1283 = vadd.f32 0.0, %v1282
        %v1284 = vpop.f32.mrb[0].mxu0
        %v1285 = vpop.f32.mrb[0].mxu0
        %v1286 = vpop.f32.mrb[0].mxu0
        %1287 = vdwg.mxu0
        %v1289 = vsel %vm792, %v1238, 0
        %v1292 = vsel %vm1244, %v627, 0
        %1294 = vmatprep.subr.bf16.mxu0 0
        %1295 = vmatpush1.bf16.msra.mxu0 %v1292
        %1296 = vmatprep.subr.bf16.mxu0 0
        %1297 = vmatpush1.bf16.msra.mxu0 0
        %1298 = vmatprep.subr.bf16.mxu0 0
        %1299 = vmatpush1.bf16.msra.mxu0 0
        %1300 = vmatprep.subr.bf16.mxu0 0
        %1301 = vmatpush1.bf16.msra.mxu0 0
        %1302 = vmatprep.subr.bf16.mxu0 0
        %1303 = vmatpush1.bf16.msra.mxu0 0
        %1304 = vmatprep.subr.bf16.mxu0 0
        %1305 = vmatpush1.bf16.msra.mxu0 0
        %1306 = vmatprep.subr.bf16.mxu0 0
        %1307 = vmatpush1.bf16.msra.mxu0 0
        %1308 = vmatprep.subr.bf16.mxu0 0
        %1309 = vmatpush1.bf16.msra.mxu0 0
        %1310 = vmatprep.subr.bf16.mxu0 0
        %1311 = vmatpush1.bf16.msra.mxu0 0
        %1312 = vmatprep.subr.bf16.mxu0 0
        %1313 = vmatpush1.bf16.msra.mxu0 0
        %1314 = vmatprep.subr.bf16.mxu0 0
        %1315 = vmatpush1.bf16.msra.mxu0 0
        %1316 = vmatprep.subr.bf16.mxu0 0
        %1317 = vmatpush1.bf16.msra.mxu0 0
        %1318 = vmatprep.subr.bf16.mxu0 0
        %1319 = vmatpush1.bf16.msra.mxu0 0
        %1320 = vmatprep.subr.bf16.mxu0 0
        %1321 = vmatpush1.bf16.msra.mxu0 0
        %1322 = vmatprep.subr.bf16.mxu0 0
        %1323 = vmatpush1.bf16.msra.mxu0 0
        %1324 = vmatprep.subr.bf16.mxu0 0
        %1325 = vmatpush1.bf16.msra.mxu0 0
        %1326 = vmatprep.mubr.bf16.mxu0 0
        %1327 = vmatmul.mubr.bf16.gmra.mrb[0].mxu0 %v1289
        %v1328 = vpop.f32.mrb[0].mxu0
        %v1329 = vadd.f32 0.0, %v1328
        %v1330 = vpop.f32.mrb[0].mxu0
        %v1331 = vpop.f32.mrb[0].mxu0
        %v1332 = vpop.f32.mrb[0].mxu0
        %1333 = vdwg.mxu0
        %v1335 = vsel %vm792, %v1239, 0
        %v1338 = vsel %vm1244, %v628, 0
        %1340 = vmatprep.subr.bf16.mxu0 0
        %1341 = vmatpush1.bf16.msra.mxu0 %v1338
        %1342 = vmatprep.subr.bf16.mxu0 0
        %1343 = vmatpush1.bf16.msra.mxu0 0
        %1344 = vmatprep.subr.bf16.mxu0 0
        %1345 = vmatpush1.bf16.msra.mxu0 0
        %1346 = vmatprep.subr.bf16.mxu0 0
        %1347 = vmatpush1.bf16.msra.mxu0 0
        %1348 = vmatprep.subr.bf16.mxu0 0
        %1349 = vmatpush1.bf16.msra.mxu0 0
        %1350 = vmatprep.subr.bf16.mxu0 0
        %1351 = vmatpush1.bf16.msra.mxu0 0
        %1352 = vmatprep.subr.bf16.mxu0 0
        %1353 = vmatpush1.bf16.msra.mxu0 0
        %1354 = vmatprep.subr.bf16.mxu0 0
        %1355 = vmatpush1.bf16.msra.mxu0 0
        %1356 = vmatprep.subr.bf16.mxu0 0
        %1357 = vmatpush1.bf16.msra.mxu0 0
        %1358 = vmatprep.subr.bf16.mxu0 0
        %1359 = vmatpush1.bf16.msra.mxu0 0
        %1360 = vmatprep.subr.bf16.mxu0 0
        %1361 = vmatpush1.bf16.msra.mxu0 0
        %1362 = vmatprep.subr.bf16.mxu0 0
        %1363 = vmatpush1.bf16.msra.mxu0 0
        %1364 = vmatprep.subr.bf16.mxu0 0
        %1365 = vmatpush1.bf16.msra.mxu0 0
        %1366 = vmatprep.subr.bf16.mxu0 0
        %1367 = vmatpush1.bf16.msra.mxu0 0
        %1368 = vmatprep.subr.bf16.mxu0 0
        %1369 = vmatpush1.bf16.msra.mxu0 0
        %1370 = vmatprep.subr.bf16.mxu0 0
        %1371 = vmatpush1.bf16.msra.mxu0 0
        %1372 = vmatprep.mubr.bf16.mxu0 0
        %1373 = vmatmul.mubr.bf16.gmra.mrb[0].mxu0 %v1335
        %v1374 = vpop.f32.mrb[0].mxu0
        %v1375 = vadd.f32 0.0, %v1374
        %v1376 = vpop.f32.mrb[0].mxu0
        %v1377 = vpop.f32.mrb[0].mxu0
        %v1378 = vpop.f32.mrb[0].mxu0
        %1379 = vdwg.mxu0
        %v1381 = vsel %vm792, %v1240, 0
        %v1384 = vsel %vm1244, %v629, 0
        %1386 = vmatprep.subr.bf16.mxu0 0
        %1387 = vmatpush1.bf16.msra.mxu0 %v1384
        %1388 = vmatprep.subr.bf16.mxu0 0
        %1389 = vmatpush1.bf16.msra.mxu0 0
        %1390 = vmatprep.subr.bf16.mxu0 0
        %1391 = vmatpush1.bf16.msra.mxu0 0
        %1392 = vmatprep.subr.bf16.mxu0 0
        %1393 = vmatpush1.bf16.msra.mxu0 0
        %1394 = vmatprep.subr.bf16.mxu0 0
        %1395 = vmatpush1.bf16.msra.mxu0 0
        %1396 = vmatprep.subr.bf16.mxu0 0
        %1397 = vmatpush1.bf16.msra.mxu0 0
        %1398 = vmatprep.subr.bf16.mxu0 0
        %1399 = vmatpush1.bf16.msra.mxu0 0
        %1400 = vmatprep.subr.bf16.mxu0 0
        %1401 = vmatpush1.bf16.msra.mxu0 0
        %1402 = vmatprep.subr.bf16.mxu0 0
        %1403 = vmatpush1.bf16.msra.mxu0 0
        %1404 = vmatprep.subr.bf16.mxu0 0
        %1405 = vmatpush1.bf16.msra.mxu0 0
        %1406 = vmatprep.subr.bf16.mxu0 0
        %1407 = vmatpush1.bf16.msra.mxu0 0
        %1408 = vmatprep.subr.bf16.mxu0 0
        %1409 = vmatpush1.bf16.msra.mxu0 0
        %1410 = vmatprep.subr.bf16.mxu0 0
        %1411 = vmatpush1.bf16.msra.mxu0 0
        %1412 = vmatprep.subr.bf16.mxu0 0
        %1413 = vmatpush1.bf16.msra.mxu0 0
        %1414 = vmatprep.subr.bf16.mxu0 0
        %1415 = vmatpush1.bf16.msra.mxu0 0
        %1416 = vmatprep.subr.bf16.mxu0 0
        %1417 = vmatpush1.bf16.msra.mxu0 0
        %1418 = vmatprep.mubr.bf16.mxu0 0
        %1419 = vmatmul.mubr.bf16.gmra.mrb[0].mxu0 %v1381
        %v1420 = vpop.f32.mrb[0].mxu0
        %v1421 = vadd.f32 0.0, %v1420
        %v1422 = vpop.f32.mrb[0].mxu0
        %v1423 = vpop.f32.mrb[0].mxu0
        %v1424 = vpop.f32.mrb[0].mxu0
        %1425 = vdwg.mxu0
        %v1426 = vadd.f32 %v1283, %v1329
        %v1427 = vadd.f32 %v1426, %v1375
        %v1428 = vadd.f32 %v1427, %v1421
        %v1430 = vlaneseq
        %v1431 = vshrl.u32 %v1430, 7
        %v1432 = vsub.s32 0, %v1431
        %v1433 = vrot.slane %v630, %v1432
        %v1435 = vadd.f32 %v1428, %v1433
        %v1436 = vadd.f32 %v579, %v1435
        %v1437 = vld [vmem:[%s11] sm:$0x1]
        %v1438 = vld [vmem:[%s12] sm:$0x1]
        %v1439 = vsel %vm582, %v1436, 0.0
        %1440 = vadd.xlane.f32.xlu0 %v1439
        %v1441 = vpop.xlane.xlu0 %1440
        %v1442 = vmul.f32 %v1441, %v586
        %v1443 = vsub.f32 %v1436, %v1442
        %v1444 = vmul.f32 %v1443, %v1443
        %v1445 = vsel %vm582, %v1444, 0.0
        %1446 = vadd.xlane.f32.xlu0 %v1445
        %v1447 = vpop.xlane.xlu0 %1446
        %v1448 = vmul.f32 %v1447, %v586
        %v1449 = vadd.f32 %v1448, 1e-05
        %v1450 = vrsqrt.pop %v1449
        %v1451 = vmul.f32 %v1443, %v1450
        %v1453 = vlaneseq
        %v1454 = vshrl.u32 %v1453, 7
        %v1455 = vsub.s32 0, %v1454
        %v1456 = vrot.slane %v1437, %v1455
        %v1458 = vmul.f32 %v1451, %v1456
        %v1460 = vlaneseq
        %v1461 = vshrl.u32 %v1460, 7
        %v1462 = vsub.s32 0, %v1461
        %v1463 = vrot.slane %v1438, %v1462
        %v1465 = vadd.f32 %v1458, %v1463
        %v1466 = vpack.c.bf16 %v1465, %v1465
        %v1467 = vld [vmem:[%s13] sm:$0xf]
        %v1468 = vld [vmem:[%s13 + $0x4] sm:$0xf]
        %v1469 = vld [vmem:[%s13 + $0x8] sm:$0xf]
        %v1470 = vld [vmem:[%s13 + $0xc] sm:$0xf]
        %v1471 = vld [vmem:[%s14] sm:$0x1]
        %v1473 = vlaneseq
        %v1474 = vshrl.u32 %v1473, 7
        %v1475 = vsub.s32 0, %v1474
        %v1476 = vrot.slane %v1471, %v1475
        %v1482 = vunpack.c.l.b16 %v1467
        %v1483 = vunpack.c.l.b16 %v1468
        %v1484 = vunpack.c.l.b16 %v1469
        %v1485 = vunpack.c.l.b16 %v1470
        %v1486 = vpack.c.b16 %v1483, %v1482
        %v1487 = vpack.c.b16 %v1485, %v1484
        %v1491 = vsel %vm582, %v1466, 0
        %1493 = vmatprep.subr.bf16.mxu0 0
        %1494 = vmatpush1.bf16.msra.mxu0 %v1486
        %1495 = vmatprep.subr.bf16.mxu0 0
        %1496 = vmatpush1.bf16.msra.mxu0 %v1487
        %1497 = vmatprep.subr.bf16.mxu0 0
        %1498 = vmatpush1.bf16.msra.mxu0 0
        %1499 = vmatprep.subr.bf16.mxu0 0
        %1500 = vmatpush1.bf16.msra.mxu0 0
        %1501 = vmatprep.subr.bf16.mxu0 0
        %1502 = vmatpush1.bf16.msra.mxu0 0
        %1503 = vmatprep.subr.bf16.mxu0 0
        %1504 = vmatpush1.bf16.msra.mxu0 0
        %1505 = vmatprep.subr.bf16.mxu0 0
        %1506 = vmatpush1.bf16.msra.mxu0 0
        %1507 = vmatprep.subr.bf16.mxu0 0
        %1508 = vmatpush1.bf16.msra.mxu0 0
        %1509 = vmatprep.subr.bf16.mxu0 0
        %1510 = vmatpush1.bf16.msra.mxu0 0
        %1511 = vmatprep.subr.bf16.mxu0 0
        %1512 = vmatpush1.bf16.msra.mxu0 0
        %1513 = vmatprep.subr.bf16.mxu0 0
        %1514 = vmatpush1.bf16.msra.mxu0 0
        %1515 = vmatprep.subr.bf16.mxu0 0
        %1516 = vmatpush1.bf16.msra.mxu0 0
        %1517 = vmatprep.subr.bf16.mxu0 0
        %1518 = vmatpush1.bf16.msra.mxu0 0
        %1519 = vmatprep.subr.bf16.mxu0 0
        %1520 = vmatpush1.bf16.msra.mxu0 0
        %1521 = vmatprep.subr.bf16.mxu0 0
        %1522 = vmatpush1.bf16.msra.mxu0 0
        %1523 = vmatprep.subr.bf16.mxu0 0
        %1524 = vmatpush1.bf16.msra.mxu0 0
        %1525 = vmatprep.mubr.bf16.mxu0 0
        %1526 = vmatmul.mubr.bf16.gmra.mrb[0].mxu0 %v1491
        %v1527 = vpop.f32.mrb[0].mxu0
        %v1528 = vadd.f32 %v1476, %v1527
        %v1529 = vpop.f32.mrb[0].mxu0
        %v1530 = vpop.f32.mrb[0].mxu0
        %v1531 = vpop.f32.mrb[0].mxu0
        %1532 = vdwg.mxu0
        %v1533 = vmax.f32 %v1528, 0.0
        %v1534 = vpack.c.bf16 %v1533, %v1533
        %v1535 = vld [vmem:[%s15] sm:$0xf]
        %v1536 = vld [vmem:[%s15 + $0x4] sm:$0xf]
        %v1537 = vld [vmem:[%s15 + $0x8] sm:$0xf]
        %v1538 = vld [vmem:[%s15 + $0xc] sm:$0xf]
        %v1539 = vld [vmem:[%s15 + $0x10] sm:$0xf]
        %v1540 = vld [vmem:[%s15 + $0x14] sm:$0xf]
        %v1541 = vld [vmem:[%s15 + $0x18] sm:$0xf]
        %v1542 = vld [vmem:[%s15 + $0x1c] sm:$0xf]
        %v1543 = vld [vmem:[%s16] sm:$0x1]
        %v1545 = vlaneseq
        %v1546 = vshrl.u32 %v1545, 7
        %v1547 = vsub.s32 0, %v1546
        %v1548 = vrot.slane %v1543, %v1547
        %v1558 = vunpack.c.l.b16 %v1535
        %v1559 = vunpack.c.l.b16 %v1536
        %v1560 = vunpack.c.l.b16 %v1537
        %v1561 = vunpack.c.l.b16 %v1538
        %v1562 = vunpack.c.l.b16 %v1539
        %v1563 = vunpack.c.l.b16 %v1540
        %v1564 = vunpack.c.l.b16 %v1541
        %v1565 = vunpack.c.l.b16 %v1542
        %v1566 = vpack.c.b16 %v1559, %v1558
        %v1567 = vpack.c.b16 %v1561, %v1560
        %v1568 = vpack.c.b16 %v1563, %v1562
        %v1569 = vpack.c.b16 %v1565, %v1564
        %vm1574 = vcmask 523264
        %v1576 = vsel %vm1574, %v1534, 0
        %1578 = vmatprep.subr.bf16.mxu0 0
        %1579 = vmatpush1.bf16.msra.mxu0 %v1566
        %1580 = vmatprep.subr.bf16.mxu0 0
        %1581 = vmatpush1.bf16.msra.mxu0 %v1567
        %1582 = vmatprep.subr.bf16.mxu0 0
        %1583 = vmatpush1.bf16.msra.mxu0 %v1568
        %1584 = vmatprep.subr.bf16.mxu0 0
        %1585 = vmatpush1.bf16.msra.mxu0 %v1569
        %1586 = vmatprep.subr.bf16.mxu0 0
        %1587 = vmatpush1.bf16.msra.mxu0 0
        %1588 = vmatprep.subr.bf16.mxu0 0
        %1589 = vmatpush1.bf16.msra.mxu0 0
        %1590 = vmatprep.subr.bf16.mxu0 0
        %1591 = vmatpush1.bf16.msra.mxu0 0
        %1592 = vmatprep.subr.bf16.mxu0 0
        %1593 = vmatpush1.bf16.msra.mxu0 0
        %1594 = vmatprep.subr.bf16.mxu0 0
        %1595 = vmatpush1.bf16.msra.mxu0 0
        %1596 = vmatprep.subr.bf16.mxu0 0
        %1597 = vmatpush1.bf16.msra.mxu0 0
        %1598 = vmatprep.subr.bf16.mxu0 0
        %1599 = vmatpush1.bf16.msra.mxu0 0
        %1600 = vmatprep.subr.bf16.mxu0 0
        %1601 = vmatpush1.bf16.msra.mxu0 0
        %1602 = vmatprep.subr.bf16.mxu0 0
        %1603 = vmatpush1.bf16.msra.mxu0 0
        %1604 = vmatprep.subr.bf16.mxu0 0
        %1605 = vmatpush1.bf16.msra.mxu0 0
        %1606 = vmatprep.subr.bf16.mxu0 0
        %1607 = vmatpush1.bf16.msra.mxu0 0
        %1608 = vmatprep.subr.bf16.mxu0 0
        %1609 = vmatpush1.bf16.msra.mxu0 0
        %1610 = vmatprep.mubr.bf16.mxu0 0
        %1611 = vmatmul.mubr.bf16.gmra.mrb[0].mxu0 %v1576
        %v1612 = vpop.f32.mrb[0].mxu0
        %v1613 = vadd.f32 %v1548, %v1612
        %v1614 = vpop.f32.mrb[0].mxu0
        %v1615 = vpop.f32.mrb[0].mxu0
        %v1616 = vpop.f32.mrb[0].mxu0
        %1617 = vdwg.mxu0
        %v1618 = vadd.f32 %v1436, %v1613
        %1619 = vst.msk [vmem:[%s565] sm:$0xff] %vm582, %v1618
        %s1620 = sand.u32 %s411, 1
        %s1621 = scalar_lea.sflag [#allocation3], %s1620
        %s1622 = sand.u32 %s411, 1
        %s1623 = smul.addr %s1622, 8
        %s1624 = scalar_lea.vmem [#allocation2], %s1623
        // Predicated region
        $region89: #{_lambda_.15} parent=87 // pred_check
          %p1625 = pneg %p421
        $region90: #{_lambda_.15} parent=87 // pred_check_branch
          %1627 = sbr.rel (%p1625) target = $region92
        $region91: #{_lambda_.15} parent=87 // pred_region
          %s1629 = ssub.s32 128, 128
          %1630 = vsyncadd %s1621, %s1629
          %s1631 = smul.addr %s31, 128
          %s1632 = scalar_lea.hbm %s17, %s1631
          %s1634 = sshll.u32 %s1624, 4
          %s1635 = int_to_ptr.vmem [resolvable:$true] %s1634
          %1637 = dma.vmem_to_hbm [thread:$0]  %s1635, 128, %s1632, %s1621
        $region92: #{_lambda_.15} parent=87 // pred_fallthru
          _
      $region88: #{_lambda_.15} parent=5 // pred_fallthru
        _
      %p1638 = scmp.le.s32.totalorder 2, %s26
      // Predicated region
      $region93: #{_lambda_.15} parent=5 // pred_check
        %p1639 = pneg %p1638
      $region94: #{_lambda_.15} parent=5 // pred_check_branch
        %1641 = sbr.rel (%p1639) target = $region96
      $region95: #{_lambda_.15} parent=5 // pred_region
        %s1642 = ssub.s32 %s26, 2
        // Predicated region
        $region97: #{_lambda_.15} parent=95 // pred_check
          %p1643 = pneg %p427
        $region98: #{_lambda_.15} parent=95 // pred_check_branch
          %1645 = sbr.rel (%p1643) target = $region100
        $region99: #{_lambda_.15} parent=95 // pred_region
          %s1646 = sand.u32 %s412, 1
          %s1647 = scalar_lea.sflag [#allocation3], %s1646
          %s1648 = sand.u32 %s412, 1
          %s1649 = smul.addr %s1648, 8
          %s1650 = scalar_lea.vmem [#allocation2], %s1649
          %1651 = dma.done %s1647, 128
        $region100: #{_lambda_.15} parent=95 // pred_fallthru
          _
      $region96: #{_lambda_.15} parent=5 // pred_fallthru
        _
    $region6: #{_lambda_.15} parent=1 // loop_footer
      %s30 = sadd.s32 1, %s26
    $region7: #{_lambda_.15} parent=1 // loop_footer_branch
      %25 = sbr.rel target = $region3
    $region8: #{_lambda_.15} parent=1 // loop_exit
      _
    %1652 = vsyncpa [#allocation3], 1
    %s1653 = scalar_lea.sflag [#allocation3], 1
    %1654 = vsyncpa %s1653, 1

</llo_original>
